<compile_context>
chip_gen: v7x
topology: tpu7x:2x2x1
jax: 0.10.0
libtpu: 0.0.40
codegen_flags: <defaults>
</compile_context>

<pallas_src>
import jax
import jax.numpy as jnp
from jax.experimental import pallas as pl
from jax.experimental.pallas import tpu as pltpu

CDT = jnp.float32          # matmul operand dtype (bf16 = faster MXU path on v6e/v7x)
GRID_W = 28                # virtual spatial grid width (MNIST 28x28)
J = GRID_W * GRID_W        # flattened spatial size = 784 (lane axis)
_TB = 8                    # batch tile per grid step (batch is zero-padded to a multiple)

_WKEYS = ('c1w', 'c1b', 'c2w', 'c2b', 'c3w', 'c3b', 'sel',
          'f1w', 'f1b', 'f2w', 'f2b', 'f3w', 'f3b')


# ------------------------------ fused kernel --------------------------------

def _cnn_kernel(x_ref, c1w_ref, c1b_ref, c2w_ref, c2b_ref, c3w_ref, c3b_ref,
                sel_ref, f1w_ref, f1b_ref, f2w_ref, f2b_ref, f3w_ref, f3b_ref,
                o_ref):
    tb = o_ref.shape[0]

    def shift(a, off):
        # a[..., j] <- a[..., j + off], zero fill past the end (static off).
        if off == 0:
            return a
        zeros = jnp.zeros(a.shape[:-1] + (off,), a.dtype)
        return jnp.concatenate([a[:, off:], zeros], axis=-1)

    def conv3x3(act, w_bd, bias, dil):
        # act: (Cin*tb, J) rows ordered (ci, b).  Taps become lane shifts on the
        # virtual grid; K ordering is (kh, kw, ci) and matches the packed weight.
        pieces = [shift(act, dil * (kh * GRID_W + kw))
                  for kh in range(3) for kw in range(3)]
        p = jnp.concatenate(pieces, axis=0)               # (9*Cin*tb, J), rows (k, b)
        out = jnp.dot(w_bd.astype(CDT), p.astype(CDT),    # block-diag kron(W, I_tb)
                      preferred_element_type=jnp.float32) # (Cout*tb, J)
        return jnp.maximum(out + bias, 0.0)

    def pool2x2(act, dil):
        # 2x2/stride-2 max pool without subsampling: valid outputs stay on the same
        # virtual grid at stride 2*dil; the next conv doubles its dilation instead.
        h = jnp.maximum(act, shift(act, dil))
        return jnp.maximum(h, shift(h, dil * GRID_W))

    a = x_ref[...]                                        # (tb, 784)   Cin = 1
    a = conv3x3(a, c1w_ref[...], c1b_ref[...], dil=1)     # (10*tb, 784) valid 26x26
    a = pool2x2(a, dil=1)                                 # valid 13x13 @ stride 2
    a = conv3x3(a, c2w_ref[...], c2b_ref[...], dil=2)     # (5*tb, 784)  valid 11x11
    a = conv3x3(a, c3w_ref[...], c3b_ref[...], dil=2)     # (16*tb, 784) valid  9x9
    a = pool2x2(a, dil=2)                                 # valid 4x4 @ stride 4

    # Gather the 16 valid spatial positions per channel (j = 112h + 4w) with a
    # one-hot selection matmul, then rebuild PyTorch's view(-1, 256) = (c, h, w) order.
    g = jnp.dot(a.astype(CDT), sel_ref[...],
                preferred_element_type=jnp.float32)       # (16*tb, 16), rows (c, b)
    xf = jnp.concatenate([g[c * tb:(c + 1) * tb, :] for c in range(16)],
                         axis=-1)                         # (tb, 256)

    h1 = jnp.maximum(jnp.dot(xf.astype(CDT), f1w_ref[...],
                             preferred_element_type=jnp.float32) + f1b_ref[...], 0.0)
    h2 = jnp.maximum(jnp.dot(h1.astype(CDT), f2w_ref[...],
                             preferred_element_type=jnp.float32) + f2b_ref[...], 0.0)
    o_ref[...] = jnp.dot(h2.astype(CDT), f3w_ref[...],
                         preferred_element_type=jnp.float32) + f3b_ref[...]


# ----------------------------- parameter packing ----------------------------

def init_params(key):
    """PyTorch-equivalent initialization (kept from the original module)."""
    def conv_init(k, cout, cin, ksz):
        bound = 1.0 / (cin * ksz * ksz) ** 0.5
        kw, kb = jax.random.split(k)
        return (jax.random.uniform(kw, (cout, cin, ksz, ksz), jnp.float32, -bound, bound),
                jax.random.uniform(kb, (cout,), jnp.float32, -bound, bound))

    def lin_init(k, fout, fin):
        bound = 1.0 / fin ** 0.5
        kw, kb = jax.random.split(k)
        return (jax.random.uniform(kw, (fout, fin), jnp.float32, -bound, bound),
                jax.random.uniform(kb, (fout,), jnp.float32, -bound, bound))

    k1, k2, k3, k4, k5, k6 = jax.random.split(key, 6)
    p = {}
    p['conv1_w'], p['conv1_b'] = conv_init(k1, 10, 1, 3)
    p['conv2_w'], p['conv2_b'] = conv_init(k2, 5, 10, 3)
    p['conv3_w'], p['conv3_b'] = conv_init(k3, 16, 5, 3)
    p['fc1_w'], p['fc1_b'] = lin_init(k4, 120, 16 * 4 * 4)
    p['fc2_w'], p['fc2_b'] = lin_init(k5, 84, 120)
    p['fc3_w'], p['fc3_b'] = lin_init(k6, 10, 84)
    return p


def prepare_params(params, block_batch=_TB):
    """Pack weights once into the kernel-ready layout (done outside the hot path)."""
    tb = block_batch
    eye = jnp.eye(tb, dtype=jnp.float32)

    def conv_pack(w, b):
        cout, cin = w.shape[0], w.shape[1]
        # K ordered (kh, kw, ci) to match the in-kernel patch stacking order.
        wmat = jnp.transpose(w, (0, 2, 3, 1)).reshape(cout, 9 * cin)
        w_bd = jnp.kron(wmat, eye).astype(CDT)              # (cout*tb, 9*cin*tb)
        b_bd = jnp.repeat(b, tb).reshape(cout * tb, 1).astype(jnp.float32)
        return w_bd, b_bd

    c1w, c1b = conv_pack(params['conv1_w'], params['conv1_b'])
    c2w, c2b = conv_pack(params['conv2_w'], params['conv2_b'])
    c3w, c3b = conv_pack(params['conv3_w'], params['conv3_b'])

    # One-hot selector: final 4x4 valid grid sits at flat positions 112*h + 4*w.
    pos = jnp.array([112 * h + 4 * w for h in range(4) for w in range(4)], jnp.int32)
    sel = jnp.zeros((J, 16), jnp.float32).at[pos, jnp.arange(16)].set(1.0).astype(CDT)

    def fc_pack(w, b, kin_pad, kout_pad):
        fout, fin = w.shape
        wp = jnp.zeros((kin_pad, kout_pad), jnp.float32).at[:fin, :fout].set(w.T)
        bp = jnp.zeros((1, kout_pad), jnp.float32).at[0, :fout].set(b)
        return wp.astype(CDT), bp

    f1w, f1b = fc_pack(params['fc1_w'], params['fc1_b'], 256, 128)
    f2w, f2b = fc_pack(params['fc2_w'], params['fc2_b'], 128, 128)
    f3w, f3b = fc_pack(params['fc3_w'], params['fc3_b'], 128, 128)

    return dict(c1w=c1w, c1b=c1b, c2w=c2w, c2b=c2b, c3w=c3w, c3b=c3b, sel=sel,
                f1w=f1w, f1b=f1b, f2w=f2w, f2b=f2b, f3w=f3w, f3b=f3b)


# --------------------------------- forward ----------------------------------

@jax.jit
def cnn_forward(prep, x):
    # x: (N, 1, 28, 28) float32 -> logits (N, 10)
    n = x.shape[0]
    xf = x.reshape(n, J).astype(jnp.float32)
    n_pad = ((n + _TB - 1) // _TB) * _TB
    if n_pad != n:
        xf = jnp.pad(xf, ((0, n_pad - n), (0, 0)))
    steps = n_pad // _TB
    weights = [prep[k] for k in _WKEYS]

    flops_step = (2 * J * (10 * _TB * 9 * _TB + 5 * _TB * 90 * _TB
                           + 16 * _TB * 45 * _TB + 16 * _TB * 16)
                  + 2 * _TB * (256 * 128 + 128 * 128 + 128 * 128))
    w_bytes = sum(int(w.size) * w.dtype.itemsize for w in weights)
    cost = pl.CostEstimate(flops=int(flops_step * steps), transcendentals=0,
                           bytes_accessed=int(4 * xf.size + 4 * n_pad * 128 + w_bytes))

    out = pl.pallas_call(
        _cnn_kernel,
        out_shape=jax.ShapeDtypeStruct((n_pad, 128), jnp.float32),
        grid_spec=pltpu.PrefetchScalarGridSpec(
            num_scalar_prefetch=0,
            grid=(steps,),
            in_specs=[pl.BlockSpec((_TB, J), lambda i: (i, 0))] +
                     [pl.BlockSpec(w.shape, lambda i: (0, 0)) for w in weights],
            out_specs=pl.BlockSpec((_TB, 128), lambda i: (i, 0)),
        ),
        compiler_params=pltpu.CompilerParams(dimension_semantics=("parallel",)),
        cost_estimate=cost,
    )(xf, *weights)
    return out[:n, :10]


# ------------------------- pure-JAX reference (check) ------------------------

def cnn_reference(params, x):
    def conv(a, w, b):
        out = jax.lax.conv_general_dilated(
            a, w, (1, 1), 'VALID', dimension_numbers=('NCHW', 'OIHW', 'NCHW'))
        return jax.nn.relu(out + b.reshape(1, -1, 1, 1))

    def pool(a):
        return jax.lax.reduce_window(a, -jnp.inf, jax.lax.max,
                                     (1, 1, 2, 2), (1, 1, 2, 2), 'VALID')

    a = conv(x, params['conv1_w'], params['conv1_b'])
    a = pool(a)
    a = conv(a, params['conv2_w'], params['conv2_b'])
    a = conv(a, params['conv3_w'], params['conv3_b'])
    a = pool(a)
    xf = a.reshape(a.shape[0], 16 * 4 * 4)
    h = jax.nn.relu(xf @ params['fc1_w'].T + params['fc1_b'])
    h = jax.nn.relu(h @ params['fc2_w'].T + params['fc2_b'])
    return h @ params['fc3_w'].T + params['fc3_b']


if __name__ == "__main__":
    key = jax.random.PRNGKey(0)
    pkey, xkey = jax.random.split(key)
    params = init_params(pkey)
    prep = prepare_params(params)

    x = jax.random.normal(xkey, (2, 1, 28, 28), dtype=jnp.float32)
    out = cnn_forward(prep, x)
    jax.block_until_ready(out)
    assert out.shape == (2, 10) and out.dtype == jnp.float32

    ref = cnn_reference(params, x)
    assert jnp.allclose(out, ref, atol=1e-3, rtol=1e-3), \
        float(jnp.max(jnp.abs(out - ref)))
    print("KERNEL_OK")
</pallas_src>

<mosaic_0001>
module attributes {stable_mosaic.version = 11 : i64} {
  func.func @_cnn_kernel(%arg0: i32, %arg1: memref<8x784xf32, #tpu.memory_space<vmem>>, %arg2: memref<80x72xf32, #tpu.memory_space<vmem>>, %arg3: memref<80x1xf32, #tpu.memory_space<vmem>>, %arg4: memref<40x720xf32, #tpu.memory_space<vmem>>, %arg5: memref<40x1xf32, #tpu.memory_space<vmem>>, %arg6: memref<128x360xf32, #tpu.memory_space<vmem>>, %arg7: memref<128x1xf32, #tpu.memory_space<vmem>>, %arg8: memref<784x16xf32, #tpu.memory_space<vmem>>, %arg9: memref<256x128xf32, #tpu.memory_space<vmem>>, %arg10: memref<1x128xf32, #tpu.memory_space<vmem>>, %arg11: memref<128x128xf32, #tpu.memory_space<vmem>>, %arg12: memref<1x128xf32, #tpu.memory_space<vmem>>, %arg13: memref<128x128xf32, #tpu.memory_space<vmem>>, %arg14: memref<1x128xf32, #tpu.memory_space<vmem>>, %arg15: memref<8x128xf32, #tpu.memory_space<vmem>>) attributes {dimension_semantics = [#tpu.dimension_semantics<parallel>], iteration_bounds = array<i64: 1>, scalar_prefetch = 0 : i64, scratch_operands = 0 : i64, tpu.core_type = #tpu.core_type<tc>, window_params = [{transform_indices = @transform_0, window_bounds = array<i64: 8, 784>}, {pipeline_mode = #tpu.pipeline_mode<synchronous>, transform_indices = @transform_1, window_bounds = array<i64: 80, 72>}, {pipeline_mode = #tpu.pipeline_mode<synchronous>, transform_indices = @transform_2, window_bounds = array<i64: 80, 1>}, {pipeline_mode = #tpu.pipeline_mode<synchronous>, transform_indices = @transform_3, window_bounds = array<i64: 40, 720>}, {pipeline_mode = #tpu.pipeline_mode<synchronous>, transform_indices = @transform_4, window_bounds = array<i64: 40, 1>}, {pipeline_mode = #tpu.pipeline_mode<synchronous>, transform_indices = @transform_5, window_bounds = array<i64: 128, 360>}, {pipeline_mode = #tpu.pipeline_mode<synchronous>, transform_indices = @transform_6, window_bounds = array<i64: 128, 1>}, {pipeline_mode = #tpu.pipeline_mode<synchronous>, transform_indices = @transform_7, window_bounds = array<i64: 784, 16>}, {pipeline_mode = #tpu.pipeline_mode<synchronous>, transform_indices = @transform_8, window_bounds = array<i64: 256, 128>}, {pipeline_mode = #tpu.pipeline_mode<synchronous>, transform_indices = @transform_9, window_bounds = array<i64: 1, 128>}, {pipeline_mode = #tpu.pipeline_mode<synchronous>, transform_indices = @transform_10, window_bounds = array<i64: 128, 128>}, {pipeline_mode = #tpu.pipeline_mode<synchronous>, transform_indices = @transform_11, window_bounds = array<i64: 1, 128>}, {pipeline_mode = #tpu.pipeline_mode<synchronous>, transform_indices = @transform_12, window_bounds = array<i64: 128, 128>}, {pipeline_mode = #tpu.pipeline_mode<synchronous>, transform_indices = @transform_13, window_bounds = array<i64: 1, 128>}, {transform_indices = @transform_14, window_bounds = array<i64: 8, 128>}]} {
    %c0 = arith.constant 0 : index
    %c0_0 = arith.constant 0 : index
    %0 = vector.load %arg1[%c0, %c0_0] : memref<8x784xf32, #tpu.memory_space<vmem>>, vector<8x784xf32>
    %c0_1 = arith.constant 0 : index
    %c0_2 = arith.constant 0 : index
    %1 = vector.load %arg2[%c0_1, %c0_2] : memref<80x72xf32, #tpu.memory_space<vmem>>, vector<80x72xf32>
    %c0_3 = arith.constant 0 : index
    %c0_4 = arith.constant 0 : index
    %2 = vector.load %arg3[%c0_3, %c0_4] : memref<80x1xf32, #tpu.memory_space<vmem>>, vector<80x1xf32>
    %cst = arith.constant 0.000000e+00 : f32
    %3 = vector.broadcast %cst : f32 to vector<8x1xf32>
    %4 = vector.extract_strided_slice %0 {offsets = [0, 1], sizes = [8, 783], strides = [1, 1]} : vector<8x784xf32> to vector<8x783xf32>
    %5 = tpu.concatenate %4, %3 in 1 : vector<8x783xf32>, vector<8x1xf32> -> vector<8x784xf32>
    %cst_5 = arith.constant 0.000000e+00 : f32
    %6 = vector.broadcast %cst_5 : f32 to vector<8x2xf32>
    %7 = vector.extract_strided_slice %0 {offsets = [0, 2], sizes = [8, 782], strides = [1, 1]} : vector<8x784xf32> to vector<8x782xf32>
    %8 = tpu.concatenate %7, %6 in 1 : vector<8x782xf32>, vector<8x2xf32> -> vector<8x784xf32>
    %cst_6 = arith.constant 0.000000e+00 : f32
    %9 = vector.broadcast %cst_6 : f32 to vector<8x28xf32>
    %10 = vector.extract_strided_slice %0 {offsets = [0, 28], sizes = [8, 756], strides = [1, 1]} : vector<8x784xf32> to vector<8x756xf32>
    %11 = tpu.concatenate %10, %9 in 1 : vector<8x756xf32>, vector<8x28xf32> -> vector<8x784xf32>
    %cst_7 = arith.constant 0.000000e+00 : f32
    %12 = vector.broadcast %cst_7 : f32 to vector<8x29xf32>
    %13 = vector.extract_strided_slice %0 {offsets = [0, 29], sizes = [8, 755], strides = [1, 1]} : vector<8x784xf32> to vector<8x755xf32>
    %14 = tpu.concatenate %13, %12 in 1 : vector<8x755xf32>, vector<8x29xf32> -> vector<8x784xf32>
    %cst_8 = arith.constant 0.000000e+00 : f32
    %15 = vector.broadcast %cst_8 : f32 to vector<8x30xf32>
    %16 = vector.extract_strided_slice %0 {offsets = [0, 30], sizes = [8, 754], strides = [1, 1]} : vector<8x784xf32> to vector<8x754xf32>
    %17 = tpu.concatenate %16, %15 in 1 : vector<8x754xf32>, vector<8x30xf32> -> vector<8x784xf32>
    %cst_9 = arith.constant 0.000000e+00 : f32
    %18 = vector.broadcast %cst_9 : f32 to vector<8x56xf32>
    %19 = vector.extract_strided_slice %0 {offsets = [0, 56], sizes = [8, 728], strides = [1, 1]} : vector<8x784xf32> to vector<8x728xf32>
    %20 = tpu.concatenate %19, %18 in 1 : vector<8x728xf32>, vector<8x56xf32> -> vector<8x784xf32>
    %cst_10 = arith.constant 0.000000e+00 : f32
    %21 = vector.broadcast %cst_10 : f32 to vector<8x57xf32>
    %22 = vector.extract_strided_slice %0 {offsets = [0, 57], sizes = [8, 727], strides = [1, 1]} : vector<8x784xf32> to vector<8x727xf32>
    %23 = tpu.concatenate %22, %21 in 1 : vector<8x727xf32>, vector<8x57xf32> -> vector<8x784xf32>
    %cst_11 = arith.constant 0.000000e+00 : f32
    %24 = vector.broadcast %cst_11 : f32 to vector<8x58xf32>
    %25 = vector.extract_strided_slice %0 {offsets = [0, 58], sizes = [8, 726], strides = [1, 1]} : vector<8x784xf32> to vector<8x726xf32>
    %26 = tpu.concatenate %25, %24 in 1 : vector<8x726xf32>, vector<8x58xf32> -> vector<8x784xf32>
    %27 = tpu.concatenate %0, %5, %8, %11, %14, %17, %20, %23, %26 in 0 : vector<8x784xf32>, vector<8x784xf32>, vector<8x784xf32>, vector<8x784xf32>, vector<8x784xf32>, vector<8x784xf32>, vector<8x784xf32>, vector<8x784xf32>, vector<8x784xf32> -> vector<72x784xf32>
    %cst_12 = arith.constant dense<0.000000e+00> : vector<80x784xf32>
    %28 = tpu.matmul %1, %27, %cst_12 {dimension_numbers = #tpu.dot_dimension_numbers<[1], [0], [0], [1], [0, 0, 1, 1], [], []>} : vector<80x72xf32>, vector<72x784xf32>, vector<80x784xf32> -> vector<80x784xf32>
    %29 = vector.broadcast %2 : vector<80x1xf32> to vector<80x784xf32>
    %30 = arith.addf %28, %29 : vector<80x784xf32>
    %cst_13 = arith.constant 0.000000e+00 : f32
    %31 = vector.broadcast %cst_13 : f32 to vector<80x784xf32>
    %32 = arith.maximumf %30, %31 : vector<80x784xf32>
    %cst_14 = arith.constant 0.000000e+00 : f32
    %33 = vector.broadcast %cst_14 : f32 to vector<80x1xf32>
    %34 = vector.extract_strided_slice %32 {offsets = [0, 1], sizes = [80, 783], strides = [1, 1]} : vector<80x784xf32> to vector<80x783xf32>
    %35 = tpu.concatenate %34, %33 in 1 : vector<80x783xf32>, vector<80x1xf32> -> vector<80x784xf32>
    %36 = arith.maximumf %32, %35 : vector<80x784xf32>
    %cst_15 = arith.constant 0.000000e+00 : f32
    %37 = vector.broadcast %cst_15 : f32 to vector<80x28xf32>
    %38 = vector.extract_strided_slice %36 {offsets = [0, 28], sizes = [80, 756], strides = [1, 1]} : vector<80x784xf32> to vector<80x756xf32>
    %39 = tpu.concatenate %38, %37 in 1 : vector<80x756xf32>, vector<80x28xf32> -> vector<80x784xf32>
    %40 = arith.maximumf %36, %39 : vector<80x784xf32>
    %c0_16 = arith.constant 0 : index
    %c0_17 = arith.constant 0 : index
    %41 = vector.load %arg4[%c0_16, %c0_17] : memref<40x720xf32, #tpu.memory_space<vmem>>, vector<40x720xf32>
    %c0_18 = arith.constant 0 : index
    %c0_19 = arith.constant 0 : index
    %42 = vector.load %arg5[%c0_18, %c0_19] : memref<40x1xf32, #tpu.memory_space<vmem>>, vector<40x1xf32>
    %cst_20 = arith.constant 0.000000e+00 : f32
    %43 = vector.broadcast %cst_20 : f32 to vector<80x2xf32>
    %44 = vector.extract_strided_slice %40 {offsets = [0, 2], sizes = [80, 782], strides = [1, 1]} : vector<80x784xf32> to vector<80x782xf32>
    %45 = tpu.concatenate %44, %43 in 1 : vector<80x782xf32>, vector<80x2xf32> -> vector<80x784xf32>
    %cst_21 = arith.constant 0.000000e+00 : f32
    %46 = vector.broadcast %cst_21 : f32 to vector<80x4xf32>
    %47 = vector.extract_strided_slice %40 {offsets = [0, 4], sizes = [80, 780], strides = [1, 1]} : vector<80x784xf32> to vector<80x780xf32>
    %48 = tpu.concatenate %47, %46 in 1 : vector<80x780xf32>, vector<80x4xf32> -> vector<80x784xf32>
    %cst_22 = arith.constant 0.000000e+00 : f32
    %49 = vector.broadcast %cst_22 : f32 to vector<80x56xf32>
    %50 = vector.extract_strided_slice %40 {offsets = [0, 56], sizes = [80, 728], strides = [1, 1]} : vector<80x784xf32> to vector<80x728xf32>
    %51 = tpu.concatenate %50, %49 in 1 : vector<80x728xf32>, vector<80x56xf32> -> vector<80x784xf32>
    %cst_23 = arith.constant 0.000000e+00 : f32
    %52 = vector.broadcast %cst_23 : f32 to vector<80x58xf32>
    %53 = vector.extract_strided_slice %40 {offsets = [0, 58], sizes = [80, 726], strides = [1, 1]} : vector<80x784xf32> to vector<80x726xf32>
    %54 = tpu.concatenate %53, %52 in 1 : vector<80x726xf32>, vector<80x58xf32> -> vector<80x784xf32>
    %cst_24 = arith.constant 0.000000e+00 : f32
    %55 = vector.broadcast %cst_24 : f32 to vector<80x60xf32>
    %56 = vector.extract_strided_slice %40 {offsets = [0, 60], sizes = [80, 724], strides = [1, 1]} : vector<80x784xf32> to vector<80x724xf32>
    %57 = tpu.concatenate %56, %55 in 1 : vector<80x724xf32>, vector<80x60xf32> -> vector<80x784xf32>
    %cst_25 = arith.constant 0.000000e+00 : f32
    %58 = vector.broadcast %cst_25 : f32 to vector<80x112xf32>
    %59 = vector.extract_strided_slice %40 {offsets = [0, 112], sizes = [80, 672], strides = [1, 1]} : vector<80x784xf32> to vector<80x672xf32>
    %60 = tpu.concatenate %59, %58 in 1 : vector<80x672xf32>, vector<80x112xf32> -> vector<80x784xf32>
    %cst_26 = arith.constant 0.000000e+00 : f32
    %61 = vector.broadcast %cst_26 : f32 to vector<80x114xf32>
    %62 = vector.extract_strided_slice %40 {offsets = [0, 114], sizes = [80, 670], strides = [1, 1]} : vector<80x784xf32> to vector<80x670xf32>
    %63 = tpu.concatenate %62, %61 in 1 : vector<80x670xf32>, vector<80x114xf32> -> vector<80x784xf32>
    %cst_27 = arith.constant 0.000000e+00 : f32
    %64 = vector.broadcast %cst_27 : f32 to vector<80x116xf32>
    %65 = vector.extract_strided_slice %40 {offsets = [0, 116], sizes = [80, 668], strides = [1, 1]} : vector<80x784xf32> to vector<80x668xf32>
    %66 = tpu.concatenate %65, %64 in 1 : vector<80x668xf32>, vector<80x116xf32> -> vector<80x784xf32>
    %67 = tpu.concatenate %40, %45, %48, %51, %54, %57, %60, %63, %66 in 0 : vector<80x784xf32>, vector<80x784xf32>, vector<80x784xf32>, vector<80x784xf32>, vector<80x784xf32>, vector<80x784xf32>, vector<80x784xf32>, vector<80x784xf32>, vector<80x784xf32> -> vector<720x784xf32>
    %cst_28 = arith.constant dense<0.000000e+00> : vector<40x784xf32>
    %68 = tpu.matmul %41, %67, %cst_28 {dimension_numbers = #tpu.dot_dimension_numbers<[1], [0], [0], [1], [0, 0, 1, 1], [], []>} : vector<40x720xf32>, vector<720x784xf32>, vector<40x784xf32> -> vector<40x784xf32>
    %69 = vector.broadcast %42 : vector<40x1xf32> to vector<40x784xf32>
    %70 = arith.addf %68, %69 : vector<40x784xf32>
    %cst_29 = arith.constant 0.000000e+00 : f32
    %71 = vector.broadcast %cst_29 : f32 to vector<40x784xf32>
    %72 = arith.maximumf %70, %71 : vector<40x784xf32>
    %c0_30 = arith.constant 0 : index
    %c0_31 = arith.constant 0 : index
    %73 = vector.load %arg6[%c0_30, %c0_31] : memref<128x360xf32, #tpu.memory_space<vmem>>, vector<128x360xf32>
    %c0_32 = arith.constant 0 : index
    %c0_33 = arith.constant 0 : index
    %74 = vector.load %arg7[%c0_32, %c0_33] : memref<128x1xf32, #tpu.memory_space<vmem>>, vector<128x1xf32>
    %cst_34 = arith.constant 0.000000e+00 : f32
    %75 = vector.broadcast %cst_34 : f32 to vector<40x2xf32>
    %76 = vector.extract_strided_slice %72 {offsets = [0, 2], sizes = [40, 782], strides = [1, 1]} : vector<40x784xf32> to vector<40x782xf32>
    %77 = tpu.concatenate %76, %75 in 1 : vector<40x782xf32>, vector<40x2xf32> -> vector<40x784xf32>
    %cst_35 = arith.constant 0.000000e+00 : f32
    %78 = vector.broadcast %cst_35 : f32 to vector<40x4xf32>
    %79 = vector.extract_strided_slice %72 {offsets = [0, 4], sizes = [40, 780], strides = [1, 1]} : vector<40x784xf32> to vector<40x780xf32>
    %80 = tpu.concatenate %79, %78 in 1 : vector<40x780xf32>, vector<40x4xf32> -> vector<40x784xf32>
    %cst_36 = arith.constant 0.000000e+00 : f32
    %81 = vector.broadcast %cst_36 : f32 to vector<40x56xf32>
    %82 = vector.extract_strided_slice %72 {offsets = [0, 56], sizes = [40, 728], strides = [1, 1]} : vector<40x784xf32> to vector<40x728xf32>
    %83 = tpu.concatenate %82, %81 in 1 : vector<40x728xf32>, vector<40x56xf32> -> vector<40x784xf32>
    %cst_37 = arith.constant 0.000000e+00 : f32
    %84 = vector.broadcast %cst_37 : f32 to vector<40x58xf32>
    %85 = vector.extract_strided_slice %72 {offsets = [0, 58], sizes = [40, 726], strides = [1, 1]} : vector<40x784xf32> to vector<40x726xf32>
    %86 = tpu.concatenate %85, %84 in 1 : vector<40x726xf32>, vector<40x58xf32> -> vector<40x784xf32>
    %cst_38 = arith.constant 0.000000e+00 : f32
    %87 = vector.broadcast %cst_38 : f32 to vector<40x60xf32>
    %88 = vector.extract_strided_slice %72 {offsets = [0, 60], sizes = [40, 724], strides = [1, 1]} : vector<40x784xf32> to vector<40x724xf32>
    %89 = tpu.concatenate %88, %87 in 1 : vector<40x724xf32>, vector<40x60xf32> -> vector<40x784xf32>
    %cst_39 = arith.constant 0.000000e+00 : f32
    %90 = vector.broadcast %cst_39 : f32 to vector<40x112xf32>
    %91 = vector.extract_strided_slice %72 {offsets = [0, 112], sizes = [40, 672], strides = [1, 1]} : vector<40x784xf32> to vector<40x672xf32>
    %92 = tpu.concatenate %91, %90 in 1 : vector<40x672xf32>, vector<40x112xf32> -> vector<40x784xf32>
    %cst_40 = arith.constant 0.000000e+00 : f32
    %93 = vector.broadcast %cst_40 : f32 to vector<40x114xf32>
    %94 = vector.extract_strided_slice %72 {offsets = [0, 114], sizes = [40, 670], strides = [1, 1]} : vector<40x784xf32> to vector<40x670xf32>
    %95 = tpu.concatenate %94, %93 in 1 : vector<40x670xf32>, vector<40x114xf32> -> vector<40x784xf32>
    %cst_41 = arith.constant 0.000000e+00 : f32
    %96 = vector.broadcast %cst_41 : f32 to vector<40x116xf32>
    %97 = vector.extract_strided_slice %72 {offsets = [0, 116], sizes = [40, 668], strides = [1, 1]} : vector<40x784xf32> to vector<40x668xf32>
    %98 = tpu.concatenate %97, %96 in 1 : vector<40x668xf32>, vector<40x116xf32> -> vector<40x784xf32>
    %99 = tpu.concatenate %72, %77, %80, %83, %86, %89, %92, %95, %98 in 0 : vector<40x784xf32>, vector<40x784xf32>, vector<40x784xf32>, vector<40x784xf32>, vector<40x784xf32>, vector<40x784xf32>, vector<40x784xf32>, vector<40x784xf32>, vector<40x784xf32> -> vector<360x784xf32>
    %cst_42 = arith.constant dense<0.000000e+00> : vector<128x784xf32>
    %100 = tpu.matmul %73, %99, %cst_42 {dimension_numbers = #tpu.dot_dimension_numbers<[1], [0], [0], [1], [0, 0, 1, 1], [], []>} : vector<128x360xf32>, vector<360x784xf32>, vector<128x784xf32> -> vector<128x784xf32>
    %101 = vector.broadcast %74 : vector<128x1xf32> to vector<128x784xf32>
    %102 = arith.addf %100, %101 : vector<128x784xf32>
    %cst_43 = arith.constant 0.000000e+00 : f32
    %103 = vector.broadcast %cst_43 : f32 to vector<128x784xf32>
    %104 = arith.maximumf %102, %103 : vector<128x784xf32>
    %cst_44 = arith.constant 0.000000e+00 : f32
    %105 = vector.broadcast %cst_44 : f32 to vector<128x2xf32>
    %106 = vector.extract_strided_slice %104 {offsets = [0, 2], sizes = [128, 782], strides = [1, 1]} : vector<128x784xf32> to vector<128x782xf32>
    %107 = tpu.concatenate %106, %105 in 1 : vector<128x782xf32>, vector<128x2xf32> -> vector<128x784xf32>
    %108 = arith.maximumf %104, %107 : vector<128x784xf32>
    %cst_45 = arith.constant 0.000000e+00 : f32
    %109 = vector.broadcast %cst_45 : f32 to vector<128x56xf32>
    %110 = vector.extract_strided_slice %108 {offsets = [0, 56], sizes = [128, 728], strides = [1, 1]} : vector<128x784xf32> to vector<128x728xf32>
    %111 = tpu.concatenate %110, %109 in 1 : vector<128x728xf32>, vector<128x56xf32> -> vector<128x784xf32>
    %112 = arith.maximumf %108, %111 : vector<128x784xf32>
    %c0_46 = arith.constant 0 : index
    %c0_47 = arith.constant 0 : index
    %113 = vector.load %arg8[%c0_46, %c0_47] : memref<784x16xf32, #tpu.memory_space<vmem>>, vector<784x16xf32>
    %cst_48 = arith.constant dense<0.000000e+00> : vector<128x16xf32>
    %114 = tpu.matmul %112, %113, %cst_48 {dimension_numbers = #tpu.dot_dimension_numbers<[1], [0], [0], [1], [0, 0, 1, 1], [], []>} : vector<128x784xf32>, vector<784x16xf32>, vector<128x16xf32> -> vector<128x16xf32>
    %115 = vector.extract_strided_slice %114 {offsets = [0, 0], sizes = [8, 16], strides = [1, 1]} : vector<128x16xf32> to vector<8x16xf32>
    %116 = vector.extract_strided_slice %114 {offsets = [8, 0], sizes = [8, 16], strides = [1, 1]} : vector<128x16xf32> to vector<8x16xf32>
    %117 = vector.extract_strided_slice %114 {offsets = [16, 0], sizes = [8, 16], strides = [1, 1]} : vector<128x16xf32> to vector<8x16xf32>
    %118 = vector.extract_strided_slice %114 {offsets = [24, 0], sizes = [8, 16], strides = [1, 1]} : vector<128x16xf32> to vector<8x16xf32>
    %119 = vector.extract_strided_slice %114 {offsets = [32, 0], sizes = [8, 16], strides = [1, 1]} : vector<128x16xf32> to vector<8x16xf32>
    %120 = vector.extract_strided_slice %114 {offsets = [40, 0], sizes = [8, 16], strides = [1, 1]} : vector<128x16xf32> to vector<8x16xf32>
    %121 = vector.extract_strided_slice %114 {offsets = [48, 0], sizes = [8, 16], strides = [1, 1]} : vector<128x16xf32> to vector<8x16xf32>
    %122 = vector.extract_strided_slice %114 {offsets = [56, 0], sizes = [8, 16], strides = [1, 1]} : vector<128x16xf32> to vector<8x16xf32>
    %123 = vector.extract_strided_slice %114 {offsets = [64, 0], sizes = [8, 16], strides = [1, 1]} : vector<128x16xf32> to vector<8x16xf32>
    %124 = vector.extract_strided_slice %114 {offsets = [72, 0], sizes = [8, 16], strides = [1, 1]} : vector<128x16xf32> to vector<8x16xf32>
    %125 = vector.extract_strided_slice %114 {offsets = [80, 0], sizes = [8, 16], strides = [1, 1]} : vector<128x16xf32> to vector<8x16xf32>
    %126 = vector.extract_strided_slice %114 {offsets = [88, 0], sizes = [8, 16], strides = [1, 1]} : vector<128x16xf32> to vector<8x16xf32>
    %127 = vector.extract_strided_slice %114 {offsets = [96, 0], sizes = [8, 16], strides = [1, 1]} : vector<128x16xf32> to vector<8x16xf32>
    %128 = vector.extract_strided_slice %114 {offsets = [104, 0], sizes = [8, 16], strides = [1, 1]} : vector<128x16xf32> to vector<8x16xf32>
    %129 = vector.extract_strided_slice %114 {offsets = [112, 0], sizes = [8, 16], strides = [1, 1]} : vector<128x16xf32> to vector<8x16xf32>
    %130 = vector.extract_strided_slice %114 {offsets = [120, 0], sizes = [8, 16], strides = [1, 1]} : vector<128x16xf32> to vector<8x16xf32>
    %131 = tpu.concatenate %115, %116, %117, %118, %119, %120, %121, %122, %123, %124, %125, %126, %127, %128, %129, %130 in 1 : vector<8x16xf32>, vector<8x16xf32>, vector<8x16xf32>, vector<8x16xf32>, vector<8x16xf32>, vector<8x16xf32>, vector<8x16xf32>, vector<8x16xf32>, vector<8x16xf32>, vector<8x16xf32>, vector<8x16xf32>, vector<8x16xf32>, vector<8x16xf32>, vector<8x16xf32>, vector<8x16xf32>, vector<8x16xf32> -> vector<8x256xf32>
    %c0_49 = arith.constant 0 : index
    %c0_50 = arith.constant 0 : index
    %132 = vector.load %arg9[%c0_49, %c0_50] : memref<256x128xf32, #tpu.memory_space<vmem>>, vector<256x128xf32>
    %cst_51 = arith.constant dense<0.000000e+00> : vector<8x128xf32>
    %133 = tpu.matmul %131, %132, %cst_51 {dimension_numbers = #tpu.dot_dimension_numbers<[1], [0], [0], [1], [0, 0, 1, 1], [], []>} : vector<8x256xf32>, vector<256x128xf32>, vector<8x128xf32> -> vector<8x128xf32>
    %c0_52 = arith.constant 0 : index
    %c0_53 = arith.constant 0 : index
    %134 = vector.load %arg10[%c0_52, %c0_53] : memref<1x128xf32, #tpu.memory_space<vmem>>, vector<1x128xf32>
    %135 = vector.broadcast %134 : vector<1x128xf32> to vector<8x128xf32>
    %136 = arith.addf %133, %135 : vector<8x128xf32>
    %cst_54 = arith.constant 0.000000e+00 : f32
    %137 = vector.broadcast %cst_54 : f32 to vector<8x128xf32>
    %138 = arith.maximumf %136, %137 : vector<8x128xf32>
    %c0_55 = arith.constant 0 : index
    %c0_56 = arith.constant 0 : index
    %139 = vector.load %arg11[%c0_55, %c0_56] : memref<128x128xf32, #tpu.memory_space<vmem>>, vector<128x128xf32>
    %cst_57 = arith.constant dense<0.000000e+00> : vector<8x128xf32>
    %140 = tpu.matmul %138, %139, %cst_57 {dimension_numbers = #tpu.dot_dimension_numbers<[1], [0], [0], [1], [0, 0, 1, 1], [], []>} : vector<8x128xf32>, vector<128x128xf32>, vector<8x128xf32> -> vector<8x128xf32>
    %c0_58 = arith.constant 0 : index
    %c0_59 = arith.constant 0 : index
    %141 = vector.load %arg12[%c0_58, %c0_59] : memref<1x128xf32, #tpu.memory_space<vmem>>, vector<1x128xf32>
    %142 = vector.broadcast %141 : vector<1x128xf32> to vector<8x128xf32>
    %143 = arith.addf %140, %142 : vector<8x128xf32>
    %cst_60 = arith.constant 0.000000e+00 : f32
    %144 = vector.broadcast %cst_60 : f32 to vector<8x128xf32>
    %145 = arith.maximumf %143, %144 : vector<8x128xf32>
    %c0_61 = arith.constant 0 : index
    %c0_62 = arith.constant 0 : index
    %146 = vector.load %arg13[%c0_61, %c0_62] : memref<128x128xf32, #tpu.memory_space<vmem>>, vector<128x128xf32>
    %cst_63 = arith.constant dense<0.000000e+00> : vector<8x128xf32>
    %147 = tpu.matmul %145, %146, %cst_63 {dimension_numbers = #tpu.dot_dimension_numbers<[1], [0], [0], [1], [0, 0, 1, 1], [], []>} : vector<8x128xf32>, vector<128x128xf32>, vector<8x128xf32> -> vector<8x128xf32>
    %c0_64 = arith.constant 0 : index
    %c0_65 = arith.constant 0 : index
    %148 = vector.load %arg14[%c0_64, %c0_65] : memref<1x128xf32, #tpu.memory_space<vmem>>, vector<1x128xf32>
    %149 = vector.broadcast %148 : vector<1x128xf32> to vector<8x128xf32>
    %150 = arith.addf %147, %149 : vector<8x128xf32>
    %c0_66 = arith.constant 0 : index
    %c0_67 = arith.constant 0 : index
    %151 = vector.load %arg15[%c0_66, %c0_67] : memref<8x128xf32, #tpu.memory_space<vmem>>, vector<8x128xf32>
    tpu.vector_store %arg15[%c0_66, %c0_67], %150 {strides = array<i32>} : memref<8x128xf32, #tpu.memory_space<vmem>>, vector<8x128xf32>,
    return
  }
  func.func @transform_0(%arg0: i32) -> (i32, i32) {
    %c0_i32 = arith.constant 0 : i32
    %c0_i32_0 = arith.constant 0 : i32
    return %arg0, %c0_i32 : i32, i32
  }
  func.func @transform_1(%arg0: i32) -> (i32, i32) {
    %c0_i32 = arith.constant 0 : i32
    %c0_i32_0 = arith.constant 0 : i32
    %c0_i32_1 = arith.constant 0 : i32
    return %c0_i32, %c0_i32_0 : i32, i32
  }
  func.func @transform_2(%arg0: i32) -> (i32, i32) {
    %c0_i32 = arith.constant 0 : i32
    %c0_i32_0 = arith.constant 0 : i32
    %c0_i32_1 = arith.constant 0 : i32
    return %c0_i32, %c0_i32_0 : i32, i32
  }
  func.func @transform_3(%arg0: i32) -> (i32, i32) {
    %c0_i32 = arith.constant 0 : i32
    %c0_i32_0 = arith.constant 0 : i32
    %c0_i32_1 = arith.constant 0 : i32
    return %c0_i32, %c0_i32_0 : i32, i32
  }
  func.func @transform_4(%arg0: i32) -> (i32, i32) {
    %c0_i32 = arith.constant 0 : i32
    %c0_i32_0 = arith.constant 0 : i32
    %c0_i32_1 = arith.constant 0 : i32
    return %c0_i32, %c0_i32_0 : i32, i32
  }
  func.func @transform_5(%arg0: i32) -> (i32, i32) {
    %c0_i32 = arith.constant 0 : i32
    %c0_i32_0 = arith.constant 0 : i32
    %c0_i32_1 = arith.constant 0 : i32
    return %c0_i32, %c0_i32_0 : i32, i32
  }
  func.func @transform_6(%arg0: i32) -> (i32, i32) {
    %c0_i32 = arith.constant 0 : i32
    %c0_i32_0 = arith.constant 0 : i32
    %c0_i32_1 = arith.constant 0 : i32
    return %c0_i32, %c0_i32_0 : i32, i32
  }
  func.func @transform_7(%arg0: i32) -> (i32, i32) {
    %c0_i32 = arith.constant 0 : i32
    %c0_i32_0 = arith.constant 0 : i32
    %c0_i32_1 = arith.constant 0 : i32
    return %c0_i32, %c0_i32_0 : i32, i32
  }
  func.func @transform_8(%arg0: i32) -> (i32, i32) {
    %c0_i32 = arith.constant 0 : i32
    %c0_i32_0 = arith.constant 0 : i32
    %c0_i32_1 = arith.constant 0 : i32
    return %c0_i32, %c0_i32_0 : i32, i32
  }
  func.func @transform_9(%arg0: i32) -> (i32, i32) {
    %c0_i32 = arith.constant 0 : i32
    %c0_i32_0 = arith.constant 0 : i32
    %c0_i32_1 = arith.constant 0 : i32
    return %c0_i32, %c0_i32_0 : i32, i32
  }
  func.func @transform_10(%arg0: i32) -> (i32, i32) {
    %c0_i32 = arith.constant 0 : i32
    %c0_i32_0 = arith.constant 0 : i32
    %c0_i32_1 = arith.constant 0 : i32
    return %c0_i32, %c0_i32_0 : i32, i32
  }
  func.func @transform_11(%arg0: i32) -> (i32, i32) {
    %c0_i32 = arith.constant 0 : i32
    %c0_i32_0 = arith.constant 0 : i32
    %c0_i32_1 = arith.constant 0 : i32
    return %c0_i32, %c0_i32_0 : i32, i32
  }
  func.func @transform_12(%arg0: i32) -> (i32, i32) {
    %c0_i32 = arith.constant 0 : i32
    %c0_i32_0 = arith.constant 0 : i32
    %c0_i32_1 = arith.constant 0 : i32
    return %c0_i32, %c0_i32_0 : i32, i32
  }
  func.func @transform_13(%arg0: i32) -> (i32, i32) {
    %c0_i32 = arith.constant 0 : i32
    %c0_i32_0 = arith.constant 0 : i32
    %c0_i32_1 = arith.constant 0 : i32
    return %c0_i32, %c0_i32_0 : i32, i32
  }
  func.func @transform_14(%arg0: i32) -> (i32, i32) {
    %c0_i32 = arith.constant 0 : i32
    %c0_i32_0 = arith.constant 0 : i32
    return %arg0, %c0_i32 : i32, i32
  }
}

</mosaic_0001>

<llo_original>
// kernel: cnn_forward.1
$region0: #{cnn_forward.1}
  #allocation0 [shape = 'u32[]', space=smem, size = 0x4, offset = 0x4, fixed_abs, tag = 'smem constant byte address 0x4 - core index']
  #allocation1 [shape = 'u32[144,128]{1,0:T(1,128)}', space=vmem, size = 0x12000, scoped, tag = 'internal scratch']
  %s0 = inlined_call_operand.vmem [shape: f32[8,784], index: 0, kind: input, shape index: {}]
  %s1 = inlined_call_operand.vmem [shape: f32[80,72], index: 1, kind: input, shape index: {}]
  %s2 = inlined_call_operand.vmem [shape: f32[80,1], index: 2, kind: input, shape index: {}]
  %s3 = inlined_call_operand.vmem [shape: f32[40,720], index: 3, kind: input, shape index: {}]
  %s4 = inlined_call_operand.vmem [shape: f32[40,1], index: 4, kind: input, shape index: {}]
  %s5 = inlined_call_operand.vmem [shape: f32[128,360], index: 5, kind: input, shape index: {}]
  %s6 = inlined_call_operand.vmem [shape: f32[128,1], index: 6, kind: input, shape index: {}]
  %s7 = inlined_call_operand.vmem [shape: f32[784,16], index: 7, kind: input, shape index: {}]
  %s8 = inlined_call_operand.vmem [shape: f32[256,128], index: 8, kind: input, shape index: {}]
  %s9 = inlined_call_operand.vmem [shape: f32[1,128], index: 9, kind: input, shape index: {}]
  %s10 = inlined_call_operand.vmem [shape: f32[128,128], index: 10, kind: input, shape index: {}]
  %s11 = inlined_call_operand.vmem [shape: f32[1,128], index: 11, kind: input, shape index: {}]
  %s12 = inlined_call_operand.vmem [shape: f32[128,128], index: 12, kind: input, shape index: {}]
  %s13 = inlined_call_operand.vmem [shape: f32[1,128], index: 13, kind: input, shape index: {}]
  %s14 = inlined_call_operand.vmem [shape: f32[8,128], index: 14, kind: output, shape index: {}]
  %s15 = sld [smem:[#allocation0]]
  $region66: #{cnn_forward.1} parent=0
    _
  %s17 = ssub.s32 1, %s15
  %s18 = scalar_select 0, %s17, %s15
  // Predicated region
  $region2: #{cnn_forward.1} parent=0 // pred_check
    _
  $region3: #{cnn_forward.1} parent=0 // pred_check_branch
    %20 = sbr.rel (0) target = $region5
  $region4: #{cnn_forward.1} parent=0 // pred_region
    _
  $region5: #{cnn_forward.1} parent=0 // pred_fallthru
    _
  // Predicated region
  $region6: #{cnn_forward.1} parent=0 // pred_check
    _
  $region7: #{cnn_forward.1} parent=0 // pred_check_branch
    %22 = sbr.rel (0) target = $region9
  $region8: #{cnn_forward.1} parent=0 // pred_region
    _
  $region9: #{cnn_forward.1} parent=0 // pred_fallthru
    _
  // Predicated region
  $region10: #{cnn_forward.1} parent=0 // pred_check
    _
  $region11: #{cnn_forward.1} parent=0 // pred_check_branch
    %24 = sbr.rel (0) target = $region13
  $region12: #{cnn_forward.1} parent=0 // pred_region
    _
  $region13: #{cnn_forward.1} parent=0 // pred_fallthru
    _
  // Predicated region
  $region14: #{cnn_forward.1} parent=0 // pred_check
    _
  $region15: #{cnn_forward.1} parent=0 // pred_check_branch
    %26 = sbr.rel (0) target = $region17
  $region16: #{cnn_forward.1} parent=0 // pred_region
    _
  $region17: #{cnn_forward.1} parent=0 // pred_fallthru
    _
  // Predicated region
  $region18: #{cnn_forward.1} parent=0 // pred_check
    _
  $region19: #{cnn_forward.1} parent=0 // pred_check_branch
    %28 = sbr.rel (0) target = $region21
  $region20: #{cnn_forward.1} parent=0 // pred_region
    _
  $region21: #{cnn_forward.1} parent=0 // pred_fallthru
    _
  // Predicated region
  $region22: #{cnn_forward.1} parent=0 // pred_check
    _
  $region23: #{cnn_forward.1} parent=0 // pred_check_branch
    %30 = sbr.rel (0) target = $region25
  $region24: #{cnn_forward.1} parent=0 // pred_region
    _
  $region25: #{cnn_forward.1} parent=0 // pred_fallthru
    _
  // Predicated region
  $region26: #{cnn_forward.1} parent=0 // pred_check
    _
  $region27: #{cnn_forward.1} parent=0 // pred_check_branch
    %32 = sbr.rel (0) target = $region29
  $region28: #{cnn_forward.1} parent=0 // pred_region
    _
  $region29: #{cnn_forward.1} parent=0 // pred_fallthru
    _
  // Predicated region
  $region30: #{cnn_forward.1} parent=0 // pred_check
    _
  $region31: #{cnn_forward.1} parent=0 // pred_check_branch
    %34 = sbr.rel (0) target = $region33
  $region32: #{cnn_forward.1} parent=0 // pred_region
    _
  $region33: #{cnn_forward.1} parent=0 // pred_fallthru
    _
  // Predicated region
  $region34: #{cnn_forward.1} parent=0 // pred_check
    _
  $region35: #{cnn_forward.1} parent=0 // pred_check_branch
    %36 = sbr.rel (0) target = $region37
  $region36: #{cnn_forward.1} parent=0 // pred_region
    _
  $region37: #{cnn_forward.1} parent=0 // pred_fallthru
    _
  // Predicated region
  $region38: #{cnn_forward.1} parent=0 // pred_check
    _
  $region39: #{cnn_forward.1} parent=0 // pred_check_branch
    %38 = sbr.rel (0) target = $region41
  $region40: #{cnn_forward.1} parent=0 // pred_region
    _
  $region41: #{cnn_forward.1} parent=0 // pred_fallthru
    _
  // Predicated region
  $region42: #{cnn_forward.1} parent=0 // pred_check
    _
  $region43: #{cnn_forward.1} parent=0 // pred_check_branch
    %40 = sbr.rel (0) target = $region45
  $region44: #{cnn_forward.1} parent=0 // pred_region
    _
  $region45: #{cnn_forward.1} parent=0 // pred_fallthru
    _
  // Predicated region
  $region46: #{cnn_forward.1} parent=0 // pred_check
    _
  $region47: #{cnn_forward.1} parent=0 // pred_check_branch
    %42 = sbr.rel (0) target = $region49
  $region48: #{cnn_forward.1} parent=0 // pred_region
    _
  $region49: #{cnn_forward.1} parent=0 // pred_fallthru
    _
  // Predicated region
  $region50: #{cnn_forward.1} parent=0 // pred_check
    _
  $region51: #{cnn_forward.1} parent=0 // pred_check_branch
    %44 = sbr.rel (0) target = $region53
  $region52: #{cnn_forward.1} parent=0 // pred_region
    _
  $region53: #{cnn_forward.1} parent=0 // pred_fallthru
    _
  // Predicated region
  $region54: #{cnn_forward.1} parent=0 // pred_check
    _
  $region55: #{cnn_forward.1} parent=0 // pred_check_branch
    %46 = sbr.rel (0) target = $region57
  $region56: #{cnn_forward.1} parent=0 // pred_region
    _
  $region57: #{cnn_forward.1} parent=0 // pred_fallthru
    _
  %v47 = vld [vmem:[%s0] sm:$0xff]
  %v48 = vld [vmem:[%s0 + $0x8] sm:$0xff]
  %v49 = vld [vmem:[%s0 + $0x10] sm:$0xff]
  %v50 = vld [vmem:[%s0 + $0x18] sm:$0xff]
  %v51 = vld [vmem:[%s0 + $0x20] sm:$0xff]
  %v52 = vld [vmem:[%s0 + $0x28] sm:$0xff]
  %v53 = vld [vmem:[%s0 + $0x30] sm:$0xff]
  %v54 = vld [vmem:[%s1] sm:$0xff]
  %v55 = vld [vmem:[%s1 + $0x8] sm:$0xff]
  %v56 = vld [vmem:[%s1 + $0x10] sm:$0xff]
  %v57 = vld [vmem:[%s1 + $0x18] sm:$0xff]
  %v58 = vld [vmem:[%s1 + $0x20] sm:$0xff]
  %v59 = vld [vmem:[%s1 + $0x28] sm:$0xff]
  %v60 = vld [vmem:[%s1 + $0x30] sm:$0xff]
  %v61 = vld [vmem:[%s1 + $0x38] sm:$0xff]
  %v62 = vld [vmem:[%s1 + $0x40] sm:$0xff]
  %v63 = vld [vmem:[%s1 + $0x48] sm:$0xff]
  %v64 = vld [vmem:[%s2] sm:$0xff]
  %v65 = vld [vmem:[%s2 + $0x8] sm:$0xff]
  %v66 = vld [vmem:[%s2 + $0x10] sm:$0xff]
  %v67 = vld [vmem:[%s2 + $0x18] sm:$0xff]
  %v68 = vld [vmem:[%s2 + $0x20] sm:$0xff]
  %v69 = vld [vmem:[%s2 + $0x28] sm:$0xff]
  %v70 = vld [vmem:[%s2 + $0x30] sm:$0xff]
  %v71 = vld [vmem:[%s2 + $0x38] sm:$0xff]
  %v72 = vld [vmem:[%s2 + $0x40] sm:$0xff]
  %v73 = vld [vmem:[%s2 + $0x48] sm:$0xff]
  %81 = vrot.lane.b32.xlu0 %v47, 127
  %v82 = vpop.permute.xlu0 %81
  %83 = vrot.lane.b32.xlu0 %v48, 127
  %v84 = vpop.permute.xlu0 %83
  %85 = vrot.lane.b32.xlu0 %v49, 127
  %v86 = vpop.permute.xlu0 %85
  %87 = vrot.lane.b32.xlu0 %v50, 127
  %v88 = vpop.permute.xlu0 %87
  %89 = vrot.lane.b32.xlu0 %v51, 127
  %v90 = vpop.permute.xlu0 %89
  %91 = vrot.lane.b32.xlu0 %v52, 127
  %v92 = vpop.permute.xlu0 %91
  %93 = vrot.lane.b32.xlu0 %v53, 127
  %v94 = vpop.permute.xlu0 %93
  %vm95 = vcmask 1039360
  %v96 = vsel %vm95, %v82, %v84
  %v97 = vsel %vm95, %v84, %v86
  %v98 = vsel %vm95, %v86, %v88
  %v99 = vsel %vm95, %v88, %v90
  %v100 = vsel %vm95, %v90, %v92
  %v101 = vsel %vm95, %v92, %v94
  %vm109 = vcmask 121856
  %v110 = vsel %vm109, %v94, 0.0
  %111 = vrot.lane.b32.xlu0 %v47, 126
  %v112 = vpop.permute.xlu0 %111
  %113 = vrot.lane.b32.xlu0 %v48, 126
  %v114 = vpop.permute.xlu0 %113
  %115 = vrot.lane.b32.xlu0 %v49, 126
  %v116 = vpop.permute.xlu0 %115
  %117 = vrot.lane.b32.xlu0 %v50, 126
  %v118 = vpop.permute.xlu0 %117
  %119 = vrot.lane.b32.xlu0 %v51, 126
  %v120 = vpop.permute.xlu0 %119
  %121 = vrot.lane.b32.xlu0 %v52, 126
  %v122 = vpop.permute.xlu0 %121
  %123 = vrot.lane.b32.xlu0 %v53, 126
  %v124 = vpop.permute.xlu0 %123
  %vm125 = vcmask 1031168
  %v126 = vsel %vm125, %v112, %v114
  %v127 = vsel %vm125, %v114, %v116
  %v128 = vsel %vm125, %v116, %v118
  %v129 = vsel %vm125, %v118, %v120
  %v130 = vsel %vm125, %v120, %v122
  %v131 = vsel %vm125, %v122, %v124
  %vm139 = vcmask 113664
  %v140 = vsel %vm139, %v124, 0.0
  %141 = vrot.lane.b32.xlu0 %v47, 100
  %v142 = vpop.permute.xlu0 %141
  %143 = vrot.lane.b32.xlu0 %v48, 100
  %v144 = vpop.permute.xlu0 %143
  %145 = vrot.lane.b32.xlu0 %v49, 100
  %v146 = vpop.permute.xlu0 %145
  %147 = vrot.lane.b32.xlu0 %v50, 100
  %v148 = vpop.permute.xlu0 %147
  %149 = vrot.lane.b32.xlu0 %v51, 100
  %v150 = vpop.permute.xlu0 %149
  %151 = vrot.lane.b32.xlu0 %v52, 100
  %v152 = vpop.permute.xlu0 %151
  %153 = vrot.lane.b32.xlu0 %v53, 100
  %v154 = vpop.permute.xlu0 %153
  %vm155 = vcmask 818176
  %v156 = vsel %vm155, %v142, %v144
  %v157 = vsel %vm155, %v144, %v146
  %v158 = vsel %vm155, %v146, %v148
  %v159 = vsel %vm155, %v148, %v150
  %v160 = vsel %vm155, %v150, %v152
  %v161 = vsel %vm155, %v152, %v154
  %vm168 = vcmask 949248
  %v169 = vsel %vm168, %v161, 0.0
  %170 = vrot.lane.b32.xlu0 %v47, 99
  %v171 = vpop.permute.xlu0 %170
  %172 = vrot.lane.b32.xlu0 %v48, 99
  %v173 = vpop.permute.xlu0 %172
  %174 = vrot.lane.b32.xlu0 %v49, 99
  %v175 = vpop.permute.xlu0 %174
  %176 = vrot.lane.b32.xlu0 %v50, 99
  %v177 = vpop.permute.xlu0 %176
  %178 = vrot.lane.b32.xlu0 %v51, 99
  %v179 = vpop.permute.xlu0 %178
  %180 = vrot.lane.b32.xlu0 %v52, 99
  %v181 = vpop.permute.xlu0 %180
  %182 = vrot.lane.b32.xlu0 %v53, 99
  %v183 = vpop.permute.xlu0 %182
  %vm184 = vcmask 809984
  %v185 = vsel %vm184, %v171, %v173
  %v186 = vsel %vm184, %v173, %v175
  %v187 = vsel %vm184, %v175, %v177
  %v188 = vsel %vm184, %v177, %v179
  %v189 = vsel %vm184, %v179, %v181
  %v190 = vsel %vm184, %v181, %v183
  %vm197 = vcmask 941056
  %v198 = vsel %vm197, %v190, 0.0
  %199 = vrot.lane.b32.xlu0 %v47, 98
  %v200 = vpop.permute.xlu0 %199
  %201 = vrot.lane.b32.xlu0 %v48, 98
  %v202 = vpop.permute.xlu0 %201
  %203 = vrot.lane.b32.xlu0 %v49, 98
  %v204 = vpop.permute.xlu0 %203
  %205 = vrot.lane.b32.xlu0 %v50, 98
  %v206 = vpop.permute.xlu0 %205
  %207 = vrot.lane.b32.xlu0 %v51, 98
  %v208 = vpop.permute.xlu0 %207
  %209 = vrot.lane.b32.xlu0 %v52, 98
  %v210 = vpop.permute.xlu0 %209
  %211 = vrot.lane.b32.xlu0 %v53, 98
  %v212 = vpop.permute.xlu0 %211
  %vm213 = vcmask 801792
  %v214 = vsel %vm213, %v200, %v202
  %v215 = vsel %vm213, %v202, %v204
  %v216 = vsel %vm213, %v204, %v206
  %v217 = vsel %vm213, %v206, %v208
  %v218 = vsel %vm213, %v208, %v210
  %v219 = vsel %vm213, %v210, %v212
  %vm226 = vcmask 932864
  %v227 = vsel %vm226, %v219, 0.0
  %228 = vrot.lane.b32.xlu0 %v47, 72
  %v229 = vpop.permute.xlu0 %228
  %230 = vrot.lane.b32.xlu0 %v48, 72
  %v231 = vpop.permute.xlu0 %230
  %232 = vrot.lane.b32.xlu0 %v49, 72
  %v233 = vpop.permute.xlu0 %232
  %234 = vrot.lane.b32.xlu0 %v50, 72
  %v235 = vpop.permute.xlu0 %234
  %236 = vrot.lane.b32.xlu0 %v51, 72
  %v237 = vpop.permute.xlu0 %236
  %238 = vrot.lane.b32.xlu0 %v52, 72
  %v239 = vpop.permute.xlu0 %238
  %240 = vrot.lane.b32.xlu0 %v53, 72
  %v241 = vpop.permute.xlu0 %240
  %vm242 = vcmask 588800
  %v243 = vsel %vm242, %v229, %v231
  %v244 = vsel %vm242, %v231, %v233
  %v245 = vsel %vm242, %v233, %v235
  %v246 = vsel %vm242, %v235, %v237
  %v247 = vsel %vm242, %v237, %v239
  %v248 = vsel %vm242, %v239, %v241
  %vm255 = vcmask 719872
  %v256 = vsel %vm255, %v248, 0.0
  %257 = vrot.lane.b32.xlu0 %v47, 71
  %v258 = vpop.permute.xlu0 %257
  %259 = vrot.lane.b32.xlu0 %v48, 71
  %v260 = vpop.permute.xlu0 %259
  %261 = vrot.lane.b32.xlu0 %v49, 71
  %v262 = vpop.permute.xlu0 %261
  %263 = vrot.lane.b32.xlu0 %v50, 71
  %v264 = vpop.permute.xlu0 %263
  %265 = vrot.lane.b32.xlu0 %v51, 71
  %v266 = vpop.permute.xlu0 %265
  %267 = vrot.lane.b32.xlu0 %v52, 71
  %v268 = vpop.permute.xlu0 %267
  %269 = vrot.lane.b32.xlu0 %v53, 71
  %v270 = vpop.permute.xlu0 %269
  %vm271 = vcmask 580608
  %v272 = vsel %vm271, %v258, %v260
  %v273 = vsel %vm271, %v260, %v262
  %v274 = vsel %vm271, %v262, %v264
  %v275 = vsel %vm271, %v264, %v266
  %v276 = vsel %vm271, %v266, %v268
  %v277 = vsel %vm271, %v268, %v270
  %vm284 = vcmask 711680
  %v285 = vsel %vm284, %v277, 0.0
  %286 = vrot.lane.b32.xlu0 %v47, 70
  %v287 = vpop.permute.xlu0 %286
  %288 = vrot.lane.b32.xlu0 %v48, 70
  %v289 = vpop.permute.xlu0 %288
  %290 = vrot.lane.b32.xlu0 %v49, 70
  %v291 = vpop.permute.xlu0 %290
  %292 = vrot.lane.b32.xlu0 %v50, 70
  %v293 = vpop.permute.xlu0 %292
  %294 = vrot.lane.b32.xlu0 %v51, 70
  %v295 = vpop.permute.xlu0 %294
  %296 = vrot.lane.b32.xlu0 %v52, 70
  %v297 = vpop.permute.xlu0 %296
  %298 = vrot.lane.b32.xlu0 %v53, 70
  %v299 = vpop.permute.xlu0 %298
  %vm300 = vcmask 572416
  %v301 = vsel %vm300, %v287, %v289
  %v302 = vsel %vm300, %v289, %v291
  %v303 = vsel %vm300, %v291, %v293
  %v304 = vsel %vm300, %v293, %v295
  %v305 = vsel %vm300, %v295, %v297
  %v306 = vsel %vm300, %v297, %v299
  %vm313 = vcmask 703488
  %v314 = vsel %vm313, %v306, 0.0
  %316 = vset.pattern.permute.xlu0 0
  %317 = vperm.xlu0 %316, %v64
  %v318 = vpop.permute.xlu0 %317
  %321 = vset.pattern.permute.xlu0 0
  %322 = vperm.xlu0 %321, %v65
  %v323 = vpop.permute.xlu0 %322
  %326 = vset.pattern.permute.xlu0 0
  %327 = vperm.xlu0 %326, %v66
  %v328 = vpop.permute.xlu0 %327
  %331 = vset.pattern.permute.xlu0 0
  %332 = vperm.xlu0 %331, %v67
  %v333 = vpop.permute.xlu0 %332
  %336 = vset.pattern.permute.xlu0 0
  %337 = vperm.xlu0 %336, %v68
  %v338 = vpop.permute.xlu0 %337
  %341 = vset.pattern.permute.xlu0 0
  %342 = vperm.xlu0 %341, %v69
  %v343 = vpop.permute.xlu0 %342
  %346 = vset.pattern.permute.xlu0 0
  %347 = vperm.xlu0 %346, %v70
  %v348 = vpop.permute.xlu0 %347
  %351 = vset.pattern.permute.xlu0 0
  %352 = vperm.xlu0 %351, %v71
  %v353 = vpop.permute.xlu0 %352
  %356 = vset.pattern.permute.xlu0 0
  %357 = vperm.xlu0 %356, %v72
  %v358 = vpop.permute.xlu0 %357
  %361 = vset.pattern.permute.xlu0 0
  %362 = vperm.xlu0 %361, %v73
  %v363 = vpop.permute.xlu0 %362
  %v366 = vsel %vm242, %v54, 0
  %v369 = vsel %vm242, %v55, 0
  %v372 = vsel %vm242, %v56, 0
  %v375 = vsel %vm242, %v57, 0
  %v378 = vsel %vm242, %v58, 0
  %v381 = vsel %vm242, %v59, 0
  %v384 = vsel %vm242, %v60, 0
  %v387 = vsel %vm242, %v61, 0
  %v390 = vsel %vm242, %v62, 0
  %v393 = vsel %vm242, %v63, 0
  %395 = vmatprep.subr.mxu0 %v48
  %396 = vmatpush1.msra.mxu0 %v47
  %397 = vmatprep.subr.mxu0 %v97
  %398 = vmatpush1.msra.mxu0 %v96
  %399 = vmatprep.subr.mxu0 %v127
  %400 = vmatpush1.msra.mxu0 %v126
  %401 = vmatprep.subr.mxu0 %v157
  %402 = vmatpush1.msra.mxu0 %v156
  %403 = vmatprep.subr.mxu0 %v186
  %404 = vmatpush1.msra.mxu0 %v185
  %405 = vmatprep.subr.mxu0 %v215
  %406 = vmatpush1.msra.mxu0 %v214
  %407 = vmatprep.subr.mxu0 %v244
  %408 = vmatpush1.msra.mxu0 %v243
  %409 = vmatprep.subr.mxu0 %v273
  %410 = vmatpush1.msra.mxu0 %v272
  %411 = vmatprep.subr.mxu0 %v302
  %412 = vmatpush1.msra.mxu0 %v301
  %413 = vmatprep.subr.mxu0 0.0
  %414 = vmatpush1.msra.mxu0 0.0
  %415 = vmatprep.subr.mxu0 0.0
  %416 = vmatpush1.msra.mxu0 0.0
  %417 = vmatprep.subr.mxu0 0.0
  %418 = vmatpush1.msra.mxu0 0.0
  %419 = vmatprep.subr.mxu0 0.0
  %420 = vmatpush1.msra.mxu0 0.0
  %421 = vmatprep.subr.mxu0 0.0
  %422 = vmatpush1.msra.mxu0 0.0
  %423 = vmatprep.subr.mxu0 0.0
  %424 = vmatpush1.msra.mxu0 0.0
  %425 = vmatprep.subr.mxu0 0.0
  %426 = vmatpush1.msra.mxu0 0.0
  %427 = vmatprep.subr.mxu0 0.0
  %428 = vmatpush1.msra.mxu0 0.0
  %429 = vmatprep.subr.mxu0 0.0
  %430 = vmatpush1.msra.mxu0 0.0
  %431 = vmatprep.subr.mxu0 0.0
  %432 = vmatpush1.msra.mxu0 0.0
  %433 = vmatprep.subr.mxu0 0.0
  %434 = vmatpush1.msra.mxu0 0.0
  %435 = vmatprep.subr.mxu0 0.0
  %436 = vmatpush1.msra.mxu0 0.0
  %437 = vmatprep.subr.mxu0 0.0
  %438 = vmatpush1.msra.mxu0 0.0
  %439 = vmatprep.subr.mxu0 0.0
  %440 = vmatpush1.msra.mxu0 0.0
  %441 = vmatprep.subr.mxu0 0.0
  %442 = vmatpush1.msra.mxu0 0.0
  %443 = vmatprep.subr.mxu0 0.0
  %444 = vmatpush1.msra.mxu0 0.0
  %445 = vmatprep.subr.mxu0 0.0
  %446 = vmatpush1.msra.mxu0 0.0
  %447 = vmatprep.subr.mxu0 0.0
  %448 = vmatpush1.msra.mxu0 0.0
  %449 = vmatprep.subr.mxu0 0.0
  %450 = vmatpush1.msra.mxu0 0.0
  %451 = vmatprep.subr.mxu0 0.0
  %452 = vmatpush1.msra.mxu0 0.0
  %453 = vmatprep.subr.mxu0 0.0
  %454 = vmatpush1.msra.mxu0 0.0
  %455 = vmatprep.subr.mxu0 0.0
  %456 = vmatpush1.msra.mxu0 0.0
  %457 = vmatprep.subr.mxu0 0.0
  %458 = vmatpush1.msra.mxu0 0.0
  %459 = vmatprep.mubr.f32.mxu0 0.0
  %460 = vmatmul.mubr.f32.gmra.mrb[0].mxu0 %v366
  %v461 = vpop.f32.mrb[0].mxu0
  %v462 = vadd.f32 %v318, %v461
  %v463 = vpop.f32.mrb[0].mxu0
  %v464 = vadd.f32 %v318, %v463
  %465 = vmatprep.mubr.f32.mxu0 0.0
  %466 = vmatmul.mubr.f32.gmra.mrb[0].mxu0 %v369
  %v467 = vpop.f32.mrb[0].mxu0
  %v468 = vadd.f32 %v323, %v467
  %v469 = vpop.f32.mrb[0].mxu0
  %v470 = vadd.f32 %v323, %v469
  %471 = vmatprep.mubr.f32.mxu0 0.0
  %472 = vmatmul.mubr.f32.gmra.mrb[0].mxu0 %v372
  %v473 = vpop.f32.mrb[0].mxu0
  %v474 = vadd.f32 %v328, %v473
  %v475 = vpop.f32.mrb[0].mxu0
  %v476 = vadd.f32 %v328, %v475
  %477 = vmatprep.mubr.f32.mxu0 0.0
  %478 = vmatmul.mubr.f32.gmra.mrb[0].mxu0 %v375
  %v479 = vpop.f32.mrb[0].mxu0
  %v480 = vadd.f32 %v333, %v479
  %v481 = vpop.f32.mrb[0].mxu0
  %v482 = vadd.f32 %v333, %v481
  %483 = vmatprep.mubr.f32.mxu0 0.0
  %484 = vmatmul.mubr.f32.gmra.mrb[0].mxu0 %v378
  %v485 = vpop.f32.mrb[0].mxu0
  %v486 = vadd.f32 %v338, %v485
  %v487 = vpop.f32.mrb[0].mxu0
  %v488 = vadd.f32 %v338, %v487
  %489 = vmatprep.mubr.f32.mxu0 0.0
  %490 = vmatmul.mubr.f32.gmra.mrb[0].mxu0 %v381
  %v491 = vpop.f32.mrb[0].mxu0
  %v492 = vadd.f32 %v343, %v491
  %v493 = vpop.f32.mrb[0].mxu0
  %v494 = vadd.f32 %v343, %v493
  %495 = vmatprep.mubr.f32.mxu0 0.0
  %496 = vmatmul.mubr.f32.gmra.mrb[0].mxu0 %v384
  %v497 = vpop.f32.mrb[0].mxu0
  %v498 = vadd.f32 %v348, %v497
  %v499 = vpop.f32.mrb[0].mxu0
  %v500 = vadd.f32 %v348, %v499
  %501 = vmatprep.mubr.f32.mxu0 0.0
  %502 = vmatmul.mubr.f32.gmra.mrb[0].mxu0 %v387
  %v503 = vpop.f32.mrb[0].mxu0
  %v504 = vadd.f32 %v353, %v503
  %v505 = vpop.f32.mrb[0].mxu0
  %v506 = vadd.f32 %v353, %v505
  %507 = vmatprep.mubr.f32.mxu0 0.0
  %508 = vmatmul.mubr.f32.gmra.mrb[0].mxu0 %v390
  %v509 = vpop.f32.mrb[0].mxu0
  %v510 = vadd.f32 %v358, %v509
  %v511 = vpop.f32.mrb[0].mxu0
  %v512 = vadd.f32 %v358, %v511
  %513 = vmatprep.mubr.f32.mxu0 0.0
  %514 = vmatmul.mubr.f32.gmra.mrb[0].mxu0 %v393
  %v515 = vpop.f32.mrb[0].mxu0
  %v516 = vadd.f32 %v363, %v515
  %v517 = vpop.f32.mrb[0].mxu0
  %v518 = vadd.f32 %v363, %v517
  %519 = vdwg.mxu0
  %520 = vmatprep.subr.mxu0 %v50
  %521 = vmatpush1.msra.mxu0 %v49
  %522 = vmatprep.subr.mxu0 %v99
  %523 = vmatpush1.msra.mxu0 %v98
  %524 = vmatprep.subr.mxu0 %v129
  %525 = vmatpush1.msra.mxu0 %v128
  %526 = vmatprep.subr.mxu0 %v159
  %527 = vmatpush1.msra.mxu0 %v158
  %528 = vmatprep.subr.mxu0 %v188
  %529 = vmatpush1.msra.mxu0 %v187
  %530 = vmatprep.subr.mxu0 %v217
  %531 = vmatpush1.msra.mxu0 %v216
  %532 = vmatprep.subr.mxu0 %v246
  %533 = vmatpush1.msra.mxu0 %v245
  %534 = vmatprep.subr.mxu0 %v275
  %535 = vmatpush1.msra.mxu0 %v274
  %536 = vmatprep.subr.mxu0 %v304
  %537 = vmatpush1.msra.mxu0 %v303
  %538 = vmatprep.subr.mxu0 0.0
  %539 = vmatpush1.msra.mxu0 0.0
  %540 = vmatprep.subr.mxu0 0.0
  %541 = vmatpush1.msra.mxu0 0.0
  %542 = vmatprep.subr.mxu0 0.0
  %543 = vmatpush1.msra.mxu0 0.0
  %544 = vmatprep.subr.mxu0 0.0
  %545 = vmatpush1.msra.mxu0 0.0
  %546 = vmatprep.subr.mxu0 0.0
  %547 = vmatpush1.msra.mxu0 0.0
  %548 = vmatprep.subr.mxu0 0.0
  %549 = vmatpush1.msra.mxu0 0.0
  %550 = vmatprep.subr.mxu0 0.0
  %551 = vmatpush1.msra.mxu0 0.0
  %552 = vmatprep.subr.mxu0 0.0
  %553 = vmatpush1.msra.mxu0 0.0
  %554 = vmatprep.subr.mxu0 0.0
  %555 = vmatpush1.msra.mxu0 0.0
  %556 = vmatprep.subr.mxu0 0.0
  %557 = vmatpush1.msra.mxu0 0.0
  %558 = vmatprep.subr.mxu0 0.0
  %559 = vmatpush1.msra.mxu0 0.0
  %560 = vmatprep.subr.mxu0 0.0
  %561 = vmatpush1.msra.mxu0 0.0
  %562 = vmatprep.subr.mxu0 0.0
  %563 = vmatpush1.msra.mxu0 0.0
  %564 = vmatprep.subr.mxu0 0.0
  %565 = vmatpush1.msra.mxu0 0.0
  %566 = vmatprep.subr.mxu0 0.0
  %567 = vmatpush1.msra.mxu0 0.0
  %568 = vmatprep.subr.mxu0 0.0
  %569 = vmatpush1.msra.mxu0 0.0
  %570 = vmatprep.subr.mxu0 0.0
  %571 = vmatpush1.msra.mxu0 0.0
  %572 = vmatprep.subr.mxu0 0.0
  %573 = vmatpush1.msra.mxu0 0.0
  %574 = vmatprep.subr.mxu0 0.0
  %575 = vmatpush1.msra.mxu0 0.0
  %576 = vmatprep.subr.mxu0 0.0
  %577 = vmatpush1.msra.mxu0 0.0
  %578 = vmatprep.subr.mxu0 0.0
  %579 = vmatpush1.msra.mxu0 0.0
  %580 = vmatprep.subr.mxu0 0.0
  %581 = vmatpush1.msra.mxu0 0.0
  %582 = vmatprep.subr.mxu0 0.0
  %583 = vmatpush1.msra.mxu0 0.0
  %584 = vmatprep.mubr.f32.mxu0 0.0
  %585 = vmatmul.mubr.f32.gmra.mrb[0].mxu0 %v366
  %v586 = vpop.f32.mrb[0].mxu0
  %v587 = vadd.f32 %v318, %v586
  %v588 = vpop.f32.mrb[0].mxu0
  %v589 = vadd.f32 %v318, %v588
  %590 = vmatprep.mubr.f32.mxu0 0.0
  %591 = vmatmul.mubr.f32.gmra.mrb[0].mxu0 %v369
  %v592 = vpop.f32.mrb[0].mxu0
  %v593 = vadd.f32 %v323, %v592
  %v594 = vpop.f32.mrb[0].mxu0
  %v595 = vadd.f32 %v323, %v594
  %596 = vmatprep.mubr.f32.mxu0 0.0
  %597 = vmatmul.mubr.f32.gmra.mrb[0].mxu0 %v372
  %v598 = vpop.f32.mrb[0].mxu0
  %v599 = vadd.f32 %v328, %v598
  %v600 = vpop.f32.mrb[0].mxu0
  %v601 = vadd.f32 %v328, %v600
  %602 = vmatprep.mubr.f32.mxu0 0.0
  %603 = vmatmul.mubr.f32.gmra.mrb[0].mxu0 %v375
  %v604 = vpop.f32.mrb[0].mxu0
  %v605 = vadd.f32 %v333, %v604
  %v606 = vpop.f32.mrb[0].mxu0
  %v607 = vadd.f32 %v333, %v606
  %608 = vmatprep.mubr.f32.mxu0 0.0
  %609 = vmatmul.mubr.f32.gmra.mrb[0].mxu0 %v378
  %v610 = vpop.f32.mrb[0].mxu0
  %v611 = vadd.f32 %v338, %v610
  %v612 = vpop.f32.mrb[0].mxu0
  %v613 = vadd.f32 %v338, %v612
  %614 = vmatprep.mubr.f32.mxu0 0.0
  %615 = vmatmul.mubr.f32.gmra.mrb[0].mxu0 %v381
  %v616 = vpop.f32.mrb[0].mxu0
  %v617 = vadd.f32 %v343, %v616
  %v618 = vpop.f32.mrb[0].mxu0
  %v619 = vadd.f32 %v343, %v618
  %620 = vmatprep.mubr.f32.mxu0 0.0
  %621 = vmatmul.mubr.f32.gmra.mrb[0].mxu0 %v384
  %v622 = vpop.f32.mrb[0].mxu0
  %v623 = vadd.f32 %v348, %v622
  %v624 = vpop.f32.mrb[0].mxu0
  %v625 = vadd.f32 %v348, %v624
  %626 = vmatprep.mubr.f32.mxu0 0.0
  %627 = vmatmul.mubr.f32.gmra.mrb[0].mxu0 %v387
  %v628 = vpop.f32.mrb[0].mxu0
  %v629 = vadd.f32 %v353, %v628
  %v630 = vpop.f32.mrb[0].mxu0
  %v631 = vadd.f32 %v353, %v630
  %632 = vmatprep.mubr.f32.mxu0 0.0
  %633 = vmatmul.mubr.f32.gmra.mrb[0].mxu0 %v390
  %v634 = vpop.f32.mrb[0].mxu0
  %v635 = vadd.f32 %v358, %v634
  %v636 = vpop.f32.mrb[0].mxu0
  %v637 = vadd.f32 %v358, %v636
  %638 = vmatprep.mubr.f32.mxu0 0.0
  %639 = vmatmul.mubr.f32.gmra.mrb[0].mxu0 %v393
  %v640 = vpop.f32.mrb[0].mxu0
  %v641 = vadd.f32 %v363, %v640
  %v642 = vpop.f32.mrb[0].mxu0
  %v643 = vadd.f32 %v363, %v642
  %644 = vdwg.mxu0
  %645 = vmatprep.subr.mxu0 %v52
  %646 = vmatpush1.msra.mxu0 %v51
  %647 = vmatprep.subr.mxu0 %v101
  %648 = vmatpush1.msra.mxu0 %v100
  %649 = vmatprep.subr.mxu0 %v131
  %650 = vmatpush1.msra.mxu0 %v130
  %651 = vmatprep.subr.mxu0 %v169
  %652 = vmatpush1.msra.mxu0 %v160
  %653 = vmatprep.subr.mxu0 %v198
  %654 = vmatpush1.msra.mxu0 %v189
  %655 = vmatprep.subr.mxu0 %v227
  %656 = vmatpush1.msra.mxu0 %v218
  %657 = vmatprep.subr.mxu0 %v256
  %658 = vmatpush1.msra.mxu0 %v247
  %659 = vmatprep.subr.mxu0 %v285
  %660 = vmatpush1.msra.mxu0 %v276
  %661 = vmatprep.subr.mxu0 %v314
  %662 = vmatpush1.msra.mxu0 %v305
  %663 = vmatprep.subr.mxu0 0.0
  %664 = vmatpush1.msra.mxu0 0.0
  %665 = vmatprep.subr.mxu0 0.0
  %666 = vmatpush1.msra.mxu0 0.0
  %667 = vmatprep.subr.mxu0 0.0
  %668 = vmatpush1.msra.mxu0 0.0
  %669 = vmatprep.subr.mxu0 0.0
  %670 = vmatpush1.msra.mxu0 0.0
  %671 = vmatprep.subr.mxu0 0.0
  %672 = vmatpush1.msra.mxu0 0.0
  %673 = vmatprep.subr.mxu0 0.0
  %674 = vmatpush1.msra.mxu0 0.0
  %675 = vmatprep.subr.mxu0 0.0
  %676 = vmatpush1.msra.mxu0 0.0
  %677 = vmatprep.subr.mxu0 0.0
  %678 = vmatpush1.msra.mxu0 0.0
  %679 = vmatprep.subr.mxu0 0.0
  %680 = vmatpush1.msra.mxu0 0.0
  %681 = vmatprep.subr.mxu0 0.0
  %682 = vmatpush1.msra.mxu0 0.0
  %683 = vmatprep.subr.mxu0 0.0
  %684 = vmatpush1.msra.mxu0 0.0
  %685 = vmatprep.subr.mxu0 0.0
  %686 = vmatpush1.msra.mxu0 0.0
  %687 = vmatprep.subr.mxu0 0.0
  %688 = vmatpush1.msra.mxu0 0.0
  %689 = vmatprep.subr.mxu0 0.0
  %690 = vmatpush1.msra.mxu0 0.0
  %691 = vmatprep.subr.mxu0 0.0
  %692 = vmatpush1.msra.mxu0 0.0
  %693 = vmatprep.subr.mxu0 0.0
  %694 = vmatpush1.msra.mxu0 0.0
  %695 = vmatprep.subr.mxu0 0.0
  %696 = vmatpush1.msra.mxu0 0.0
  %697 = vmatprep.subr.mxu0 0.0
  %698 = vmatpush1.msra.mxu0 0.0
  %699 = vmatprep.subr.mxu0 0.0
  %700 = vmatpush1.msra.mxu0 0.0
  %701 = vmatprep.subr.mxu0 0.0
  %702 = vmatpush1.msra.mxu0 0.0
  %703 = vmatprep.subr.mxu0 0.0
  %704 = vmatpush1.msra.mxu0 0.0
  %705 = vmatprep.subr.mxu0 0.0
  %706 = vmatpush1.msra.mxu0 0.0
  %707 = vmatprep.subr.mxu0 0.0
  %708 = vmatpush1.msra.mxu0 0.0
  %709 = vmatprep.mubr.f32.mxu0 0.0
  %710 = vmatmul.mubr.f32.gmra.mrb[0].mxu0 %v366
  %v711 = vpop.f32.mrb[0].mxu0
  %v712 = vadd.f32 %v318, %v711
  %v713 = vpop.f32.mrb[0].mxu0
  %v714 = vadd.f32 %v318, %v713
  %715 = vmatprep.mubr.f32.mxu0 0.0
  %716 = vmatmul.mubr.f32.gmra.mrb[0].mxu0 %v369
  %v717 = vpop.f32.mrb[0].mxu0
  %v718 = vadd.f32 %v323, %v717
  %v719 = vpop.f32.mrb[0].mxu0
  %v720 = vadd.f32 %v323, %v719
  %721 = vmatprep.mubr.f32.mxu0 0.0
  %722 = vmatmul.mubr.f32.gmra.mrb[0].mxu0 %v372
  %v723 = vpop.f32.mrb[0].mxu0
  %v724 = vadd.f32 %v328, %v723
  %v725 = vpop.f32.mrb[0].mxu0
  %v726 = vadd.f32 %v328, %v725
  %727 = vmatprep.mubr.f32.mxu0 0.0
  %728 = vmatmul.mubr.f32.gmra.mrb[0].mxu0 %v375
  %v729 = vpop.f32.mrb[0].mxu0
  %v730 = vadd.f32 %v333, %v729
  %v731 = vpop.f32.mrb[0].mxu0
  %v732 = vadd.f32 %v333, %v731
  %733 = vmatprep.mubr.f32.mxu0 0.0
  %734 = vmatmul.mubr.f32.gmra.mrb[0].mxu0 %v378
  %v735 = vpop.f32.mrb[0].mxu0
  %v736 = vadd.f32 %v338, %v735
  %v737 = vpop.f32.mrb[0].mxu0
  %v738 = vadd.f32 %v338, %v737
  %739 = vmatprep.mubr.f32.mxu0 0.0
  %740 = vmatmul.mubr.f32.gmra.mrb[0].mxu0 %v381
  %v741 = vpop.f32.mrb[0].mxu0
  %v742 = vadd.f32 %v343, %v741
  %v743 = vpop.f32.mrb[0].mxu0
  %v744 = vadd.f32 %v343, %v743
  %745 = vmatprep.mubr.f32.mxu0 0.0
  %746 = vmatmul.mubr.f32.gmra.mrb[0].mxu0 %v384
  %v747 = vpop.f32.mrb[0].mxu0
  %v748 = vadd.f32 %v348, %v747
  %v749 = vpop.f32.mrb[0].mxu0
  %v750 = vadd.f32 %v348, %v749
  %751 = vmatprep.mubr.f32.mxu0 0.0
  %752 = vmatmul.mubr.f32.gmra.mrb[0].mxu0 %v387
  %v753 = vpop.f32.mrb[0].mxu0
  %v754 = vadd.f32 %v353, %v753
  %v755 = vpop.f32.mrb[0].mxu0
  %v756 = vadd.f32 %v353, %v755
  %757 = vmatprep.mubr.f32.mxu0 0.0
  %758 = vmatmul.mubr.f32.gmra.mrb[0].mxu0 %v390
  %v759 = vpop.f32.mrb[0].mxu0
  %v760 = vadd.f32 %v358, %v759
  %v761 = vpop.f32.mrb[0].mxu0
  %v762 = vadd.f32 %v358, %v761
  %763 = vmatprep.mubr.f32.mxu0 0.0
  %764 = vmatmul.mubr.f32.gmra.mrb[0].mxu0 %v393
  %v765 = vpop.f32.mrb[0].mxu0
  %v766 = vadd.f32 %v363, %v765
  %v767 = vpop.f32.mrb[0].mxu0
  %v768 = vadd.f32 %v363, %v767
  %769 = vdwg.mxu0
  %770 = vmatprep.subr.mxu0 0.0
  %771 = vmatpush1.msra.mxu0 %v53
  %772 = vmatprep.subr.mxu0 0.0
  %773 = vmatpush1.msra.mxu0 %v110
  %774 = vmatprep.subr.mxu0 0.0
  %775 = vmatpush1.msra.mxu0 %v140
  %776 = vmatprep.subr.mxu0 0.0
  %777 = vmatpush1.msra.mxu0 0.0
  %778 = vmatprep.subr.mxu0 0.0
  %779 = vmatpush1.msra.mxu0 0.0
  %780 = vmatprep.subr.mxu0 0.0
  %781 = vmatpush1.msra.mxu0 0.0
  %782 = vmatprep.subr.mxu0 0.0
  %783 = vmatpush1.msra.mxu0 0.0
  %784 = vmatprep.subr.mxu0 0.0
  %785 = vmatpush1.msra.mxu0 0.0
  %786 = vmatprep.subr.mxu0 0.0
  %787 = vmatpush1.msra.mxu0 0.0
  %788 = vmatprep.subr.mxu0 0.0
  %789 = vmatpush1.msra.mxu0 0.0
  %790 = vmatprep.subr.mxu0 0.0
  %791 = vmatpush1.msra.mxu0 0.0
  %792 = vmatprep.subr.mxu0 0.0
  %793 = vmatpush1.msra.mxu0 0.0
  %794 = vmatprep.subr.mxu0 0.0
  %795 = vmatpush1.msra.mxu0 0.0
  %796 = vmatprep.subr.mxu0 0.0
  %797 = vmatpush1.msra.mxu0 0.0
  %798 = vmatprep.subr.mxu0 0.0
  %799 = vmatpush1.msra.mxu0 0.0
  %800 = vmatprep.subr.mxu0 0.0
  %801 = vmatpush1.msra.mxu0 0.0
  %802 = vmatprep.subr.mxu0 0.0
  %803 = vmatpush1.msra.mxu0 0.0
  %804 = vmatprep.subr.mxu0 0.0
  %805 = vmatpush1.msra.mxu0 0.0
  %806 = vmatprep.subr.mxu0 0.0
  %807 = vmatpush1.msra.mxu0 0.0
  %808 = vmatprep.subr.mxu0 0.0
  %809 = vmatpush1.msra.mxu0 0.0
  %810 = vmatprep.subr.mxu0 0.0
  %811 = vmatpush1.msra.mxu0 0.0
  %812 = vmatprep.subr.mxu0 0.0
  %813 = vmatpush1.msra.mxu0 0.0
  %814 = vmatprep.subr.mxu0 0.0
  %815 = vmatpush1.msra.mxu0 0.0
  %816 = vmatprep.subr.mxu0 0.0
  %817 = vmatpush1.msra.mxu0 0.0
  %818 = vmatprep.subr.mxu0 0.0
  %819 = vmatpush1.msra.mxu0 0.0
  %820 = vmatprep.subr.mxu0 0.0
  %821 = vmatpush1.msra.mxu0 0.0
  %822 = vmatprep.subr.mxu0 0.0
  %823 = vmatpush1.msra.mxu0 0.0
  %824 = vmatprep.subr.mxu0 0.0
  %825 = vmatpush1.msra.mxu0 0.0
  %826 = vmatprep.subr.mxu0 0.0
  %827 = vmatpush1.msra.mxu0 0.0
  %828 = vmatprep.subr.mxu0 0.0
  %829 = vmatpush1.msra.mxu0 0.0
  %830 = vmatprep.subr.mxu0 0.0
  %831 = vmatpush1.msra.mxu0 0.0
  %832 = vmatprep.subr.mxu0 0.0
  %833 = vmatpush1.msra.mxu0 0.0
  %834 = vmatprep.mubr.f32.mxu0 0.0
  %835 = vmatmul.mubr.f32.gmra.mrb[0].mxu0 %v366
  %v836 = vpop.f32.mrb[0].mxu0
  %v837 = vadd.f32 %v318, %v836
  %v838 = vpop.f32.mrb[0].mxu0
  %839 = vmatprep.mubr.f32.mxu0 0.0
  %840 = vmatmul.mubr.f32.gmra.mrb[0].mxu0 %v369
  %v841 = vpop.f32.mrb[0].mxu0
  %v842 = vadd.f32 %v323, %v841
  %v843 = vpop.f32.mrb[0].mxu0
  %844 = vmatprep.mubr.f32.mxu0 0.0
  %845 = vmatmul.mubr.f32.gmra.mrb[0].mxu0 %v372
  %v846 = vpop.f32.mrb[0].mxu0
  %v847 = vadd.f32 %v328, %v846
  %v848 = vpop.f32.mrb[0].mxu0
  %849 = vmatprep.mubr.f32.mxu0 0.0
  %850 = vmatmul.mubr.f32.gmra.mrb[0].mxu0 %v375
  %v851 = vpop.f32.mrb[0].mxu0
  %v852 = vadd.f32 %v333, %v851
  %v853 = vpop.f32.mrb[0].mxu0
  %854 = vmatprep.mubr.f32.mxu0 0.0
  %855 = vmatmul.mubr.f32.gmra.mrb[0].mxu0 %v378
  %v856 = vpop.f32.mrb[0].mxu0
  %v857 = vadd.f32 %v338, %v856
  %v858 = vpop.f32.mrb[0].mxu0
  %859 = vmatprep.mubr.f32.mxu0 0.0
  %860 = vmatmul.mubr.f32.gmra.mrb[0].mxu0 %v381
  %v861 = vpop.f32.mrb[0].mxu0
  %v862 = vadd.f32 %v343, %v861
  %v863 = vpop.f32.mrb[0].mxu0
  %864 = vmatprep.mubr.f32.mxu0 0.0
  %865 = vmatmul.mubr.f32.gmra.mrb[0].mxu0 %v384
  %v866 = vpop.f32.mrb[0].mxu0
  %v867 = vadd.f32 %v348, %v866
  %v868 = vpop.f32.mrb[0].mxu0
  %869 = vmatprep.mubr.f32.mxu0 0.0
  %870 = vmatmul.mubr.f32.gmra.mrb[0].mxu0 %v387
  %v871 = vpop.f32.mrb[0].mxu0
  %v872 = vadd.f32 %v353, %v871
  %v873 = vpop.f32.mrb[0].mxu0
  %874 = vmatprep.mubr.f32.mxu0 0.0
  %875 = vmatmul.mubr.f32.gmra.mrb[0].mxu0 %v390
  %v876 = vpop.f32.mrb[0].mxu0
  %v877 = vadd.f32 %v358, %v876
  %v878 = vpop.f32.mrb[0].mxu0
  %879 = vmatprep.mubr.f32.mxu0 0.0
  %880 = vmatmul.mubr.f32.gmra.mrb[0].mxu0 %v393
  %v881 = vpop.f32.mrb[0].mxu0
  %v882 = vadd.f32 %v363, %v881
  %v883 = vpop.f32.mrb[0].mxu0
  %884 = vdwg.mxu0
  %v885 = vmax.f32 %v462, 0.0
  %v886 = vmax.f32 %v464, 0.0
  %v887 = vmax.f32 %v587, 0.0
  %v888 = vmax.f32 %v589, 0.0
  %v889 = vmax.f32 %v712, 0.0
  %v890 = vmax.f32 %v714, 0.0
  %v891 = vmax.f32 %v837, 0.0
  %v892 = vmax.f32 %v468, 0.0
  %v893 = vmax.f32 %v470, 0.0
  %v894 = vmax.f32 %v593, 0.0
  %v895 = vmax.f32 %v595, 0.0
  %v896 = vmax.f32 %v718, 0.0
  %v897 = vmax.f32 %v720, 0.0
  %v898 = vmax.f32 %v842, 0.0
  %v899 = vmax.f32 %v474, 0.0
  %v900 = vmax.f32 %v476, 0.0
  %v901 = vmax.f32 %v599, 0.0
  %v902 = vmax.f32 %v601, 0.0
  %v903 = vmax.f32 %v724, 0.0
  %v904 = vmax.f32 %v726, 0.0
  %v905 = vmax.f32 %v847, 0.0
  %v906 = vmax.f32 %v480, 0.0
  %v907 = vmax.f32 %v482, 0.0
  %v908 = vmax.f32 %v605, 0.0
  %v909 = vmax.f32 %v607, 0.0
  %v910 = vmax.f32 %v730, 0.0
  %v911 = vmax.f32 %v732, 0.0
  %v912 = vmax.f32 %v852, 0.0
  %v913 = vmax.f32 %v486, 0.0
  %v914 = vmax.f32 %v488, 0.0
  %v915 = vmax.f32 %v611, 0.0
  %v916 = vmax.f32 %v613, 0.0
  %v917 = vmax.f32 %v736, 0.0
  %v918 = vmax.f32 %v738, 0.0
  %v919 = vmax.f32 %v857, 0.0
  %v920 = vmax.f32 %v492, 0.0
  %v921 = vmax.f32 %v494, 0.0
  %v922 = vmax.f32 %v617, 0.0
  %v923 = vmax.f32 %v619, 0.0
  %v924 = vmax.f32 %v742, 0.0
  %v925 = vmax.f32 %v744, 0.0
  %v926 = vmax.f32 %v862, 0.0
  %v927 = vmax.f32 %v498, 0.0
  %v928 = vmax.f32 %v500, 0.0
  %v929 = vmax.f32 %v623, 0.0
  %v930 = vmax.f32 %v625, 0.0
  %v931 = vmax.f32 %v748, 0.0
  %v932 = vmax.f32 %v750, 0.0
  %v933 = vmax.f32 %v867, 0.0
  %v934 = vmax.f32 %v504, 0.0
  %v935 = vmax.f32 %v506, 0.0
  %v936 = vmax.f32 %v629, 0.0
  %v937 = vmax.f32 %v631, 0.0
  %v938 = vmax.f32 %v754, 0.0
  %v939 = vmax.f32 %v756, 0.0
  %v940 = vmax.f32 %v872, 0.0
  %v941 = vmax.f32 %v510, 0.0
  %v942 = vmax.f32 %v512, 0.0
  %v943 = vmax.f32 %v635, 0.0
  %v944 = vmax.f32 %v637, 0.0
  %v945 = vmax.f32 %v760, 0.0
  %v946 = vmax.f32 %v762, 0.0
  %v947 = vmax.f32 %v877, 0.0
  %v948 = vmax.f32 %v516, 0.0
  %v949 = vmax.f32 %v518, 0.0
  %v950 = vmax.f32 %v641, 0.0
  %v951 = vmax.f32 %v643, 0.0
  %v952 = vmax.f32 %v766, 0.0
  %v953 = vmax.f32 %v768, 0.0
  %v954 = vmax.f32 %v882, 0.0
  %1025 = vrot.lane.b32.xlu0 %v885, 127
  %v1026 = vpop.permute.xlu0 %1025
  %1027 = vrot.lane.b32.xlu0 %v886, 127
  %v1028 = vpop.permute.xlu0 %1027
  %1029 = vrot.lane.b32.xlu0 %v887, 127
  %v1030 = vpop.permute.xlu0 %1029
  %1031 = vrot.lane.b32.xlu0 %v888, 127
  %v1032 = vpop.permute.xlu0 %1031
  %1033 = vrot.lane.b32.xlu0 %v889, 127
  %v1034 = vpop.permute.xlu0 %1033
  %1035 = vrot.lane.b32.xlu0 %v890, 127
  %v1036 = vpop.permute.xlu0 %1035
  %1037 = vrot.lane.b32.xlu0 %v891, 127
  %v1038 = vpop.permute.xlu0 %1037
  %1039 = vrot.lane.b32.xlu0 %v892, 127
  %v1040 = vpop.permute.xlu0 %1039
  %1041 = vrot.lane.b32.xlu0 %v893, 127
  %v1042 = vpop.permute.xlu0 %1041
  %1043 = vrot.lane.b32.xlu0 %v894, 127
  %v1044 = vpop.permute.xlu0 %1043
  %1045 = vrot.lane.b32.xlu0 %v895, 127
  %v1046 = vpop.permute.xlu0 %1045
  %1047 = vrot.lane.b32.xlu0 %v896, 127
  %v1048 = vpop.permute.xlu0 %1047
  %1049 = vrot.lane.b32.xlu0 %v897, 127
  %v1050 = vpop.permute.xlu0 %1049
  %1051 = vrot.lane.b32.xlu0 %v898, 127
  %v1052 = vpop.permute.xlu0 %1051
  %1053 = vrot.lane.b32.xlu0 %v899, 127
  %v1054 = vpop.permute.xlu0 %1053
  %1055 = vrot.lane.b32.xlu0 %v900, 127
  %v1056 = vpop.permute.xlu0 %1055
  %1057 = vrot.lane.b32.xlu0 %v901, 127
  %v1058 = vpop.permute.xlu0 %1057
  %1059 = vrot.lane.b32.xlu0 %v902, 127
  %v1060 = vpop.permute.xlu0 %1059
  %1061 = vrot.lane.b32.xlu0 %v903, 127
  %v1062 = vpop.permute.xlu0 %1061
  %1063 = vrot.lane.b32.xlu0 %v904, 127
  %v1064 = vpop.permute.xlu0 %1063
  %1065 = vrot.lane.b32.xlu0 %v905, 127
  %v1066 = vpop.permute.xlu0 %1065
  %1067 = vrot.lane.b32.xlu0 %v906, 127
  %v1068 = vpop.permute.xlu0 %1067
  %1069 = vrot.lane.b32.xlu0 %v907, 127
  %v1070 = vpop.permute.xlu0 %1069
  %1071 = vrot.lane.b32.xlu0 %v908, 127
  %v1072 = vpop.permute.xlu0 %1071
  %1073 = vrot.lane.b32.xlu0 %v909, 127
  %v1074 = vpop.permute.xlu0 %1073
  %1075 = vrot.lane.b32.xlu0 %v910, 127
  %v1076 = vpop.permute.xlu0 %1075
  %1077 = vrot.lane.b32.xlu0 %v911, 127
  %v1078 = vpop.permute.xlu0 %1077
  %1079 = vrot.lane.b32.xlu0 %v912, 127
  %v1080 = vpop.permute.xlu0 %1079
  %1081 = vrot.lane.b32.xlu0 %v913, 127
  %v1082 = vpop.permute.xlu0 %1081
  %1083 = vrot.lane.b32.xlu0 %v914, 127
  %v1084 = vpop.permute.xlu0 %1083
  %1085 = vrot.lane.b32.xlu0 %v915, 127
  %v1086 = vpop.permute.xlu0 %1085
  %1087 = vrot.lane.b32.xlu0 %v916, 127
  %v1088 = vpop.permute.xlu0 %1087
  %1089 = vrot.lane.b32.xlu0 %v917, 127
  %v1090 = vpop.permute.xlu0 %1089
  %1091 = vrot.lane.b32.xlu0 %v918, 127
  %v1092 = vpop.permute.xlu0 %1091
  %1093 = vrot.lane.b32.xlu0 %v919, 127
  %v1094 = vpop.permute.xlu0 %1093
  %1095 = vrot.lane.b32.xlu0 %v920, 127
  %v1096 = vpop.permute.xlu0 %1095
  %1097 = vrot.lane.b32.xlu0 %v921, 127
  %v1098 = vpop.permute.xlu0 %1097
  %1099 = vrot.lane.b32.xlu0 %v922, 127
  %v1100 = vpop.permute.xlu0 %1099
  %1101 = vrot.lane.b32.xlu0 %v923, 127
  %v1102 = vpop.permute.xlu0 %1101
  %1103 = vrot.lane.b32.xlu0 %v924, 127
  %v1104 = vpop.permute.xlu0 %1103
  %1105 = vrot.lane.b32.xlu0 %v925, 127
  %v1106 = vpop.permute.xlu0 %1105
  %1107 = vrot.lane.b32.xlu0 %v926, 127
  %v1108 = vpop.permute.xlu0 %1107
  %1109 = vrot.lane.b32.xlu0 %v927, 127
  %v1110 = vpop.permute.xlu0 %1109
  %1111 = vrot.lane.b32.xlu0 %v928, 127
  %v1112 = vpop.permute.xlu0 %1111
  %1113 = vrot.lane.b32.xlu0 %v929, 127
  %v1114 = vpop.permute.xlu0 %1113
  %1115 = vrot.lane.b32.xlu0 %v930, 127
  %v1116 = vpop.permute.xlu0 %1115
  %1117 = vrot.lane.b32.xlu0 %v931, 127
  %v1118 = vpop.permute.xlu0 %1117
  %1119 = vrot.lane.b32.xlu0 %v932, 127
  %v1120 = vpop.permute.xlu0 %1119
  %1121 = vrot.lane.b32.xlu0 %v933, 127
  %v1122 = vpop.permute.xlu0 %1121
  %1123 = vrot.lane.b32.xlu0 %v934, 127
  %v1124 = vpop.permute.xlu0 %1123
  %1125 = vrot.lane.b32.xlu0 %v935, 127
  %v1126 = vpop.permute.xlu0 %1125
  %1127 = vrot.lane.b32.xlu0 %v936, 127
  %v1128 = vpop.permute.xlu0 %1127
  %1129 = vrot.lane.b32.xlu0 %v937, 127
  %v1130 = vpop.permute.xlu0 %1129
  %1131 = vrot.lane.b32.xlu0 %v938, 127
  %v1132 = vpop.permute.xlu0 %1131
  %1133 = vrot.lane.b32.xlu0 %v939, 127
  %v1134 = vpop.permute.xlu0 %1133
  %1135 = vrot.lane.b32.xlu0 %v940, 127
  %v1136 = vpop.permute.xlu0 %1135
  %1137 = vrot.lane.b32.xlu0 %v941, 127
  %v1138 = vpop.permute.xlu0 %1137
  %1139 = vrot.lane.b32.xlu0 %v942, 127
  %v1140 = vpop.permute.xlu0 %1139
  %1141 = vrot.lane.b32.xlu0 %v943, 127
  %v1142 = vpop.permute.xlu0 %1141
  %1143 = vrot.lane.b32.xlu0 %v944, 127
  %v1144 = vpop.permute.xlu0 %1143
  %1145 = vrot.lane.b32.xlu0 %v945, 127
  %v1146 = vpop.permute.xlu0 %1145
  %1147 = vrot.lane.b32.xlu0 %v946, 127
  %v1148 = vpop.permute.xlu0 %1147
  %1149 = vrot.lane.b32.xlu0 %v947, 127
  %v1150 = vpop.permute.xlu0 %1149
  %1151 = vrot.lane.b32.xlu0 %v948, 127
  %v1152 = vpop.permute.xlu0 %1151
  %1153 = vrot.lane.b32.xlu0 %v949, 127
  %v1154 = vpop.permute.xlu0 %1153
  %1155 = vrot.lane.b32.xlu0 %v950, 127
  %v1156 = vpop.permute.xlu0 %1155
  %1157 = vrot.lane.b32.xlu0 %v951, 127
  %v1158 = vpop.permute.xlu0 %1157
  %1159 = vrot.lane.b32.xlu0 %v952, 127
  %v1160 = vpop.permute.xlu0 %1159
  %1161 = vrot.lane.b32.xlu0 %v953, 127
  %v1162 = vpop.permute.xlu0 %1161
  %1163 = vrot.lane.b32.xlu0 %v954, 127
  %v1164 = vpop.permute.xlu0 %1163
  %v1165 = vsel %vm95, %v1026, %v1028
  %v1166 = vsel %vm95, %v1028, %v1030
  %v1167 = vsel %vm95, %v1030, %v1032
  %v1168 = vsel %vm95, %v1032, %v1034
  %v1169 = vsel %vm95, %v1034, %v1036
  %v1170 = vsel %vm95, %v1036, %v1038
  %v1171 = vsel %vm95, %v1040, %v1042
  %v1172 = vsel %vm95, %v1042, %v1044
  %v1173 = vsel %vm95, %v1044, %v1046
  %v1174 = vsel %vm95, %v1046, %v1048
  %v1175 = vsel %vm95, %v1048, %v1050
  %v1176 = vsel %vm95, %v1050, %v1052
  %v1177 = vsel %vm95, %v1054, %v1056
  %v1178 = vsel %vm95, %v1056, %v1058
  %v1179 = vsel %vm95, %v1058, %v1060
  %v1180 = vsel %vm95, %v1060, %v1062
  %v1181 = vsel %vm95, %v1062, %v1064
  %v1182 = vsel %vm95, %v1064, %v1066
  %v1183 = vsel %vm95, %v1068, %v1070
  %v1184 = vsel %vm95, %v1070, %v1072
  %v1185 = vsel %vm95, %v1072, %v1074
  %v1186 = vsel %vm95, %v1074, %v1076
  %v1187 = vsel %vm95, %v1076, %v1078
  %v1188 = vsel %vm95, %v1078, %v1080
  %v1189 = vsel %vm95, %v1082, %v1084
  %v1190 = vsel %vm95, %v1084, %v1086
  %v1191 = vsel %vm95, %v1086, %v1088
  %v1192 = vsel %vm95, %v1088, %v1090
  %v1193 = vsel %vm95, %v1090, %v1092
  %v1194 = vsel %vm95, %v1092, %v1094
  %v1195 = vsel %vm95, %v1096, %v1098
  %v1196 = vsel %vm95, %v1098, %v1100
  %v1197 = vsel %vm95, %v1100, %v1102
  %v1198 = vsel %vm95, %v1102, %v1104
  %v1199 = vsel %vm95, %v1104, %v1106
  %v1200 = vsel %vm95, %v1106, %v1108
  %v1201 = vsel %vm95, %v1110, %v1112
  %v1202 = vsel %vm95, %v1112, %v1114
  %v1203 = vsel %vm95, %v1114, %v1116
  %v1204 = vsel %vm95, %v1116, %v1118
  %v1205 = vsel %vm95, %v1118, %v1120
  %v1206 = vsel %vm95, %v1120, %v1122
  %v1207 = vsel %vm95, %v1124, %v1126
  %v1208 = vsel %vm95, %v1126, %v1128
  %v1209 = vsel %vm95, %v1128, %v1130
  %v1210 = vsel %vm95, %v1130, %v1132
  %v1211 = vsel %vm95, %v1132, %v1134
  %v1212 = vsel %vm95, %v1134, %v1136
  %v1213 = vsel %vm95, %v1138, %v1140
  %v1214 = vsel %vm95, %v1140, %v1142
  %v1215 = vsel %vm95, %v1142, %v1144
  %v1216 = vsel %vm95, %v1144, %v1146
  %v1217 = vsel %vm95, %v1146, %v1148
  %v1218 = vsel %vm95, %v1148, %v1150
  %v1219 = vsel %vm95, %v1152, %v1154
  %v1220 = vsel %vm95, %v1154, %v1156
  %v1221 = vsel %vm95, %v1156, %v1158
  %v1222 = vsel %vm95, %v1158, %v1160
  %v1223 = vsel %vm95, %v1160, %v1162
  %v1224 = vsel %vm95, %v1162, %v1164
  %v1295 = vsel %vm109, %v1038, 0.0
  %v1296 = vsel %vm109, %v1052, 0.0
  %v1297 = vsel %vm109, %v1066, 0.0
  %v1298 = vsel %vm109, %v1080, 0.0
  %v1299 = vsel %vm109, %v1094, 0.0
  %v1300 = vsel %vm109, %v1108, 0.0
  %v1301 = vsel %vm109, %v1122, 0.0
  %v1302 = vsel %vm109, %v1136, 0.0
  %v1303 = vsel %vm109, %v1150, 0.0
  %v1304 = vsel %vm109, %v1164, 0.0
  %v1305 = vmax.f32 %v885, %v1165
  %v1306 = vmax.f32 %v886, %v1166
  %v1307 = vmax.f32 %v887, %v1167
  %v1308 = vmax.f32 %v888, %v1168
  %v1309 = vmax.f32 %v889, %v1169
  %v1310 = vmax.f32 %v890, %v1170
  %v1311 = vmax.f32 %v891, %v1295
  %v1312 = vmax.f32 %v892, %v1171
  %v1313 = vmax.f32 %v893, %v1172
  %v1314 = vmax.f32 %v894, %v1173
  %v1315 = vmax.f32 %v895, %v1174
  %v1316 = vmax.f32 %v896, %v1175
  %v1317 = vmax.f32 %v897, %v1176
  %v1318 = vmax.f32 %v898, %v1296
  %v1319 = vmax.f32 %v899, %v1177
  %v1320 = vmax.f32 %v900, %v1178
  %v1321 = vmax.f32 %v901, %v1179
  %v1322 = vmax.f32 %v902, %v1180
  %v1323 = vmax.f32 %v903, %v1181
  %v1324 = vmax.f32 %v904, %v1182
  %v1325 = vmax.f32 %v905, %v1297
  %v1326 = vmax.f32 %v906, %v1183
  %v1327 = vmax.f32 %v907, %v1184
  %v1328 = vmax.f32 %v908, %v1185
  %v1329 = vmax.f32 %v909, %v1186
  %v1330 = vmax.f32 %v910, %v1187
  %v1331 = vmax.f32 %v911, %v1188
  %v1332 = vmax.f32 %v912, %v1298
  %v1333 = vmax.f32 %v913, %v1189
  %v1334 = vmax.f32 %v914, %v1190
  %v1335 = vmax.f32 %v915, %v1191
  %v1336 = vmax.f32 %v916, %v1192
  %v1337 = vmax.f32 %v917, %v1193
  %v1338 = vmax.f32 %v918, %v1194
  %v1339 = vmax.f32 %v919, %v1299
  %v1340 = vmax.f32 %v920, %v1195
  %v1341 = vmax.f32 %v921, %v1196
  %v1342 = vmax.f32 %v922, %v1197
  %v1343 = vmax.f32 %v923, %v1198
  %v1344 = vmax.f32 %v924, %v1199
  %v1345 = vmax.f32 %v925, %v1200
  %v1346 = vmax.f32 %v926, %v1300
  %v1347 = vmax.f32 %v927, %v1201
  %v1348 = vmax.f32 %v928, %v1202
  %v1349 = vmax.f32 %v929, %v1203
  %v1350 = vmax.f32 %v930, %v1204
  %v1351 = vmax.f32 %v931, %v1205
  %v1352 = vmax.f32 %v932, %v1206
  %v1353 = vmax.f32 %v933, %v1301
  %v1354 = vmax.f32 %v934, %v1207
  %v1355 = vmax.f32 %v935, %v1208
  %v1356 = vmax.f32 %v936, %v1209
  %v1357 = vmax.f32 %v937, %v1210
  %v1358 = vmax.f32 %v938, %v1211
  %v1359 = vmax.f32 %v939, %v1212
  %v1360 = vmax.f32 %v940, %v1302
  %v1361 = vmax.f32 %v941, %v1213
  %v1362 = vmax.f32 %v942, %v1214
  %v1363 = vmax.f32 %v943, %v1215
  %v1364 = vmax.f32 %v944, %v1216
  %v1365 = vmax.f32 %v945, %v1217
  %v1366 = vmax.f32 %v946, %v1218
  %v1367 = vmax.f32 %v947, %v1303
  %v1368 = vmax.f32 %v948, %v1219
  %v1369 = vmax.f32 %v949, %v1220
  %v1370 = vmax.f32 %v950, %v1221
  %v1371 = vmax.f32 %v951, %v1222
  %v1372 = vmax.f32 %v952, %v1223
  %v1373 = vmax.f32 %v953, %v1224
  %v1374 = vmax.f32 %v954, %v1304
  %1445 = vrot.lane.b32.xlu0 %v1305, 100
  %v1446 = vpop.permute.xlu0 %1445
  %1447 = vrot.lane.b32.xlu0 %v1306, 100
  %v1448 = vpop.permute.xlu0 %1447
  %1449 = vrot.lane.b32.xlu0 %v1307, 100
  %v1450 = vpop.permute.xlu0 %1449
  %1451 = vrot.lane.b32.xlu0 %v1308, 100
  %v1452 = vpop.permute.xlu0 %1451
  %1453 = vrot.lane.b32.xlu0 %v1309, 100
  %v1454 = vpop.permute.xlu0 %1453
  %1455 = vrot.lane.b32.xlu0 %v1310, 100
  %v1456 = vpop.permute.xlu0 %1455
  %1457 = vrot.lane.b32.xlu0 %v1311, 100
  %v1458 = vpop.permute.xlu0 %1457
  %1459 = vrot.lane.b32.xlu0 %v1312, 100
  %v1460 = vpop.permute.xlu0 %1459
  %1461 = vrot.lane.b32.xlu0 %v1313, 100
  %v1462 = vpop.permute.xlu0 %1461
  %1463 = vrot.lane.b32.xlu0 %v1314, 100
  %v1464 = vpop.permute.xlu0 %1463
  %1465 = vrot.lane.b32.xlu0 %v1315, 100
  %v1466 = vpop.permute.xlu0 %1465
  %1467 = vrot.lane.b32.xlu0 %v1316, 100
  %v1468 = vpop.permute.xlu0 %1467
  %1469 = vrot.lane.b32.xlu0 %v1317, 100
  %v1470 = vpop.permute.xlu0 %1469
  %1471 = vrot.lane.b32.xlu0 %v1318, 100
  %v1472 = vpop.permute.xlu0 %1471
  %1473 = vrot.lane.b32.xlu0 %v1319, 100
  %v1474 = vpop.permute.xlu0 %1473
  %1475 = vrot.lane.b32.xlu0 %v1320, 100
  %v1476 = vpop.permute.xlu0 %1475
  %1477 = vrot.lane.b32.xlu0 %v1321, 100
  %v1478 = vpop.permute.xlu0 %1477
  %1479 = vrot.lane.b32.xlu0 %v1322, 100
  %v1480 = vpop.permute.xlu0 %1479
  %1481 = vrot.lane.b32.xlu0 %v1323, 100
  %v1482 = vpop.permute.xlu0 %1481
  %1483 = vrot.lane.b32.xlu0 %v1324, 100
  %v1484 = vpop.permute.xlu0 %1483
  %1485 = vrot.lane.b32.xlu0 %v1325, 100
  %v1486 = vpop.permute.xlu0 %1485
  %1487 = vrot.lane.b32.xlu0 %v1326, 100
  %v1488 = vpop.permute.xlu0 %1487
  %1489 = vrot.lane.b32.xlu0 %v1327, 100
  %v1490 = vpop.permute.xlu0 %1489
  %1491 = vrot.lane.b32.xlu0 %v1328, 100
  %v1492 = vpop.permute.xlu0 %1491
  %1493 = vrot.lane.b32.xlu0 %v1329, 100
  %v1494 = vpop.permute.xlu0 %1493
  %1495 = vrot.lane.b32.xlu0 %v1330, 100
  %v1496 = vpop.permute.xlu0 %1495
  %1497 = vrot.lane.b32.xlu0 %v1331, 100
  %v1498 = vpop.permute.xlu0 %1497
  %1499 = vrot.lane.b32.xlu0 %v1332, 100
  %v1500 = vpop.permute.xlu0 %1499
  %1501 = vrot.lane.b32.xlu0 %v1333, 100
  %v1502 = vpop.permute.xlu0 %1501
  %1503 = vrot.lane.b32.xlu0 %v1334, 100
  %v1504 = vpop.permute.xlu0 %1503
  %1505 = vrot.lane.b32.xlu0 %v1335, 100
  %v1506 = vpop.permute.xlu0 %1505
  %1507 = vrot.lane.b32.xlu0 %v1336, 100
  %v1508 = vpop.permute.xlu0 %1507
  %1509 = vrot.lane.b32.xlu0 %v1337, 100
  %v1510 = vpop.permute.xlu0 %1509
  %1511 = vrot.lane.b32.xlu0 %v1338, 100
  %v1512 = vpop.permute.xlu0 %1511
  %1513 = vrot.lane.b32.xlu0 %v1339, 100
  %v1514 = vpop.permute.xlu0 %1513
  %1515 = vrot.lane.b32.xlu0 %v1340, 100
  %v1516 = vpop.permute.xlu0 %1515
  %1517 = vrot.lane.b32.xlu0 %v1341, 100
  %v1518 = vpop.permute.xlu0 %1517
  %1519 = vrot.lane.b32.xlu0 %v1342, 100
  %v1520 = vpop.permute.xlu0 %1519
  %1521 = vrot.lane.b32.xlu0 %v1343, 100
  %v1522 = vpop.permute.xlu0 %1521
  %1523 = vrot.lane.b32.xlu0 %v1344, 100
  %v1524 = vpop.permute.xlu0 %1523
  %1525 = vrot.lane.b32.xlu0 %v1345, 100
  %v1526 = vpop.permute.xlu0 %1525
  %1527 = vrot.lane.b32.xlu0 %v1346, 100
  %v1528 = vpop.permute.xlu0 %1527
  %1529 = vrot.lane.b32.xlu0 %v1347, 100
  %v1530 = vpop.permute.xlu0 %1529
  %1531 = vrot.lane.b32.xlu0 %v1348, 100
  %v1532 = vpop.permute.xlu0 %1531
  %1533 = vrot.lane.b32.xlu0 %v1349, 100
  %v1534 = vpop.permute.xlu0 %1533
  %1535 = vrot.lane.b32.xlu0 %v1350, 100
  %v1536 = vpop.permute.xlu0 %1535
  %1537 = vrot.lane.b32.xlu0 %v1351, 100
  %v1538 = vpop.permute.xlu0 %1537
  %1539 = vrot.lane.b32.xlu0 %v1352, 100
  %v1540 = vpop.permute.xlu0 %1539
  %1541 = vrot.lane.b32.xlu0 %v1353, 100
  %v1542 = vpop.permute.xlu0 %1541
  %1543 = vrot.lane.b32.xlu0 %v1354, 100
  %v1544 = vpop.permute.xlu0 %1543
  %1545 = vrot.lane.b32.xlu0 %v1355, 100
  %v1546 = vpop.permute.xlu0 %1545
  %1547 = vrot.lane.b32.xlu0 %v1356, 100
  %v1548 = vpop.permute.xlu0 %1547
  %1549 = vrot.lane.b32.xlu0 %v1357, 100
  %v1550 = vpop.permute.xlu0 %1549
  %1551 = vrot.lane.b32.xlu0 %v1358, 100
  %v1552 = vpop.permute.xlu0 %1551
  %1553 = vrot.lane.b32.xlu0 %v1359, 100
  %v1554 = vpop.permute.xlu0 %1553
  %1555 = vrot.lane.b32.xlu0 %v1360, 100
  %v1556 = vpop.permute.xlu0 %1555
  %1557 = vrot.lane.b32.xlu0 %v1361, 100
  %v1558 = vpop.permute.xlu0 %1557
  %1559 = vrot.lane.b32.xlu0 %v1362, 100
  %v1560 = vpop.permute.xlu0 %1559
  %1561 = vrot.lane.b32.xlu0 %v1363, 100
  %v1562 = vpop.permute.xlu0 %1561
  %1563 = vrot.lane.b32.xlu0 %v1364, 100
  %v1564 = vpop.permute.xlu0 %1563
  %1565 = vrot.lane.b32.xlu0 %v1365, 100
  %v1566 = vpop.permute.xlu0 %1565
  %1567 = vrot.lane.b32.xlu0 %v1366, 100
  %v1568 = vpop.permute.xlu0 %1567
  %1569 = vrot.lane.b32.xlu0 %v1367, 100
  %v1570 = vpop.permute.xlu0 %1569
  %1571 = vrot.lane.b32.xlu0 %v1368, 100
  %v1572 = vpop.permute.xlu0 %1571
  %1573 = vrot.lane.b32.xlu0 %v1369, 100
  %v1574 = vpop.permute.xlu0 %1573
  %1575 = vrot.lane.b32.xlu0 %v1370, 100
  %v1576 = vpop.permute.xlu0 %1575
  %1577 = vrot.lane.b32.xlu0 %v1371, 100
  %v1578 = vpop.permute.xlu0 %1577
  %1579 = vrot.lane.b32.xlu0 %v1372, 100
  %v1580 = vpop.permute.xlu0 %1579
  %1581 = vrot.lane.b32.xlu0 %v1373, 100
  %v1582 = vpop.permute.xlu0 %1581
  %1583 = vrot.lane.b32.xlu0 %v1374, 100
  %v1584 = vpop.permute.xlu0 %1583
  %v1585 = vsel %vm155, %v1446, %v1448
  %v1586 = vsel %vm155, %v1448, %v1450
  %v1587 = vsel %vm155, %v1450, %v1452
  %v1588 = vsel %vm155, %v1452, %v1454
  %v1589 = vsel %vm155, %v1454, %v1456
  %v1590 = vsel %vm155, %v1456, %v1458
  %v1591 = vsel %vm155, %v1460, %v1462
  %v1592 = vsel %vm155, %v1462, %v1464
  %v1593 = vsel %vm155, %v1464, %v1466
  %v1594 = vsel %vm155, %v1466, %v1468
  %v1595 = vsel %vm155, %v1468, %v1470
  %v1596 = vsel %vm155, %v1470, %v1472
  %v1597 = vsel %vm155, %v1474, %v1476
  %v1598 = vsel %vm155, %v1476, %v1478
  %v1599 = vsel %vm155, %v1478, %v1480
  %v1600 = vsel %vm155, %v1480, %v1482
  %v1601 = vsel %vm155, %v1482, %v1484
  %v1602 = vsel %vm155, %v1484, %v1486
  %v1603 = vsel %vm155, %v1488, %v1490
  %v1604 = vsel %vm155, %v1490, %v1492
  %v1605 = vsel %vm155, %v1492, %v1494
  %v1606 = vsel %vm155, %v1494, %v1496
  %v1607 = vsel %vm155, %v1496, %v1498
  %v1608 = vsel %vm155, %v1498, %v1500
  %v1609 = vsel %vm155, %v1502, %v1504
  %v1610 = vsel %vm155, %v1504, %v1506
  %v1611 = vsel %vm155, %v1506, %v1508
  %v1612 = vsel %vm155, %v1508, %v1510
  %v1613 = vsel %vm155, %v1510, %v1512
  %v1614 = vsel %vm155, %v1512, %v1514
  %v1615 = vsel %vm155, %v1516, %v1518
  %v1616 = vsel %vm155, %v1518, %v1520
  %v1617 = vsel %vm155, %v1520, %v1522
  %v1618 = vsel %vm155, %v1522, %v1524
  %v1619 = vsel %vm155, %v1524, %v1526
  %v1620 = vsel %vm155, %v1526, %v1528
  %v1621 = vsel %vm155, %v1530, %v1532
  %v1622 = vsel %vm155, %v1532, %v1534
  %v1623 = vsel %vm155, %v1534, %v1536
  %v1624 = vsel %vm155, %v1536, %v1538
  %v1625 = vsel %vm155, %v1538, %v1540
  %v1626 = vsel %vm155, %v1540, %v1542
  %v1627 = vsel %vm155, %v1544, %v1546
  %v1628 = vsel %vm155, %v1546, %v1548
  %v1629 = vsel %vm155, %v1548, %v1550
  %v1630 = vsel %vm155, %v1550, %v1552
  %v1631 = vsel %vm155, %v1552, %v1554
  %v1632 = vsel %vm155, %v1554, %v1556
  %v1633 = vsel %vm155, %v1558, %v1560
  %v1634 = vsel %vm155, %v1560, %v1562
  %v1635 = vsel %vm155, %v1562, %v1564
  %v1636 = vsel %vm155, %v1564, %v1566
  %v1637 = vsel %vm155, %v1566, %v1568
  %v1638 = vsel %vm155, %v1568, %v1570
  %v1639 = vsel %vm155, %v1572, %v1574
  %v1640 = vsel %vm155, %v1574, %v1576
  %v1641 = vsel %vm155, %v1576, %v1578
  %v1642 = vsel %vm155, %v1578, %v1580
  %v1643 = vsel %vm155, %v1580, %v1582
  %v1644 = vsel %vm155, %v1582, %v1584
  %v1705 = vsel %vm168, %v1590, 0.0
  %v1706 = vsel %vm168, %v1596, 0.0
  %v1707 = vsel %vm168, %v1602, 0.0
  %v1708 = vsel %vm168, %v1608, 0.0
  %v1709 = vsel %vm168, %v1614, 0.0
  %v1710 = vsel %vm168, %v1620, 0.0
  %v1711 = vsel %vm168, %v1626, 0.0
  %v1712 = vsel %vm168, %v1632, 0.0
  %v1713 = vsel %vm168, %v1638, 0.0
  %v1714 = vsel %vm168, %v1644, 0.0
  %v1715 = vmax.f32 %v1305, %v1585
  %v1716 = vmax.f32 %v1306, %v1586
  %v1717 = vmax.f32 %v1307, %v1587
  %v1718 = vmax.f32 %v1308, %v1588
  %v1719 = vmax.f32 %v1309, %v1589
  %v1720 = vmax.f32 %v1310, %v1705
  %v1721 = vmax.f32 %v1311, 0.0
  %v1722 = vmax.f32 %v1312, %v1591
  %v1723 = vmax.f32 %v1313, %v1592
  %v1724 = vmax.f32 %v1314, %v1593
  %v1725 = vmax.f32 %v1315, %v1594
  %v1726 = vmax.f32 %v1316, %v1595
  %v1727 = vmax.f32 %v1317, %v1706
  %v1728 = vmax.f32 %v1318, 0.0
  %v1729 = vmax.f32 %v1319, %v1597
  %v1730 = vmax.f32 %v1320, %v1598
  %v1731 = vmax.f32 %v1321, %v1599
  %v1732 = vmax.f32 %v1322, %v1600
  %v1733 = vmax.f32 %v1323, %v1601
  %v1734 = vmax.f32 %v1324, %v1707
  %v1735 = vmax.f32 %v1325, 0.0
  %v1736 = vmax.f32 %v1326, %v1603
  %v1737 = vmax.f32 %v1327, %v1604
  %v1738 = vmax.f32 %v1328, %v1605
  %v1739 = vmax.f32 %v1329, %v1606
  %v1740 = vmax.f32 %v1330, %v1607
  %v1741 = vmax.f32 %v1331, %v1708
  %v1742 = vmax.f32 %v1332, 0.0
  %v1743 = vmax.f32 %v1333, %v1609
  %v1744 = vmax.f32 %v1334, %v1610
  %v1745 = vmax.f32 %v1335, %v1611
  %v1746 = vmax.f32 %v1336, %v1612
  %v1747 = vmax.f32 %v1337, %v1613
  %v1748 = vmax.f32 %v1338, %v1709
  %v1749 = vmax.f32 %v1339, 0.0
  %v1750 = vmax.f32 %v1340, %v1615
  %v1751 = vmax.f32 %v1341, %v1616
  %v1752 = vmax.f32 %v1342, %v1617
  %v1753 = vmax.f32 %v1343, %v1618
  %v1754 = vmax.f32 %v1344, %v1619
  %v1755 = vmax.f32 %v1345, %v1710
  %v1756 = vmax.f32 %v1346, 0.0
  %v1757 = vmax.f32 %v1347, %v1621
  %v1758 = vmax.f32 %v1348, %v1622
  %v1759 = vmax.f32 %v1349, %v1623
  %v1760 = vmax.f32 %v1350, %v1624
  %v1761 = vmax.f32 %v1351, %v1625
  %v1762 = vmax.f32 %v1352, %v1711
  %v1763 = vmax.f32 %v1353, 0.0
  %v1764 = vmax.f32 %v1354, %v1627
  %v1765 = vmax.f32 %v1355, %v1628
  %v1766 = vmax.f32 %v1356, %v1629
  %v1767 = vmax.f32 %v1357, %v1630
  %v1768 = vmax.f32 %v1358, %v1631
  %v1769 = vmax.f32 %v1359, %v1712
  %v1770 = vmax.f32 %v1360, 0.0
  %v1771 = vmax.f32 %v1361, %v1633
  %v1772 = vmax.f32 %v1362, %v1634
  %v1773 = vmax.f32 %v1363, %v1635
  %v1774 = vmax.f32 %v1364, %v1636
  %v1775 = vmax.f32 %v1365, %v1637
  %v1776 = vmax.f32 %v1366, %v1713
  %v1777 = vmax.f32 %v1367, 0.0
  %v1778 = vmax.f32 %v1368, %v1639
  %v1779 = vmax.f32 %v1369, %v1640
  %v1780 = vmax.f32 %v1370, %v1641
  %v1781 = vmax.f32 %v1371, %v1642
  %v1782 = vmax.f32 %v1372, %v1643
  %v1783 = vmax.f32 %v1373, %v1714
  %v1784 = vmax.f32 %v1374, 0.0
  %v1785 = vld [vmem:[%s3] sm:$0xff]
  %v1786 = vld [vmem:[%s3 + $0x8] sm:$0xff]
  %v1787 = vld [vmem:[%s3 + $0x10] sm:$0xff]
  %v1788 = vld [vmem:[%s3 + $0x18] sm:$0xff]
  %v1789 = vld [vmem:[%s3 + $0x20] sm:$0xff]
  %v1790 = vld [vmem:[%s3 + $0x28] sm:$0xff]
  %v1791 = vld [vmem:[%s3 + $0x30] sm:$0xff]
  %v1792 = vld [vmem:[%s3 + $0x38] sm:$0xff]
  %v1793 = vld [vmem:[%s3 + $0x40] sm:$0xff]
  %v1794 = vld [vmem:[%s3 + $0x48] sm:$0xff]
  %v1795 = vld [vmem:[%s3 + $0x50] sm:$0xff]
  %v1796 = vld [vmem:[%s3 + $0x58] sm:$0xff]
  %v1797 = vld [vmem:[%s3 + $0x60] sm:$0xff]
  %v1798 = vld [vmem:[%s3 + $0x68] sm:$0xff]
  %v1799 = vld [vmem:[%s3 + $0x70] sm:$0xff]
  %v1800 = vld [vmem:[%s3 + $0x78] sm:$0xff]
  %v1801 = vld [vmem:[%s3 + $0x80] sm:$0xff]
  %v1802 = vld [vmem:[%s3 + $0x88] sm:$0xff]
  %v1803 = vld [vmem:[%s3 + $0x90] sm:$0xff]
  %v1804 = vld [vmem:[%s3 + $0x98] sm:$0xff]
  %v1805 = vld [vmem:[%s3 + $0xa0] sm:$0xff]
  %v1806 = vld [vmem:[%s3 + $0xa8] sm:$0xff]
  %v1807 = vld [vmem:[%s3 + $0xb0] sm:$0xff]
  %v1808 = vld [vmem:[%s3 + $0xb8] sm:$0xff]
  %v1809 = vld [vmem:[%s3 + $0xc0] sm:$0xff]
  %v1810 = vld [vmem:[%s3 + $0xc8] sm:$0xff]
  %v1811 = vld [vmem:[%s3 + $0xd0] sm:$0xff]
  %v1812 = vld [vmem:[%s3 + $0xd8] sm:$0xff]
  %v1813 = vld [vmem:[%s3 + $0xe0] sm:$0xff]
  %v1814 = vld [vmem:[%s3 + $0xe8] sm:$0xff]
  %v1815 = vld [vmem:[%s4] sm:$0xff]
  %v1816 = vld [vmem:[%s4 + $0x8] sm:$0xff]
  %v1817 = vld [vmem:[%s4 + $0x10] sm:$0xff]
  %v1818 = vld [vmem:[%s4 + $0x18] sm:$0xff]
  %v1819 = vld [vmem:[%s4 + $0x20] sm:$0xff]
  %1890 = vrot.lane.b32.xlu0 %v1715, 126
  %v1891 = vpop.permute.xlu0 %1890
  %1892 = vrot.lane.b32.xlu0 %v1716, 126
  %v1893 = vpop.permute.xlu0 %1892
  %1894 = vrot.lane.b32.xlu0 %v1717, 126
  %v1895 = vpop.permute.xlu0 %1894
  %1896 = vrot.lane.b32.xlu0 %v1718, 126
  %v1897 = vpop.permute.xlu0 %1896
  %1898 = vrot.lane.b32.xlu0 %v1719, 126
  %v1899 = vpop.permute.xlu0 %1898
  %1900 = vrot.lane.b32.xlu0 %v1720, 126
  %v1901 = vpop.permute.xlu0 %1900
  %1902 = vrot.lane.b32.xlu0 %v1721, 126
  %v1903 = vpop.permute.xlu0 %1902
  %1904 = vrot.lane.b32.xlu0 %v1722, 126
  %v1905 = vpop.permute.xlu0 %1904
  %1906 = vrot.lane.b32.xlu0 %v1723, 126
  %v1907 = vpop.permute.xlu0 %1906
  %1908 = vrot.lane.b32.xlu0 %v1724, 126
  %v1909 = vpop.permute.xlu0 %1908
  %1910 = vrot.lane.b32.xlu0 %v1725, 126
  %v1911 = vpop.permute.xlu0 %1910
  %1912 = vrot.lane.b32.xlu0 %v1726, 126
  %v1913 = vpop.permute.xlu0 %1912
  %1914 = vrot.lane.b32.xlu0 %v1727, 126
  %v1915 = vpop.permute.xlu0 %1914
  %1916 = vrot.lane.b32.xlu0 %v1728, 126
  %v1917 = vpop.permute.xlu0 %1916
  %1918 = vrot.lane.b32.xlu0 %v1729, 126
  %v1919 = vpop.permute.xlu0 %1918
  %1920 = vrot.lane.b32.xlu0 %v1730, 126
  %v1921 = vpop.permute.xlu0 %1920
  %1922 = vrot.lane.b32.xlu0 %v1731, 126
  %v1923 = vpop.permute.xlu0 %1922
  %1924 = vrot.lane.b32.xlu0 %v1732, 126
  %v1925 = vpop.permute.xlu0 %1924
  %1926 = vrot.lane.b32.xlu0 %v1733, 126
  %v1927 = vpop.permute.xlu0 %1926
  %1928 = vrot.lane.b32.xlu0 %v1734, 126
  %v1929 = vpop.permute.xlu0 %1928
  %1930 = vrot.lane.b32.xlu0 %v1735, 126
  %v1931 = vpop.permute.xlu0 %1930
  %1932 = vrot.lane.b32.xlu0 %v1736, 126
  %v1933 = vpop.permute.xlu0 %1932
  %1934 = vrot.lane.b32.xlu0 %v1737, 126
  %v1935 = vpop.permute.xlu0 %1934
  %1936 = vrot.lane.b32.xlu0 %v1738, 126
  %v1937 = vpop.permute.xlu0 %1936
  %1938 = vrot.lane.b32.xlu0 %v1739, 126
  %v1939 = vpop.permute.xlu0 %1938
  %1940 = vrot.lane.b32.xlu0 %v1740, 126
  %v1941 = vpop.permute.xlu0 %1940
  %1942 = vrot.lane.b32.xlu0 %v1741, 126
  %v1943 = vpop.permute.xlu0 %1942
  %1944 = vrot.lane.b32.xlu0 %v1742, 126
  %v1945 = vpop.permute.xlu0 %1944
  %1946 = vrot.lane.b32.xlu0 %v1743, 126
  %v1947 = vpop.permute.xlu0 %1946
  %1948 = vrot.lane.b32.xlu0 %v1744, 126
  %v1949 = vpop.permute.xlu0 %1948
  %1950 = vrot.lane.b32.xlu0 %v1745, 126
  %v1951 = vpop.permute.xlu0 %1950
  %1952 = vrot.lane.b32.xlu0 %v1746, 126
  %v1953 = vpop.permute.xlu0 %1952
  %1954 = vrot.lane.b32.xlu0 %v1747, 126
  %v1955 = vpop.permute.xlu0 %1954
  %1956 = vrot.lane.b32.xlu0 %v1748, 126
  %v1957 = vpop.permute.xlu0 %1956
  %1958 = vrot.lane.b32.xlu0 %v1749, 126
  %v1959 = vpop.permute.xlu0 %1958
  %1960 = vrot.lane.b32.xlu0 %v1750, 126
  %v1961 = vpop.permute.xlu0 %1960
  %1962 = vrot.lane.b32.xlu0 %v1751, 126
  %v1963 = vpop.permute.xlu0 %1962
  %1964 = vrot.lane.b32.xlu0 %v1752, 126
  %v1965 = vpop.permute.xlu0 %1964
  %1966 = vrot.lane.b32.xlu0 %v1753, 126
  %v1967 = vpop.permute.xlu0 %1966
  %1968 = vrot.lane.b32.xlu0 %v1754, 126
  %v1969 = vpop.permute.xlu0 %1968
  %1970 = vrot.lane.b32.xlu0 %v1755, 126
  %v1971 = vpop.permute.xlu0 %1970
  %1972 = vrot.lane.b32.xlu0 %v1756, 126
  %v1973 = vpop.permute.xlu0 %1972
  %1974 = vrot.lane.b32.xlu0 %v1757, 126
  %v1975 = vpop.permute.xlu0 %1974
  %1976 = vrot.lane.b32.xlu0 %v1758, 126
  %v1977 = vpop.permute.xlu0 %1976
  %1978 = vrot.lane.b32.xlu0 %v1759, 126
  %v1979 = vpop.permute.xlu0 %1978
  %1980 = vrot.lane.b32.xlu0 %v1760, 126
  %v1981 = vpop.permute.xlu0 %1980
  %1982 = vrot.lane.b32.xlu0 %v1761, 126
  %v1983 = vpop.permute.xlu0 %1982
  %1984 = vrot.lane.b32.xlu0 %v1762, 126
  %v1985 = vpop.permute.xlu0 %1984
  %1986 = vrot.lane.b32.xlu0 %v1763, 126
  %v1987 = vpop.permute.xlu0 %1986
  %1988 = vrot.lane.b32.xlu0 %v1764, 126
  %v1989 = vpop.permute.xlu0 %1988
  %1990 = vrot.lane.b32.xlu0 %v1765, 126
  %v1991 = vpop.permute.xlu0 %1990
  %1992 = vrot.lane.b32.xlu0 %v1766, 126
  %v1993 = vpop.permute.xlu0 %1992
  %1994 = vrot.lane.b32.xlu0 %v1767, 126
  %v1995 = vpop.permute.xlu0 %1994
  %1996 = vrot.lane.b32.xlu0 %v1768, 126
  %v1997 = vpop.permute.xlu0 %1996
  %1998 = vrot.lane.b32.xlu0 %v1769, 126
  %v1999 = vpop.permute.xlu0 %1998
  %2000 = vrot.lane.b32.xlu0 %v1770, 126
  %v2001 = vpop.permute.xlu0 %2000
  %2002 = vrot.lane.b32.xlu0 %v1771, 126
  %v2003 = vpop.permute.xlu0 %2002
  %2004 = vrot.lane.b32.xlu0 %v1772, 126
  %v2005 = vpop.permute.xlu0 %2004
  %2006 = vrot.lane.b32.xlu0 %v1773, 126
  %v2007 = vpop.permute.xlu0 %2006
  %2008 = vrot.lane.b32.xlu0 %v1774, 126
  %v2009 = vpop.permute.xlu0 %2008
  %2010 = vrot.lane.b32.xlu0 %v1775, 126
  %v2011 = vpop.permute.xlu0 %2010
  %2012 = vrot.lane.b32.xlu0 %v1776, 126
  %v2013 = vpop.permute.xlu0 %2012
  %2014 = vrot.lane.b32.xlu0 %v1777, 126
  %v2015 = vpop.permute.xlu0 %2014
  %2016 = vrot.lane.b32.xlu0 %v1778, 126
  %v2017 = vpop.permute.xlu0 %2016
  %2018 = vrot.lane.b32.xlu0 %v1779, 126
  %v2019 = vpop.permute.xlu0 %2018
  %2020 = vrot.lane.b32.xlu0 %v1780, 126
  %v2021 = vpop.permute.xlu0 %2020
  %2022 = vrot.lane.b32.xlu0 %v1781, 126
  %v2023 = vpop.permute.xlu0 %2022
  %2024 = vrot.lane.b32.xlu0 %v1782, 126
  %v2025 = vpop.permute.xlu0 %2024
  %2026 = vrot.lane.b32.xlu0 %v1783, 126
  %v2027 = vpop.permute.xlu0 %2026
  %2028 = vrot.lane.b32.xlu0 %v1784, 126
  %v2029 = vpop.permute.xlu0 %2028
  %v2030 = vsel %vm125, %v1891, %v1893
  %v2031 = vsel %vm125, %v1893, %v1895
  %v2032 = vsel %vm125, %v1895, %v1897
  %v2033 = vsel %vm125, %v1897, %v1899
  %v2034 = vsel %vm125, %v1899, %v1901
  %v2035 = vsel %vm125, %v1901, %v1903
  %v2036 = vsel %vm125, %v1905, %v1907
  %v2037 = vsel %vm125, %v1907, %v1909
  %v2038 = vsel %vm125, %v1909, %v1911
  %v2039 = vsel %vm125, %v1911, %v1913
  %v2040 = vsel %vm125, %v1913, %v1915
  %v2041 = vsel %vm125, %v1915, %v1917
  %v2042 = vsel %vm125, %v1919, %v1921
  %v2043 = vsel %vm125, %v1921, %v1923
  %v2044 = vsel %vm125, %v1923, %v1925
  %v2045 = vsel %vm125, %v1925, %v1927
  %v2046 = vsel %vm125, %v1927, %v1929
  %v2047 = vsel %vm125, %v1929, %v1931
  %v2048 = vsel %vm125, %v1933, %v1935
  %v2049 = vsel %vm125, %v1935, %v1937
  %v2050 = vsel %vm125, %v1937, %v1939
  %v2051 = vsel %vm125, %v1939, %v1941
  %v2052 = vsel %vm125, %v1941, %v1943
  %v2053 = vsel %vm125, %v1943, %v1945
  %v2054 = vsel %vm125, %v1947, %v1949
  %v2055 = vsel %vm125, %v1949, %v1951
  %v2056 = vsel %vm125, %v1951, %v1953
  %v2057 = vsel %vm125, %v1953, %v1955
  %v2058 = vsel %vm125, %v1955, %v1957
  %v2059 = vsel %vm125, %v1957, %v1959
  %v2060 = vsel %vm125, %v1961, %v1963
  %v2061 = vsel %vm125, %v1963, %v1965
  %v2062 = vsel %vm125, %v1965, %v1967
  %v2063 = vsel %vm125, %v1967, %v1969
  %v2064 = vsel %vm125, %v1969, %v1971
  %v2065 = vsel %vm125, %v1971, %v1973
  %v2066 = vsel %vm125, %v1975, %v1977
  %v2067 = vsel %vm125, %v1977, %v1979
  %v2068 = vsel %vm125, %v1979, %v1981
  %v2069 = vsel %vm125, %v1981, %v1983
  %v2070 = vsel %vm125, %v1983, %v1985
  %v2071 = vsel %vm125, %v1985, %v1987
  %v2072 = vsel %vm125, %v1989, %v1991
  %v2073 = vsel %vm125, %v1991, %v1993
  %v2074 = vsel %vm125, %v1993, %v1995
  %v2075 = vsel %vm125, %v1995, %v1997
  %v2076 = vsel %vm125, %v1997, %v1999
  %v2077 = vsel %vm125, %v1999, %v2001
  %v2078 = vsel %vm125, %v2003, %v2005
  %v2079 = vsel %vm125, %v2005, %v2007
  %v2080 = vsel %vm125, %v2007, %v2009
  %v2081 = vsel %vm125, %v2009, %v2011
  %v2082 = vsel %vm125, %v2011, %v2013
  %v2083 = vsel %vm125, %v2013, %v2015
  %v2084 = vsel %vm125, %v2017, %v2019
  %v2085 = vsel %vm125, %v2019, %v2021
  %v2086 = vsel %vm125, %v2021, %v2023
  %v2087 = vsel %vm125, %v2023, %v2025
  %v2088 = vsel %vm125, %v2025, %v2027
  %v2089 = vsel %vm125, %v2027, %v2029
  %v2160 = vsel %vm139, %v1903, 0.0
  %v2161 = vsel %vm139, %v1917, 0.0
  %v2162 = vsel %vm139, %v1931, 0.0
  %v2163 = vsel %vm139, %v1945, 0.0
  %v2164 = vsel %vm139, %v1959, 0.0
  %v2165 = vsel %vm139, %v1973, 0.0
  %v2166 = vsel %vm139, %v1987, 0.0
  %v2167 = vsel %vm139, %v2001, 0.0
  %v2168 = vsel %vm139, %v2015, 0.0
  %v2169 = vsel %vm139, %v2029, 0.0
  %2170 = vrot.lane.b32.xlu0 %v1715, 124
  %v2171 = vpop.permute.xlu0 %2170
  %2172 = vrot.lane.b32.xlu0 %v1716, 124
  %v2173 = vpop.permute.xlu0 %2172
  %2174 = vrot.lane.b32.xlu0 %v1717, 124
  %v2175 = vpop.permute.xlu0 %2174
  %2176 = vrot.lane.b32.xlu0 %v1718, 124
  %v2177 = vpop.permute.xlu0 %2176
  %2178 = vrot.lane.b32.xlu0 %v1719, 124
  %v2179 = vpop.permute.xlu0 %2178
  %2180 = vrot.lane.b32.xlu0 %v1720, 124
  %v2181 = vpop.permute.xlu0 %2180
  %2182 = vrot.lane.b32.xlu0 %v1721, 124
  %v2183 = vpop.permute.xlu0 %2182
  %2184 = vrot.lane.b32.xlu0 %v1722, 124
  %v2185 = vpop.permute.xlu0 %2184
  %2186 = vrot.lane.b32.xlu0 %v1723, 124
  %v2187 = vpop.permute.xlu0 %2186
  %2188 = vrot.lane.b32.xlu0 %v1724, 124
  %v2189 = vpop.permute.xlu0 %2188
  %2190 = vrot.lane.b32.xlu0 %v1725, 124
  %v2191 = vpop.permute.xlu0 %2190
  %2192 = vrot.lane.b32.xlu0 %v1726, 124
  %v2193 = vpop.permute.xlu0 %2192
  %2194 = vrot.lane.b32.xlu0 %v1727, 124
  %v2195 = vpop.permute.xlu0 %2194
  %2196 = vrot.lane.b32.xlu0 %v1728, 124
  %v2197 = vpop.permute.xlu0 %2196
  %2198 = vrot.lane.b32.xlu0 %v1729, 124
  %v2199 = vpop.permute.xlu0 %2198
  %2200 = vrot.lane.b32.xlu0 %v1730, 124
  %v2201 = vpop.permute.xlu0 %2200
  %2202 = vrot.lane.b32.xlu0 %v1731, 124
  %v2203 = vpop.permute.xlu0 %2202
  %2204 = vrot.lane.b32.xlu0 %v1732, 124
  %v2205 = vpop.permute.xlu0 %2204
  %2206 = vrot.lane.b32.xlu0 %v1733, 124
  %v2207 = vpop.permute.xlu0 %2206
  %2208 = vrot.lane.b32.xlu0 %v1734, 124
  %v2209 = vpop.permute.xlu0 %2208
  %2210 = vrot.lane.b32.xlu0 %v1735, 124
  %v2211 = vpop.permute.xlu0 %2210
  %2212 = vrot.lane.b32.xlu0 %v1736, 124
  %v2213 = vpop.permute.xlu0 %2212
  %2214 = vrot.lane.b32.xlu0 %v1737, 124
  %v2215 = vpop.permute.xlu0 %2214
  %2216 = vrot.lane.b32.xlu0 %v1738, 124
  %v2217 = vpop.permute.xlu0 %2216
  %2218 = vrot.lane.b32.xlu0 %v1739, 124
  %v2219 = vpop.permute.xlu0 %2218
  %2220 = vrot.lane.b32.xlu0 %v1740, 124
  %v2221 = vpop.permute.xlu0 %2220
  %2222 = vrot.lane.b32.xlu0 %v1741, 124
  %v2223 = vpop.permute.xlu0 %2222
  %2224 = vrot.lane.b32.xlu0 %v1742, 124
  %v2225 = vpop.permute.xlu0 %2224
  %2226 = vrot.lane.b32.xlu0 %v1743, 124
  %v2227 = vpop.permute.xlu0 %2226
  %2228 = vrot.lane.b32.xlu0 %v1744, 124
  %v2229 = vpop.permute.xlu0 %2228
  %2230 = vrot.lane.b32.xlu0 %v1745, 124
  %v2231 = vpop.permute.xlu0 %2230
  %2232 = vrot.lane.b32.xlu0 %v1746, 124
  %v2233 = vpop.permute.xlu0 %2232
  %2234 = vrot.lane.b32.xlu0 %v1747, 124
  %v2235 = vpop.permute.xlu0 %2234
  %2236 = vrot.lane.b32.xlu0 %v1748, 124
  %v2237 = vpop.permute.xlu0 %2236
  %2238 = vrot.lane.b32.xlu0 %v1749, 124
  %v2239 = vpop.permute.xlu0 %2238
  %2240 = vrot.lane.b32.xlu0 %v1750, 124
  %v2241 = vpop.permute.xlu0 %2240
  %2242 = vrot.lane.b32.xlu0 %v1751, 124
  %v2243 = vpop.permute.xlu0 %2242
  %2244 = vrot.lane.b32.xlu0 %v1752, 124
  %v2245 = vpop.permute.xlu0 %2244
  %2246 = vrot.lane.b32.xlu0 %v1753, 124
  %v2247 = vpop.permute.xlu0 %2246
  %2248 = vrot.lane.b32.xlu0 %v1754, 124
  %v2249 = vpop.permute.xlu0 %2248
  %2250 = vrot.lane.b32.xlu0 %v1755, 124
  %v2251 = vpop.permute.xlu0 %2250
  %2252 = vrot.lane.b32.xlu0 %v1756, 124
  %v2253 = vpop.permute.xlu0 %2252
  %2254 = vrot.lane.b32.xlu0 %v1757, 124
  %v2255 = vpop.permute.xlu0 %2254
  %2256 = vrot.lane.b32.xlu0 %v1758, 124
  %v2257 = vpop.permute.xlu0 %2256
  %2258 = vrot.lane.b32.xlu0 %v1759, 124
  %v2259 = vpop.permute.xlu0 %2258
  %2260 = vrot.lane.b32.xlu0 %v1760, 124
  %v2261 = vpop.permute.xlu0 %2260
  %2262 = vrot.lane.b32.xlu0 %v1761, 124
  %v2263 = vpop.permute.xlu0 %2262
  %2264 = vrot.lane.b32.xlu0 %v1762, 124
  %v2265 = vpop.permute.xlu0 %2264
  %2266 = vrot.lane.b32.xlu0 %v1763, 124
  %v2267 = vpop.permute.xlu0 %2266
  %2268 = vrot.lane.b32.xlu0 %v1764, 124
  %v2269 = vpop.permute.xlu0 %2268
  %2270 = vrot.lane.b32.xlu0 %v1765, 124
  %v2271 = vpop.permute.xlu0 %2270
  %2272 = vrot.lane.b32.xlu0 %v1766, 124
  %v2273 = vpop.permute.xlu0 %2272
  %2274 = vrot.lane.b32.xlu0 %v1767, 124
  %v2275 = vpop.permute.xlu0 %2274
  %2276 = vrot.lane.b32.xlu0 %v1768, 124
  %v2277 = vpop.permute.xlu0 %2276
  %2278 = vrot.lane.b32.xlu0 %v1769, 124
  %v2279 = vpop.permute.xlu0 %2278
  %2280 = vrot.lane.b32.xlu0 %v1770, 124
  %v2281 = vpop.permute.xlu0 %2280
  %2282 = vrot.lane.b32.xlu0 %v1771, 124
  %v2283 = vpop.permute.xlu0 %2282
  %2284 = vrot.lane.b32.xlu0 %v1772, 124
  %v2285 = vpop.permute.xlu0 %2284
  %2286 = vrot.lane.b32.xlu0 %v1773, 124
  %v2287 = vpop.permute.xlu0 %2286
  %2288 = vrot.lane.b32.xlu0 %v1774, 124
  %v2289 = vpop.permute.xlu0 %2288
  %2290 = vrot.lane.b32.xlu0 %v1775, 124
  %v2291 = vpop.permute.xlu0 %2290
  %2292 = vrot.lane.b32.xlu0 %v1776, 124
  %v2293 = vpop.permute.xlu0 %2292
  %2294 = vrot.lane.b32.xlu0 %v1777, 124
  %v2295 = vpop.permute.xlu0 %2294
  %2296 = vrot.lane.b32.xlu0 %v1778, 124
  %v2297 = vpop.permute.xlu0 %2296
  %2298 = vrot.lane.b32.xlu0 %v1779, 124
  %v2299 = vpop.permute.xlu0 %2298
  %2300 = vrot.lane.b32.xlu0 %v1780, 124
  %v2301 = vpop.permute.xlu0 %2300
  %2302 = vrot.lane.b32.xlu0 %v1781, 124
  %v2303 = vpop.permute.xlu0 %2302
  %2304 = vrot.lane.b32.xlu0 %v1782, 124
  %v2305 = vpop.permute.xlu0 %2304
  %2306 = vrot.lane.b32.xlu0 %v1783, 124
  %v2307 = vpop.permute.xlu0 %2306
  %2308 = vrot.lane.b32.xlu0 %v1784, 124
  %v2309 = vpop.permute.xlu0 %2308
  %vm2310 = vcmask 1014784
  %v2311 = vsel %vm2310, %v2171, %v2173
  %v2312 = vsel %vm2310, %v2173, %v2175
  %v2313 = vsel %vm2310, %v2175, %v2177
  %v2314 = vsel %vm2310, %v2177, %v2179
  %v2315 = vsel %vm2310, %v2179, %v2181
  %v2316 = vsel %vm2310, %v2181, %v2183
  %v2317 = vsel %vm2310, %v2185, %v2187
  %v2318 = vsel %vm2310, %v2187, %v2189
  %v2319 = vsel %vm2310, %v2189, %v2191
  %v2320 = vsel %vm2310, %v2191, %v2193
  %v2321 = vsel %vm2310, %v2193, %v2195
  %v2322 = vsel %vm2310, %v2195, %v2197
  %v2323 = vsel %vm2310, %v2199, %v2201
  %v2324 = vsel %vm2310, %v2201, %v2203
  %v2325 = vsel %vm2310, %v2203, %v2205
  %v2326 = vsel %vm2310, %v2205, %v2207
  %v2327 = vsel %vm2310, %v2207, %v2209
  %v2328 = vsel %vm2310, %v2209, %v2211
  %v2329 = vsel %vm2310, %v2213, %v2215
  %v2330 = vsel %vm2310, %v2215, %v2217
  %v2331 = vsel %vm2310, %v2217, %v2219
  %v2332 = vsel %vm2310, %v2219, %v2221
  %v2333 = vsel %vm2310, %v2221, %v2223
  %v2334 = vsel %vm2310, %v2223, %v2225
  %v2335 = vsel %vm2310, %v2227, %v2229
  %v2336 = vsel %vm2310, %v2229, %v2231
  %v2337 = vsel %vm2310, %v2231, %v2233
  %v2338 = vsel %vm2310, %v2233, %v2235
  %v2339 = vsel %vm2310, %v2235, %v2237
  %v2340 = vsel %vm2310, %v2237, %v2239
  %v2341 = vsel %vm2310, %v2241, %v2243
  %v2342 = vsel %vm2310, %v2243, %v2245
  %v2343 = vsel %vm2310, %v2245, %v2247
  %v2344 = vsel %vm2310, %v2247, %v2249
  %v2345 = vsel %vm2310, %v2249, %v2251
  %v2346 = vsel %vm2310, %v2251, %v2253
  %v2347 = vsel %vm2310, %v2255, %v2257
  %v2348 = vsel %vm2310, %v2257, %v2259
  %v2349 = vsel %vm2310, %v2259, %v2261
  %v2350 = vsel %vm2310, %v2261, %v2263
  %v2351 = vsel %vm2310, %v2263, %v2265
  %v2352 = vsel %vm2310, %v2265, %v2267
  %v2353 = vsel %vm2310, %v2269, %v2271
  %v2354 = vsel %vm2310, %v2271, %v2273
  %v2355 = vsel %vm2310, %v2273, %v2275
  %v2356 = vsel %vm2310, %v2275, %v2277
  %v2357 = vsel %vm2310, %v2277, %v2279
  %v2358 = vsel %vm2310, %v2279, %v2281
  %v2359 = vsel %vm2310, %v2283, %v2285
  %v2360 = vsel %vm2310, %v2285, %v2287
  %v2361 = vsel %vm2310, %v2287, %v2289
  %v2362 = vsel %vm2310, %v2289, %v2291
  %v2363 = vsel %vm2310, %v2291, %v2293
  %v2364 = vsel %vm2310, %v2293, %v2295
  %v2365 = vsel %vm2310, %v2297, %v2299
  %v2366 = vsel %vm2310, %v2299, %v2301
  %v2367 = vsel %vm2310, %v2301, %v2303
  %v2368 = vsel %vm2310, %v2303, %v2305
  %v2369 = vsel %vm2310, %v2305, %v2307
  %v2370 = vsel %vm2310, %v2307, %v2309
  %vm2441 = vcmask 97280
  %v2442 = vsel %vm2441, %v2183, 0.0
  %v2443 = vsel %vm2441, %v2197, 0.0
  %v2444 = vsel %vm2441, %v2211, 0.0
  %v2445 = vsel %vm2441, %v2225, 0.0
  %v2446 = vsel %vm2441, %v2239, 0.0
  %v2447 = vsel %vm2441, %v2253, 0.0
  %v2448 = vsel %vm2441, %v2267, 0.0
  %v2449 = vsel %vm2441, %v2281, 0.0
  %v2450 = vsel %vm2441, %v2295, 0.0
  %v2451 = vsel %vm2441, %v2309, 0.0
  %2452 = vrot.lane.b32.xlu0 %v1715, 72
  %v2453 = vpop.permute.xlu0 %2452
  %2454 = vrot.lane.b32.xlu0 %v1716, 72
  %v2455 = vpop.permute.xlu0 %2454
  %2456 = vrot.lane.b32.xlu0 %v1717, 72
  %v2457 = vpop.permute.xlu0 %2456
  %2458 = vrot.lane.b32.xlu0 %v1718, 72
  %v2459 = vpop.permute.xlu0 %2458
  %2460 = vrot.lane.b32.xlu0 %v1719, 72
  %v2461 = vpop.permute.xlu0 %2460
  %2462 = vrot.lane.b32.xlu0 %v1720, 72
  %v2463 = vpop.permute.xlu0 %2462
  %2464 = vrot.lane.b32.xlu0 %v1721, 72
  %v2465 = vpop.permute.xlu0 %2464
  %2466 = vrot.lane.b32.xlu0 %v1722, 72
  %v2467 = vpop.permute.xlu0 %2466
  %2468 = vrot.lane.b32.xlu0 %v1723, 72
  %v2469 = vpop.permute.xlu0 %2468
  %2470 = vrot.lane.b32.xlu0 %v1724, 72
  %v2471 = vpop.permute.xlu0 %2470
  %2472 = vrot.lane.b32.xlu0 %v1725, 72
  %v2473 = vpop.permute.xlu0 %2472
  %2474 = vrot.lane.b32.xlu0 %v1726, 72
  %v2475 = vpop.permute.xlu0 %2474
  %2476 = vrot.lane.b32.xlu0 %v1727, 72
  %v2477 = vpop.permute.xlu0 %2476
  %2478 = vrot.lane.b32.xlu0 %v1728, 72
  %v2479 = vpop.permute.xlu0 %2478
  %2480 = vrot.lane.b32.xlu0 %v1729, 72
  %v2481 = vpop.permute.xlu0 %2480
  %2482 = vrot.lane.b32.xlu0 %v1730, 72
  %v2483 = vpop.permute.xlu0 %2482
  %2484 = vrot.lane.b32.xlu0 %v1731, 72
  %v2485 = vpop.permute.xlu0 %2484
  %2486 = vrot.lane.b32.xlu0 %v1732, 72
  %v2487 = vpop.permute.xlu0 %2486
  %2488 = vrot.lane.b32.xlu0 %v1733, 72
  %v2489 = vpop.permute.xlu0 %2488
  %2490 = vrot.lane.b32.xlu0 %v1734, 72
  %v2491 = vpop.permute.xlu0 %2490
  %2492 = vrot.lane.b32.xlu0 %v1735, 72
  %v2493 = vpop.permute.xlu0 %2492
  %2494 = vrot.lane.b32.xlu0 %v1736, 72
  %v2495 = vpop.permute.xlu0 %2494
  %2496 = vrot.lane.b32.xlu0 %v1737, 72
  %v2497 = vpop.permute.xlu0 %2496
  %2498 = vrot.lane.b32.xlu0 %v1738, 72
  %v2499 = vpop.permute.xlu0 %2498
  %2500 = vrot.lane.b32.xlu0 %v1739, 72
  %v2501 = vpop.permute.xlu0 %2500
  %2502 = vrot.lane.b32.xlu0 %v1740, 72
  %v2503 = vpop.permute.xlu0 %2502
  %2504 = vrot.lane.b32.xlu0 %v1741, 72
  %v2505 = vpop.permute.xlu0 %2504
  %2506 = vrot.lane.b32.xlu0 %v1742, 72
  %v2507 = vpop.permute.xlu0 %2506
  %2508 = vrot.lane.b32.xlu0 %v1743, 72
  %v2509 = vpop.permute.xlu0 %2508
  %2510 = vrot.lane.b32.xlu0 %v1744, 72
  %v2511 = vpop.permute.xlu0 %2510
  %2512 = vrot.lane.b32.xlu0 %v1745, 72
  %v2513 = vpop.permute.xlu0 %2512
  %2514 = vrot.lane.b32.xlu0 %v1746, 72
  %v2515 = vpop.permute.xlu0 %2514
  %2516 = vrot.lane.b32.xlu0 %v1747, 72
  %v2517 = vpop.permute.xlu0 %2516
  %2518 = vrot.lane.b32.xlu0 %v1748, 72
  %v2519 = vpop.permute.xlu0 %2518
  %2520 = vrot.lane.b32.xlu0 %v1749, 72
  %v2521 = vpop.permute.xlu0 %2520
  %2522 = vrot.lane.b32.xlu0 %v1750, 72
  %v2523 = vpop.permute.xlu0 %2522
  %2524 = vrot.lane.b32.xlu0 %v1751, 72
  %v2525 = vpop.permute.xlu0 %2524
  %2526 = vrot.lane.b32.xlu0 %v1752, 72
  %v2527 = vpop.permute.xlu0 %2526
  %2528 = vrot.lane.b32.xlu0 %v1753, 72
  %v2529 = vpop.permute.xlu0 %2528
  %2530 = vrot.lane.b32.xlu0 %v1754, 72
  %v2531 = vpop.permute.xlu0 %2530
  %2532 = vrot.lane.b32.xlu0 %v1755, 72
  %v2533 = vpop.permute.xlu0 %2532
  %2534 = vrot.lane.b32.xlu0 %v1756, 72
  %v2535 = vpop.permute.xlu0 %2534
  %2536 = vrot.lane.b32.xlu0 %v1757, 72
  %v2537 = vpop.permute.xlu0 %2536
  %2538 = vrot.lane.b32.xlu0 %v1758, 72
  %v2539 = vpop.permute.xlu0 %2538
  %2540 = vrot.lane.b32.xlu0 %v1759, 72
  %v2541 = vpop.permute.xlu0 %2540
  %2542 = vrot.lane.b32.xlu0 %v1760, 72
  %v2543 = vpop.permute.xlu0 %2542
  %2544 = vrot.lane.b32.xlu0 %v1761, 72
  %v2545 = vpop.permute.xlu0 %2544
  %2546 = vrot.lane.b32.xlu0 %v1762, 72
  %v2547 = vpop.permute.xlu0 %2546
  %2548 = vrot.lane.b32.xlu0 %v1763, 72
  %v2549 = vpop.permute.xlu0 %2548
  %2550 = vrot.lane.b32.xlu0 %v1764, 72
  %v2551 = vpop.permute.xlu0 %2550
  %2552 = vrot.lane.b32.xlu0 %v1765, 72
  %v2553 = vpop.permute.xlu0 %2552
  %2554 = vrot.lane.b32.xlu0 %v1766, 72
  %v2555 = vpop.permute.xlu0 %2554
  %2556 = vrot.lane.b32.xlu0 %v1767, 72
  %v2557 = vpop.permute.xlu0 %2556
  %2558 = vrot.lane.b32.xlu0 %v1768, 72
  %v2559 = vpop.permute.xlu0 %2558
  %2560 = vrot.lane.b32.xlu0 %v1769, 72
  %v2561 = vpop.permute.xlu0 %2560
  %2562 = vrot.lane.b32.xlu0 %v1770, 72
  %v2563 = vpop.permute.xlu0 %2562
  %2564 = vrot.lane.b32.xlu0 %v1771, 72
  %v2565 = vpop.permute.xlu0 %2564
  %2566 = vrot.lane.b32.xlu0 %v1772, 72
  %v2567 = vpop.permute.xlu0 %2566
  %2568 = vrot.lane.b32.xlu0 %v1773, 72
  %v2569 = vpop.permute.xlu0 %2568
  %2570 = vrot.lane.b32.xlu0 %v1774, 72
  %v2571 = vpop.permute.xlu0 %2570
  %2572 = vrot.lane.b32.xlu0 %v1775, 72
  %v2573 = vpop.permute.xlu0 %2572
  %2574 = vrot.lane.b32.xlu0 %v1776, 72
  %v2575 = vpop.permute.xlu0 %2574
  %2576 = vrot.lane.b32.xlu0 %v1777, 72
  %v2577 = vpop.permute.xlu0 %2576
  %2578 = vrot.lane.b32.xlu0 %v1778, 72
  %v2579 = vpop.permute.xlu0 %2578
  %2580 = vrot.lane.b32.xlu0 %v1779, 72
  %v2581 = vpop.permute.xlu0 %2580
  %2582 = vrot.lane.b32.xlu0 %v1780, 72
  %v2583 = vpop.permute.xlu0 %2582
  %2584 = vrot.lane.b32.xlu0 %v1781, 72
  %v2585 = vpop.permute.xlu0 %2584
  %2586 = vrot.lane.b32.xlu0 %v1782, 72
  %v2587 = vpop.permute.xlu0 %2586
  %2588 = vrot.lane.b32.xlu0 %v1783, 72
  %v2589 = vpop.permute.xlu0 %2588
  %2590 = vrot.lane.b32.xlu0 %v1784, 72
  %v2591 = vpop.permute.xlu0 %2590
  %v2592 = vsel %vm242, %v2453, %v2455
  %v2593 = vsel %vm242, %v2455, %v2457
  %v2594 = vsel %vm242, %v2457, %v2459
  %v2595 = vsel %vm242, %v2459, %v2461
  %v2596 = vsel %vm242, %v2461, %v2463
  %v2597 = vsel %vm242, %v2463, %v2465
  %v2598 = vsel %vm242, %v2467, %v2469
  %v2599 = vsel %vm242, %v2469, %v2471
  %v2600 = vsel %vm242, %v2471, %v2473
  %v2601 = vsel %vm242, %v2473, %v2475
  %v2602 = vsel %vm242, %v2475, %v2477
  %v2603 = vsel %vm242, %v2477, %v2479
  %v2604 = vsel %vm242, %v2481, %v2483
  %v2605 = vsel %vm242, %v2483, %v2485
  %v2606 = vsel %vm242, %v2485, %v2487
  %v2607 = vsel %vm242, %v2487, %v2489
  %v2608 = vsel %vm242, %v2489, %v2491
  %v2609 = vsel %vm242, %v2491, %v2493
  %v2610 = vsel %vm242, %v2495, %v2497
  %v2611 = vsel %vm242, %v2497, %v2499
  %v2612 = vsel %vm242, %v2499, %v2501
  %v2613 = vsel %vm242, %v2501, %v2503
  %v2614 = vsel %vm242, %v2503, %v2505
  %v2615 = vsel %vm242, %v2505, %v2507
  %v2616 = vsel %vm242, %v2509, %v2511
  %v2617 = vsel %vm242, %v2511, %v2513
  %v2618 = vsel %vm242, %v2513, %v2515
  %v2619 = vsel %vm242, %v2515, %v2517
  %v2620 = vsel %vm242, %v2517, %v2519
  %v2621 = vsel %vm242, %v2519, %v2521
  %v2622 = vsel %vm242, %v2523, %v2525
  %v2623 = vsel %vm242, %v2525, %v2527
  %v2624 = vsel %vm242, %v2527, %v2529
  %v2625 = vsel %vm242, %v2529, %v2531
  %v2626 = vsel %vm242, %v2531, %v2533
  %v2627 = vsel %vm242, %v2533, %v2535
  %v2628 = vsel %vm242, %v2537, %v2539
  %v2629 = vsel %vm242, %v2539, %v2541
  %v2630 = vsel %vm242, %v2541, %v2543
  %v2631 = vsel %vm242, %v2543, %v2545
  %v2632 = vsel %vm242, %v2545, %v2547
  %v2633 = vsel %vm242, %v2547, %v2549
  %v2634 = vsel %vm242, %v2551, %v2553
  %v2635 = vsel %vm242, %v2553, %v2555
  %v2636 = vsel %vm242, %v2555, %v2557
  %v2637 = vsel %vm242, %v2557, %v2559
  %v2638 = vsel %vm242, %v2559, %v2561
  %v2639 = vsel %vm242, %v2561, %v2563
  %v2640 = vsel %vm242, %v2565, %v2567
  %v2641 = vsel %vm242, %v2567, %v2569
  %v2642 = vsel %vm242, %v2569, %v2571
  %v2643 = vsel %vm242, %v2571, %v2573
  %v2644 = vsel %vm242, %v2573, %v2575
  %v2645 = vsel %vm242, %v2575, %v2577
  %v2646 = vsel %vm242, %v2579, %v2581
  %v2647 = vsel %vm242, %v2581, %v2583
  %v2648 = vsel %vm242, %v2583, %v2585
  %v2649 = vsel %vm242, %v2585, %v2587
  %v2650 = vsel %vm242, %v2587, %v2589
  %v2651 = vsel %vm242, %v2589, %v2591
  %v2712 = vsel %vm255, %v2597, 0.0
  %v2713 = vsel %vm255, %v2603, 0.0
  %v2714 = vsel %vm255, %v2609, 0.0
  %v2715 = vsel %vm255, %v2615, 0.0
  %v2716 = vsel %vm255, %v2621, 0.0
  %v2717 = vsel %vm255, %v2627, 0.0
  %v2718 = vsel %vm255, %v2633, 0.0
  %v2719 = vsel %vm255, %v2639, 0.0
  %v2720 = vsel %vm255, %v2645, 0.0
  %v2721 = vsel %vm255, %v2651, 0.0
  %2722 = vrot.lane.b32.xlu0 %v1715, 70
  %v2723 = vpop.permute.xlu0 %2722
  %2724 = vrot.lane.b32.xlu0 %v1716, 70
  %v2725 = vpop.permute.xlu0 %2724
  %2726 = vrot.lane.b32.xlu0 %v1717, 70
  %v2727 = vpop.permute.xlu0 %2726
  %2728 = vrot.lane.b32.xlu0 %v1718, 70
  %v2729 = vpop.permute.xlu0 %2728
  %2730 = vrot.lane.b32.xlu0 %v1719, 70
  %v2731 = vpop.permute.xlu0 %2730
  %2732 = vrot.lane.b32.xlu0 %v1720, 70
  %v2733 = vpop.permute.xlu0 %2732
  %2734 = vrot.lane.b32.xlu0 %v1721, 70
  %v2735 = vpop.permute.xlu0 %2734
  %2736 = vrot.lane.b32.xlu0 %v1722, 70
  %v2737 = vpop.permute.xlu0 %2736
  %2738 = vrot.lane.b32.xlu0 %v1723, 70
  %v2739 = vpop.permute.xlu0 %2738
  %2740 = vrot.lane.b32.xlu0 %v1724, 70
  %v2741 = vpop.permute.xlu0 %2740
  %2742 = vrot.lane.b32.xlu0 %v1725, 70
  %v2743 = vpop.permute.xlu0 %2742
  %2744 = vrot.lane.b32.xlu0 %v1726, 70
  %v2745 = vpop.permute.xlu0 %2744
  %2746 = vrot.lane.b32.xlu0 %v1727, 70
  %v2747 = vpop.permute.xlu0 %2746
  %2748 = vrot.lane.b32.xlu0 %v1728, 70
  %v2749 = vpop.permute.xlu0 %2748
  %2750 = vrot.lane.b32.xlu0 %v1729, 70
  %v2751 = vpop.permute.xlu0 %2750
  %2752 = vrot.lane.b32.xlu0 %v1730, 70
  %v2753 = vpop.permute.xlu0 %2752
  %2754 = vrot.lane.b32.xlu0 %v1731, 70
  %v2755 = vpop.permute.xlu0 %2754
  %2756 = vrot.lane.b32.xlu0 %v1732, 70
  %v2757 = vpop.permute.xlu0 %2756
  %2758 = vrot.lane.b32.xlu0 %v1733, 70
  %v2759 = vpop.permute.xlu0 %2758
  %2760 = vrot.lane.b32.xlu0 %v1734, 70
  %v2761 = vpop.permute.xlu0 %2760
  %2762 = vrot.lane.b32.xlu0 %v1735, 70
  %v2763 = vpop.permute.xlu0 %2762
  %2764 = vrot.lane.b32.xlu0 %v1736, 70
  %v2765 = vpop.permute.xlu0 %2764
  %2766 = vrot.lane.b32.xlu0 %v1737, 70
  %v2767 = vpop.permute.xlu0 %2766
  %2768 = vrot.lane.b32.xlu0 %v1738, 70
  %v2769 = vpop.permute.xlu0 %2768
  %2770 = vrot.lane.b32.xlu0 %v1739, 70
  %v2771 = vpop.permute.xlu0 %2770
  %2772 = vrot.lane.b32.xlu0 %v1740, 70
  %v2773 = vpop.permute.xlu0 %2772
  %2774 = vrot.lane.b32.xlu0 %v1741, 70
  %v2775 = vpop.permute.xlu0 %2774
  %2776 = vrot.lane.b32.xlu0 %v1742, 70
  %v2777 = vpop.permute.xlu0 %2776
  %2778 = vrot.lane.b32.xlu0 %v1743, 70
  %v2779 = vpop.permute.xlu0 %2778
  %2780 = vrot.lane.b32.xlu0 %v1744, 70
  %v2781 = vpop.permute.xlu0 %2780
  %2782 = vrot.lane.b32.xlu0 %v1745, 70
  %v2783 = vpop.permute.xlu0 %2782
  %2784 = vrot.lane.b32.xlu0 %v1746, 70
  %v2785 = vpop.permute.xlu0 %2784
  %2786 = vrot.lane.b32.xlu0 %v1747, 70
  %v2787 = vpop.permute.xlu0 %2786
  %2788 = vrot.lane.b32.xlu0 %v1748, 70
  %v2789 = vpop.permute.xlu0 %2788
  %2790 = vrot.lane.b32.xlu0 %v1749, 70
  %v2791 = vpop.permute.xlu0 %2790
  %2792 = vrot.lane.b32.xlu0 %v1750, 70
  %v2793 = vpop.permute.xlu0 %2792
  %2794 = vrot.lane.b32.xlu0 %v1751, 70
  %v2795 = vpop.permute.xlu0 %2794
  %2796 = vrot.lane.b32.xlu0 %v1752, 70
  %v2797 = vpop.permute.xlu0 %2796
  %2798 = vrot.lane.b32.xlu0 %v1753, 70
  %v2799 = vpop.permute.xlu0 %2798
  %2800 = vrot.lane.b32.xlu0 %v1754, 70
  %v2801 = vpop.permute.xlu0 %2800
  %2802 = vrot.lane.b32.xlu0 %v1755, 70
  %v2803 = vpop.permute.xlu0 %2802
  %2804 = vrot.lane.b32.xlu0 %v1756, 70
  %v2805 = vpop.permute.xlu0 %2804
  %2806 = vrot.lane.b32.xlu0 %v1757, 70
  %v2807 = vpop.permute.xlu0 %2806
  %2808 = vrot.lane.b32.xlu0 %v1758, 70
  %v2809 = vpop.permute.xlu0 %2808
  %2810 = vrot.lane.b32.xlu0 %v1759, 70
  %v2811 = vpop.permute.xlu0 %2810
  %2812 = vrot.lane.b32.xlu0 %v1760, 70
  %v2813 = vpop.permute.xlu0 %2812
  %2814 = vrot.lane.b32.xlu0 %v1761, 70
  %v2815 = vpop.permute.xlu0 %2814
  %2816 = vrot.lane.b32.xlu0 %v1762, 70
  %v2817 = vpop.permute.xlu0 %2816
  %2818 = vrot.lane.b32.xlu0 %v1763, 70
  %v2819 = vpop.permute.xlu0 %2818
  %2820 = vrot.lane.b32.xlu0 %v1764, 70
  %v2821 = vpop.permute.xlu0 %2820
  %2822 = vrot.lane.b32.xlu0 %v1765, 70
  %v2823 = vpop.permute.xlu0 %2822
  %2824 = vrot.lane.b32.xlu0 %v1766, 70
  %v2825 = vpop.permute.xlu0 %2824
  %2826 = vrot.lane.b32.xlu0 %v1767, 70
  %v2827 = vpop.permute.xlu0 %2826
  %2828 = vrot.lane.b32.xlu0 %v1768, 70
  %v2829 = vpop.permute.xlu0 %2828
  %2830 = vrot.lane.b32.xlu0 %v1769, 70
  %v2831 = vpop.permute.xlu0 %2830
  %2832 = vrot.lane.b32.xlu0 %v1770, 70
  %v2833 = vpop.permute.xlu0 %2832
  %2834 = vrot.lane.b32.xlu0 %v1771, 70
  %v2835 = vpop.permute.xlu0 %2834
  %2836 = vrot.lane.b32.xlu0 %v1772, 70
  %v2837 = vpop.permute.xlu0 %2836
  %2838 = vrot.lane.b32.xlu0 %v1773, 70
  %v2839 = vpop.permute.xlu0 %2838
  %2840 = vrot.lane.b32.xlu0 %v1774, 70
  %v2841 = vpop.permute.xlu0 %2840
  %2842 = vrot.lane.b32.xlu0 %v1775, 70
  %v2843 = vpop.permute.xlu0 %2842
  %2844 = vrot.lane.b32.xlu0 %v1776, 70
  %v2845 = vpop.permute.xlu0 %2844
  %2846 = vrot.lane.b32.xlu0 %v1777, 70
  %v2847 = vpop.permute.xlu0 %2846
  %2848 = vrot.lane.b32.xlu0 %v1778, 70
  %v2849 = vpop.permute.xlu0 %2848
  %2850 = vrot.lane.b32.xlu0 %v1779, 70
  %v2851 = vpop.permute.xlu0 %2850
  %2852 = vrot.lane.b32.xlu0 %v1780, 70
  %v2853 = vpop.permute.xlu0 %2852
  %2854 = vrot.lane.b32.xlu0 %v1781, 70
  %v2855 = vpop.permute.xlu0 %2854
  %2856 = vrot.lane.b32.xlu0 %v1782, 70
  %v2857 = vpop.permute.xlu0 %2856
  %2858 = vrot.lane.b32.xlu0 %v1783, 70
  %v2859 = vpop.permute.xlu0 %2858
  %2860 = vrot.lane.b32.xlu0 %v1784, 70
  %v2861 = vpop.permute.xlu0 %2860
  %v2862 = vsel %vm300, %v2723, %v2725
  %v2863 = vsel %vm300, %v2725, %v2727
  %v2864 = vsel %vm300, %v2727, %v2729
  %v2865 = vsel %vm300, %v2729, %v2731
  %v2866 = vsel %vm300, %v2731, %v2733
  %v2867 = vsel %vm300, %v2733, %v2735
  %v2868 = vsel %vm300, %v2737, %v2739
  %v2869 = vsel %vm300, %v2739, %v2741
  %v2870 = vsel %vm300, %v2741, %v2743
  %v2871 = vsel %vm300, %v2743, %v2745
  %v2872 = vsel %vm300, %v2745, %v2747
  %v2873 = vsel %vm300, %v2747, %v2749
  %v2874 = vsel %vm300, %v2751, %v2753
  %v2875 = vsel %vm300, %v2753, %v2755
  %v2876 = vsel %vm300, %v2755, %v2757
  %v2877 = vsel %vm300, %v2757, %v2759
  %v2878 = vsel %vm300, %v2759, %v2761
  %v2879 = vsel %vm300, %v2761, %v2763
  %v2880 = vsel %vm300, %v2765, %v2767
  %v2881 = vsel %vm300, %v2767, %v2769
  %v2882 = vsel %vm300, %v2769, %v2771
  %v2883 = vsel %vm300, %v2771, %v2773
  %v2884 = vsel %vm300, %v2773, %v2775
  %v2885 = vsel %vm300, %v2775, %v2777
  %v2886 = vsel %vm300, %v2779, %v2781
  %v2887 = vsel %vm300, %v2781, %v2783
  %v2888 = vsel %vm300, %v2783, %v2785
  %v2889 = vsel %vm300, %v2785, %v2787
  %v2890 = vsel %vm300, %v2787, %v2789
  %v2891 = vsel %vm300, %v2789, %v2791
  %v2892 = vsel %vm300, %v2793, %v2795
  %v2893 = vsel %vm300, %v2795, %v2797
  %v2894 = vsel %vm300, %v2797, %v2799
  %v2895 = vsel %vm300, %v2799, %v2801
  %v2896 = vsel %vm300, %v2801, %v2803
  %v2897 = vsel %vm300, %v2803, %v2805
  %v2898 = vsel %vm300, %v2807, %v2809
  %v2899 = vsel %vm300, %v2809, %v2811
  %v2900 = vsel %vm300, %v2811, %v2813
  %v2901 = vsel %vm300, %v2813, %v2815
  %v2902 = vsel %vm300, %v2815, %v2817
  %v2903 = vsel %vm300, %v2817, %v2819
  %v2904 = vsel %vm300, %v2821, %v2823
  %v2905 = vsel %vm300, %v2823, %v2825
  %v2906 = vsel %vm300, %v2825, %v2827
  %v2907 = vsel %vm300, %v2827, %v2829
  %v2908 = vsel %vm300, %v2829, %v2831
  %v2909 = vsel %vm300, %v2831, %v2833
  %v2910 = vsel %vm300, %v2835, %v2837
  %v2911 = vsel %vm300, %v2837, %v2839
  %v2912 = vsel %vm300, %v2839, %v2841
  %v2913 = vsel %vm300, %v2841, %v2843
  %v2914 = vsel %vm300, %v2843, %v2845
  %v2915 = vsel %vm300, %v2845, %v2847
  %v2916 = vsel %vm300, %v2849, %v2851
  %v2917 = vsel %vm300, %v2851, %v2853
  %v2918 = vsel %vm300, %v2853, %v2855
  %v2919 = vsel %vm300, %v2855, %v2857
  %v2920 = vsel %vm300, %v2857, %v2859
  %v2921 = vsel %vm300, %v2859, %v2861
  %v2982 = vsel %vm313, %v2867, 0.0
  %v2983 = vsel %vm313, %v2873, 0.0
  %v2984 = vsel %vm313, %v2879, 0.0
  %v2985 = vsel %vm313, %v2885, 0.0
  %v2986 = vsel %vm313, %v2891, 0.0
  %v2987 = vsel %vm313, %v2897, 0.0
  %v2988 = vsel %vm313, %v2903, 0.0
  %v2989 = vsel %vm313, %v2909, 0.0
  %v2990 = vsel %vm313, %v2915, 0.0
  %v2991 = vsel %vm313, %v2921, 0.0
  %2992 = vrot.lane.b32.xlu0 %v1715, 68
  %v2993 = vpop.permute.xlu0 %2992
  %2994 = vrot.lane.b32.xlu0 %v1716, 68
  %v2995 = vpop.permute.xlu0 %2994
  %2996 = vrot.lane.b32.xlu0 %v1717, 68
  %v2997 = vpop.permute.xlu0 %2996
  %2998 = vrot.lane.b32.xlu0 %v1718, 68
  %v2999 = vpop.permute.xlu0 %2998
  %3000 = vrot.lane.b32.xlu0 %v1719, 68
  %v3001 = vpop.permute.xlu0 %3000
  %3002 = vrot.lane.b32.xlu0 %v1720, 68
  %v3003 = vpop.permute.xlu0 %3002
  %3004 = vrot.lane.b32.xlu0 %v1721, 68
  %v3005 = vpop.permute.xlu0 %3004
  %3006 = vrot.lane.b32.xlu0 %v1722, 68
  %v3007 = vpop.permute.xlu0 %3006
  %3008 = vrot.lane.b32.xlu0 %v1723, 68
  %v3009 = vpop.permute.xlu0 %3008
  %3010 = vrot.lane.b32.xlu0 %v1724, 68
  %v3011 = vpop.permute.xlu0 %3010
  %3012 = vrot.lane.b32.xlu0 %v1725, 68
  %v3013 = vpop.permute.xlu0 %3012
  %3014 = vrot.lane.b32.xlu0 %v1726, 68
  %v3015 = vpop.permute.xlu0 %3014
  %3016 = vrot.lane.b32.xlu0 %v1727, 68
  %v3017 = vpop.permute.xlu0 %3016
  %3018 = vrot.lane.b32.xlu0 %v1728, 68
  %v3019 = vpop.permute.xlu0 %3018
  %3020 = vrot.lane.b32.xlu0 %v1729, 68
  %v3021 = vpop.permute.xlu0 %3020
  %3022 = vrot.lane.b32.xlu0 %v1730, 68
  %v3023 = vpop.permute.xlu0 %3022
  %3024 = vrot.lane.b32.xlu0 %v1731, 68
  %v3025 = vpop.permute.xlu0 %3024
  %3026 = vrot.lane.b32.xlu0 %v1732, 68
  %v3027 = vpop.permute.xlu0 %3026
  %3028 = vrot.lane.b32.xlu0 %v1733, 68
  %v3029 = vpop.permute.xlu0 %3028
  %3030 = vrot.lane.b32.xlu0 %v1734, 68
  %v3031 = vpop.permute.xlu0 %3030
  %3032 = vrot.lane.b32.xlu0 %v1735, 68
  %v3033 = vpop.permute.xlu0 %3032
  %3034 = vrot.lane.b32.xlu0 %v1736, 68
  %v3035 = vpop.permute.xlu0 %3034
  %3036 = vrot.lane.b32.xlu0 %v1737, 68
  %v3037 = vpop.permute.xlu0 %3036
  %3038 = vrot.lane.b32.xlu0 %v1738, 68
  %v3039 = vpop.permute.xlu0 %3038
  %3040 = vrot.lane.b32.xlu0 %v1739, 68
  %v3041 = vpop.permute.xlu0 %3040
  %3042 = vrot.lane.b32.xlu0 %v1740, 68
  %v3043 = vpop.permute.xlu0 %3042
  %3044 = vrot.lane.b32.xlu0 %v1741, 68
  %v3045 = vpop.permute.xlu0 %3044
  %3046 = vrot.lane.b32.xlu0 %v1742, 68
  %v3047 = vpop.permute.xlu0 %3046
  %3048 = vrot.lane.b32.xlu0 %v1743, 68
  %v3049 = vpop.permute.xlu0 %3048
  %3050 = vrot.lane.b32.xlu0 %v1744, 68
  %v3051 = vpop.permute.xlu0 %3050
  %3052 = vrot.lane.b32.xlu0 %v1745, 68
  %v3053 = vpop.permute.xlu0 %3052
  %3054 = vrot.lane.b32.xlu0 %v1746, 68
  %v3055 = vpop.permute.xlu0 %3054
  %3056 = vrot.lane.b32.xlu0 %v1747, 68
  %v3057 = vpop.permute.xlu0 %3056
  %3058 = vrot.lane.b32.xlu0 %v1748, 68
  %v3059 = vpop.permute.xlu0 %3058
  %3060 = vrot.lane.b32.xlu0 %v1749, 68
  %v3061 = vpop.permute.xlu0 %3060
  %3062 = vrot.lane.b32.xlu0 %v1750, 68
  %v3063 = vpop.permute.xlu0 %3062
  %3064 = vrot.lane.b32.xlu0 %v1751, 68
  %v3065 = vpop.permute.xlu0 %3064
  %3066 = vrot.lane.b32.xlu0 %v1752, 68
  %v3067 = vpop.permute.xlu0 %3066
  %3068 = vrot.lane.b32.xlu0 %v1753, 68
  %v3069 = vpop.permute.xlu0 %3068
  %3070 = vrot.lane.b32.xlu0 %v1754, 68
  %v3071 = vpop.permute.xlu0 %3070
  %3072 = vrot.lane.b32.xlu0 %v1755, 68
  %v3073 = vpop.permute.xlu0 %3072
  %3074 = vrot.lane.b32.xlu0 %v1756, 68
  %v3075 = vpop.permute.xlu0 %3074
  %3076 = vrot.lane.b32.xlu0 %v1757, 68
  %v3077 = vpop.permute.xlu0 %3076
  %3078 = vrot.lane.b32.xlu0 %v1758, 68
  %v3079 = vpop.permute.xlu0 %3078
  %3080 = vrot.lane.b32.xlu0 %v1759, 68
  %v3081 = vpop.permute.xlu0 %3080
  %3082 = vrot.lane.b32.xlu0 %v1760, 68
  %v3083 = vpop.permute.xlu0 %3082
  %3084 = vrot.lane.b32.xlu0 %v1761, 68
  %v3085 = vpop.permute.xlu0 %3084
  %3086 = vrot.lane.b32.xlu0 %v1762, 68
  %v3087 = vpop.permute.xlu0 %3086
  %3088 = vrot.lane.b32.xlu0 %v1763, 68
  %v3089 = vpop.permute.xlu0 %3088
  %3090 = vrot.lane.b32.xlu0 %v1764, 68
  %v3091 = vpop.permute.xlu0 %3090
  %3092 = vrot.lane.b32.xlu0 %v1765, 68
  %v3093 = vpop.permute.xlu0 %3092
  %3094 = vrot.lane.b32.xlu0 %v1766, 68
  %v3095 = vpop.permute.xlu0 %3094
  %3096 = vrot.lane.b32.xlu0 %v1767, 68
  %v3097 = vpop.permute.xlu0 %3096
  %3098 = vrot.lane.b32.xlu0 %v1768, 68
  %v3099 = vpop.permute.xlu0 %3098
  %3100 = vrot.lane.b32.xlu0 %v1769, 68
  %v3101 = vpop.permute.xlu0 %3100
  %3102 = vrot.lane.b32.xlu0 %v1770, 68
  %v3103 = vpop.permute.xlu0 %3102
  %3104 = vrot.lane.b32.xlu0 %v1771, 68
  %v3105 = vpop.permute.xlu0 %3104
  %3106 = vrot.lane.b32.xlu0 %v1772, 68
  %v3107 = vpop.permute.xlu0 %3106
  %3108 = vrot.lane.b32.xlu0 %v1773, 68
  %v3109 = vpop.permute.xlu0 %3108
  %3110 = vrot.lane.b32.xlu0 %v1774, 68
  %v3111 = vpop.permute.xlu0 %3110
  %3112 = vrot.lane.b32.xlu0 %v1775, 68
  %v3113 = vpop.permute.xlu0 %3112
  %3114 = vrot.lane.b32.xlu0 %v1776, 68
  %v3115 = vpop.permute.xlu0 %3114
  %3116 = vrot.lane.b32.xlu0 %v1777, 68
  %v3117 = vpop.permute.xlu0 %3116
  %3118 = vrot.lane.b32.xlu0 %v1778, 68
  %v3119 = vpop.permute.xlu0 %3118
  %3120 = vrot.lane.b32.xlu0 %v1779, 68
  %v3121 = vpop.permute.xlu0 %3120
  %3122 = vrot.lane.b32.xlu0 %v1780, 68
  %v3123 = vpop.permute.xlu0 %3122
  %3124 = vrot.lane.b32.xlu0 %v1781, 68
  %v3125 = vpop.permute.xlu0 %3124
  %3126 = vrot.lane.b32.xlu0 %v1782, 68
  %v3127 = vpop.permute.xlu0 %3126
  %3128 = vrot.lane.b32.xlu0 %v1783, 68
  %v3129 = vpop.permute.xlu0 %3128
  %3130 = vrot.lane.b32.xlu0 %v1784, 68
  %v3131 = vpop.permute.xlu0 %3130
  %vm3132 = vcmask 556032
  %v3133 = vsel %vm3132, %v2993, %v2995
  %v3134 = vsel %vm3132, %v2995, %v2997
  %v3135 = vsel %vm3132, %v2997, %v2999
  %v3136 = vsel %vm3132, %v2999, %v3001
  %v3137 = vsel %vm3132, %v3001, %v3003
  %v3138 = vsel %vm3132, %v3003, %v3005
  %v3139 = vsel %vm3132, %v3007, %v3009
  %v3140 = vsel %vm3132, %v3009, %v3011
  %v3141 = vsel %vm3132, %v3011, %v3013
  %v3142 = vsel %vm3132, %v3013, %v3015
  %v3143 = vsel %vm3132, %v3015, %v3017
  %v3144 = vsel %vm3132, %v3017, %v3019
  %v3145 = vsel %vm3132, %v3021, %v3023
  %v3146 = vsel %vm3132, %v3023, %v3025
  %v3147 = vsel %vm3132, %v3025, %v3027
  %v3148 = vsel %vm3132, %v3027, %v3029
  %v3149 = vsel %vm3132, %v3029, %v3031
  %v3150 = vsel %vm3132, %v3031, %v3033
  %v3151 = vsel %vm3132, %v3035, %v3037
  %v3152 = vsel %vm3132, %v3037, %v3039
  %v3153 = vsel %vm3132, %v3039, %v3041
  %v3154 = vsel %vm3132, %v3041, %v3043
  %v3155 = vsel %vm3132, %v3043, %v3045
  %v3156 = vsel %vm3132, %v3045, %v3047
  %v3157 = vsel %vm3132, %v3049, %v3051
  %v3158 = vsel %vm3132, %v3051, %v3053
  %v3159 = vsel %vm3132, %v3053, %v3055
  %v3160 = vsel %vm3132, %v3055, %v3057
  %v3161 = vsel %vm3132, %v3057, %v3059
  %v3162 = vsel %vm3132, %v3059, %v3061
  %v3163 = vsel %vm3132, %v3063, %v3065
  %v3164 = vsel %vm3132, %v3065, %v3067
  %v3165 = vsel %vm3132, %v3067, %v3069
  %v3166 = vsel %vm3132, %v3069, %v3071
  %v3167 = vsel %vm3132, %v3071, %v3073
  %v3168 = vsel %vm3132, %v3073, %v3075
  %v3169 = vsel %vm3132, %v3077, %v3079
  %v3170 = vsel %vm3132, %v3079, %v3081
  %v3171 = vsel %vm3132, %v3081, %v3083
  %v3172 = vsel %vm3132, %v3083, %v3085
  %v3173 = vsel %vm3132, %v3085, %v3087
  %v3174 = vsel %vm3132, %v3087, %v3089
  %v3175 = vsel %vm3132, %v3091, %v3093
  %v3176 = vsel %vm3132, %v3093, %v3095
  %v3177 = vsel %vm3132, %v3095, %v3097
  %v3178 = vsel %vm3132, %v3097, %v3099
  %v3179 = vsel %vm3132, %v3099, %v3101
  %v3180 = vsel %vm3132, %v3101, %v3103
  %v3181 = vsel %vm3132, %v3105, %v3107
  %v3182 = vsel %vm3132, %v3107, %v3109
  %v3183 = vsel %vm3132, %v3109, %v3111
  %v3184 = vsel %vm3132, %v3111, %v3113
  %v3185 = vsel %vm3132, %v3113, %v3115
  %v3186 = vsel %vm3132, %v3115, %v3117
  %v3187 = vsel %vm3132, %v3119, %v3121
  %v3188 = vsel %vm3132, %v3121, %v3123
  %v3189 = vsel %vm3132, %v3123, %v3125
  %v3190 = vsel %vm3132, %v3125, %v3127
  %v3191 = vsel %vm3132, %v3127, %v3129
  %v3192 = vsel %vm3132, %v3129, %v3131
  %vm3253 = vcmask 687104
  %v3254 = vsel %vm3253, %v3138, 0.0
  %v3255 = vsel %vm3253, %v3144, 0.0
  %v3256 = vsel %vm3253, %v3150, 0.0
  %v3257 = vsel %vm3253, %v3156, 0.0
  %v3258 = vsel %vm3253, %v3162, 0.0
  %v3259 = vsel %vm3253, %v3168, 0.0
  %v3260 = vsel %vm3253, %v3174, 0.0
  %v3261 = vsel %vm3253, %v3180, 0.0
  %v3262 = vsel %vm3253, %v3186, 0.0
  %v3263 = vsel %vm3253, %v3192, 0.0
  %3264 = vrot.lane.b32.xlu0 %v1715, 16
  %v3265 = vpop.permute.xlu0 %3264
  %3266 = vrot.lane.b32.xlu0 %v1716, 16
  %v3267 = vpop.permute.xlu0 %3266
  %3268 = vrot.lane.b32.xlu0 %v1717, 16
  %v3269 = vpop.permute.xlu0 %3268
  %3270 = vrot.lane.b32.xlu0 %v1718, 16
  %v3271 = vpop.permute.xlu0 %3270
  %3272 = vrot.lane.b32.xlu0 %v1719, 16
  %v3273 = vpop.permute.xlu0 %3272
  %3274 = vrot.lane.b32.xlu0 %v1720, 16
  %v3275 = vpop.permute.xlu0 %3274
  %3276 = vrot.lane.b32.xlu0 %v1721, 16
  %v3277 = vpop.permute.xlu0 %3276
  %3278 = vrot.lane.b32.xlu0 %v1722, 16
  %v3279 = vpop.permute.xlu0 %3278
  %3280 = vrot.lane.b32.xlu0 %v1723, 16
  %v3281 = vpop.permute.xlu0 %3280
  %3282 = vrot.lane.b32.xlu0 %v1724, 16
  %v3283 = vpop.permute.xlu0 %3282
  %3284 = vrot.lane.b32.xlu0 %v1725, 16
  %v3285 = vpop.permute.xlu0 %3284
  %3286 = vrot.lane.b32.xlu0 %v1726, 16
  %v3287 = vpop.permute.xlu0 %3286
  %3288 = vrot.lane.b32.xlu0 %v1727, 16
  %v3289 = vpop.permute.xlu0 %3288
  %3290 = vrot.lane.b32.xlu0 %v1728, 16
  %v3291 = vpop.permute.xlu0 %3290
  %3292 = vrot.lane.b32.xlu0 %v1729, 16
  %v3293 = vpop.permute.xlu0 %3292
  %3294 = vrot.lane.b32.xlu0 %v1730, 16
  %v3295 = vpop.permute.xlu0 %3294
  %3296 = vrot.lane.b32.xlu0 %v1731, 16
  %v3297 = vpop.permute.xlu0 %3296
  %3298 = vrot.lane.b32.xlu0 %v1732, 16
  %v3299 = vpop.permute.xlu0 %3298
  %3300 = vrot.lane.b32.xlu0 %v1733, 16
  %v3301 = vpop.permute.xlu0 %3300
  %3302 = vrot.lane.b32.xlu0 %v1734, 16
  %v3303 = vpop.permute.xlu0 %3302
  %3304 = vrot.lane.b32.xlu0 %v1735, 16
  %v3305 = vpop.permute.xlu0 %3304
  %3306 = vrot.lane.b32.xlu0 %v1736, 16
  %v3307 = vpop.permute.xlu0 %3306
  %3308 = vrot.lane.b32.xlu0 %v1737, 16
  %v3309 = vpop.permute.xlu0 %3308
  %3310 = vrot.lane.b32.xlu0 %v1738, 16
  %v3311 = vpop.permute.xlu0 %3310
  %3312 = vrot.lane.b32.xlu0 %v1739, 16
  %v3313 = vpop.permute.xlu0 %3312
  %3314 = vrot.lane.b32.xlu0 %v1740, 16
  %v3315 = vpop.permute.xlu0 %3314
  %3316 = vrot.lane.b32.xlu0 %v1741, 16
  %v3317 = vpop.permute.xlu0 %3316
  %3318 = vrot.lane.b32.xlu0 %v1742, 16
  %v3319 = vpop.permute.xlu0 %3318
  %3320 = vrot.lane.b32.xlu0 %v1743, 16
  %v3321 = vpop.permute.xlu0 %3320
  %3322 = vrot.lane.b32.xlu0 %v1744, 16
  %v3323 = vpop.permute.xlu0 %3322
  %3324 = vrot.lane.b32.xlu0 %v1745, 16
  %v3325 = vpop.permute.xlu0 %3324
  %3326 = vrot.lane.b32.xlu0 %v1746, 16
  %v3327 = vpop.permute.xlu0 %3326
  %3328 = vrot.lane.b32.xlu0 %v1747, 16
  %v3329 = vpop.permute.xlu0 %3328
  %3330 = vrot.lane.b32.xlu0 %v1748, 16
  %v3331 = vpop.permute.xlu0 %3330
  %3332 = vrot.lane.b32.xlu0 %v1749, 16
  %v3333 = vpop.permute.xlu0 %3332
  %3334 = vrot.lane.b32.xlu0 %v1750, 16
  %v3335 = vpop.permute.xlu0 %3334
  %3336 = vrot.lane.b32.xlu0 %v1751, 16
  %v3337 = vpop.permute.xlu0 %3336
  %3338 = vrot.lane.b32.xlu0 %v1752, 16
  %v3339 = vpop.permute.xlu0 %3338
  %3340 = vrot.lane.b32.xlu0 %v1753, 16
  %v3341 = vpop.permute.xlu0 %3340
  %3342 = vrot.lane.b32.xlu0 %v1754, 16
  %v3343 = vpop.permute.xlu0 %3342
  %3344 = vrot.lane.b32.xlu0 %v1755, 16
  %v3345 = vpop.permute.xlu0 %3344
  %3346 = vrot.lane.b32.xlu0 %v1756, 16
  %v3347 = vpop.permute.xlu0 %3346
  %3348 = vrot.lane.b32.xlu0 %v1757, 16
  %v3349 = vpop.permute.xlu0 %3348
  %3350 = vrot.lane.b32.xlu0 %v1758, 16
  %v3351 = vpop.permute.xlu0 %3350
  %3352 = vrot.lane.b32.xlu0 %v1759, 16
  %v3353 = vpop.permute.xlu0 %3352
  %3354 = vrot.lane.b32.xlu0 %v1760, 16
  %v3355 = vpop.permute.xlu0 %3354
  %3356 = vrot.lane.b32.xlu0 %v1761, 16
  %v3357 = vpop.permute.xlu0 %3356
  %3358 = vrot.lane.b32.xlu0 %v1762, 16
  %v3359 = vpop.permute.xlu0 %3358
  %3360 = vrot.lane.b32.xlu0 %v1763, 16
  %v3361 = vpop.permute.xlu0 %3360
  %3362 = vrot.lane.b32.xlu0 %v1764, 16
  %v3363 = vpop.permute.xlu0 %3362
  %3364 = vrot.lane.b32.xlu0 %v1765, 16
  %v3365 = vpop.permute.xlu0 %3364
  %3366 = vrot.lane.b32.xlu0 %v1766, 16
  %v3367 = vpop.permute.xlu0 %3366
  %3368 = vrot.lane.b32.xlu0 %v1767, 16
  %v3369 = vpop.permute.xlu0 %3368
  %3370 = vrot.lane.b32.xlu0 %v1768, 16
  %v3371 = vpop.permute.xlu0 %3370
  %3372 = vrot.lane.b32.xlu0 %v1769, 16
  %v3373 = vpop.permute.xlu0 %3372
  %3374 = vrot.lane.b32.xlu0 %v1770, 16
  %v3375 = vpop.permute.xlu0 %3374
  %3376 = vrot.lane.b32.xlu0 %v1771, 16
  %v3377 = vpop.permute.xlu0 %3376
  %3378 = vrot.lane.b32.xlu0 %v1772, 16
  %v3379 = vpop.permute.xlu0 %3378
  %3380 = vrot.lane.b32.xlu0 %v1773, 16
  %v3381 = vpop.permute.xlu0 %3380
  %3382 = vrot.lane.b32.xlu0 %v1774, 16
  %v3383 = vpop.permute.xlu0 %3382
  %3384 = vrot.lane.b32.xlu0 %v1775, 16
  %v3385 = vpop.permute.xlu0 %3384
  %3386 = vrot.lane.b32.xlu0 %v1776, 16
  %v3387 = vpop.permute.xlu0 %3386
  %3388 = vrot.lane.b32.xlu0 %v1777, 16
  %v3389 = vpop.permute.xlu0 %3388
  %3390 = vrot.lane.b32.xlu0 %v1778, 16
  %v3391 = vpop.permute.xlu0 %3390
  %3392 = vrot.lane.b32.xlu0 %v1779, 16
  %v3393 = vpop.permute.xlu0 %3392
  %3394 = vrot.lane.b32.xlu0 %v1780, 16
  %v3395 = vpop.permute.xlu0 %3394
  %3396 = vrot.lane.b32.xlu0 %v1781, 16
  %v3397 = vpop.permute.xlu0 %3396
  %3398 = vrot.lane.b32.xlu0 %v1782, 16
  %v3399 = vpop.permute.xlu0 %3398
  %3400 = vrot.lane.b32.xlu0 %v1783, 16
  %v3401 = vpop.permute.xlu0 %3400
  %3402 = vrot.lane.b32.xlu0 %v1784, 16
  %v3403 = vpop.permute.xlu0 %3402
  %vm3404 = vcmask 130048
  %v3405 = vsel %vm3404, %v3265, %v3267
  %v3406 = vsel %vm3404, %v3267, %v3269
  %v3407 = vsel %vm3404, %v3269, %v3271
  %v3408 = vsel %vm3404, %v3271, %v3273
  %v3409 = vsel %vm3404, %v3273, %v3275
  %v3410 = vsel %vm3404, %v3275, %v3277
  %v3411 = vsel %vm3404, %v3279, %v3281
  %v3412 = vsel %vm3404, %v3281, %v3283
  %v3413 = vsel %vm3404, %v3283, %v3285
  %v3414 = vsel %vm3404, %v3285, %v3287
  %v3415 = vsel %vm3404, %v3287, %v3289
  %v3416 = vsel %vm3404, %v3289, %v3291
  %v3417 = vsel %vm3404, %v3293, %v3295
  %v3418 = vsel %vm3404, %v3295, %v3297
  %v3419 = vsel %vm3404, %v3297, %v3299
  %v3420 = vsel %vm3404, %v3299, %v3301
  %v3421 = vsel %vm3404, %v3301, %v3303
  %v3422 = vsel %vm3404, %v3303, %v3305
  %v3423 = vsel %vm3404, %v3307, %v3309
  %v3424 = vsel %vm3404, %v3309, %v3311
  %v3425 = vsel %vm3404, %v3311, %v3313
  %v3426 = vsel %vm3404, %v3313, %v3315
  %v3427 = vsel %vm3404, %v3315, %v3317
  %v3428 = vsel %vm3404, %v3317, %v3319
  %v3429 = vsel %vm3404, %v3321, %v3323
  %v3430 = vsel %vm3404, %v3323, %v3325
  %v3431 = vsel %vm3404, %v3325, %v3327
  %v3432 = vsel %vm3404, %v3327, %v3329
  %v3433 = vsel %vm3404, %v3329, %v3331
  %v3434 = vsel %vm3404, %v3331, %v3333
  %v3435 = vsel %vm3404, %v3335, %v3337
  %v3436 = vsel %vm3404, %v3337, %v3339
  %v3437 = vsel %vm3404, %v3339, %v3341
  %v3438 = vsel %vm3404, %v3341, %v3343
  %v3439 = vsel %vm3404, %v3343, %v3345
  %v3440 = vsel %vm3404, %v3345, %v3347
  %v3441 = vsel %vm3404, %v3349, %v3351
  %v3442 = vsel %vm3404, %v3351, %v3353
  %v3443 = vsel %vm3404, %v3353, %v3355
  %v3444 = vsel %vm3404, %v3355, %v3357
  %v3445 = vsel %vm3404, %v3357, %v3359
  %v3446 = vsel %vm3404, %v3359, %v3361
  %v3447 = vsel %vm3404, %v3363, %v3365
  %v3448 = vsel %vm3404, %v3365, %v3367
  %v3449 = vsel %vm3404, %v3367, %v3369
  %v3450 = vsel %vm3404, %v3369, %v3371
  %v3451 = vsel %vm3404, %v3371, %v3373
  %v3452 = vsel %vm3404, %v3373, %v3375
  %v3453 = vsel %vm3404, %v3377, %v3379
  %v3454 = vsel %vm3404, %v3379, %v3381
  %v3455 = vsel %vm3404, %v3381, %v3383
  %v3456 = vsel %vm3404, %v3383, %v3385
  %v3457 = vsel %vm3404, %v3385, %v3387
  %v3458 = vsel %vm3404, %v3387, %v3389
  %v3459 = vsel %vm3404, %v3391, %v3393
  %v3460 = vsel %vm3404, %v3393, %v3395
  %v3461 = vsel %vm3404, %v3395, %v3397
  %v3462 = vsel %vm3404, %v3397, %v3399
  %v3463 = vsel %vm3404, %v3399, %v3401
  %v3464 = vsel %vm3404, %v3401, %v3403
  %vm3525 = vcmask 261120
  %v3526 = vsel %vm3525, %v3410, 0.0
  %v3527 = vsel %vm3525, %v3416, 0.0
  %v3528 = vsel %vm3525, %v3422, 0.0
  %v3529 = vsel %vm3525, %v3428, 0.0
  %v3530 = vsel %vm3525, %v3434, 0.0
  %v3531 = vsel %vm3525, %v3440, 0.0
  %v3532 = vsel %vm3525, %v3446, 0.0
  %v3533 = vsel %vm3525, %v3452, 0.0
  %v3534 = vsel %vm3525, %v3458, 0.0
  %v3535 = vsel %vm3525, %v3464, 0.0
  %3536 = vrot.lane.b32.xlu0 %v1715, 14
  %v3537 = vpop.permute.xlu0 %3536
  %3538 = vrot.lane.b32.xlu0 %v1716, 14
  %v3539 = vpop.permute.xlu0 %3538
  %3540 = vrot.lane.b32.xlu0 %v1717, 14
  %v3541 = vpop.permute.xlu0 %3540
  %3542 = vrot.lane.b32.xlu0 %v1718, 14
  %v3543 = vpop.permute.xlu0 %3542
  %3544 = vrot.lane.b32.xlu0 %v1719, 14
  %v3545 = vpop.permute.xlu0 %3544
  %3546 = vrot.lane.b32.xlu0 %v1720, 14
  %v3547 = vpop.permute.xlu0 %3546
  %3548 = vrot.lane.b32.xlu0 %v1721, 14
  %v3549 = vpop.permute.xlu0 %3548
  %3550 = vrot.lane.b32.xlu0 %v1722, 14
  %v3551 = vpop.permute.xlu0 %3550
  %3552 = vrot.lane.b32.xlu0 %v1723, 14
  %v3553 = vpop.permute.xlu0 %3552
  %3554 = vrot.lane.b32.xlu0 %v1724, 14
  %v3555 = vpop.permute.xlu0 %3554
  %3556 = vrot.lane.b32.xlu0 %v1725, 14
  %v3557 = vpop.permute.xlu0 %3556
  %3558 = vrot.lane.b32.xlu0 %v1726, 14
  %v3559 = vpop.permute.xlu0 %3558
  %3560 = vrot.lane.b32.xlu0 %v1727, 14
  %v3561 = vpop.permute.xlu0 %3560
  %3562 = vrot.lane.b32.xlu0 %v1728, 14
  %v3563 = vpop.permute.xlu0 %3562
  %3564 = vrot.lane.b32.xlu0 %v1729, 14
  %v3565 = vpop.permute.xlu0 %3564
  %3566 = vrot.lane.b32.xlu0 %v1730, 14
  %v3567 = vpop.permute.xlu0 %3566
  %3568 = vrot.lane.b32.xlu0 %v1731, 14
  %v3569 = vpop.permute.xlu0 %3568
  %3570 = vrot.lane.b32.xlu0 %v1732, 14
  %v3571 = vpop.permute.xlu0 %3570
  %3572 = vrot.lane.b32.xlu0 %v1733, 14
  %v3573 = vpop.permute.xlu0 %3572
  %3574 = vrot.lane.b32.xlu0 %v1734, 14
  %v3575 = vpop.permute.xlu0 %3574
  %3576 = vrot.lane.b32.xlu0 %v1735, 14
  %v3577 = vpop.permute.xlu0 %3576
  %3578 = vrot.lane.b32.xlu0 %v1736, 14
  %v3579 = vpop.permute.xlu0 %3578
  %3580 = vrot.lane.b32.xlu0 %v1737, 14
  %v3581 = vpop.permute.xlu0 %3580
  %3582 = vrot.lane.b32.xlu0 %v1738, 14
  %v3583 = vpop.permute.xlu0 %3582
  %3584 = vrot.lane.b32.xlu0 %v1739, 14
  %v3585 = vpop.permute.xlu0 %3584
  %3586 = vrot.lane.b32.xlu0 %v1740, 14
  %v3587 = vpop.permute.xlu0 %3586
  %3588 = vrot.lane.b32.xlu0 %v1741, 14
  %v3589 = vpop.permute.xlu0 %3588
  %3590 = vrot.lane.b32.xlu0 %v1742, 14
  %v3591 = vpop.permute.xlu0 %3590
  %3592 = vrot.lane.b32.xlu0 %v1743, 14
  %v3593 = vpop.permute.xlu0 %3592
  %3594 = vrot.lane.b32.xlu0 %v1744, 14
  %v3595 = vpop.permute.xlu0 %3594
  %3596 = vrot.lane.b32.xlu0 %v1745, 14
  %v3597 = vpop.permute.xlu0 %3596
  %3598 = vrot.lane.b32.xlu0 %v1746, 14
  %v3599 = vpop.permute.xlu0 %3598
  %3600 = vrot.lane.b32.xlu0 %v1747, 14
  %v3601 = vpop.permute.xlu0 %3600
  %3602 = vrot.lane.b32.xlu0 %v1748, 14
  %v3603 = vpop.permute.xlu0 %3602
  %3604 = vrot.lane.b32.xlu0 %v1749, 14
  %v3605 = vpop.permute.xlu0 %3604
  %3606 = vrot.lane.b32.xlu0 %v1750, 14
  %v3607 = vpop.permute.xlu0 %3606
  %3608 = vrot.lane.b32.xlu0 %v1751, 14
  %v3609 = vpop.permute.xlu0 %3608
  %3610 = vrot.lane.b32.xlu0 %v1752, 14
  %v3611 = vpop.permute.xlu0 %3610
  %3612 = vrot.lane.b32.xlu0 %v1753, 14
  %v3613 = vpop.permute.xlu0 %3612
  %3614 = vrot.lane.b32.xlu0 %v1754, 14
  %v3615 = vpop.permute.xlu0 %3614
  %3616 = vrot.lane.b32.xlu0 %v1755, 14
  %v3617 = vpop.permute.xlu0 %3616
  %3618 = vrot.lane.b32.xlu0 %v1756, 14
  %v3619 = vpop.permute.xlu0 %3618
  %3620 = vrot.lane.b32.xlu0 %v1757, 14
  %v3621 = vpop.permute.xlu0 %3620
  %3622 = vrot.lane.b32.xlu0 %v1758, 14
  %v3623 = vpop.permute.xlu0 %3622
  %3624 = vrot.lane.b32.xlu0 %v1759, 14
  %v3625 = vpop.permute.xlu0 %3624
  %3626 = vrot.lane.b32.xlu0 %v1760, 14
  %v3627 = vpop.permute.xlu0 %3626
  %3628 = vrot.lane.b32.xlu0 %v1761, 14
  %v3629 = vpop.permute.xlu0 %3628
  %3630 = vrot.lane.b32.xlu0 %v1762, 14
  %v3631 = vpop.permute.xlu0 %3630
  %3632 = vrot.lane.b32.xlu0 %v1763, 14
  %v3633 = vpop.permute.xlu0 %3632
  %3634 = vrot.lane.b32.xlu0 %v1764, 14
  %v3635 = vpop.permute.xlu0 %3634
  %3636 = vrot.lane.b32.xlu0 %v1765, 14
  %v3637 = vpop.permute.xlu0 %3636
  %3638 = vrot.lane.b32.xlu0 %v1766, 14
  %v3639 = vpop.permute.xlu0 %3638
  %3640 = vrot.lane.b32.xlu0 %v1767, 14
  %v3641 = vpop.permute.xlu0 %3640
  %3642 = vrot.lane.b32.xlu0 %v1768, 14
  %v3643 = vpop.permute.xlu0 %3642
  %3644 = vrot.lane.b32.xlu0 %v1769, 14
  %v3645 = vpop.permute.xlu0 %3644
  %3646 = vrot.lane.b32.xlu0 %v1770, 14
  %v3647 = vpop.permute.xlu0 %3646
  %3648 = vrot.lane.b32.xlu0 %v1771, 14
  %v3649 = vpop.permute.xlu0 %3648
  %3650 = vrot.lane.b32.xlu0 %v1772, 14
  %v3651 = vpop.permute.xlu0 %3650
  %3652 = vrot.lane.b32.xlu0 %v1773, 14
  %v3653 = vpop.permute.xlu0 %3652
  %3654 = vrot.lane.b32.xlu0 %v1774, 14
  %v3655 = vpop.permute.xlu0 %3654
  %3656 = vrot.lane.b32.xlu0 %v1775, 14
  %v3657 = vpop.permute.xlu0 %3656
  %3658 = vrot.lane.b32.xlu0 %v1776, 14
  %v3659 = vpop.permute.xlu0 %3658
  %3660 = vrot.lane.b32.xlu0 %v1777, 14
  %v3661 = vpop.permute.xlu0 %3660
  %3662 = vrot.lane.b32.xlu0 %v1778, 14
  %v3663 = vpop.permute.xlu0 %3662
  %3664 = vrot.lane.b32.xlu0 %v1779, 14
  %v3665 = vpop.permute.xlu0 %3664
  %3666 = vrot.lane.b32.xlu0 %v1780, 14
  %v3667 = vpop.permute.xlu0 %3666
  %3668 = vrot.lane.b32.xlu0 %v1781, 14
  %v3669 = vpop.permute.xlu0 %3668
  %3670 = vrot.lane.b32.xlu0 %v1782, 14
  %v3671 = vpop.permute.xlu0 %3670
  %3672 = vrot.lane.b32.xlu0 %v1783, 14
  %v3673 = vpop.permute.xlu0 %3672
  %3674 = vrot.lane.b32.xlu0 %v1784, 14
  %v3675 = vpop.permute.xlu0 %3674
  %v3676 = vsel %vm139, %v3537, %v3539
  %v3677 = vsel %vm139, %v3539, %v3541
  %v3678 = vsel %vm139, %v3541, %v3543
  %v3679 = vsel %vm139, %v3543, %v3545
  %v3680 = vsel %vm139, %v3545, %v3547
  %v3681 = vsel %vm139, %v3547, %v3549
  %v3682 = vsel %vm139, %v3551, %v3553
  %v3683 = vsel %vm139, %v3553, %v3555
  %v3684 = vsel %vm139, %v3555, %v3557
  %v3685 = vsel %vm139, %v3557, %v3559
  %v3686 = vsel %vm139, %v3559, %v3561
  %v3687 = vsel %vm139, %v3561, %v3563
  %v3688 = vsel %vm139, %v3565, %v3567
  %v3689 = vsel %vm139, %v3567, %v3569
  %v3690 = vsel %vm139, %v3569, %v3571
  %v3691 = vsel %vm139, %v3571, %v3573
  %v3692 = vsel %vm139, %v3573, %v3575
  %v3693 = vsel %vm139, %v3575, %v3577
  %v3694 = vsel %vm139, %v3579, %v3581
  %v3695 = vsel %vm139, %v3581, %v3583
  %v3696 = vsel %vm139, %v3583, %v3585
  %v3697 = vsel %vm139, %v3585, %v3587
  %v3698 = vsel %vm139, %v3587, %v3589
  %v3699 = vsel %vm139, %v3589, %v3591
  %v3700 = vsel %vm139, %v3593, %v3595
  %v3701 = vsel %vm139, %v3595, %v3597
  %v3702 = vsel %vm139, %v3597, %v3599
  %v3703 = vsel %vm139, %v3599, %v3601
  %v3704 = vsel %vm139, %v3601, %v3603
  %v3705 = vsel %vm139, %v3603, %v3605
  %v3706 = vsel %vm139, %v3607, %v3609
  %v3707 = vsel %vm139, %v3609, %v3611
  %v3708 = vsel %vm139, %v3611, %v3613
  %v3709 = vsel %vm139, %v3613, %v3615
  %v3710 = vsel %vm139, %v3615, %v3617
  %v3711 = vsel %vm139, %v3617, %v3619
  %v3712 = vsel %vm139, %v3621, %v3623
  %v3713 = vsel %vm139, %v3623, %v3625
  %v3714 = vsel %vm139, %v3625, %v3627
  %v3715 = vsel %vm139, %v3627, %v3629
  %v3716 = vsel %vm139, %v3629, %v3631
  %v3717 = vsel %vm139, %v3631, %v3633
  %v3718 = vsel %vm139, %v3635, %v3637
  %v3719 = vsel %vm139, %v3637, %v3639
  %v3720 = vsel %vm139, %v3639, %v3641
  %v3721 = vsel %vm139, %v3641, %v3643
  %v3722 = vsel %vm139, %v3643, %v3645
  %v3723 = vsel %vm139, %v3645, %v3647
  %v3724 = vsel %vm139, %v3649, %v3651
  %v3725 = vsel %vm139, %v3651, %v3653
  %v3726 = vsel %vm139, %v3653, %v3655
  %v3727 = vsel %vm139, %v3655, %v3657
  %v3728 = vsel %vm139, %v3657, %v3659
  %v3729 = vsel %vm139, %v3659, %v3661
  %v3730 = vsel %vm139, %v3663, %v3665
  %v3731 = vsel %vm139, %v3665, %v3667
  %v3732 = vsel %vm139, %v3667, %v3669
  %v3733 = vsel %vm139, %v3669, %v3671
  %v3734 = vsel %vm139, %v3671, %v3673
  %v3735 = vsel %vm139, %v3673, %v3675
  %vm3796 = vcmask 244736
  %v3797 = vsel %vm3796, %v3681, 0.0
  %v3798 = vsel %vm3796, %v3687, 0.0
  %v3799 = vsel %vm3796, %v3693, 0.0
  %v3800 = vsel %vm3796, %v3699, 0.0
  %v3801 = vsel %vm3796, %v3705, 0.0
  %v3802 = vsel %vm3796, %v3711, 0.0
  %v3803 = vsel %vm3796, %v3717, 0.0
  %v3804 = vsel %vm3796, %v3723, 0.0
  %v3805 = vsel %vm3796, %v3729, 0.0
  %v3806 = vsel %vm3796, %v3735, 0.0
  %3807 = vrot.lane.b32.xlu0 %v1715, 12
  %v3808 = vpop.permute.xlu0 %3807
  %3809 = vrot.lane.b32.xlu0 %v1716, 12
  %v3810 = vpop.permute.xlu0 %3809
  %3811 = vrot.lane.b32.xlu0 %v1717, 12
  %v3812 = vpop.permute.xlu0 %3811
  %3813 = vrot.lane.b32.xlu0 %v1718, 12
  %v3814 = vpop.permute.xlu0 %3813
  %3815 = vrot.lane.b32.xlu0 %v1719, 12
  %v3816 = vpop.permute.xlu0 %3815
  %3817 = vrot.lane.b32.xlu0 %v1720, 12
  %v3818 = vpop.permute.xlu0 %3817
  %3819 = vrot.lane.b32.xlu0 %v1721, 12
  %v3820 = vpop.permute.xlu0 %3819
  %3821 = vrot.lane.b32.xlu0 %v1722, 12
  %v3822 = vpop.permute.xlu0 %3821
  %3823 = vrot.lane.b32.xlu0 %v1723, 12
  %v3824 = vpop.permute.xlu0 %3823
  %3825 = vrot.lane.b32.xlu0 %v1724, 12
  %v3826 = vpop.permute.xlu0 %3825
  %3827 = vrot.lane.b32.xlu0 %v1725, 12
  %v3828 = vpop.permute.xlu0 %3827
  %3829 = vrot.lane.b32.xlu0 %v1726, 12
  %v3830 = vpop.permute.xlu0 %3829
  %3831 = vrot.lane.b32.xlu0 %v1727, 12
  %v3832 = vpop.permute.xlu0 %3831
  %3833 = vrot.lane.b32.xlu0 %v1728, 12
  %v3834 = vpop.permute.xlu0 %3833
  %3835 = vrot.lane.b32.xlu0 %v1729, 12
  %v3836 = vpop.permute.xlu0 %3835
  %3837 = vrot.lane.b32.xlu0 %v1730, 12
  %v3838 = vpop.permute.xlu0 %3837
  %3839 = vrot.lane.b32.xlu0 %v1731, 12
  %v3840 = vpop.permute.xlu0 %3839
  %3841 = vrot.lane.b32.xlu0 %v1732, 12
  %v3842 = vpop.permute.xlu0 %3841
  %3843 = vrot.lane.b32.xlu0 %v1733, 12
  %v3844 = vpop.permute.xlu0 %3843
  %3845 = vrot.lane.b32.xlu0 %v1734, 12
  %v3846 = vpop.permute.xlu0 %3845
  %3847 = vrot.lane.b32.xlu0 %v1735, 12
  %v3848 = vpop.permute.xlu0 %3847
  %3849 = vrot.lane.b32.xlu0 %v1736, 12
  %v3850 = vpop.permute.xlu0 %3849
  %3851 = vrot.lane.b32.xlu0 %v1737, 12
  %v3852 = vpop.permute.xlu0 %3851
  %3853 = vrot.lane.b32.xlu0 %v1738, 12
  %v3854 = vpop.permute.xlu0 %3853
  %3855 = vrot.lane.b32.xlu0 %v1739, 12
  %v3856 = vpop.permute.xlu0 %3855
  %3857 = vrot.lane.b32.xlu0 %v1740, 12
  %v3858 = vpop.permute.xlu0 %3857
  %3859 = vrot.lane.b32.xlu0 %v1741, 12
  %v3860 = vpop.permute.xlu0 %3859
  %3861 = vrot.lane.b32.xlu0 %v1742, 12
  %v3862 = vpop.permute.xlu0 %3861
  %3863 = vrot.lane.b32.xlu0 %v1743, 12
  %v3864 = vpop.permute.xlu0 %3863
  %3865 = vrot.lane.b32.xlu0 %v1744, 12
  %v3866 = vpop.permute.xlu0 %3865
  %3867 = vrot.lane.b32.xlu0 %v1745, 12
  %v3868 = vpop.permute.xlu0 %3867
  %3869 = vrot.lane.b32.xlu0 %v1746, 12
  %v3870 = vpop.permute.xlu0 %3869
  %3871 = vrot.lane.b32.xlu0 %v1747, 12
  %v3872 = vpop.permute.xlu0 %3871
  %3873 = vrot.lane.b32.xlu0 %v1748, 12
  %v3874 = vpop.permute.xlu0 %3873
  %3875 = vrot.lane.b32.xlu0 %v1749, 12
  %v3876 = vpop.permute.xlu0 %3875
  %3877 = vrot.lane.b32.xlu0 %v1750, 12
  %v3878 = vpop.permute.xlu0 %3877
  %3879 = vrot.lane.b32.xlu0 %v1751, 12
  %v3880 = vpop.permute.xlu0 %3879
  %3881 = vrot.lane.b32.xlu0 %v1752, 12
  %v3882 = vpop.permute.xlu0 %3881
  %3883 = vrot.lane.b32.xlu0 %v1753, 12
  %v3884 = vpop.permute.xlu0 %3883
  %3885 = vrot.lane.b32.xlu0 %v1754, 12
  %v3886 = vpop.permute.xlu0 %3885
  %3887 = vrot.lane.b32.xlu0 %v1755, 12
  %v3888 = vpop.permute.xlu0 %3887
  %3889 = vrot.lane.b32.xlu0 %v1756, 12
  %v3890 = vpop.permute.xlu0 %3889
  %3891 = vrot.lane.b32.xlu0 %v1757, 12
  %v3892 = vpop.permute.xlu0 %3891
  %3893 = vrot.lane.b32.xlu0 %v1758, 12
  %v3894 = vpop.permute.xlu0 %3893
  %3895 = vrot.lane.b32.xlu0 %v1759, 12
  %v3896 = vpop.permute.xlu0 %3895
  %3897 = vrot.lane.b32.xlu0 %v1760, 12
  %v3898 = vpop.permute.xlu0 %3897
  %3899 = vrot.lane.b32.xlu0 %v1761, 12
  %v3900 = vpop.permute.xlu0 %3899
  %3901 = vrot.lane.b32.xlu0 %v1762, 12
  %v3902 = vpop.permute.xlu0 %3901
  %3903 = vrot.lane.b32.xlu0 %v1763, 12
  %v3904 = vpop.permute.xlu0 %3903
  %3905 = vrot.lane.b32.xlu0 %v1764, 12
  %v3906 = vpop.permute.xlu0 %3905
  %3907 = vrot.lane.b32.xlu0 %v1765, 12
  %v3908 = vpop.permute.xlu0 %3907
  %3909 = vrot.lane.b32.xlu0 %v1766, 12
  %v3910 = vpop.permute.xlu0 %3909
  %3911 = vrot.lane.b32.xlu0 %v1767, 12
  %v3912 = vpop.permute.xlu0 %3911
  %3913 = vrot.lane.b32.xlu0 %v1768, 12
  %v3914 = vpop.permute.xlu0 %3913
  %3915 = vrot.lane.b32.xlu0 %v1769, 12
  %v3916 = vpop.permute.xlu0 %3915
  %3917 = vrot.lane.b32.xlu0 %v1770, 12
  %v3918 = vpop.permute.xlu0 %3917
  %3919 = vrot.lane.b32.xlu0 %v1771, 12
  %v3920 = vpop.permute.xlu0 %3919
  %3921 = vrot.lane.b32.xlu0 %v1772, 12
  %v3922 = vpop.permute.xlu0 %3921
  %3923 = vrot.lane.b32.xlu0 %v1773, 12
  %v3924 = vpop.permute.xlu0 %3923
  %3925 = vrot.lane.b32.xlu0 %v1774, 12
  %v3926 = vpop.permute.xlu0 %3925
  %3927 = vrot.lane.b32.xlu0 %v1775, 12
  %v3928 = vpop.permute.xlu0 %3927
  %3929 = vrot.lane.b32.xlu0 %v1776, 12
  %v3930 = vpop.permute.xlu0 %3929
  %3931 = vrot.lane.b32.xlu0 %v1777, 12
  %v3932 = vpop.permute.xlu0 %3931
  %3933 = vrot.lane.b32.xlu0 %v1778, 12
  %v3934 = vpop.permute.xlu0 %3933
  %3935 = vrot.lane.b32.xlu0 %v1779, 12
  %v3936 = vpop.permute.xlu0 %3935
  %3937 = vrot.lane.b32.xlu0 %v1780, 12
  %v3938 = vpop.permute.xlu0 %3937
  %3939 = vrot.lane.b32.xlu0 %v1781, 12
  %v3940 = vpop.permute.xlu0 %3939
  %3941 = vrot.lane.b32.xlu0 %v1782, 12
  %v3942 = vpop.permute.xlu0 %3941
  %3943 = vrot.lane.b32.xlu0 %v1783, 12
  %v3944 = vpop.permute.xlu0 %3943
  %3945 = vrot.lane.b32.xlu0 %v1784, 12
  %v3946 = vpop.permute.xlu0 %3945
  %v3947 = vsel %vm2441, %v3808, %v3810
  %v3948 = vsel %vm2441, %v3810, %v3812
  %v3949 = vsel %vm2441, %v3812, %v3814
  %v3950 = vsel %vm2441, %v3814, %v3816
  %v3951 = vsel %vm2441, %v3816, %v3818
  %v3952 = vsel %vm2441, %v3818, %v3820
  %v3953 = vsel %vm2441, %v3822, %v3824
  %v3954 = vsel %vm2441, %v3824, %v3826
  %v3955 = vsel %vm2441, %v3826, %v3828
  %v3956 = vsel %vm2441, %v3828, %v3830
  %v3957 = vsel %vm2441, %v3830, %v3832
  %v3958 = vsel %vm2441, %v3832, %v3834
  %v3959 = vsel %vm2441, %v3836, %v3838
  %v3960 = vsel %vm2441, %v3838, %v3840
  %v3961 = vsel %vm2441, %v3840, %v3842
  %v3962 = vsel %vm2441, %v3842, %v3844
  %v3963 = vsel %vm2441, %v3844, %v3846
  %v3964 = vsel %vm2441, %v3846, %v3848
  %v3965 = vsel %vm2441, %v3850, %v3852
  %v3966 = vsel %vm2441, %v3852, %v3854
  %v3967 = vsel %vm2441, %v3854, %v3856
  %v3968 = vsel %vm2441, %v3856, %v3858
  %v3969 = vsel %vm2441, %v3858, %v3860
  %v3970 = vsel %vm2441, %v3860, %v3862
  %v3971 = vsel %vm2441, %v3864, %v3866
  %v3972 = vsel %vm2441, %v3866, %v3868
  %v3973 = vsel %vm2441, %v3868, %v3870
  %v3974 = vsel %vm2441, %v3870, %v3872
  %v3975 = vsel %vm2441, %v3872, %v3874
  %v3976 = vsel %vm2441, %v3874, %v3876
  %v3977 = vsel %vm2441, %v3878, %v3880
  %v3978 = vsel %vm2441, %v3880, %v3882
  %v3979 = vsel %vm2441, %v3882, %v3884
  %v3980 = vsel %vm2441, %v3884, %v3886
  %v3981 = vsel %vm2441, %v3886, %v3888
  %v3982 = vsel %vm2441, %v3888, %v3890
  %v3983 = vsel %vm2441, %v3892, %v3894
  %v3984 = vsel %vm2441, %v3894, %v3896
  %v3985 = vsel %vm2441, %v3896, %v3898
  %v3986 = vsel %vm2441, %v3898, %v3900
  %v3987 = vsel %vm2441, %v3900, %v3902
  %v3988 = vsel %vm2441, %v3902, %v3904
  %v3989 = vsel %vm2441, %v3906, %v3908
  %v3990 = vsel %vm2441, %v3908, %v3910
  %v3991 = vsel %vm2441, %v3910, %v3912
  %v3992 = vsel %vm2441, %v3912, %v3914
  %v3993 = vsel %vm2441, %v3914, %v3916
  %v3994 = vsel %vm2441, %v3916, %v3918
  %v3995 = vsel %vm2441, %v3920, %v3922
  %v3996 = vsel %vm2441, %v3922, %v3924
  %v3997 = vsel %vm2441, %v3924, %v3926
  %v3998 = vsel %vm2441, %v3926, %v3928
  %v3999 = vsel %vm2441, %v3928, %v3930
  %v4000 = vsel %vm2441, %v3930, %v3932
  %v4001 = vsel %vm2441, %v3934, %v3936
  %v4002 = vsel %vm2441, %v3936, %v3938
  %v4003 = vsel %vm2441, %v3938, %v3940
  %v4004 = vsel %vm2441, %v3940, %v3942
  %v4005 = vsel %vm2441, %v3942, %v3944
  %v4006 = vsel %vm2441, %v3944, %v3946
  %vm4067 = vcmask 228352
  %v4068 = vsel %vm4067, %v3952, 0.0
  %v4069 = vsel %vm4067, %v3958, 0.0
  %v4070 = vsel %vm4067, %v3964, 0.0
  %v4071 = vsel %vm4067, %v3970, 0.0
  %v4072 = vsel %vm4067, %v3976, 0.0
  %v4073 = vsel %vm4067, %v3982, 0.0
  %v4074 = vsel %vm4067, %v3988, 0.0
  %v4075 = vsel %vm4067, %v3994, 0.0
  %v4076 = vsel %vm4067, %v4000, 0.0
  %v4077 = vsel %vm4067, %v4006, 0.0
  %4079 = vset.pattern.permute.xlu0 0
  %4080 = vperm.xlu0 %4079, %v1815
  %v4081 = vpop.permute.xlu0 %4080
  %4084 = vset.pattern.permute.xlu0 0
  %4085 = vperm.xlu0 %4084, %v1816
  %v4086 = vpop.permute.xlu0 %4085
  %4089 = vset.pattern.permute.xlu0 0
  %4090 = vperm.xlu0 %4089, %v1817
  %v4091 = vpop.permute.xlu0 %4090
  %4094 = vset.pattern.permute.xlu0 0
  %4095 = vperm.xlu0 %4094, %v1818
  %v4096 = vpop.permute.xlu0 %4095
  %4099 = vset.pattern.permute.xlu0 0
  %4100 = vperm.xlu0 %4099, %v1819
  %v4101 = vpop.permute.xlu0 %4100
  %vm4103 = vcmask 654336
  %v4105 = vsel %vm4103, %v1790, 0
  %v4108 = vsel %vm4103, %v1796, 0
  %v4111 = vsel %vm4103, %v1802, 0
  %v4114 = vsel %vm4103, %v1808, 0
  %v4117 = vsel %vm4103, %v1814, 0
  %4119 = vmatprep.subr.mxu0 %v1716
  %4120 = vmatpush1.msra.mxu0 %v1715
  %4121 = vmatprep.subr.mxu0 %v1723
  %4122 = vmatpush1.msra.mxu0 %v1722
  %4123 = vmatprep.subr.mxu0 %v1730
  %4124 = vmatpush1.msra.mxu0 %v1729
  %4125 = vmatprep.subr.mxu0 %v1737
  %4126 = vmatpush1.msra.mxu0 %v1736
  %4127 = vmatprep.subr.mxu0 %v1744
  %4128 = vmatpush1.msra.mxu0 %v1743
  %4129 = vmatprep.subr.mxu0 %v1751
  %4130 = vmatpush1.msra.mxu0 %v1750
  %4131 = vmatprep.subr.mxu0 %v1758
  %4132 = vmatpush1.msra.mxu0 %v1757
  %4133 = vmatprep.subr.mxu0 %v1765
  %4134 = vmatpush1.msra.mxu0 %v1764
  %4135 = vmatprep.subr.mxu0 %v1772
  %4136 = vmatpush1.msra.mxu0 %v1771
  %4137 = vmatprep.subr.mxu0 %v1779
  %4138 = vmatpush1.msra.mxu0 %v1778
  %4139 = vmatprep.subr.mxu0 %v2031
  %4140 = vmatpush1.msra.mxu0 %v2030
  %4141 = vmatprep.subr.mxu0 %v2037
  %4142 = vmatpush1.msra.mxu0 %v2036
  %4143 = vmatprep.subr.mxu0 %v2043
  %4144 = vmatpush1.msra.mxu0 %v2042
  %4145 = vmatprep.subr.mxu0 %v2049
  %4146 = vmatpush1.msra.mxu0 %v2048
  %4147 = vmatprep.subr.mxu0 %v2055
  %4148 = vmatpush1.msra.mxu0 %v2054
  %4149 = vmatprep.subr.mxu0 %v2061
  %4150 = vmatpush1.msra.mxu0 %v2060
  %4151 = vmatprep.subr.mxu0 %v2067
  %4152 = vmatpush1.msra.mxu0 %v2066
  %4153 = vmatprep.subr.mxu0 %v2073
  %4154 = vmatpush1.msra.mxu0 %v2072
  %4155 = vmatprep.subr.mxu0 %v2079
  %4156 = vmatpush1.msra.mxu0 %v2078
  %4157 = vmatprep.subr.mxu0 %v2085
  %4158 = vmatpush1.msra.mxu0 %v2084
  %4159 = vmatprep.subr.mxu0 %v2312
  %4160 = vmatpush1.msra.mxu0 %v2311
  %4161 = vmatprep.subr.mxu0 %v2318
  %4162 = vmatpush1.msra.mxu0 %v2317
  %4163 = vmatprep.subr.mxu0 %v2324
  %4164 = vmatpush1.msra.mxu0 %v2323
  %4165 = vmatprep.subr.mxu0 %v2330
  %4166 = vmatpush1.msra.mxu0 %v2329
  %4167 = vmatprep.subr.mxu0 %v2336
  %4168 = vmatpush1.msra.mxu0 %v2335
  %4169 = vmatprep.subr.mxu0 %v2342
  %4170 = vmatpush1.msra.mxu0 %v2341
  %4171 = vmatprep.subr.mxu0 %v2348
  %4172 = vmatpush1.msra.mxu0 %v2347
  %4173 = vmatprep.subr.mxu0 %v2354
  %4174 = vmatpush1.msra.mxu0 %v2353
  %4175 = vmatprep.subr.mxu0 %v2360
  %4176 = vmatpush1.msra.mxu0 %v2359
  %4177 = vmatprep.subr.mxu0 %v2366
  %4178 = vmatpush1.msra.mxu0 %v2365
  %4179 = vmatprep.subr.mxu0 %v2593
  %4180 = vmatpush1.msra.mxu0 %v2592
  %4181 = vmatprep.subr.mxu0 %v2599
  %4182 = vmatpush1.msra.mxu0 %v2598
  %4183 = vmatprep.mubr.f32.mxu0 %v1786
  %4184 = vmatmul.mubr.f32.gmra.mrb[0].mxu0 %v1785
  %v4185 = vpop.f32.mrb[0].mxu0
  %v4186 = vadd.f32 %v4081, %v4185
  %v4187 = vpop.f32.mrb[0].mxu0
  %v4188 = vadd.f32 %v4081, %v4187
  %4189 = vmatprep.mubr.f32.mxu0 %v1792
  %4190 = vmatmul.mubr.f32.gmra.mrb[0].mxu0 %v1791
  %v4191 = vpop.f32.mrb[0].mxu0
  %v4192 = vadd.f32 %v4086, %v4191
  %v4193 = vpop.f32.mrb[0].mxu0
  %v4194 = vadd.f32 %v4086, %v4193
  %4195 = vmatprep.mubr.f32.mxu0 %v1798
  %4196 = vmatmul.mubr.f32.gmra.mrb[0].mxu0 %v1797
  %v4197 = vpop.f32.mrb[0].mxu0
  %v4198 = vadd.f32 %v4091, %v4197
  %v4199 = vpop.f32.mrb[0].mxu0
  %v4200 = vadd.f32 %v4091, %v4199
  %4201 = vmatprep.mubr.f32.mxu0 %v1804
  %4202 = vmatmul.mubr.f32.gmra.mrb[0].mxu0 %v1803
  %v4203 = vpop.f32.mrb[0].mxu0
  %v4204 = vadd.f32 %v4096, %v4203
  %v4205 = vpop.f32.mrb[0].mxu0
  %v4206 = vadd.f32 %v4096, %v4205
  %4207 = vmatprep.mubr.f32.mxu0 %v1810
  %4208 = vmatmul.mubr.f32.gmra.mrb[0].mxu0 %v1809
  %v4209 = vpop.f32.mrb[0].mxu0
  %v4210 = vadd.f32 %v4101, %v4209
  %v4211 = vpop.f32.mrb[0].mxu0
  %v4212 = vadd.f32 %v4101, %v4211
  %4213 = vdwg.mxu0
  %4214 = vmatprep.subr.mxu0 %v2605
  %4215 = vmatpush1.msra.mxu0 %v2604
  %4216 = vmatprep.subr.mxu0 %v2611
  %4217 = vmatpush1.msra.mxu0 %v2610
  %4218 = vmatprep.subr.mxu0 %v2617
  %4219 = vmatpush1.msra.mxu0 %v2616
  %4220 = vmatprep.subr.mxu0 %v2623
  %4221 = vmatpush1.msra.mxu0 %v2622
  %4222 = vmatprep.subr.mxu0 %v2629
  %4223 = vmatpush1.msra.mxu0 %v2628
  %4224 = vmatprep.subr.mxu0 %v2635
  %4225 = vmatpush1.msra.mxu0 %v2634
  %4226 = vmatprep.subr.mxu0 %v2641
  %4227 = vmatpush1.msra.mxu0 %v2640
  %4228 = vmatprep.subr.mxu0 %v2647
  %4229 = vmatpush1.msra.mxu0 %v2646
  %4230 = vmatprep.subr.mxu0 %v2863
  %4231 = vmatpush1.msra.mxu0 %v2862
  %4232 = vmatprep.subr.mxu0 %v2869
  %4233 = vmatpush1.msra.mxu0 %v2868
  %4234 = vmatprep.subr.mxu0 %v2875
  %4235 = vmatpush1.msra.mxu0 %v2874
  %4236 = vmatprep.subr.mxu0 %v2881
  %4237 = vmatpush1.msra.mxu0 %v2880
  %4238 = vmatprep.subr.mxu0 %v2887
  %4239 = vmatpush1.msra.mxu0 %v2886
  %4240 = vmatprep.subr.mxu0 %v2893
  %4241 = vmatpush1.msra.mxu0 %v2892
  %4242 = vmatprep.subr.mxu0 %v2899
  %4243 = vmatpush1.msra.mxu0 %v2898
  %4244 = vmatprep.subr.mxu0 %v2905
  %4245 = vmatpush1.msra.mxu0 %v2904
  %4246 = vmatprep.subr.mxu0 %v2911
  %4247 = vmatpush1.msra.mxu0 %v2910
  %4248 = vmatprep.subr.mxu0 %v2917
  %4249 = vmatpush1.msra.mxu0 %v2916
  %4250 = vmatprep.subr.mxu0 %v3134
  %4251 = vmatpush1.msra.mxu0 %v3133
  %4252 = vmatprep.subr.mxu0 %v3140
  %4253 = vmatpush1.msra.mxu0 %v3139
  %4254 = vmatprep.subr.mxu0 %v3146
  %4255 = vmatpush1.msra.mxu0 %v3145
  %4256 = vmatprep.subr.mxu0 %v3152
  %4257 = vmatpush1.msra.mxu0 %v3151
  %4258 = vmatprep.subr.mxu0 %v3158
  %4259 = vmatpush1.msra.mxu0 %v3157
  %4260 = vmatprep.subr.mxu0 %v3164
  %4261 = vmatpush1.msra.mxu0 %v3163
  %4262 = vmatprep.subr.mxu0 %v3170
  %4263 = vmatpush1.msra.mxu0 %v3169
  %4264 = vmatprep.subr.mxu0 %v3176
  %4265 = vmatpush1.msra.mxu0 %v3175
  %4266 = vmatprep.subr.mxu0 %v3182
  %4267 = vmatpush1.msra.mxu0 %v3181
  %4268 = vmatprep.subr.mxu0 %v3188
  %4269 = vmatpush1.msra.mxu0 %v3187
  %4270 = vmatprep.subr.mxu0 %v3406
  %4271 = vmatpush1.msra.mxu0 %v3405
  %4272 = vmatprep.subr.mxu0 %v3412
  %4273 = vmatpush1.msra.mxu0 %v3411
  %4274 = vmatprep.subr.mxu0 %v3418
  %4275 = vmatpush1.msra.mxu0 %v3417
  %4276 = vmatprep.subr.mxu0 %v3424
  %4277 = vmatpush1.msra.mxu0 %v3423
  %4278 = vmatprep.mubr.f32.mxu0 %v1788
  %4279 = vmatmul.mubr.f32.gmra.mrb[0].mxu0 %v1787
  %v4280 = vpop.f32.mrb[0].mxu0
  %v4281 = vadd.f32 %v4186, %v4280
  %v4282 = vpop.f32.mrb[0].mxu0
  %v4283 = vadd.f32 %v4188, %v4282
  %4284 = vmatprep.mubr.f32.mxu0 %v1794
  %4285 = vmatmul.mubr.f32.gmra.mrb[0].mxu0 %v1793
  %v4286 = vpop.f32.mrb[0].mxu0
  %v4287 = vadd.f32 %v4192, %v4286
  %v4288 = vpop.f32.mrb[0].mxu0
  %v4289 = vadd.f32 %v4194, %v4288
  %4290 = vmatprep.mubr.f32.mxu0 %v1800
  %4291 = vmatmul.mubr.f32.gmra.mrb[0].mxu0 %v1799
  %v4292 = vpop.f32.mrb[0].mxu0
  %v4293 = vadd.f32 %v4198, %v4292
  %v4294 = vpop.f32.mrb[0].mxu0
  %v4295 = vadd.f32 %v4200, %v4294
  %4296 = vmatprep.mubr.f32.mxu0 %v1806
  %4297 = vmatmul.mubr.f32.gmra.mrb[0].mxu0 %v1805
  %v4298 = vpop.f32.mrb[0].mxu0
  %v4299 = vadd.f32 %v4204, %v4298
  %v4300 = vpop.f32.mrb[0].mxu0
  %v4301 = vadd.f32 %v4206, %v4300
  %4302 = vmatprep.mubr.f32.mxu0 %v1812
  %4303 = vmatmul.mubr.f32.gmra.mrb[0].mxu0 %v1811
  %v4304 = vpop.f32.mrb[0].mxu0
  %v4305 = vadd.f32 %v4210, %v4304
  %v4306 = vpop.f32.mrb[0].mxu0
  %v4307 = vadd.f32 %v4212, %v4306
  %4308 = vdwg.mxu0
  %4309 = vmatprep.subr.mxu0 %v3430
  %4310 = vmatpush1.msra.mxu0 %v3429
  %4311 = vmatprep.subr.mxu0 %v3436
  %4312 = vmatpush1.msra.mxu0 %v3435
  %4313 = vmatprep.subr.mxu0 %v3442
  %4314 = vmatpush1.msra.mxu0 %v3441
  %4315 = vmatprep.subr.mxu0 %v3448
  %4316 = vmatpush1.msra.mxu0 %v3447
  %4317 = vmatprep.subr.mxu0 %v3454
  %4318 = vmatpush1.msra.mxu0 %v3453
  %4319 = vmatprep.subr.mxu0 %v3460
  %4320 = vmatpush1.msra.mxu0 %v3459
  %4321 = vmatprep.subr.mxu0 %v3677
  %4322 = vmatpush1.msra.mxu0 %v3676
  %4323 = vmatprep.subr.mxu0 %v3683
  %4324 = vmatpush1.msra.mxu0 %v3682
  %4325 = vmatprep.subr.mxu0 %v3689
  %4326 = vmatpush1.msra.mxu0 %v3688
  %4327 = vmatprep.subr.mxu0 %v3695
  %4328 = vmatpush1.msra.mxu0 %v3694
  %4329 = vmatprep.subr.mxu0 %v3701
  %4330 = vmatpush1.msra.mxu0 %v3700
  %4331 = vmatprep.subr.mxu0 %v3707
  %4332 = vmatpush1.msra.mxu0 %v3706
  %4333 = vmatprep.subr.mxu0 %v3713
  %4334 = vmatpush1.msra.mxu0 %v3712
  %4335 = vmatprep.subr.mxu0 %v3719
  %4336 = vmatpush1.msra.mxu0 %v3718
  %4337 = vmatprep.subr.mxu0 %v3725
  %4338 = vmatpush1.msra.mxu0 %v3724
  %4339 = vmatprep.subr.mxu0 %v3731
  %4340 = vmatpush1.msra.mxu0 %v3730
  %4341 = vmatprep.subr.mxu0 %v3948
  %4342 = vmatpush1.msra.mxu0 %v3947
  %4343 = vmatprep.subr.mxu0 %v3954
  %4344 = vmatpush1.msra.mxu0 %v3953
  %4345 = vmatprep.subr.mxu0 %v3960
  %4346 = vmatpush1.msra.mxu0 %v3959
  %4347 = vmatprep.subr.mxu0 %v3966
  %4348 = vmatpush1.msra.mxu0 %v3965
  %4349 = vmatprep.subr.mxu0 %v3972
  %4350 = vmatpush1.msra.mxu0 %v3971
  %4351 = vmatprep.subr.mxu0 %v3978
  %4352 = vmatpush1.msra.mxu0 %v3977
  %4353 = vmatprep.subr.mxu0 %v3984
  %4354 = vmatpush1.msra.mxu0 %v3983
  %4355 = vmatprep.subr.mxu0 %v3990
  %4356 = vmatpush1.msra.mxu0 %v3989
  %4357 = vmatprep.subr.mxu0 %v3996
  %4358 = vmatpush1.msra.mxu0 %v3995
  %4359 = vmatprep.subr.mxu0 %v4002
  %4360 = vmatpush1.msra.mxu0 %v4001
  %4361 = vmatprep.subr.mxu0 0.0
  %4362 = vmatpush1.msra.mxu0 0.0
  %4363 = vmatprep.subr.mxu0 0.0
  %4364 = vmatpush1.msra.mxu0 0.0
  %4365 = vmatprep.subr.mxu0 0.0
  %4366 = vmatpush1.msra.mxu0 0.0
  %4367 = vmatprep.subr.mxu0 0.0
  %4368 = vmatpush1.msra.mxu0 0.0
  %4369 = vmatprep.subr.mxu0 0.0
  %4370 = vmatpush1.msra.mxu0 0.0
  %4371 = vmatprep.subr.mxu0 0.0
  %4372 = vmatpush1.msra.mxu0 0.0
  %4373 = vmatprep.mubr.f32.mxu0 %v4105
  %4374 = vmatmul.mubr.f32.gmra.mrb[0].mxu0 %v1789
  %v4375 = vpop.f32.mrb[0].mxu0
  %v4376 = vadd.f32 %v4281, %v4375
  %v4377 = vpop.f32.mrb[0].mxu0
  %v4378 = vadd.f32 %v4283, %v4377
  %4379 = vmatprep.mubr.f32.mxu0 %v4108
  %4380 = vmatmul.mubr.f32.gmra.mrb[0].mxu0 %v1795
  %v4381 = vpop.f32.mrb[0].mxu0
  %v4382 = vadd.f32 %v4287, %v4381
  %v4383 = vpop.f32.mrb[0].mxu0
  %v4384 = vadd.f32 %v4289, %v4383
  %4385 = vmatprep.mubr.f32.mxu0 %v4111
  %4386 = vmatmul.mubr.f32.gmra.mrb[0].mxu0 %v1801
  %v4387 = vpop.f32.mrb[0].mxu0
  %v4388 = vadd.f32 %v4293, %v4387
  %v4389 = vpop.f32.mrb[0].mxu0
  %v4390 = vadd.f32 %v4295, %v4389
  %4391 = vmatprep.mubr.f32.mxu0 %v4114
  %4392 = vmatmul.mubr.f32.gmra.mrb[0].mxu0 %v1807
  %v4393 = vpop.f32.mrb[0].mxu0
  %v4394 = vadd.f32 %v4299, %v4393
  %v4395 = vpop.f32.mrb[0].mxu0
  %v4396 = vadd.f32 %v4301, %v4395
  %4397 = vmatprep.mubr.f32.mxu0 %v4117
  %4398 = vmatmul.mubr.f32.gmra.mrb[0].mxu0 %v1813
  %v4399 = vpop.f32.mrb[0].mxu0
  %v4400 = vadd.f32 %v4305, %v4399
  %v4401 = vpop.f32.mrb[0].mxu0
  %v4402 = vadd.f32 %v4307, %v4401
  %4403 = vdwg.mxu0
  %4404 = vmatprep.subr.mxu0 %v1718
  %4405 = vmatpush1.msra.mxu0 %v1717
  %4406 = vmatprep.subr.mxu0 %v1725
  %4407 = vmatpush1.msra.mxu0 %v1724
  %4408 = vmatprep.subr.mxu0 %v1732
  %4409 = vmatpush1.msra.mxu0 %v1731
  %4410 = vmatprep.subr.mxu0 %v1739
  %4411 = vmatpush1.msra.mxu0 %v1738
  %4412 = vmatprep.subr.mxu0 %v1746
  %4413 = vmatpush1.msra.mxu0 %v1745
  %4414 = vmatprep.subr.mxu0 %v1753
  %4415 = vmatpush1.msra.mxu0 %v1752
  %4416 = vmatprep.subr.mxu0 %v1760
  %4417 = vmatpush1.msra.mxu0 %v1759
  %4418 = vmatprep.subr.mxu0 %v1767
  %4419 = vmatpush1.msra.mxu0 %v1766
  %4420 = vmatprep.subr.mxu0 %v1774
  %4421 = vmatpush1.msra.mxu0 %v1773
  %4422 = vmatprep.subr.mxu0 %v1781
  %4423 = vmatpush1.msra.mxu0 %v1780
  %4424 = vmatprep.subr.mxu0 %v2033
  %4425 = vmatpush1.msra.mxu0 %v2032
  %4426 = vmatprep.subr.mxu0 %v2039
  %4427 = vmatpush1.msra.mxu0 %v2038
  %4428 = vmatprep.subr.mxu0 %v2045
  %4429 = vmatpush1.msra.mxu0 %v2044
  %4430 = vmatprep.subr.mxu0 %v2051
  %4431 = vmatpush1.msra.mxu0 %v2050
  %4432 = vmatprep.subr.mxu0 %v2057
  %4433 = vmatpush1.msra.mxu0 %v2056
  %4434 = vmatprep.subr.mxu0 %v2063
  %4435 = vmatpush1.msra.mxu0 %v2062
  %4436 = vmatprep.subr.mxu0 %v2069
  %4437 = vmatpush1.msra.mxu0 %v2068
  %4438 = vmatprep.subr.mxu0 %v2075
  %4439 = vmatpush1.msra.mxu0 %v2074
  %4440 = vmatprep.subr.mxu0 %v2081
  %4441 = vmatpush1.msra.mxu0 %v2080
  %4442 = vmatprep.subr.mxu0 %v2087
  %4443 = vmatpush1.msra.mxu0 %v2086
  %4444 = vmatprep.subr.mxu0 %v2314
  %4445 = vmatpush1.msra.mxu0 %v2313
  %4446 = vmatprep.subr.mxu0 %v2320
  %4447 = vmatpush1.msra.mxu0 %v2319
  %4448 = vmatprep.subr.mxu0 %v2326
  %4449 = vmatpush1.msra.mxu0 %v2325
  %4450 = vmatprep.subr.mxu0 %v2332
  %4451 = vmatpush1.msra.mxu0 %v2331
  %4452 = vmatprep.subr.mxu0 %v2338
  %4453 = vmatpush1.msra.mxu0 %v2337
  %4454 = vmatprep.subr.mxu0 %v2344
  %4455 = vmatpush1.msra.mxu0 %v2343
  %4456 = vmatprep.subr.mxu0 %v2350
  %4457 = vmatpush1.msra.mxu0 %v2349
  %4458 = vmatprep.subr.mxu0 %v2356
  %4459 = vmatpush1.msra.mxu0 %v2355
  %4460 = vmatprep.subr.mxu0 %v2362
  %4461 = vmatpush1.msra.mxu0 %v2361
  %4462 = vmatprep.subr.mxu0 %v2368
  %4463 = vmatpush1.msra.mxu0 %v2367
  %4464 = vmatprep.subr.mxu0 %v2595
  %4465 = vmatpush1.msra.mxu0 %v2594
  %4466 = vmatprep.subr.mxu0 %v2601
  %4467 = vmatpush1.msra.mxu0 %v2600
  %4468 = vmatprep.mubr.f32.mxu0 %v1786
  %4469 = vmatmul.mubr.f32.gmra.mrb[0].mxu0 %v1785
  %v4470 = vpop.f32.mrb[0].mxu0
  %v4471 = vadd.f32 %v4081, %v4470
  %v4472 = vpop.f32.mrb[0].mxu0
  %v4473 = vadd.f32 %v4081, %v4472
  %4474 = vmatprep.mubr.f32.mxu0 %v1792
  %4475 = vmatmul.mubr.f32.gmra.mrb[0].mxu0 %v1791
  %v4476 = vpop.f32.mrb[0].mxu0
  %v4477 = vadd.f32 %v4086, %v4476
  %v4478 = vpop.f32.mrb[0].mxu0
  %v4479 = vadd.f32 %v4086, %v4478
  %4480 = vmatprep.mubr.f32.mxu0 %v1798
  %4481 = vmatmul.mubr.f32.gmra.mrb[0].mxu0 %v1797
  %v4482 = vpop.f32.mrb[0].mxu0
  %v4483 = vadd.f32 %v4091, %v4482
  %v4484 = vpop.f32.mrb[0].mxu0
  %v4485 = vadd.f32 %v4091, %v4484
  %4486 = vmatprep.mubr.f32.mxu0 %v1804
  %4487 = vmatmul.mubr.f32.gmra.mrb[0].mxu0 %v1803
  %v4488 = vpop.f32.mrb[0].mxu0
  %v4489 = vadd.f32 %v4096, %v4488
  %v4490 = vpop.f32.mrb[0].mxu0
  %v4491 = vadd.f32 %v4096, %v4490
  %4492 = vmatprep.mubr.f32.mxu0 %v1810
  %4493 = vmatmul.mubr.f32.gmra.mrb[0].mxu0 %v1809
  %v4494 = vpop.f32.mrb[0].mxu0
  %v4495 = vadd.f32 %v4101, %v4494
  %v4496 = vpop.f32.mrb[0].mxu0
  %v4497 = vadd.f32 %v4101, %v4496
  %4498 = vdwg.mxu0
  %4499 = vmatprep.subr.mxu0 %v2607
  %4500 = vmatpush1.msra.mxu0 %v2606
  %4501 = vmatprep.subr.mxu0 %v2613
  %4502 = vmatpush1.msra.mxu0 %v2612
  %4503 = vmatprep.subr.mxu0 %v2619
  %4504 = vmatpush1.msra.mxu0 %v2618
  %4505 = vmatprep.subr.mxu0 %v2625
  %4506 = vmatpush1.msra.mxu0 %v2624
  %4507 = vmatprep.subr.mxu0 %v2631
  %4508 = vmatpush1.msra.mxu0 %v2630
  %4509 = vmatprep.subr.mxu0 %v2637
  %4510 = vmatpush1.msra.mxu0 %v2636
  %4511 = vmatprep.subr.mxu0 %v2643
  %4512 = vmatpush1.msra.mxu0 %v2642
  %4513 = vmatprep.subr.mxu0 %v2649
  %4514 = vmatpush1.msra.mxu0 %v2648
  %4515 = vmatprep.subr.mxu0 %v2865
  %4516 = vmatpush1.msra.mxu0 %v2864
  %4517 = vmatprep.subr.mxu0 %v2871
  %4518 = vmatpush1.msra.mxu0 %v2870
  %4519 = vmatprep.subr.mxu0 %v2877
  %4520 = vmatpush1.msra.mxu0 %v2876
  %4521 = vmatprep.subr.mxu0 %v2883
  %4522 = vmatpush1.msra.mxu0 %v2882
  %4523 = vmatprep.subr.mxu0 %v2889
  %4524 = vmatpush1.msra.mxu0 %v2888
  %4525 = vmatprep.subr.mxu0 %v2895
  %4526 = vmatpush1.msra.mxu0 %v2894
  %4527 = vmatprep.subr.mxu0 %v2901
  %4528 = vmatpush1.msra.mxu0 %v2900
  %4529 = vmatprep.subr.mxu0 %v2907
  %4530 = vmatpush1.msra.mxu0 %v2906
  %4531 = vmatprep.subr.mxu0 %v2913
  %4532 = vmatpush1.msra.mxu0 %v2912
  %4533 = vmatprep.subr.mxu0 %v2919
  %4534 = vmatpush1.msra.mxu0 %v2918
  %4535 = vmatprep.subr.mxu0 %v3136
  %4536 = vmatpush1.msra.mxu0 %v3135
  %4537 = vmatprep.subr.mxu0 %v3142
  %4538 = vmatpush1.msra.mxu0 %v3141
  %4539 = vmatprep.subr.mxu0 %v3148
  %4540 = vmatpush1.msra.mxu0 %v3147
  %4541 = vmatprep.subr.mxu0 %v3154
  %4542 = vmatpush1.msra.mxu0 %v3153
  %4543 = vmatprep.subr.mxu0 %v3160
  %4544 = vmatpush1.msra.mxu0 %v3159
  %4545 = vmatprep.subr.mxu0 %v3166
  %4546 = vmatpush1.msra.mxu0 %v3165
  %4547 = vmatprep.subr.mxu0 %v3172
  %4548 = vmatpush1.msra.mxu0 %v3171
  %4549 = vmatprep.subr.mxu0 %v3178
  %4550 = vmatpush1.msra.mxu0 %v3177
  %4551 = vmatprep.subr.mxu0 %v3184
  %4552 = vmatpush1.msra.mxu0 %v3183
  %4553 = vmatprep.subr.mxu0 %v3190
  %4554 = vmatpush1.msra.mxu0 %v3189
  %4555 = vmatprep.subr.mxu0 %v3408
  %4556 = vmatpush1.msra.mxu0 %v3407
  %4557 = vmatprep.subr.mxu0 %v3414
  %4558 = vmatpush1.msra.mxu0 %v3413
  %4559 = vmatprep.subr.mxu0 %v3420
  %4560 = vmatpush1.msra.mxu0 %v3419
  %4561 = vmatprep.subr.mxu0 %v3426
  %4562 = vmatpush1.msra.mxu0 %v3425
  %4563 = vmatprep.mubr.f32.mxu0 %v1788
  %4564 = vmatmul.mubr.f32.gmra.mrb[0].mxu0 %v1787
  %v4565 = vpop.f32.mrb[0].mxu0
  %v4566 = vadd.f32 %v4471, %v4565
  %v4567 = vpop.f32.mrb[0].mxu0
  %v4568 = vadd.f32 %v4473, %v4567
  %4569 = vmatprep.mubr.f32.mxu0 %v1794
  %4570 = vmatmul.mubr.f32.gmra.mrb[0].mxu0 %v1793
  %v4571 = vpop.f32.mrb[0].mxu0
  %v4572 = vadd.f32 %v4477, %v4571
  %v4573 = vpop.f32.mrb[0].mxu0
  %v4574 = vadd.f32 %v4479, %v4573
  %4575 = vmatprep.mubr.f32.mxu0 %v1800
  %4576 = vmatmul.mubr.f32.gmra.mrb[0].mxu0 %v1799
  %v4577 = vpop.f32.mrb[0].mxu0
  %v4578 = vadd.f32 %v4483, %v4577
  %v4579 = vpop.f32.mrb[0].mxu0
  %v4580 = vadd.f32 %v4485, %v4579
  %4581 = vmatprep.mubr.f32.mxu0 %v1806
  %4582 = vmatmul.mubr.f32.gmra.mrb[0].mxu0 %v1805
  %v4583 = vpop.f32.mrb[0].mxu0
  %v4584 = vadd.f32 %v4489, %v4583
  %v4585 = vpop.f32.mrb[0].mxu0
  %v4586 = vadd.f32 %v4491, %v4585
  %4587 = vmatprep.mubr.f32.mxu0 %v1812
  %4588 = vmatmul.mubr.f32.gmra.mrb[0].mxu0 %v1811
  %v4589 = vpop.f32.mrb[0].mxu0
  %v4590 = vadd.f32 %v4495, %v4589
  %v4591 = vpop.f32.mrb[0].mxu0
  %v4592 = vadd.f32 %v4497, %v4591
  %4593 = vdwg.mxu0
  %4594 = vmatprep.subr.mxu0 %v3432
  %4595 = vmatpush1.msra.mxu0 %v3431
  %4596 = vmatprep.subr.mxu0 %v3438
  %4597 = vmatpush1.msra.mxu0 %v3437
  %4598 = vmatprep.subr.mxu0 %v3444
  %4599 = vmatpush1.msra.mxu0 %v3443
  %4600 = vmatprep.subr.mxu0 %v3450
  %4601 = vmatpush1.msra.mxu0 %v3449
  %4602 = vmatprep.subr.mxu0 %v3456
  %4603 = vmatpush1.msra.mxu0 %v3455
  %4604 = vmatprep.subr.mxu0 %v3462
  %4605 = vmatpush1.msra.mxu0 %v3461
  %4606 = vmatprep.subr.mxu0 %v3679
  %4607 = vmatpush1.msra.mxu0 %v3678
  %4608 = vmatprep.subr.mxu0 %v3685
  %4609 = vmatpush1.msra.mxu0 %v3684
  %4610 = vmatprep.subr.mxu0 %v3691
  %4611 = vmatpush1.msra.mxu0 %v3690
  %4612 = vmatprep.subr.mxu0 %v3697
  %4613 = vmatpush1.msra.mxu0 %v3696
  %4614 = vmatprep.subr.mxu0 %v3703
  %4615 = vmatpush1.msra.mxu0 %v3702
  %4616 = vmatprep.subr.mxu0 %v3709
  %4617 = vmatpush1.msra.mxu0 %v3708
  %4618 = vmatprep.subr.mxu0 %v3715
  %4619 = vmatpush1.msra.mxu0 %v3714
  %4620 = vmatprep.subr.mxu0 %v3721
  %4621 = vmatpush1.msra.mxu0 %v3720
  %4622 = vmatprep.subr.mxu0 %v3727
  %4623 = vmatpush1.msra.mxu0 %v3726
  %4624 = vmatprep.subr.mxu0 %v3733
  %4625 = vmatpush1.msra.mxu0 %v3732
  %4626 = vmatprep.subr.mxu0 %v3950
  %4627 = vmatpush1.msra.mxu0 %v3949
  %4628 = vmatprep.subr.mxu0 %v3956
  %4629 = vmatpush1.msra.mxu0 %v3955
  %4630 = vmatprep.subr.mxu0 %v3962
  %4631 = vmatpush1.msra.mxu0 %v3961
  %4632 = vmatprep.subr.mxu0 %v3968
  %4633 = vmatpush1.msra.mxu0 %v3967
  %4634 = vmatprep.subr.mxu0 %v3974
  %4635 = vmatpush1.msra.mxu0 %v3973
  %4636 = vmatprep.subr.mxu0 %v3980
  %4637 = vmatpush1.msra.mxu0 %v3979
  %4638 = vmatprep.subr.mxu0 %v3986
  %4639 = vmatpush1.msra.mxu0 %v3985
  %4640 = vmatprep.subr.mxu0 %v3992
  %4641 = vmatpush1.msra.mxu0 %v3991
  %4642 = vmatprep.subr.mxu0 %v3998
  %4643 = vmatpush1.msra.mxu0 %v3997
  %4644 = vmatprep.subr.mxu0 %v4004
  %4645 = vmatpush1.msra.mxu0 %v4003
  %4646 = vmatprep.subr.mxu0 0.0
  %4647 = vmatpush1.msra.mxu0 0.0
  %4648 = vmatprep.subr.mxu0 0.0
  %4649 = vmatpush1.msra.mxu0 0.0
  %4650 = vmatprep.subr.mxu0 0.0
  %4651 = vmatpush1.msra.mxu0 0.0
  %4652 = vmatprep.subr.mxu0 0.0
  %4653 = vmatpush1.msra.mxu0 0.0
  %4654 = vmatprep.subr.mxu0 0.0
  %4655 = vmatpush1.msra.mxu0 0.0
  %4656 = vmatprep.subr.mxu0 0.0
  %4657 = vmatpush1.msra.mxu0 0.0
  %4658 = vmatprep.mubr.f32.mxu0 %v4105
  %4659 = vmatmul.mubr.f32.gmra.mrb[0].mxu0 %v1789
  %v4660 = vpop.f32.mrb[0].mxu0
  %v4661 = vadd.f32 %v4566, %v4660
  %v4662 = vpop.f32.mrb[0].mxu0
  %v4663 = vadd.f32 %v4568, %v4662
  %4664 = vmatprep.mubr.f32.mxu0 %v4108
  %4665 = vmatmul.mubr.f32.gmra.mrb[0].mxu0 %v1795
  %v4666 = vpop.f32.mrb[0].mxu0
  %v4667 = vadd.f32 %v4572, %v4666
  %v4668 = vpop.f32.mrb[0].mxu0
  %v4669 = vadd.f32 %v4574, %v4668
  %4670 = vmatprep.mubr.f32.mxu0 %v4111
  %4671 = vmatmul.mubr.f32.gmra.mrb[0].mxu0 %v1801
  %v4672 = vpop.f32.mrb[0].mxu0
  %v4673 = vadd.f32 %v4578, %v4672
  %v4674 = vpop.f32.mrb[0].mxu0
  %v4675 = vadd.f32 %v4580, %v4674
  %4676 = vmatprep.mubr.f32.mxu0 %v4114
  %4677 = vmatmul.mubr.f32.gmra.mrb[0].mxu0 %v1807
  %v4678 = vpop.f32.mrb[0].mxu0
  %v4679 = vadd.f32 %v4584, %v4678
  %v4680 = vpop.f32.mrb[0].mxu0
  %v4681 = vadd.f32 %v4586, %v4680
  %4682 = vmatprep.mubr.f32.mxu0 %v4117
  %4683 = vmatmul.mubr.f32.gmra.mrb[0].mxu0 %v1813
  %v4684 = vpop.f32.mrb[0].mxu0
  %v4685 = vadd.f32 %v4590, %v4684
  %v4686 = vpop.f32.mrb[0].mxu0
  %v4687 = vadd.f32 %v4592, %v4686
  %4688 = vdwg.mxu0
  %4689 = vmatprep.subr.mxu0 %v1720
  %4690 = vmatpush1.msra.mxu0 %v1719
  %4691 = vmatprep.subr.mxu0 %v1727
  %4692 = vmatpush1.msra.mxu0 %v1726
  %4693 = vmatprep.subr.mxu0 %v1734
  %4694 = vmatpush1.msra.mxu0 %v1733
  %4695 = vmatprep.subr.mxu0 %v1741
  %4696 = vmatpush1.msra.mxu0 %v1740
  %4697 = vmatprep.subr.mxu0 %v1748
  %4698 = vmatpush1.msra.mxu0 %v1747
  %4699 = vmatprep.subr.mxu0 %v1755
  %4700 = vmatpush1.msra.mxu0 %v1754
  %4701 = vmatprep.subr.mxu0 %v1762
  %4702 = vmatpush1.msra.mxu0 %v1761
  %4703 = vmatprep.subr.mxu0 %v1769
  %4704 = vmatpush1.msra.mxu0 %v1768
  %4705 = vmatprep.subr.mxu0 %v1776
  %4706 = vmatpush1.msra.mxu0 %v1775
  %4707 = vmatprep.subr.mxu0 %v1783
  %4708 = vmatpush1.msra.mxu0 %v1782
  %4709 = vmatprep.subr.mxu0 %v2035
  %4710 = vmatpush1.msra.mxu0 %v2034
  %4711 = vmatprep.subr.mxu0 %v2041
  %4712 = vmatpush1.msra.mxu0 %v2040
  %4713 = vmatprep.subr.mxu0 %v2047
  %4714 = vmatpush1.msra.mxu0 %v2046
  %4715 = vmatprep.subr.mxu0 %v2053
  %4716 = vmatpush1.msra.mxu0 %v2052
  %4717 = vmatprep.subr.mxu0 %v2059
  %4718 = vmatpush1.msra.mxu0 %v2058
  %4719 = vmatprep.subr.mxu0 %v2065
  %4720 = vmatpush1.msra.mxu0 %v2064
  %4721 = vmatprep.subr.mxu0 %v2071
  %4722 = vmatpush1.msra.mxu0 %v2070
  %4723 = vmatprep.subr.mxu0 %v2077
  %4724 = vmatpush1.msra.mxu0 %v2076
  %4725 = vmatprep.subr.mxu0 %v2083
  %4726 = vmatpush1.msra.mxu0 %v2082
  %4727 = vmatprep.subr.mxu0 %v2089
  %4728 = vmatpush1.msra.mxu0 %v2088
  %4729 = vmatprep.subr.mxu0 %v2316
  %4730 = vmatpush1.msra.mxu0 %v2315
  %4731 = vmatprep.subr.mxu0 %v2322
  %4732 = vmatpush1.msra.mxu0 %v2321
  %4733 = vmatprep.subr.mxu0 %v2328
  %4734 = vmatpush1.msra.mxu0 %v2327
  %4735 = vmatprep.subr.mxu0 %v2334
  %4736 = vmatpush1.msra.mxu0 %v2333
  %4737 = vmatprep.subr.mxu0 %v2340
  %4738 = vmatpush1.msra.mxu0 %v2339
  %4739 = vmatprep.subr.mxu0 %v2346
  %4740 = vmatpush1.msra.mxu0 %v2345
  %4741 = vmatprep.subr.mxu0 %v2352
  %4742 = vmatpush1.msra.mxu0 %v2351
  %4743 = vmatprep.subr.mxu0 %v2358
  %4744 = vmatpush1.msra.mxu0 %v2357
  %4745 = vmatprep.subr.mxu0 %v2364
  %4746 = vmatpush1.msra.mxu0 %v2363
  %4747 = vmatprep.subr.mxu0 %v2370
  %4748 = vmatpush1.msra.mxu0 %v2369
  %4749 = vmatprep.subr.mxu0 %v2712
  %4750 = vmatpush1.msra.mxu0 %v2596
  %4751 = vmatprep.subr.mxu0 %v2713
  %4752 = vmatpush1.msra.mxu0 %v2602
  %4753 = vmatprep.mubr.f32.mxu0 %v1786
  %4754 = vmatmul.mubr.f32.gmra.mrb[0].mxu0 %v1785
  %v4755 = vpop.f32.mrb[0].mxu0
  %v4756 = vadd.f32 %v4081, %v4755
  %v4757 = vpop.f32.mrb[0].mxu0
  %v4758 = vadd.f32 %v4081, %v4757
  %4759 = vmatprep.mubr.f32.mxu0 %v1792
  %4760 = vmatmul.mubr.f32.gmra.mrb[0].mxu0 %v1791
  %v4761 = vpop.f32.mrb[0].mxu0
  %v4762 = vadd.f32 %v4086, %v4761
  %v4763 = vpop.f32.mrb[0].mxu0
  %v4764 = vadd.f32 %v4086, %v4763
  %4765 = vmatprep.mubr.f32.mxu0 %v1798
  %4766 = vmatmul.mubr.f32.gmra.mrb[0].mxu0 %v1797
  %v4767 = vpop.f32.mrb[0].mxu0
  %v4768 = vadd.f32 %v4091, %v4767
  %v4769 = vpop.f32.mrb[0].mxu0
  %v4770 = vadd.f32 %v4091, %v4769
  %4771 = vmatprep.mubr.f32.mxu0 %v1804
  %4772 = vmatmul.mubr.f32.gmra.mrb[0].mxu0 %v1803
  %v4773 = vpop.f32.mrb[0].mxu0
  %v4774 = vadd.f32 %v4096, %v4773
  %v4775 = vpop.f32.mrb[0].mxu0
  %v4776 = vadd.f32 %v4096, %v4775
  %4777 = vmatprep.mubr.f32.mxu0 %v1810
  %4778 = vmatmul.mubr.f32.gmra.mrb[0].mxu0 %v1809
  %v4779 = vpop.f32.mrb[0].mxu0
  %v4780 = vadd.f32 %v4101, %v4779
  %v4781 = vpop.f32.mrb[0].mxu0
  %v4782 = vadd.f32 %v4101, %v4781
  %4783 = vdwg.mxu0
  %4784 = vmatprep.subr.mxu0 %v2714
  %4785 = vmatpush1.msra.mxu0 %v2608
  %4786 = vmatprep.subr.mxu0 %v2715
  %4787 = vmatpush1.msra.mxu0 %v2614
  %4788 = vmatprep.subr.mxu0 %v2716
  %4789 = vmatpush1.msra.mxu0 %v2620
  %4790 = vmatprep.subr.mxu0 %v2717
  %4791 = vmatpush1.msra.mxu0 %v2626
  %4792 = vmatprep.subr.mxu0 %v2718
  %4793 = vmatpush1.msra.mxu0 %v2632
  %4794 = vmatprep.subr.mxu0 %v2719
  %4795 = vmatpush1.msra.mxu0 %v2638
  %4796 = vmatprep.subr.mxu0 %v2720
  %4797 = vmatpush1.msra.mxu0 %v2644
  %4798 = vmatprep.subr.mxu0 %v2721
  %4799 = vmatpush1.msra.mxu0 %v2650
  %4800 = vmatprep.subr.mxu0 %v2982
  %4801 = vmatpush1.msra.mxu0 %v2866
  %4802 = vmatprep.subr.mxu0 %v2983
  %4803 = vmatpush1.msra.mxu0 %v2872
  %4804 = vmatprep.subr.mxu0 %v2984
  %4805 = vmatpush1.msra.mxu0 %v2878
  %4806 = vmatprep.subr.mxu0 %v2985
  %4807 = vmatpush1.msra.mxu0 %v2884
  %4808 = vmatprep.subr.mxu0 %v2986
  %4809 = vmatpush1.msra.mxu0 %v2890
  %4810 = vmatprep.subr.mxu0 %v2987
  %4811 = vmatpush1.msra.mxu0 %v2896
  %4812 = vmatprep.subr.mxu0 %v2988
  %4813 = vmatpush1.msra.mxu0 %v2902
  %4814 = vmatprep.subr.mxu0 %v2989
  %4815 = vmatpush1.msra.mxu0 %v2908
  %4816 = vmatprep.subr.mxu0 %v2990
  %4817 = vmatpush1.msra.mxu0 %v2914
  %4818 = vmatprep.subr.mxu0 %v2991
  %4819 = vmatpush1.msra.mxu0 %v2920
  %4820 = vmatprep.subr.mxu0 %v3254
  %4821 = vmatpush1.msra.mxu0 %v3137
  %4822 = vmatprep.subr.mxu0 %v3255
  %4823 = vmatpush1.msra.mxu0 %v3143
  %4824 = vmatprep.subr.mxu0 %v3256
  %4825 = vmatpush1.msra.mxu0 %v3149
  %4826 = vmatprep.subr.mxu0 %v3257
  %4827 = vmatpush1.msra.mxu0 %v3155
  %4828 = vmatprep.subr.mxu0 %v3258
  %4829 = vmatpush1.msra.mxu0 %v3161
  %4830 = vmatprep.subr.mxu0 %v3259
  %4831 = vmatpush1.msra.mxu0 %v3167
  %4832 = vmatprep.subr.mxu0 %v3260
  %4833 = vmatpush1.msra.mxu0 %v3173
  %4834 = vmatprep.subr.mxu0 %v3261
  %4835 = vmatpush1.msra.mxu0 %v3179
  %4836 = vmatprep.subr.mxu0 %v3262
  %4837 = vmatpush1.msra.mxu0 %v3185
  %4838 = vmatprep.subr.mxu0 %v3263
  %4839 = vmatpush1.msra.mxu0 %v3191
  %4840 = vmatprep.subr.mxu0 %v3526
  %4841 = vmatpush1.msra.mxu0 %v3409
  %4842 = vmatprep.subr.mxu0 %v3527
  %4843 = vmatpush1.msra.mxu0 %v3415
  %4844 = vmatprep.subr.mxu0 %v3528
  %4845 = vmatpush1.msra.mxu0 %v3421
  %4846 = vmatprep.subr.mxu0 %v3529
  %4847 = vmatpush1.msra.mxu0 %v3427
  %4848 = vmatprep.mubr.f32.mxu0 %v1788
  %4849 = vmatmul.mubr.f32.gmra.mrb[0].mxu0 %v1787
  %v4850 = vpop.f32.mrb[0].mxu0
  %v4851 = vadd.f32 %v4756, %v4850
  %v4852 = vpop.f32.mrb[0].mxu0
  %v4853 = vadd.f32 %v4758, %v4852
  %4854 = vmatprep.mubr.f32.mxu0 %v1794
  %4855 = vmatmul.mubr.f32.gmra.mrb[0].mxu0 %v1793
  %v4856 = vpop.f32.mrb[0].mxu0
  %v4857 = vadd.f32 %v4762, %v4856
  %v4858 = vpop.f32.mrb[0].mxu0
  %v4859 = vadd.f32 %v4764, %v4858
  %4860 = vmatprep.mubr.f32.mxu0 %v1800
  %4861 = vmatmul.mubr.f32.gmra.mrb[0].mxu0 %v1799
  %v4862 = vpop.f32.mrb[0].mxu0
  %v4863 = vadd.f32 %v4768, %v4862
  %v4864 = vpop.f32.mrb[0].mxu0
  %v4865 = vadd.f32 %v4770, %v4864
  %4866 = vmatprep.mubr.f32.mxu0 %v1806
  %4867 = vmatmul.mubr.f32.gmra.mrb[0].mxu0 %v1805
  %v4868 = vpop.f32.mrb[0].mxu0
  %v4869 = vadd.f32 %v4774, %v4868
  %v4870 = vpop.f32.mrb[0].mxu0
  %v4871 = vadd.f32 %v4776, %v4870
  %4872 = vmatprep.mubr.f32.mxu0 %v1812
  %4873 = vmatmul.mubr.f32.gmra.mrb[0].mxu0 %v1811
  %v4874 = vpop.f32.mrb[0].mxu0
  %v4875 = vadd.f32 %v4780, %v4874
  %v4876 = vpop.f32.mrb[0].mxu0
  %v4877 = vadd.f32 %v4782, %v4876
  %4878 = vdwg.mxu0
  %4879 = vmatprep.subr.mxu0 %v3530
  %4880 = vmatpush1.msra.mxu0 %v3433
  %4881 = vmatprep.subr.mxu0 %v3531
  %4882 = vmatpush1.msra.mxu0 %v3439
  %4883 = vmatprep.subr.mxu0 %v3532
  %4884 = vmatpush1.msra.mxu0 %v3445
  %4885 = vmatprep.subr.mxu0 %v3533
  %4886 = vmatpush1.msra.mxu0 %v3451
  %4887 = vmatprep.subr.mxu0 %v3534
  %4888 = vmatpush1.msra.mxu0 %v3457
  %4889 = vmatprep.subr.mxu0 %v3535
  %4890 = vmatpush1.msra.mxu0 %v3463
  %4891 = vmatprep.subr.mxu0 %v3797
  %4892 = vmatpush1.msra.mxu0 %v3680
  %4893 = vmatprep.subr.mxu0 %v3798
  %4894 = vmatpush1.msra.mxu0 %v3686
  %4895 = vmatprep.subr.mxu0 %v3799
  %4896 = vmatpush1.msra.mxu0 %v3692
  %4897 = vmatprep.subr.mxu0 %v3800
  %4898 = vmatpush1.msra.mxu0 %v3698
  %4899 = vmatprep.subr.mxu0 %v3801
  %4900 = vmatpush1.msra.mxu0 %v3704
  %4901 = vmatprep.subr.mxu0 %v3802
  %4902 = vmatpush1.msra.mxu0 %v3710
  %4903 = vmatprep.subr.mxu0 %v3803
  %4904 = vmatpush1.msra.mxu0 %v3716
  %4905 = vmatprep.subr.mxu0 %v3804
  %4906 = vmatpush1.msra.mxu0 %v3722
  %4907 = vmatprep.subr.mxu0 %v3805
  %4908 = vmatpush1.msra.mxu0 %v3728
  %4909 = vmatprep.subr.mxu0 %v3806
  %4910 = vmatpush1.msra.mxu0 %v3734
  %4911 = vmatprep.subr.mxu0 %v4068
  %4912 = vmatpush1.msra.mxu0 %v3951
  %4913 = vmatprep.subr.mxu0 %v4069
  %4914 = vmatpush1.msra.mxu0 %v3957
  %4915 = vmatprep.subr.mxu0 %v4070
  %4916 = vmatpush1.msra.mxu0 %v3963
  %4917 = vmatprep.subr.mxu0 %v4071
  %4918 = vmatpush1.msra.mxu0 %v3969
  %4919 = vmatprep.subr.mxu0 %v4072
  %4920 = vmatpush1.msra.mxu0 %v3975
  %4921 = vmatprep.subr.mxu0 %v4073
  %4922 = vmatpush1.msra.mxu0 %v3981
  %4923 = vmatprep.subr.mxu0 %v4074
  %4924 = vmatpush1.msra.mxu0 %v3987
  %4925 = vmatprep.subr.mxu0 %v4075
  %4926 = vmatpush1.msra.mxu0 %v3993
  %4927 = vmatprep.subr.mxu0 %v4076
  %4928 = vmatpush1.msra.mxu0 %v3999
  %4929 = vmatprep.subr.mxu0 %v4077
  %4930 = vmatpush1.msra.mxu0 %v4005
  %4931 = vmatprep.subr.mxu0 0.0
  %4932 = vmatpush1.msra.mxu0 0.0
  %4933 = vmatprep.subr.mxu0 0.0
  %4934 = vmatpush1.msra.mxu0 0.0
  %4935 = vmatprep.subr.mxu0 0.0
  %4936 = vmatpush1.msra.mxu0 0.0
  %4937 = vmatprep.subr.mxu0 0.0
  %4938 = vmatpush1.msra.mxu0 0.0
  %4939 = vmatprep.subr.mxu0 0.0
  %4940 = vmatpush1.msra.mxu0 0.0
  %4941 = vmatprep.subr.mxu0 0.0
  %4942 = vmatpush1.msra.mxu0 0.0
  %4943 = vmatprep.mubr.f32.mxu0 %v4105
  %4944 = vmatmul.mubr.f32.gmra.mrb[0].mxu0 %v1789
  %v4945 = vpop.f32.mrb[0].mxu0
  %v4946 = vadd.f32 %v4851, %v4945
  %v4947 = vpop.f32.mrb[0].mxu0
  %v4948 = vadd.f32 %v4853, %v4947
  %4949 = vmatprep.mubr.f32.mxu0 %v4108
  %4950 = vmatmul.mubr.f32.gmra.mrb[0].mxu0 %v1795
  %v4951 = vpop.f32.mrb[0].mxu0
  %v4952 = vadd.f32 %v4857, %v4951
  %v4953 = vpop.f32.mrb[0].mxu0
  %v4954 = vadd.f32 %v4859, %v4953
  %4955 = vmatprep.mubr.f32.mxu0 %v4111
  %4956 = vmatmul.mubr.f32.gmra.mrb[0].mxu0 %v1801
  %v4957 = vpop.f32.mrb[0].mxu0
  %v4958 = vadd.f32 %v4863, %v4957
  %v4959 = vpop.f32.mrb[0].mxu0
  %v4960 = vadd.f32 %v4865, %v4959
  %4961 = vmatprep.mubr.f32.mxu0 %v4114
  %4962 = vmatmul.mubr.f32.gmra.mrb[0].mxu0 %v1807
  %v4963 = vpop.f32.mrb[0].mxu0
  %v4964 = vadd.f32 %v4869, %v4963
  %v4965 = vpop.f32.mrb[0].mxu0
  %v4966 = vadd.f32 %v4871, %v4965
  %4967 = vmatprep.mubr.f32.mxu0 %v4117
  %4968 = vmatmul.mubr.f32.gmra.mrb[0].mxu0 %v1813
  %v4969 = vpop.f32.mrb[0].mxu0
  %v4970 = vadd.f32 %v4875, %v4969
  %v4971 = vpop.f32.mrb[0].mxu0
  %v4972 = vadd.f32 %v4877, %v4971
  %4973 = vdwg.mxu0
  %4974 = vmatprep.subr.mxu0 0.0
  %4975 = vmatpush1.msra.mxu0 %v1721
  %4976 = vmatprep.subr.mxu0 0.0
  %4977 = vmatpush1.msra.mxu0 %v1728
  %4978 = vmatprep.subr.mxu0 0.0
  %4979 = vmatpush1.msra.mxu0 %v1735
  %4980 = vmatprep.subr.mxu0 0.0
  %4981 = vmatpush1.msra.mxu0 %v1742
  %4982 = vmatprep.subr.mxu0 0.0
  %4983 = vmatpush1.msra.mxu0 %v1749
  %4984 = vmatprep.subr.mxu0 0.0
  %4985 = vmatpush1.msra.mxu0 %v1756
  %4986 = vmatprep.subr.mxu0 0.0
  %4987 = vmatpush1.msra.mxu0 %v1763
  %4988 = vmatprep.subr.mxu0 0.0
  %4989 = vmatpush1.msra.mxu0 %v1770
  %4990 = vmatprep.subr.mxu0 0.0
  %4991 = vmatpush1.msra.mxu0 %v1777
  %4992 = vmatprep.subr.mxu0 0.0
  %4993 = vmatpush1.msra.mxu0 %v1784
  %4994 = vmatprep.subr.mxu0 0.0
  %4995 = vmatpush1.msra.mxu0 %v2160
  %4996 = vmatprep.subr.mxu0 0.0
  %4997 = vmatpush1.msra.mxu0 %v2161
  %4998 = vmatprep.subr.mxu0 0.0
  %4999 = vmatpush1.msra.mxu0 %v2162
  %5000 = vmatprep.subr.mxu0 0.0
  %5001 = vmatpush1.msra.mxu0 %v2163
  %5002 = vmatprep.subr.mxu0 0.0
  %5003 = vmatpush1.msra.mxu0 %v2164
  %5004 = vmatprep.subr.mxu0 0.0
  %5005 = vmatpush1.msra.mxu0 %v2165
  %5006 = vmatprep.subr.mxu0 0.0
  %5007 = vmatpush1.msra.mxu0 %v2166
  %5008 = vmatprep.subr.mxu0 0.0
  %5009 = vmatpush1.msra.mxu0 %v2167
  %5010 = vmatprep.subr.mxu0 0.0
  %5011 = vmatpush1.msra.mxu0 %v2168
  %5012 = vmatprep.subr.mxu0 0.0
  %5013 = vmatpush1.msra.mxu0 %v2169
  %5014 = vmatprep.subr.mxu0 0.0
  %5015 = vmatpush1.msra.mxu0 %v2442
  %5016 = vmatprep.subr.mxu0 0.0
  %5017 = vmatpush1.msra.mxu0 %v2443
  %5018 = vmatprep.subr.mxu0 0.0
  %5019 = vmatpush1.msra.mxu0 %v2444
  %5020 = vmatprep.subr.mxu0 0.0
  %5021 = vmatpush1.msra.mxu0 %v2445
  %5022 = vmatprep.subr.mxu0 0.0
  %5023 = vmatpush1.msra.mxu0 %v2446
  %5024 = vmatprep.subr.mxu0 0.0
  %5025 = vmatpush1.msra.mxu0 %v2447
  %5026 = vmatprep.subr.mxu0 0.0
  %5027 = vmatpush1.msra.mxu0 %v2448
  %5028 = vmatprep.subr.mxu0 0.0
  %5029 = vmatpush1.msra.mxu0 %v2449
  %5030 = vmatprep.subr.mxu0 0.0
  %5031 = vmatpush1.msra.mxu0 %v2450
  %5032 = vmatprep.subr.mxu0 0.0
  %5033 = vmatpush1.msra.mxu0 %v2451
  %5034 = vmatprep.subr.mxu0 0.0
  %5035 = vmatpush1.msra.mxu0 0.0
  %5036 = vmatprep.subr.mxu0 0.0
  %5037 = vmatpush1.msra.mxu0 0.0
  %5038 = vmatprep.mubr.f32.mxu0 %v1786
  %5039 = vmatmul.mubr.f32.gmra.mrb[0].mxu0 %v1785
  %v5040 = vpop.f32.mrb[0].mxu0
  %v5041 = vadd.f32 %v4081, %v5040
  %v5042 = vpop.f32.mrb[0].mxu0
  %5043 = vmatprep.mubr.f32.mxu0 %v1792
  %5044 = vmatmul.mubr.f32.gmra.mrb[0].mxu0 %v1791
  %v5045 = vpop.f32.mrb[0].mxu0
  %v5046 = vadd.f32 %v4086, %v5045
  %v5047 = vpop.f32.mrb[0].mxu0
  %5048 = vmatprep.mubr.f32.mxu0 %v1798
  %5049 = vmatmul.mubr.f32.gmra.mrb[0].mxu0 %v1797
  %v5050 = vpop.f32.mrb[0].mxu0
  %v5051 = vadd.f32 %v4091, %v5050
  %v5052 = vpop.f32.mrb[0].mxu0
  %5053 = vmatprep.mubr.f32.mxu0 %v1804
  %5054 = vmatmul.mubr.f32.gmra.mrb[0].mxu0 %v1803
  %v5055 = vpop.f32.mrb[0].mxu0
  %v5056 = vadd.f32 %v4096, %v5055
  %v5057 = vpop.f32.mrb[0].mxu0
  %5058 = vmatprep.mubr.f32.mxu0 %v1810
  %5059 = vmatmul.mubr.f32.gmra.mrb[0].mxu0 %v1809
  %v5060 = vpop.f32.mrb[0].mxu0
  %v5061 = vadd.f32 %v4101, %v5060
  %v5062 = vpop.f32.mrb[0].mxu0
  %5063 = vdwg.mxu0
  %5064 = vmatprep.subr.mxu0 0.0
  %5065 = vmatpush1.msra.mxu0 0.0
  %5066 = vmatprep.subr.mxu0 0.0
  %5067 = vmatpush1.msra.mxu0 0.0
  %5068 = vmatprep.subr.mxu0 0.0
  %5069 = vmatpush1.msra.mxu0 0.0
  %5070 = vmatprep.subr.mxu0 0.0
  %5071 = vmatpush1.msra.mxu0 0.0
  %5072 = vmatprep.subr.mxu0 0.0
  %5073 = vmatpush1.msra.mxu0 0.0
  %5074 = vmatprep.subr.mxu0 0.0
  %5075 = vmatpush1.msra.mxu0 0.0
  %5076 = vmatprep.subr.mxu0 0.0
  %5077 = vmatpush1.msra.mxu0 0.0
  %5078 = vmatprep.subr.mxu0 0.0
  %5079 = vmatpush1.msra.mxu0 0.0
  %5080 = vmatprep.subr.mxu0 0.0
  %5081 = vmatpush1.msra.mxu0 0.0
  %5082 = vmatprep.subr.mxu0 0.0
  %5083 = vmatpush1.msra.mxu0 0.0
  %5084 = vmatprep.subr.mxu0 0.0
  %5085 = vmatpush1.msra.mxu0 0.0
  %5086 = vmatprep.subr.mxu0 0.0
  %5087 = vmatpush1.msra.mxu0 0.0
  %5088 = vmatprep.subr.mxu0 0.0
  %5089 = vmatpush1.msra.mxu0 0.0
  %5090 = vmatprep.subr.mxu0 0.0
  %5091 = vmatpush1.msra.mxu0 0.0
  %5092 = vmatprep.subr.mxu0 0.0
  %5093 = vmatpush1.msra.mxu0 0.0
  %5094 = vmatprep.subr.mxu0 0.0
  %5095 = vmatpush1.msra.mxu0 0.0
  %5096 = vmatprep.subr.mxu0 0.0
  %5097 = vmatpush1.msra.mxu0 0.0
  %5098 = vmatprep.subr.mxu0 0.0
  %5099 = vmatpush1.msra.mxu0 0.0
  %5100 = vmatprep.subr.mxu0 0.0
  %5101 = vmatpush1.msra.mxu0 0.0
  %5102 = vmatprep.subr.mxu0 0.0
  %5103 = vmatpush1.msra.mxu0 0.0
  %5104 = vmatprep.subr.mxu0 0.0
  %5105 = vmatpush1.msra.mxu0 0.0
  %5106 = vmatprep.subr.mxu0 0.0
  %5107 = vmatpush1.msra.mxu0 0.0
  %5108 = vmatprep.subr.mxu0 0.0
  %5109 = vmatpush1.msra.mxu0 0.0
  %5110 = vmatprep.subr.mxu0 0.0
  %5111 = vmatpush1.msra.mxu0 0.0
  %5112 = vmatprep.subr.mxu0 0.0
  %5113 = vmatpush1.msra.mxu0 0.0
  %5114 = vmatprep.subr.mxu0 0.0
  %5115 = vmatpush1.msra.mxu0 0.0
  %5116 = vmatprep.subr.mxu0 0.0
  %5117 = vmatpush1.msra.mxu0 0.0
  %5118 = vmatprep.subr.mxu0 0.0
  %5119 = vmatpush1.msra.mxu0 0.0
  %5120 = vmatprep.subr.mxu0 0.0
  %5121 = vmatpush1.msra.mxu0 0.0
  %5122 = vmatprep.subr.mxu0 0.0
  %5123 = vmatpush1.msra.mxu0 0.0
  %5124 = vmatprep.subr.mxu0 0.0
  %5125 = vmatpush1.msra.mxu0 0.0
  %5126 = vmatprep.subr.mxu0 0.0
  %5127 = vmatpush1.msra.mxu0 0.0
  %5128 = vmatprep.mubr.f32.mxu0 %v1788
  %5129 = vmatmul.mubr.f32.gmra.mrb[0].mxu0 %v1787
  %v5130 = vpop.f32.mrb[0].mxu0
  %v5131 = vadd.f32 %v5041, %v5130
  %v5132 = vpop.f32.mrb[0].mxu0
  %5133 = vmatprep.mubr.f32.mxu0 %v1794
  %5134 = vmatmul.mubr.f32.gmra.mrb[0].mxu0 %v1793
  %v5135 = vpop.f32.mrb[0].mxu0
  %v5136 = vadd.f32 %v5046, %v5135
  %v5137 = vpop.f32.mrb[0].mxu0
  %5138 = vmatprep.mubr.f32.mxu0 %v1800
  %5139 = vmatmul.mubr.f32.gmra.mrb[0].mxu0 %v1799
  %v5140 = vpop.f32.mrb[0].mxu0
  %v5141 = vadd.f32 %v5051, %v5140
  %v5142 = vpop.f32.mrb[0].mxu0
  %5143 = vmatprep.mubr.f32.mxu0 %v1806
  %5144 = vmatmul.mubr.f32.gmra.mrb[0].mxu0 %v1805
  %v5145 = vpop.f32.mrb[0].mxu0
  %v5146 = vadd.f32 %v5056, %v5145
  %v5147 = vpop.f32.mrb[0].mxu0
  %5148 = vmatprep.mubr.f32.mxu0 %v1812
  %5149 = vmatmul.mubr.f32.gmra.mrb[0].mxu0 %v1811
  %v5150 = vpop.f32.mrb[0].mxu0
  %v5151 = vadd.f32 %v5061, %v5150
  %v5152 = vpop.f32.mrb[0].mxu0
  %5153 = vdwg.mxu0
  %5154 = vmatprep.subr.mxu0 0.0
  %5155 = vmatpush1.msra.mxu0 0.0
  %5156 = vmatprep.subr.mxu0 0.0
  %5157 = vmatpush1.msra.mxu0 0.0
  %5158 = vmatprep.subr.mxu0 0.0
  %5159 = vmatpush1.msra.mxu0 0.0
  %5160 = vmatprep.subr.mxu0 0.0
  %5161 = vmatpush1.msra.mxu0 0.0
  %5162 = vmatprep.subr.mxu0 0.0
  %5163 = vmatpush1.msra.mxu0 0.0
  %5164 = vmatprep.subr.mxu0 0.0
  %5165 = vmatpush1.msra.mxu0 0.0
  %5166 = vmatprep.subr.mxu0 0.0
  %5167 = vmatpush1.msra.mxu0 0.0
  %5168 = vmatprep.subr.mxu0 0.0
  %5169 = vmatpush1.msra.mxu0 0.0
  %5170 = vmatprep.subr.mxu0 0.0
  %5171 = vmatpush1.msra.mxu0 0.0
  %5172 = vmatprep.subr.mxu0 0.0
  %5173 = vmatpush1.msra.mxu0 0.0
  %5174 = vmatprep.subr.mxu0 0.0
  %5175 = vmatpush1.msra.mxu0 0.0
  %5176 = vmatprep.subr.mxu0 0.0
  %5177 = vmatpush1.msra.mxu0 0.0
  %5178 = vmatprep.subr.mxu0 0.0
  %5179 = vmatpush1.msra.mxu0 0.0
  %5180 = vmatprep.subr.mxu0 0.0
  %5181 = vmatpush1.msra.mxu0 0.0
  %5182 = vmatprep.subr.mxu0 0.0
  %5183 = vmatpush1.msra.mxu0 0.0
  %5184 = vmatprep.subr.mxu0 0.0
  %5185 = vmatpush1.msra.mxu0 0.0
  %5186 = vmatprep.subr.mxu0 0.0
  %5187 = vmatpush1.msra.mxu0 0.0
  %5188 = vmatprep.subr.mxu0 0.0
  %5189 = vmatpush1.msra.mxu0 0.0
  %5190 = vmatprep.subr.mxu0 0.0
  %5191 = vmatpush1.msra.mxu0 0.0
  %5192 = vmatprep.subr.mxu0 0.0
  %5193 = vmatpush1.msra.mxu0 0.0
  %5194 = vmatprep.subr.mxu0 0.0
  %5195 = vmatpush1.msra.mxu0 0.0
  %5196 = vmatprep.subr.mxu0 0.0
  %5197 = vmatpush1.msra.mxu0 0.0
  %5198 = vmatprep.subr.mxu0 0.0
  %5199 = vmatpush1.msra.mxu0 0.0
  %5200 = vmatprep.subr.mxu0 0.0
  %5201 = vmatpush1.msra.mxu0 0.0
  %5202 = vmatprep.subr.mxu0 0.0
  %5203 = vmatpush1.msra.mxu0 0.0
  %5204 = vmatprep.subr.mxu0 0.0
  %5205 = vmatpush1.msra.mxu0 0.0
  %5206 = vmatprep.subr.mxu0 0.0
  %5207 = vmatpush1.msra.mxu0 0.0
  %5208 = vmatprep.subr.mxu0 0.0
  %5209 = vmatpush1.msra.mxu0 0.0
  %5210 = vmatprep.subr.mxu0 0.0
  %5211 = vmatpush1.msra.mxu0 0.0
  %5212 = vmatprep.subr.mxu0 0.0
  %5213 = vmatpush1.msra.mxu0 0.0
  %5214 = vmatprep.subr.mxu0 0.0
  %5215 = vmatpush1.msra.mxu0 0.0
  %5216 = vmatprep.subr.mxu0 0.0
  %5217 = vmatpush1.msra.mxu0 0.0
  %5218 = vmatprep.mubr.f32.mxu0 %v4105
  %5219 = vmatmul.mubr.f32.gmra.mrb[0].mxu0 %v1789
  %v5220 = vpop.f32.mrb[0].mxu0
  %v5221 = vadd.f32 %v5131, %v5220
  %v5222 = vpop.f32.mrb[0].mxu0
  %5223 = vmatprep.mubr.f32.mxu0 %v4108
  %5224 = vmatmul.mubr.f32.gmra.mrb[0].mxu0 %v1795
  %v5225 = vpop.f32.mrb[0].mxu0
  %v5226 = vadd.f32 %v5136, %v5225
  %v5227 = vpop.f32.mrb[0].mxu0
  %5228 = vmatprep.mubr.f32.mxu0 %v4111
  %5229 = vmatmul.mubr.f32.gmra.mrb[0].mxu0 %v1801
  %v5230 = vpop.f32.mrb[0].mxu0
  %v5231 = vadd.f32 %v5141, %v5230
  %v5232 = vpop.f32.mrb[0].mxu0
  %5233 = vmatprep.mubr.f32.mxu0 %v4114
  %5234 = vmatmul.mubr.f32.gmra.mrb[0].mxu0 %v1807
  %v5235 = vpop.f32.mrb[0].mxu0
  %v5236 = vadd.f32 %v5146, %v5235
  %v5237 = vpop.f32.mrb[0].mxu0
  %5238 = vmatprep.mubr.f32.mxu0 %v4117
  %5239 = vmatmul.mubr.f32.gmra.mrb[0].mxu0 %v1813
  %v5240 = vpop.f32.mrb[0].mxu0
  %v5241 = vadd.f32 %v5151, %v5240
  %v5242 = vpop.f32.mrb[0].mxu0
  %5243 = vdwg.mxu0
  %v5244 = vmax.f32 %v4376, 0.0
  %v5245 = vmax.f32 %v4378, 0.0
  %v5246 = vmax.f32 %v4661, 0.0
  %v5247 = vmax.f32 %v4663, 0.0
  %v5248 = vmax.f32 %v4946, 0.0
  %v5249 = vmax.f32 %v4948, 0.0
  %v5250 = vmax.f32 %v5221, 0.0
  %v5251 = vmax.f32 %v4382, 0.0
  %v5252 = vmax.f32 %v4384, 0.0
  %v5253 = vmax.f32 %v4667, 0.0
  %v5254 = vmax.f32 %v4669, 0.0
  %v5255 = vmax.f32 %v4952, 0.0
  %v5256 = vmax.f32 %v4954, 0.0
  %v5257 = vmax.f32 %v5226, 0.0
  %v5258 = vmax.f32 %v4388, 0.0
  %v5259 = vmax.f32 %v4390, 0.0
  %v5260 = vmax.f32 %v4673, 0.0
  %v5261 = vmax.f32 %v4675, 0.0
  %v5262 = vmax.f32 %v4958, 0.0
  %v5263 = vmax.f32 %v4960, 0.0
  %v5264 = vmax.f32 %v5231, 0.0
  %v5265 = vmax.f32 %v4394, 0.0
  %v5266 = vmax.f32 %v4396, 0.0
  %v5267 = vmax.f32 %v4679, 0.0
  %v5268 = vmax.f32 %v4681, 0.0
  %v5269 = vmax.f32 %v4964, 0.0
  %v5270 = vmax.f32 %v4966, 0.0
  %v5271 = vmax.f32 %v5236, 0.0
  %v5272 = vmax.f32 %v4400, 0.0
  %v5273 = vmax.f32 %v4402, 0.0
  %v5274 = vmax.f32 %v4685, 0.0
  %v5275 = vmax.f32 %v4687, 0.0
  %v5276 = vmax.f32 %v4970, 0.0
  %v5277 = vmax.f32 %v4972, 0.0
  %v5278 = vmax.f32 %v5241, 0.0
  %v5279 = vld [vmem:[%s5] sm:$0xff]
  %v5280 = vld [vmem:[%s5 + $0x8] sm:$0xff]
  %v5281 = vld [vmem:[%s5 + $0x10] sm:$0xff]
  %v5282 = vld [vmem:[%s5 + $0x18] sm:$0xff]
  %v5283 = vld [vmem:[%s5 + $0x20] sm:$0xff]
  %v5284 = vld [vmem:[%s5 + $0x28] sm:$0xff]
  %v5285 = vld [vmem:[%s5 + $0x30] sm:$0xff]
  %v5286 = vld [vmem:[%s5 + $0x38] sm:$0xff]
  %v5287 = vld [vmem:[%s5 + $0x40] sm:$0xff]
  %v5288 = vld [vmem:[%s5 + $0x48] sm:$0xff]
  %v5289 = vld [vmem:[%s5 + $0x50] sm:$0xff]
  %v5290 = vld [vmem:[%s5 + $0x58] sm:$0xff]
  %v5291 = vld [vmem:[%s5 + $0x60] sm:$0xff]
  %v5292 = vld [vmem:[%s5 + $0x68] sm:$0xff]
  %v5293 = vld [vmem:[%s5 + $0x70] sm:$0xff]
  %v5294 = vld [vmem:[%s5 + $0x78] sm:$0xff]
  %v5295 = vld [vmem:[%s5 + $0x80] sm:$0xff]
  %v5296 = vld [vmem:[%s5 + $0x88] sm:$0xff]
  %v5297 = vld [vmem:[%s5 + $0x90] sm:$0xff]
  %v5298 = vld [vmem:[%s5 + $0x98] sm:$0xff]
  %v5299 = vld [vmem:[%s5 + $0xa0] sm:$0xff]
  %v5300 = vld [vmem:[%s5 + $0xa8] sm:$0xff]
  %v5301 = vld [vmem:[%s5 + $0xb0] sm:$0xff]
  %v5302 = vld [vmem:[%s5 + $0xb8] sm:$0xff]
  %v5303 = vld [vmem:[%s5 + $0xc0] sm:$0xff]
  %v5304 = vld [vmem:[%s5 + $0xc8] sm:$0xff]
  %v5305 = vld [vmem:[%s5 + $0xd0] sm:$0xff]
  %v5306 = vld [vmem:[%s5 + $0xd8] sm:$0xff]
  %v5307 = vld [vmem:[%s5 + $0xe0] sm:$0xff]
  %v5308 = vld [vmem:[%s5 + $0xe8] sm:$0xff]
  %v5309 = vld [vmem:[%s5 + $0xf0] sm:$0xff]
  %v5310 = vld [vmem:[%s5 + $0xf8] sm:$0xff]
  %v5311 = vld [vmem:[%s5 + $0x100] sm:$0xff]
  %v5312 = vld [vmem:[%s5 + $0x108] sm:$0xff]
  %v5313 = vld [vmem:[%s5 + $0x110] sm:$0xff]
  %v5314 = vld [vmem:[%s5 + $0x118] sm:$0xff]
  %v5315 = vld [vmem:[%s5 + $0x120] sm:$0xff]
  %v5316 = vld [vmem:[%s5 + $0x128] sm:$0xff]
  %v5317 = vld [vmem:[%s5 + $0x130] sm:$0xff]
  %v5318 = vld [vmem:[%s5 + $0x138] sm:$0xff]
  %v5319 = vld [vmem:[%s5 + $0x140] sm:$0xff]
  %v5320 = vld [vmem:[%s5 + $0x148] sm:$0xff]
  %v5321 = vld [vmem:[%s5 + $0x150] sm:$0xff]
  %v5322 = vld [vmem:[%s5 + $0x158] sm:$0xff]
  %v5323 = vld [vmem:[%s5 + $0x160] sm:$0xff]
  %v5324 = vld [vmem:[%s5 + $0x168] sm:$0xff]
  %v5325 = vld [vmem:[%s5 + $0x170] sm:$0xff]
  %v5326 = vld [vmem:[%s5 + $0x178] sm:$0xff]
  %v5327 = vld [vmem:[%s6] sm:$0xff]
  %v5328 = vld [vmem:[%s6 + $0x8] sm:$0xff]
  %v5329 = vld [vmem:[%s6 + $0x10] sm:$0xff]
  %v5330 = vld [vmem:[%s6 + $0x18] sm:$0xff]
  %v5331 = vld [vmem:[%s6 + $0x20] sm:$0xff]
  %v5332 = vld [vmem:[%s6 + $0x28] sm:$0xff]
  %v5333 = vld [vmem:[%s6 + $0x30] sm:$0xff]
  %v5334 = vld [vmem:[%s6 + $0x38] sm:$0xff]
  %v5335 = vld [vmem:[%s6 + $0x40] sm:$0xff]
  %v5336 = vld [vmem:[%s6 + $0x48] sm:$0xff]
  %v5337 = vld [vmem:[%s6 + $0x50] sm:$0xff]
  %v5338 = vld [vmem:[%s6 + $0x58] sm:$0xff]
  %v5339 = vld [vmem:[%s6 + $0x60] sm:$0xff]
  %v5340 = vld [vmem:[%s6 + $0x68] sm:$0xff]
  %v5341 = vld [vmem:[%s6 + $0x70] sm:$0xff]
  %v5342 = vld [vmem:[%s6 + $0x78] sm:$0xff]
  %5378 = vrot.lane.b32.xlu0 %v5244, 126
  %v5379 = vpop.permute.xlu0 %5378
  %5380 = vrot.lane.b32.xlu0 %v5245, 126
  %v5381 = vpop.permute.xlu0 %5380
  %5382 = vrot.lane.b32.xlu0 %v5246, 126
  %v5383 = vpop.permute.xlu0 %5382
  %5384 = vrot.lane.b32.xlu0 %v5247, 126
  %v5385 = vpop.permute.xlu0 %5384
  %5386 = vrot.lane.b32.xlu0 %v5248, 126
  %v5387 = vpop.permute.xlu0 %5386
  %5388 = vrot.lane.b32.xlu0 %v5249, 126
  %v5389 = vpop.permute.xlu0 %5388
  %5390 = vrot.lane.b32.xlu0 %v5250, 126
  %v5391 = vpop.permute.xlu0 %5390
  %5392 = vrot.lane.b32.xlu0 %v5251, 126
  %v5393 = vpop.permute.xlu0 %5392
  %5394 = vrot.lane.b32.xlu0 %v5252, 126
  %v5395 = vpop.permute.xlu0 %5394
  %5396 = vrot.lane.b32.xlu0 %v5253, 126
  %v5397 = vpop.permute.xlu0 %5396
  %5398 = vrot.lane.b32.xlu0 %v5254, 126
  %v5399 = vpop.permute.xlu0 %5398
  %5400 = vrot.lane.b32.xlu0 %v5255, 126
  %v5401 = vpop.permute.xlu0 %5400
  %5402 = vrot.lane.b32.xlu0 %v5256, 126
  %v5403 = vpop.permute.xlu0 %5402
  %5404 = vrot.lane.b32.xlu0 %v5257, 126
  %v5405 = vpop.permute.xlu0 %5404
  %5406 = vrot.lane.b32.xlu0 %v5258, 126
  %v5407 = vpop.permute.xlu0 %5406
  %5408 = vrot.lane.b32.xlu0 %v5259, 126
  %v5409 = vpop.permute.xlu0 %5408
  %5410 = vrot.lane.b32.xlu0 %v5260, 126
  %v5411 = vpop.permute.xlu0 %5410
  %5412 = vrot.lane.b32.xlu0 %v5261, 126
  %v5413 = vpop.permute.xlu0 %5412
  %5414 = vrot.lane.b32.xlu0 %v5262, 126
  %v5415 = vpop.permute.xlu0 %5414
  %5416 = vrot.lane.b32.xlu0 %v5263, 126
  %v5417 = vpop.permute.xlu0 %5416
  %5418 = vrot.lane.b32.xlu0 %v5264, 126
  %v5419 = vpop.permute.xlu0 %5418
  %5420 = vrot.lane.b32.xlu0 %v5265, 126
  %v5421 = vpop.permute.xlu0 %5420
  %5422 = vrot.lane.b32.xlu0 %v5266, 126
  %v5423 = vpop.permute.xlu0 %5422
  %5424 = vrot.lane.b32.xlu0 %v5267, 126
  %v5425 = vpop.permute.xlu0 %5424
  %5426 = vrot.lane.b32.xlu0 %v5268, 126
  %v5427 = vpop.permute.xlu0 %5426
  %5428 = vrot.lane.b32.xlu0 %v5269, 126
  %v5429 = vpop.permute.xlu0 %5428
  %5430 = vrot.lane.b32.xlu0 %v5270, 126
  %v5431 = vpop.permute.xlu0 %5430
  %5432 = vrot.lane.b32.xlu0 %v5271, 126
  %v5433 = vpop.permute.xlu0 %5432
  %5434 = vrot.lane.b32.xlu0 %v5272, 126
  %v5435 = vpop.permute.xlu0 %5434
  %5436 = vrot.lane.b32.xlu0 %v5273, 126
  %v5437 = vpop.permute.xlu0 %5436
  %5438 = vrot.lane.b32.xlu0 %v5274, 126
  %v5439 = vpop.permute.xlu0 %5438
  %5440 = vrot.lane.b32.xlu0 %v5275, 126
  %v5441 = vpop.permute.xlu0 %5440
  %5442 = vrot.lane.b32.xlu0 %v5276, 126
  %v5443 = vpop.permute.xlu0 %5442
  %5444 = vrot.lane.b32.xlu0 %v5277, 126
  %v5445 = vpop.permute.xlu0 %5444
  %5446 = vrot.lane.b32.xlu0 %v5278, 126
  %v5447 = vpop.permute.xlu0 %5446
  %v5448 = vsel %vm125, %v5379, %v5381
  %v5449 = vsel %vm125, %v5381, %v5383
  %v5450 = vsel %vm125, %v5383, %v5385
  %v5451 = vsel %vm125, %v5385, %v5387
  %v5452 = vsel %vm125, %v5387, %v5389
  %v5453 = vsel %vm125, %v5389, %v5391
  %v5454 = vsel %vm125, %v5393, %v5395
  %v5455 = vsel %vm125, %v5395, %v5397
  %v5456 = vsel %vm125, %v5397, %v5399
  %v5457 = vsel %vm125, %v5399, %v5401
  %v5458 = vsel %vm125, %v5401, %v5403
  %v5459 = vsel %vm125, %v5403, %v5405
  %v5460 = vsel %vm125, %v5407, %v5409
  %v5461 = vsel %vm125, %v5409, %v5411
  %v5462 = vsel %vm125, %v5411, %v5413
  %v5463 = vsel %vm125, %v5413, %v5415
  %v5464 = vsel %vm125, %v5415, %v5417
  %v5465 = vsel %vm125, %v5417, %v5419
  %v5466 = vsel %vm125, %v5421, %v5423
  %v5467 = vsel %vm125, %v5423, %v5425
  %v5468 = vsel %vm125, %v5425, %v5427
  %v5469 = vsel %vm125, %v5427, %v5429
  %v5470 = vsel %vm125, %v5429, %v5431
  %v5471 = vsel %vm125, %v5431, %v5433
  %v5472 = vsel %vm125, %v5435, %v5437
  %v5473 = vsel %vm125, %v5437, %v5439
  %v5474 = vsel %vm125, %v5439, %v5441
  %v5475 = vsel %vm125, %v5441, %v5443
  %v5476 = vsel %vm125, %v5443, %v5445
  %v5477 = vsel %vm125, %v5445, %v5447
  %v5513 = vsel %vm139, %v5391, 0.0
  %v5514 = vsel %vm139, %v5405, 0.0
  %v5515 = vsel %vm139, %v5419, 0.0
  %v5516 = vsel %vm139, %v5433, 0.0
  %v5517 = vsel %vm139, %v5447, 0.0
  %5518 = vrot.lane.b32.xlu0 %v5244, 124
  %v5519 = vpop.permute.xlu0 %5518
  %5520 = vrot.lane.b32.xlu0 %v5245, 124
  %v5521 = vpop.permute.xlu0 %5520
  %5522 = vrot.lane.b32.xlu0 %v5246, 124
  %v5523 = vpop.permute.xlu0 %5522
  %5524 = vrot.lane.b32.xlu0 %v5247, 124
  %v5525 = vpop.permute.xlu0 %5524
  %5526 = vrot.lane.b32.xlu0 %v5248, 124
  %v5527 = vpop.permute.xlu0 %5526
  %5528 = vrot.lane.b32.xlu0 %v5249, 124
  %v5529 = vpop.permute.xlu0 %5528
  %5530 = vrot.lane.b32.xlu0 %v5250, 124
  %v5531 = vpop.permute.xlu0 %5530
  %5532 = vrot.lane.b32.xlu0 %v5251, 124
  %v5533 = vpop.permute.xlu0 %5532
  %5534 = vrot.lane.b32.xlu0 %v5252, 124
  %v5535 = vpop.permute.xlu0 %5534
  %5536 = vrot.lane.b32.xlu0 %v5253, 124
  %v5537 = vpop.permute.xlu0 %5536
  %5538 = vrot.lane.b32.xlu0 %v5254, 124
  %v5539 = vpop.permute.xlu0 %5538
  %5540 = vrot.lane.b32.xlu0 %v5255, 124
  %v5541 = vpop.permute.xlu0 %5540
  %5542 = vrot.lane.b32.xlu0 %v5256, 124
  %v5543 = vpop.permute.xlu0 %5542
  %5544 = vrot.lane.b32.xlu0 %v5257, 124
  %v5545 = vpop.permute.xlu0 %5544
  %5546 = vrot.lane.b32.xlu0 %v5258, 124
  %v5547 = vpop.permute.xlu0 %5546
  %5548 = vrot.lane.b32.xlu0 %v5259, 124
  %v5549 = vpop.permute.xlu0 %5548
  %5550 = vrot.lane.b32.xlu0 %v5260, 124
  %v5551 = vpop.permute.xlu0 %5550
  %5552 = vrot.lane.b32.xlu0 %v5261, 124
  %v5553 = vpop.permute.xlu0 %5552
  %5554 = vrot.lane.b32.xlu0 %v5262, 124
  %v5555 = vpop.permute.xlu0 %5554
  %5556 = vrot.lane.b32.xlu0 %v5263, 124
  %v5557 = vpop.permute.xlu0 %5556
  %5558 = vrot.lane.b32.xlu0 %v5264, 124
  %v5559 = vpop.permute.xlu0 %5558
  %5560 = vrot.lane.b32.xlu0 %v5265, 124
  %v5561 = vpop.permute.xlu0 %5560
  %5562 = vrot.lane.b32.xlu0 %v5266, 124
  %v5563 = vpop.permute.xlu0 %5562
  %5564 = vrot.lane.b32.xlu0 %v5267, 124
  %v5565 = vpop.permute.xlu0 %5564
  %5566 = vrot.lane.b32.xlu0 %v5268, 124
  %v5567 = vpop.permute.xlu0 %5566
  %5568 = vrot.lane.b32.xlu0 %v5269, 124
  %v5569 = vpop.permute.xlu0 %5568
  %5570 = vrot.lane.b32.xlu0 %v5270, 124
  %v5571 = vpop.permute.xlu0 %5570
  %5572 = vrot.lane.b32.xlu0 %v5271, 124
  %v5573 = vpop.permute.xlu0 %5572
  %5574 = vrot.lane.b32.xlu0 %v5272, 124
  %v5575 = vpop.permute.xlu0 %5574
  %5576 = vrot.lane.b32.xlu0 %v5273, 124
  %v5577 = vpop.permute.xlu0 %5576
  %5578 = vrot.lane.b32.xlu0 %v5274, 124
  %v5579 = vpop.permute.xlu0 %5578
  %5580 = vrot.lane.b32.xlu0 %v5275, 124
  %v5581 = vpop.permute.xlu0 %5580
  %5582 = vrot.lane.b32.xlu0 %v5276, 124
  %v5583 = vpop.permute.xlu0 %5582
  %5584 = vrot.lane.b32.xlu0 %v5277, 124
  %v5585 = vpop.permute.xlu0 %5584
  %5586 = vrot.lane.b32.xlu0 %v5278, 124
  %v5587 = vpop.permute.xlu0 %5586
  %v5588 = vsel %vm2310, %v5519, %v5521
  %v5589 = vsel %vm2310, %v5521, %v5523
  %v5590 = vsel %vm2310, %v5523, %v5525
  %v5591 = vsel %vm2310, %v5525, %v5527
  %v5592 = vsel %vm2310, %v5527, %v5529
  %v5593 = vsel %vm2310, %v5529, %v5531
  %v5594 = vsel %vm2310, %v5533, %v5535
  %v5595 = vsel %vm2310, %v5535, %v5537
  %v5596 = vsel %vm2310, %v5537, %v5539
  %v5597 = vsel %vm2310, %v5539, %v5541
  %v5598 = vsel %vm2310, %v5541, %v5543
  %v5599 = vsel %vm2310, %v5543, %v5545
  %v5600 = vsel %vm2310, %v5547, %v5549
  %v5601 = vsel %vm2310, %v5549, %v5551
  %v5602 = vsel %vm2310, %v5551, %v5553
  %v5603 = vsel %vm2310, %v5553, %v5555
  %v5604 = vsel %vm2310, %v5555, %v5557
  %v5605 = vsel %vm2310, %v5557, %v5559
  %v5606 = vsel %vm2310, %v5561, %v5563
  %v5607 = vsel %vm2310, %v5563, %v5565
  %v5608 = vsel %vm2310, %v5565, %v5567
  %v5609 = vsel %vm2310, %v5567, %v5569
  %v5610 = vsel %vm2310, %v5569, %v5571
  %v5611 = vsel %vm2310, %v5571, %v5573
  %v5612 = vsel %vm2310, %v5575, %v5577
  %v5613 = vsel %vm2310, %v5577, %v5579
  %v5614 = vsel %vm2310, %v5579, %v5581
  %v5615 = vsel %vm2310, %v5581, %v5583
  %v5616 = vsel %vm2310, %v5583, %v5585
  %v5617 = vsel %vm2310, %v5585, %v5587
  %v5653 = vsel %vm2441, %v5531, 0.0
  %v5654 = vsel %vm2441, %v5545, 0.0
  %v5655 = vsel %vm2441, %v5559, 0.0
  %v5656 = vsel %vm2441, %v5573, 0.0
  %v5657 = vsel %vm2441, %v5587, 0.0
  %5658 = vrot.lane.b32.xlu0 %v5244, 72
  %v5659 = vpop.permute.xlu0 %5658
  %5660 = vrot.lane.b32.xlu0 %v5245, 72
  %v5661 = vpop.permute.xlu0 %5660
  %5662 = vrot.lane.b32.xlu0 %v5246, 72
  %v5663 = vpop.permute.xlu0 %5662
  %5664 = vrot.lane.b32.xlu0 %v5247, 72
  %v5665 = vpop.permute.xlu0 %5664
  %5666 = vrot.lane.b32.xlu0 %v5248, 72
  %v5667 = vpop.permute.xlu0 %5666
  %5668 = vrot.lane.b32.xlu0 %v5249, 72
  %v5669 = vpop.permute.xlu0 %5668
  %5670 = vrot.lane.b32.xlu0 %v5250, 72
  %v5671 = vpop.permute.xlu0 %5670
  %5672 = vrot.lane.b32.xlu0 %v5251, 72
  %v5673 = vpop.permute.xlu0 %5672
  %5674 = vrot.lane.b32.xlu0 %v5252, 72
  %v5675 = vpop.permute.xlu0 %5674
  %5676 = vrot.lane.b32.xlu0 %v5253, 72
  %v5677 = vpop.permute.xlu0 %5676
  %5678 = vrot.lane.b32.xlu0 %v5254, 72
  %v5679 = vpop.permute.xlu0 %5678
  %5680 = vrot.lane.b32.xlu0 %v5255, 72
  %v5681 = vpop.permute.xlu0 %5680
  %5682 = vrot.lane.b32.xlu0 %v5256, 72
  %v5683 = vpop.permute.xlu0 %5682
  %5684 = vrot.lane.b32.xlu0 %v5257, 72
  %v5685 = vpop.permute.xlu0 %5684
  %5686 = vrot.lane.b32.xlu0 %v5258, 72
  %v5687 = vpop.permute.xlu0 %5686
  %5688 = vrot.lane.b32.xlu0 %v5259, 72
  %v5689 = vpop.permute.xlu0 %5688
  %5690 = vrot.lane.b32.xlu0 %v5260, 72
  %v5691 = vpop.permute.xlu0 %5690
  %5692 = vrot.lane.b32.xlu0 %v5261, 72
  %v5693 = vpop.permute.xlu0 %5692
  %5694 = vrot.lane.b32.xlu0 %v5262, 72
  %v5695 = vpop.permute.xlu0 %5694
  %5696 = vrot.lane.b32.xlu0 %v5263, 72
  %v5697 = vpop.permute.xlu0 %5696
  %5698 = vrot.lane.b32.xlu0 %v5264, 72
  %v5699 = vpop.permute.xlu0 %5698
  %5700 = vrot.lane.b32.xlu0 %v5265, 72
  %v5701 = vpop.permute.xlu0 %5700
  %5702 = vrot.lane.b32.xlu0 %v5266, 72
  %v5703 = vpop.permute.xlu0 %5702
  %5704 = vrot.lane.b32.xlu0 %v5267, 72
  %v5705 = vpop.permute.xlu0 %5704
  %5706 = vrot.lane.b32.xlu0 %v5268, 72
  %v5707 = vpop.permute.xlu0 %5706
  %5708 = vrot.lane.b32.xlu0 %v5269, 72
  %v5709 = vpop.permute.xlu0 %5708
  %5710 = vrot.lane.b32.xlu0 %v5270, 72
  %v5711 = vpop.permute.xlu0 %5710
  %5712 = vrot.lane.b32.xlu0 %v5271, 72
  %v5713 = vpop.permute.xlu0 %5712
  %5714 = vrot.lane.b32.xlu0 %v5272, 72
  %v5715 = vpop.permute.xlu0 %5714
  %5716 = vrot.lane.b32.xlu0 %v5273, 72
  %v5717 = vpop.permute.xlu0 %5716
  %5718 = vrot.lane.b32.xlu0 %v5274, 72
  %v5719 = vpop.permute.xlu0 %5718
  %5720 = vrot.lane.b32.xlu0 %v5275, 72
  %v5721 = vpop.permute.xlu0 %5720
  %5722 = vrot.lane.b32.xlu0 %v5276, 72
  %v5723 = vpop.permute.xlu0 %5722
  %5724 = vrot.lane.b32.xlu0 %v5277, 72
  %v5725 = vpop.permute.xlu0 %5724
  %5726 = vrot.lane.b32.xlu0 %v5278, 72
  %v5727 = vpop.permute.xlu0 %5726
  %v5728 = vsel %vm242, %v5659, %v5661
  %v5729 = vsel %vm242, %v5661, %v5663
  %v5730 = vsel %vm242, %v5663, %v5665
  %v5731 = vsel %vm242, %v5665, %v5667
  %v5732 = vsel %vm242, %v5667, %v5669
  %v5733 = vsel %vm242, %v5669, %v5671
  %v5734 = vsel %vm242, %v5673, %v5675
  %v5735 = vsel %vm242, %v5675, %v5677
  %v5736 = vsel %vm242, %v5677, %v5679
  %v5737 = vsel %vm242, %v5679, %v5681
  %v5738 = vsel %vm242, %v5681, %v5683
  %v5739 = vsel %vm242, %v5683, %v5685
  %v5740 = vsel %vm242, %v5687, %v5689
  %v5741 = vsel %vm242, %v5689, %v5691
  %v5742 = vsel %vm242, %v5691, %v5693
  %v5743 = vsel %vm242, %v5693, %v5695
  %v5744 = vsel %vm242, %v5695, %v5697
  %v5745 = vsel %vm242, %v5697, %v5699
  %v5746 = vsel %vm242, %v5701, %v5703
  %v5747 = vsel %vm242, %v5703, %v5705
  %v5748 = vsel %vm242, %v5705, %v5707
  %v5749 = vsel %vm242, %v5707, %v5709
  %v5750 = vsel %vm242, %v5709, %v5711
  %v5751 = vsel %vm242, %v5711, %v5713
  %v5752 = vsel %vm242, %v5715, %v5717
  %v5753 = vsel %vm242, %v5717, %v5719
  %v5754 = vsel %vm242, %v5719, %v5721
  %v5755 = vsel %vm242, %v5721, %v5723
  %v5756 = vsel %vm242, %v5723, %v5725
  %v5757 = vsel %vm242, %v5725, %v5727
  %v5788 = vsel %vm255, %v5733, 0.0
  %v5789 = vsel %vm255, %v5739, 0.0
  %v5790 = vsel %vm255, %v5745, 0.0
  %v5791 = vsel %vm255, %v5751, 0.0
  %v5792 = vsel %vm255, %v5757, 0.0
  %5793 = vrot.lane.b32.xlu0 %v5244, 70
  %v5794 = vpop.permute.xlu0 %5793
  %5795 = vrot.lane.b32.xlu0 %v5245, 70
  %v5796 = vpop.permute.xlu0 %5795
  %5797 = vrot.lane.b32.xlu0 %v5246, 70
  %v5798 = vpop.permute.xlu0 %5797
  %5799 = vrot.lane.b32.xlu0 %v5247, 70
  %v5800 = vpop.permute.xlu0 %5799
  %5801 = vrot.lane.b32.xlu0 %v5248, 70
  %v5802 = vpop.permute.xlu0 %5801
  %5803 = vrot.lane.b32.xlu0 %v5249, 70
  %v5804 = vpop.permute.xlu0 %5803
  %5805 = vrot.lane.b32.xlu0 %v5250, 70
  %v5806 = vpop.permute.xlu0 %5805
  %5807 = vrot.lane.b32.xlu0 %v5251, 70
  %v5808 = vpop.permute.xlu0 %5807
  %5809 = vrot.lane.b32.xlu0 %v5252, 70
  %v5810 = vpop.permute.xlu0 %5809
  %5811 = vrot.lane.b32.xlu0 %v5253, 70
  %v5812 = vpop.permute.xlu0 %5811
  %5813 = vrot.lane.b32.xlu0 %v5254, 70
  %v5814 = vpop.permute.xlu0 %5813
  %5815 = vrot.lane.b32.xlu0 %v5255, 70
  %v5816 = vpop.permute.xlu0 %5815
  %5817 = vrot.lane.b32.xlu0 %v5256, 70
  %v5818 = vpop.permute.xlu0 %5817
  %5819 = vrot.lane.b32.xlu0 %v5257, 70
  %v5820 = vpop.permute.xlu0 %5819
  %5821 = vrot.lane.b32.xlu0 %v5258, 70
  %v5822 = vpop.permute.xlu0 %5821
  %5823 = vrot.lane.b32.xlu0 %v5259, 70
  %v5824 = vpop.permute.xlu0 %5823
  %5825 = vrot.lane.b32.xlu0 %v5260, 70
  %v5826 = vpop.permute.xlu0 %5825
  %5827 = vrot.lane.b32.xlu0 %v5261, 70
  %v5828 = vpop.permute.xlu0 %5827
  %5829 = vrot.lane.b32.xlu0 %v5262, 70
  %v5830 = vpop.permute.xlu0 %5829
  %5831 = vrot.lane.b32.xlu0 %v5263, 70
  %v5832 = vpop.permute.xlu0 %5831
  %5833 = vrot.lane.b32.xlu0 %v5264, 70
  %v5834 = vpop.permute.xlu0 %5833
  %5835 = vrot.lane.b32.xlu0 %v5265, 70
  %v5836 = vpop.permute.xlu0 %5835
  %5837 = vrot.lane.b32.xlu0 %v5266, 70
  %v5838 = vpop.permute.xlu0 %5837
  %5839 = vrot.lane.b32.xlu0 %v5267, 70
  %v5840 = vpop.permute.xlu0 %5839
  %5841 = vrot.lane.b32.xlu0 %v5268, 70
  %v5842 = vpop.permute.xlu0 %5841
  %5843 = vrot.lane.b32.xlu0 %v5269, 70
  %v5844 = vpop.permute.xlu0 %5843
  %5845 = vrot.lane.b32.xlu0 %v5270, 70
  %v5846 = vpop.permute.xlu0 %5845
  %5847 = vrot.lane.b32.xlu0 %v5271, 70
  %v5848 = vpop.permute.xlu0 %5847
  %5849 = vrot.lane.b32.xlu0 %v5272, 70
  %v5850 = vpop.permute.xlu0 %5849
  %5851 = vrot.lane.b32.xlu0 %v5273, 70
  %v5852 = vpop.permute.xlu0 %5851
  %5853 = vrot.lane.b32.xlu0 %v5274, 70
  %v5854 = vpop.permute.xlu0 %5853
  %5855 = vrot.lane.b32.xlu0 %v5275, 70
  %v5856 = vpop.permute.xlu0 %5855
  %5857 = vrot.lane.b32.xlu0 %v5276, 70
  %v5858 = vpop.permute.xlu0 %5857
  %5859 = vrot.lane.b32.xlu0 %v5277, 70
  %v5860 = vpop.permute.xlu0 %5859
  %5861 = vrot.lane.b32.xlu0 %v5278, 70
  %v5862 = vpop.permute.xlu0 %5861
  %v5863 = vsel %vm300, %v5794, %v5796
  %v5864 = vsel %vm300, %v5796, %v5798
  %v5865 = vsel %vm300, %v5798, %v5800
  %v5866 = vsel %vm300, %v5800, %v5802
  %v5867 = vsel %vm300, %v5802, %v5804
  %v5868 = vsel %vm300, %v5804, %v5806
  %v5869 = vsel %vm300, %v5808, %v5810
  %v5870 = vsel %vm300, %v5810, %v5812
  %v5871 = vsel %vm300, %v5812, %v5814
  %v5872 = vsel %vm300, %v5814, %v5816
  %v5873 = vsel %vm300, %v5816, %v5818
  %v5874 = vsel %vm300, %v5818, %v5820
  %v5875 = vsel %vm300, %v5822, %v5824
  %v5876 = vsel %vm300, %v5824, %v5826
  %v5877 = vsel %vm300, %v5826, %v5828
  %v5878 = vsel %vm300, %v5828, %v5830
  %v5879 = vsel %vm300, %v5830, %v5832
  %v5880 = vsel %vm300, %v5832, %v5834
  %v5881 = vsel %vm300, %v5836, %v5838
  %v5882 = vsel %vm300, %v5838, %v5840
  %v5883 = vsel %vm300, %v5840, %v5842
  %v5884 = vsel %vm300, %v5842, %v5844
  %v5885 = vsel %vm300, %v5844, %v5846
  %v5886 = vsel %vm300, %v5846, %v5848
  %v5887 = vsel %vm300, %v5850, %v5852
  %v5888 = vsel %vm300, %v5852, %v5854
  %v5889 = vsel %vm300, %v5854, %v5856
  %v5890 = vsel %vm300, %v5856, %v5858
  %v5891 = vsel %vm300, %v5858, %v5860
  %v5892 = vsel %vm300, %v5860, %v5862
  %v5923 = vsel %vm313, %v5868, 0.0
  %v5924 = vsel %vm313, %v5874, 0.0
  %v5925 = vsel %vm313, %v5880, 0.0
  %v5926 = vsel %vm313, %v5886, 0.0
  %v5927 = vsel %vm313, %v5892, 0.0
  %5928 = vrot.lane.b32.xlu0 %v5244, 68
  %v5929 = vpop.permute.xlu0 %5928
  %5930 = vrot.lane.b32.xlu0 %v5245, 68
  %v5931 = vpop.permute.xlu0 %5930
  %5932 = vrot.lane.b32.xlu0 %v5246, 68
  %v5933 = vpop.permute.xlu0 %5932
  %5934 = vrot.lane.b32.xlu0 %v5247, 68
  %v5935 = vpop.permute.xlu0 %5934
  %5936 = vrot.lane.b32.xlu0 %v5248, 68
  %v5937 = vpop.permute.xlu0 %5936
  %5938 = vrot.lane.b32.xlu0 %v5249, 68
  %v5939 = vpop.permute.xlu0 %5938
  %5940 = vrot.lane.b32.xlu0 %v5250, 68
  %v5941 = vpop.permute.xlu0 %5940
  %5942 = vrot.lane.b32.xlu0 %v5251, 68
  %v5943 = vpop.permute.xlu0 %5942
  %5944 = vrot.lane.b32.xlu0 %v5252, 68
  %v5945 = vpop.permute.xlu0 %5944
  %5946 = vrot.lane.b32.xlu0 %v5253, 68
  %v5947 = vpop.permute.xlu0 %5946
  %5948 = vrot.lane.b32.xlu0 %v5254, 68
  %v5949 = vpop.permute.xlu0 %5948
  %5950 = vrot.lane.b32.xlu0 %v5255, 68
  %v5951 = vpop.permute.xlu0 %5950
  %5952 = vrot.lane.b32.xlu0 %v5256, 68
  %v5953 = vpop.permute.xlu0 %5952
  %5954 = vrot.lane.b32.xlu0 %v5257, 68
  %v5955 = vpop.permute.xlu0 %5954
  %5956 = vrot.lane.b32.xlu0 %v5258, 68
  %v5957 = vpop.permute.xlu0 %5956
  %5958 = vrot.lane.b32.xlu0 %v5259, 68
  %v5959 = vpop.permute.xlu0 %5958
  %5960 = vrot.lane.b32.xlu0 %v5260, 68
  %v5961 = vpop.permute.xlu0 %5960
  %5962 = vrot.lane.b32.xlu0 %v5261, 68
  %v5963 = vpop.permute.xlu0 %5962
  %5964 = vrot.lane.b32.xlu0 %v5262, 68
  %v5965 = vpop.permute.xlu0 %5964
  %5966 = vrot.lane.b32.xlu0 %v5263, 68
  %v5967 = vpop.permute.xlu0 %5966
  %5968 = vrot.lane.b32.xlu0 %v5264, 68
  %v5969 = vpop.permute.xlu0 %5968
  %5970 = vrot.lane.b32.xlu0 %v5265, 68
  %v5971 = vpop.permute.xlu0 %5970
  %5972 = vrot.lane.b32.xlu0 %v5266, 68
  %v5973 = vpop.permute.xlu0 %5972
  %5974 = vrot.lane.b32.xlu0 %v5267, 68
  %v5975 = vpop.permute.xlu0 %5974
  %5976 = vrot.lane.b32.xlu0 %v5268, 68
  %v5977 = vpop.permute.xlu0 %5976
  %5978 = vrot.lane.b32.xlu0 %v5269, 68
  %v5979 = vpop.permute.xlu0 %5978
  %5980 = vrot.lane.b32.xlu0 %v5270, 68
  %v5981 = vpop.permute.xlu0 %5980
  %5982 = vrot.lane.b32.xlu0 %v5271, 68
  %v5983 = vpop.permute.xlu0 %5982
  %5984 = vrot.lane.b32.xlu0 %v5272, 68
  %v5985 = vpop.permute.xlu0 %5984
  %5986 = vrot.lane.b32.xlu0 %v5273, 68
  %v5987 = vpop.permute.xlu0 %5986
  %5988 = vrot.lane.b32.xlu0 %v5274, 68
  %v5989 = vpop.permute.xlu0 %5988
  %5990 = vrot.lane.b32.xlu0 %v5275, 68
  %v5991 = vpop.permute.xlu0 %5990
  %5992 = vrot.lane.b32.xlu0 %v5276, 68
  %v5993 = vpop.permute.xlu0 %5992
  %5994 = vrot.lane.b32.xlu0 %v5277, 68
  %v5995 = vpop.permute.xlu0 %5994
  %5996 = vrot.lane.b32.xlu0 %v5278, 68
  %v5997 = vpop.permute.xlu0 %5996
  %v5998 = vsel %vm3132, %v5929, %v5931
  %v5999 = vsel %vm3132, %v5931, %v5933
  %v6000 = vsel %vm3132, %v5933, %v5935
  %v6001 = vsel %vm3132, %v5935, %v5937
  %v6002 = vsel %vm3132, %v5937, %v5939
  %v6003 = vsel %vm3132, %v5939, %v5941
  %v6004 = vsel %vm3132, %v5943, %v5945
  %v6005 = vsel %vm3132, %v5945, %v5947
  %v6006 = vsel %vm3132, %v5947, %v5949
  %v6007 = vsel %vm3132, %v5949, %v5951
  %v6008 = vsel %vm3132, %v5951, %v5953
  %v6009 = vsel %vm3132, %v5953, %v5955
  %v6010 = vsel %vm3132, %v5957, %v5959
  %v6011 = vsel %vm3132, %v5959, %v5961
  %v6012 = vsel %vm3132, %v5961, %v5963
  %v6013 = vsel %vm3132, %v5963, %v5965
  %v6014 = vsel %vm3132, %v5965, %v5967
  %v6015 = vsel %vm3132, %v5967, %v5969
  %v6016 = vsel %vm3132, %v5971, %v5973
  %v6017 = vsel %vm3132, %v5973, %v5975
  %v6018 = vsel %vm3132, %v5975, %v5977
  %v6019 = vsel %vm3132, %v5977, %v5979
  %v6020 = vsel %vm3132, %v5979, %v5981
  %v6021 = vsel %vm3132, %v5981, %v5983
  %v6022 = vsel %vm3132, %v5985, %v5987
  %v6023 = vsel %vm3132, %v5987, %v5989
  %v6024 = vsel %vm3132, %v5989, %v5991
  %v6025 = vsel %vm3132, %v5991, %v5993
  %v6026 = vsel %vm3132, %v5993, %v5995
  %v6027 = vsel %vm3132, %v5995, %v5997
  %v6058 = vsel %vm3253, %v6003, 0.0
  %v6059 = vsel %vm3253, %v6009, 0.0
  %v6060 = vsel %vm3253, %v6015, 0.0
  %v6061 = vsel %vm3253, %v6021, 0.0
  %v6062 = vsel %vm3253, %v6027, 0.0
  %6063 = vrot.lane.b32.xlu0 %v5244, 16
  %v6064 = vpop.permute.xlu0 %6063
  %6065 = vrot.lane.b32.xlu0 %v5245, 16
  %v6066 = vpop.permute.xlu0 %6065
  %6067 = vrot.lane.b32.xlu0 %v5246, 16
  %v6068 = vpop.permute.xlu0 %6067
  %6069 = vrot.lane.b32.xlu0 %v5247, 16
  %v6070 = vpop.permute.xlu0 %6069
  %6071 = vrot.lane.b32.xlu0 %v5248, 16
  %v6072 = vpop.permute.xlu0 %6071
  %6073 = vrot.lane.b32.xlu0 %v5249, 16
  %v6074 = vpop.permute.xlu0 %6073
  %6075 = vrot.lane.b32.xlu0 %v5250, 16
  %v6076 = vpop.permute.xlu0 %6075
  %6077 = vrot.lane.b32.xlu0 %v5251, 16
  %v6078 = vpop.permute.xlu0 %6077
  %6079 = vrot.lane.b32.xlu0 %v5252, 16
  %v6080 = vpop.permute.xlu0 %6079
  %6081 = vrot.lane.b32.xlu0 %v5253, 16
  %v6082 = vpop.permute.xlu0 %6081
  %6083 = vrot.lane.b32.xlu0 %v5254, 16
  %v6084 = vpop.permute.xlu0 %6083
  %6085 = vrot.lane.b32.xlu0 %v5255, 16
  %v6086 = vpop.permute.xlu0 %6085
  %6087 = vrot.lane.b32.xlu0 %v5256, 16
  %v6088 = vpop.permute.xlu0 %6087
  %6089 = vrot.lane.b32.xlu0 %v5257, 16
  %v6090 = vpop.permute.xlu0 %6089
  %6091 = vrot.lane.b32.xlu0 %v5258, 16
  %v6092 = vpop.permute.xlu0 %6091
  %6093 = vrot.lane.b32.xlu0 %v5259, 16
  %v6094 = vpop.permute.xlu0 %6093
  %6095 = vrot.lane.b32.xlu0 %v5260, 16
  %v6096 = vpop.permute.xlu0 %6095
  %6097 = vrot.lane.b32.xlu0 %v5261, 16
  %v6098 = vpop.permute.xlu0 %6097
  %6099 = vrot.lane.b32.xlu0 %v5262, 16
  %v6100 = vpop.permute.xlu0 %6099
  %6101 = vrot.lane.b32.xlu0 %v5263, 16
  %v6102 = vpop.permute.xlu0 %6101
  %6103 = vrot.lane.b32.xlu0 %v5264, 16
  %v6104 = vpop.permute.xlu0 %6103
  %6105 = vrot.lane.b32.xlu0 %v5265, 16
  %v6106 = vpop.permute.xlu0 %6105
  %6107 = vrot.lane.b32.xlu0 %v5266, 16
  %v6108 = vpop.permute.xlu0 %6107
  %6109 = vrot.lane.b32.xlu0 %v5267, 16
  %v6110 = vpop.permute.xlu0 %6109
  %6111 = vrot.lane.b32.xlu0 %v5268, 16
  %v6112 = vpop.permute.xlu0 %6111
  %6113 = vrot.lane.b32.xlu0 %v5269, 16
  %v6114 = vpop.permute.xlu0 %6113
  %6115 = vrot.lane.b32.xlu0 %v5270, 16
  %v6116 = vpop.permute.xlu0 %6115
  %6117 = vrot.lane.b32.xlu0 %v5271, 16
  %v6118 = vpop.permute.xlu0 %6117
  %6119 = vrot.lane.b32.xlu0 %v5272, 16
  %v6120 = vpop.permute.xlu0 %6119
  %6121 = vrot.lane.b32.xlu0 %v5273, 16
  %v6122 = vpop.permute.xlu0 %6121
  %6123 = vrot.lane.b32.xlu0 %v5274, 16
  %v6124 = vpop.permute.xlu0 %6123
  %6125 = vrot.lane.b32.xlu0 %v5275, 16
  %v6126 = vpop.permute.xlu0 %6125
  %6127 = vrot.lane.b32.xlu0 %v5276, 16
  %v6128 = vpop.permute.xlu0 %6127
  %6129 = vrot.lane.b32.xlu0 %v5277, 16
  %v6130 = vpop.permute.xlu0 %6129
  %6131 = vrot.lane.b32.xlu0 %v5278, 16
  %v6132 = vpop.permute.xlu0 %6131
  %v6133 = vsel %vm3404, %v6064, %v6066
  %v6134 = vsel %vm3404, %v6066, %v6068
  %v6135 = vsel %vm3404, %v6068, %v6070
  %v6136 = vsel %vm3404, %v6070, %v6072
  %v6137 = vsel %vm3404, %v6072, %v6074
  %v6138 = vsel %vm3404, %v6074, %v6076
  %v6139 = vsel %vm3404, %v6078, %v6080
  %v6140 = vsel %vm3404, %v6080, %v6082
  %v6141 = vsel %vm3404, %v6082, %v6084
  %v6142 = vsel %vm3404, %v6084, %v6086
  %v6143 = vsel %vm3404, %v6086, %v6088
  %v6144 = vsel %vm3404, %v6088, %v6090
  %v6145 = vsel %vm3404, %v6092, %v6094
  %v6146 = vsel %vm3404, %v6094, %v6096
  %v6147 = vsel %vm3404, %v6096, %v6098
  %v6148 = vsel %vm3404, %v6098, %v6100
  %v6149 = vsel %vm3404, %v6100, %v6102
  %v6150 = vsel %vm3404, %v6102, %v6104
  %v6151 = vsel %vm3404, %v6106, %v6108
  %v6152 = vsel %vm3404, %v6108, %v6110
  %v6153 = vsel %vm3404, %v6110, %v6112
  %v6154 = vsel %vm3404, %v6112, %v6114
  %v6155 = vsel %vm3404, %v6114, %v6116
  %v6156 = vsel %vm3404, %v6116, %v6118
  %v6157 = vsel %vm3404, %v6120, %v6122
  %v6158 = vsel %vm3404, %v6122, %v6124
  %v6159 = vsel %vm3404, %v6124, %v6126
  %v6160 = vsel %vm3404, %v6126, %v6128
  %v6161 = vsel %vm3404, %v6128, %v6130
  %v6162 = vsel %vm3404, %v6130, %v6132
  %v6193 = vsel %vm3525, %v6138, 0.0
  %v6194 = vsel %vm3525, %v6144, 0.0
  %v6195 = vsel %vm3525, %v6150, 0.0
  %v6196 = vsel %vm3525, %v6156, 0.0
  %v6197 = vsel %vm3525, %v6162, 0.0
  %6198 = vrot.lane.b32.xlu0 %v5244, 14
  %v6199 = vpop.permute.xlu0 %6198
  %6200 = vrot.lane.b32.xlu0 %v5245, 14
  %v6201 = vpop.permute.xlu0 %6200
  %6202 = vrot.lane.b32.xlu0 %v5246, 14
  %v6203 = vpop.permute.xlu0 %6202
  %6204 = vrot.lane.b32.xlu0 %v5247, 14
  %v6205 = vpop.permute.xlu0 %6204
  %6206 = vrot.lane.b32.xlu0 %v5248, 14
  %v6207 = vpop.permute.xlu0 %6206
  %6208 = vrot.lane.b32.xlu0 %v5249, 14
  %v6209 = vpop.permute.xlu0 %6208
  %6210 = vrot.lane.b32.xlu0 %v5250, 14
  %v6211 = vpop.permute.xlu0 %6210
  %6212 = vrot.lane.b32.xlu0 %v5251, 14
  %v6213 = vpop.permute.xlu0 %6212
  %6214 = vrot.lane.b32.xlu0 %v5252, 14
  %v6215 = vpop.permute.xlu0 %6214
  %6216 = vrot.lane.b32.xlu0 %v5253, 14
  %v6217 = vpop.permute.xlu0 %6216
  %6218 = vrot.lane.b32.xlu0 %v5254, 14
  %v6219 = vpop.permute.xlu0 %6218
  %6220 = vrot.lane.b32.xlu0 %v5255, 14
  %v6221 = vpop.permute.xlu0 %6220
  %6222 = vrot.lane.b32.xlu0 %v5256, 14
  %v6223 = vpop.permute.xlu0 %6222
  %6224 = vrot.lane.b32.xlu0 %v5257, 14
  %v6225 = vpop.permute.xlu0 %6224
  %6226 = vrot.lane.b32.xlu0 %v5258, 14
  %v6227 = vpop.permute.xlu0 %6226
  %6228 = vrot.lane.b32.xlu0 %v5259, 14
  %v6229 = vpop.permute.xlu0 %6228
  %6230 = vrot.lane.b32.xlu0 %v5260, 14
  %v6231 = vpop.permute.xlu0 %6230
  %6232 = vrot.lane.b32.xlu0 %v5261, 14
  %v6233 = vpop.permute.xlu0 %6232
  %6234 = vrot.lane.b32.xlu0 %v5262, 14
  %v6235 = vpop.permute.xlu0 %6234
  %6236 = vrot.lane.b32.xlu0 %v5263, 14
  %v6237 = vpop.permute.xlu0 %6236
  %6238 = vrot.lane.b32.xlu0 %v5264, 14
  %v6239 = vpop.permute.xlu0 %6238
  %6240 = vrot.lane.b32.xlu0 %v5265, 14
  %v6241 = vpop.permute.xlu0 %6240
  %6242 = vrot.lane.b32.xlu0 %v5266, 14
  %v6243 = vpop.permute.xlu0 %6242
  %6244 = vrot.lane.b32.xlu0 %v5267, 14
  %v6245 = vpop.permute.xlu0 %6244
  %6246 = vrot.lane.b32.xlu0 %v5268, 14
  %v6247 = vpop.permute.xlu0 %6246
  %6248 = vrot.lane.b32.xlu0 %v5269, 14
  %v6249 = vpop.permute.xlu0 %6248
  %6250 = vrot.lane.b32.xlu0 %v5270, 14
  %v6251 = vpop.permute.xlu0 %6250
  %6252 = vrot.lane.b32.xlu0 %v5271, 14
  %v6253 = vpop.permute.xlu0 %6252
  %6254 = vrot.lane.b32.xlu0 %v5272, 14
  %v6255 = vpop.permute.xlu0 %6254
  %6256 = vrot.lane.b32.xlu0 %v5273, 14
  %v6257 = vpop.permute.xlu0 %6256
  %6258 = vrot.lane.b32.xlu0 %v5274, 14
  %v6259 = vpop.permute.xlu0 %6258
  %6260 = vrot.lane.b32.xlu0 %v5275, 14
  %v6261 = vpop.permute.xlu0 %6260
  %6262 = vrot.lane.b32.xlu0 %v5276, 14
  %v6263 = vpop.permute.xlu0 %6262
  %6264 = vrot.lane.b32.xlu0 %v5277, 14
  %v6265 = vpop.permute.xlu0 %6264
  %6266 = vrot.lane.b32.xlu0 %v5278, 14
  %v6267 = vpop.permute.xlu0 %6266
  %v6268 = vsel %vm139, %v6199, %v6201
  %v6269 = vsel %vm139, %v6201, %v6203
  %v6270 = vsel %vm139, %v6203, %v6205
  %v6271 = vsel %vm139, %v6205, %v6207
  %v6272 = vsel %vm139, %v6207, %v6209
  %v6273 = vsel %vm139, %v6209, %v6211
  %v6274 = vsel %vm139, %v6213, %v6215
  %v6275 = vsel %vm139, %v6215, %v6217
  %v6276 = vsel %vm139, %v6217, %v6219
  %v6277 = vsel %vm139, %v6219, %v6221
  %v6278 = vsel %vm139, %v6221, %v6223
  %v6279 = vsel %vm139, %v6223, %v6225
  %v6280 = vsel %vm139, %v6227, %v6229
  %v6281 = vsel %vm139, %v6229, %v6231
  %v6282 = vsel %vm139, %v6231, %v6233
  %v6283 = vsel %vm139, %v6233, %v6235
  %v6284 = vsel %vm139, %v6235, %v6237
  %v6285 = vsel %vm139, %v6237, %v6239
  %v6286 = vsel %vm139, %v6241, %v6243
  %v6287 = vsel %vm139, %v6243, %v6245
  %v6288 = vsel %vm139, %v6245, %v6247
  %v6289 = vsel %vm139, %v6247, %v6249
  %v6290 = vsel %vm139, %v6249, %v6251
  %v6291 = vsel %vm139, %v6251, %v6253
  %v6292 = vsel %vm139, %v6255, %v6257
  %v6293 = vsel %vm139, %v6257, %v6259
  %v6294 = vsel %vm139, %v6259, %v6261
  %v6295 = vsel %vm139, %v6261, %v6263
  %v6296 = vsel %vm139, %v6263, %v6265
  %v6297 = vsel %vm139, %v6265, %v6267
  %v6328 = vsel %vm3796, %v6273, 0.0
  %v6329 = vsel %vm3796, %v6279, 0.0
  %v6330 = vsel %vm3796, %v6285, 0.0
  %v6331 = vsel %vm3796, %v6291, 0.0
  %v6332 = vsel %vm3796, %v6297, 0.0
  %6333 = vrot.lane.b32.xlu0 %v5244, 12
  %v6334 = vpop.permute.xlu0 %6333
  %6335 = vrot.lane.b32.xlu0 %v5245, 12
  %v6336 = vpop.permute.xlu0 %6335
  %6337 = vrot.lane.b32.xlu0 %v5246, 12
  %v6338 = vpop.permute.xlu0 %6337
  %6339 = vrot.lane.b32.xlu0 %v5247, 12
  %v6340 = vpop.permute.xlu0 %6339
  %6341 = vrot.lane.b32.xlu0 %v5248, 12
  %v6342 = vpop.permute.xlu0 %6341
  %6343 = vrot.lane.b32.xlu0 %v5249, 12
  %v6344 = vpop.permute.xlu0 %6343
  %6345 = vrot.lane.b32.xlu0 %v5250, 12
  %v6346 = vpop.permute.xlu0 %6345
  %6347 = vrot.lane.b32.xlu0 %v5251, 12
  %v6348 = vpop.permute.xlu0 %6347
  %6349 = vrot.lane.b32.xlu0 %v5252, 12
  %v6350 = vpop.permute.xlu0 %6349
  %6351 = vrot.lane.b32.xlu0 %v5253, 12
  %v6352 = vpop.permute.xlu0 %6351
  %6353 = vrot.lane.b32.xlu0 %v5254, 12
  %v6354 = vpop.permute.xlu0 %6353
  %6355 = vrot.lane.b32.xlu0 %v5255, 12
  %v6356 = vpop.permute.xlu0 %6355
  %6357 = vrot.lane.b32.xlu0 %v5256, 12
  %v6358 = vpop.permute.xlu0 %6357
  %6359 = vrot.lane.b32.xlu0 %v5257, 12
  %v6360 = vpop.permute.xlu0 %6359
  %6361 = vrot.lane.b32.xlu0 %v5258, 12
  %v6362 = vpop.permute.xlu0 %6361
  %6363 = vrot.lane.b32.xlu0 %v5259, 12
  %v6364 = vpop.permute.xlu0 %6363
  %6365 = vrot.lane.b32.xlu0 %v5260, 12
  %v6366 = vpop.permute.xlu0 %6365
  %6367 = vrot.lane.b32.xlu0 %v5261, 12
  %v6368 = vpop.permute.xlu0 %6367
  %6369 = vrot.lane.b32.xlu0 %v5262, 12
  %v6370 = vpop.permute.xlu0 %6369
  %6371 = vrot.lane.b32.xlu0 %v5263, 12
  %v6372 = vpop.permute.xlu0 %6371
  %6373 = vrot.lane.b32.xlu0 %v5264, 12
  %v6374 = vpop.permute.xlu0 %6373
  %6375 = vrot.lane.b32.xlu0 %v5265, 12
  %v6376 = vpop.permute.xlu0 %6375
  %6377 = vrot.lane.b32.xlu0 %v5266, 12
  %v6378 = vpop.permute.xlu0 %6377
  %6379 = vrot.lane.b32.xlu0 %v5267, 12
  %v6380 = vpop.permute.xlu0 %6379
  %6381 = vrot.lane.b32.xlu0 %v5268, 12
  %v6382 = vpop.permute.xlu0 %6381
  %6383 = vrot.lane.b32.xlu0 %v5269, 12
  %v6384 = vpop.permute.xlu0 %6383
  %6385 = vrot.lane.b32.xlu0 %v5270, 12
  %v6386 = vpop.permute.xlu0 %6385
  %6387 = vrot.lane.b32.xlu0 %v5271, 12
  %v6388 = vpop.permute.xlu0 %6387
  %6389 = vrot.lane.b32.xlu0 %v5272, 12
  %v6390 = vpop.permute.xlu0 %6389
  %6391 = vrot.lane.b32.xlu0 %v5273, 12
  %v6392 = vpop.permute.xlu0 %6391
  %6393 = vrot.lane.b32.xlu0 %v5274, 12
  %v6394 = vpop.permute.xlu0 %6393
  %6395 = vrot.lane.b32.xlu0 %v5275, 12
  %v6396 = vpop.permute.xlu0 %6395
  %6397 = vrot.lane.b32.xlu0 %v5276, 12
  %v6398 = vpop.permute.xlu0 %6397
  %6399 = vrot.lane.b32.xlu0 %v5277, 12
  %v6400 = vpop.permute.xlu0 %6399
  %6401 = vrot.lane.b32.xlu0 %v5278, 12
  %v6402 = vpop.permute.xlu0 %6401
  %v6403 = vsel %vm2441, %v6334, %v6336
  %v6404 = vsel %vm2441, %v6336, %v6338
  %v6405 = vsel %vm2441, %v6338, %v6340
  %v6406 = vsel %vm2441, %v6340, %v6342
  %v6407 = vsel %vm2441, %v6342, %v6344
  %v6408 = vsel %vm2441, %v6344, %v6346
  %v6409 = vsel %vm2441, %v6348, %v6350
  %v6410 = vsel %vm2441, %v6350, %v6352
  %v6411 = vsel %vm2441, %v6352, %v6354
  %v6412 = vsel %vm2441, %v6354, %v6356
  %v6413 = vsel %vm2441, %v6356, %v6358
  %v6414 = vsel %vm2441, %v6358, %v6360
  %v6415 = vsel %vm2441, %v6362, %v6364
  %v6416 = vsel %vm2441, %v6364, %v6366
  %v6417 = vsel %vm2441, %v6366, %v6368
  %v6418 = vsel %vm2441, %v6368, %v6370
  %v6419 = vsel %vm2441, %v6370, %v6372
  %v6420 = vsel %vm2441, %v6372, %v6374
  %v6421 = vsel %vm2441, %v6376, %v6378
  %v6422 = vsel %vm2441, %v6378, %v6380
  %v6423 = vsel %vm2441, %v6380, %v6382
  %v6424 = vsel %vm2441, %v6382, %v6384
  %v6425 = vsel %vm2441, %v6384, %v6386
  %v6426 = vsel %vm2441, %v6386, %v6388
  %v6427 = vsel %vm2441, %v6390, %v6392
  %v6428 = vsel %vm2441, %v6392, %v6394
  %v6429 = vsel %vm2441, %v6394, %v6396
  %v6430 = vsel %vm2441, %v6396, %v6398
  %v6431 = vsel %vm2441, %v6398, %v6400
  %v6432 = vsel %vm2441, %v6400, %v6402
  %v6463 = vsel %vm4067, %v6408, 0.0
  %v6464 = vsel %vm4067, %v6414, 0.0
  %v6465 = vsel %vm4067, %v6420, 0.0
  %v6466 = vsel %vm4067, %v6426, 0.0
  %v6467 = vsel %vm4067, %v6432, 0.0
  %6469 = vset.pattern.permute.xlu0 0
  %6470 = vperm.xlu0 %6469, %v5327
  %v6471 = vpop.permute.xlu0 %6470
  %6474 = vset.pattern.permute.xlu0 0
  %6475 = vperm.xlu0 %6474, %v5328
  %v6476 = vpop.permute.xlu0 %6475
  %6479 = vset.pattern.permute.xlu0 0
  %6480 = vperm.xlu0 %6479, %v5329
  %v6481 = vpop.permute.xlu0 %6480
  %6484 = vset.pattern.permute.xlu0 0
  %6485 = vperm.xlu0 %6484, %v5330
  %v6486 = vpop.permute.xlu0 %6485
  %6489 = vset.pattern.permute.xlu0 0
  %6490 = vperm.xlu0 %6489, %v5331
  %v6491 = vpop.permute.xlu0 %6490
  %6494 = vset.pattern.permute.xlu0 0
  %6495 = vperm.xlu0 %6494, %v5332
  %v6496 = vpop.permute.xlu0 %6495
  %6499 = vset.pattern.permute.xlu0 0
  %6500 = vperm.xlu0 %6499, %v5333
  %v6501 = vpop.permute.xlu0 %6500
  %6504 = vset.pattern.permute.xlu0 0
  %6505 = vperm.xlu0 %6504, %v5334
  %v6506 = vpop.permute.xlu0 %6505
  %6509 = vset.pattern.permute.xlu0 0
  %6510 = vperm.xlu0 %6509, %v5335
  %v6511 = vpop.permute.xlu0 %6510
  %6514 = vset.pattern.permute.xlu0 0
  %6515 = vperm.xlu0 %6514, %v5336
  %v6516 = vpop.permute.xlu0 %6515
  %6519 = vset.pattern.permute.xlu0 0
  %6520 = vperm.xlu0 %6519, %v5337
  %v6521 = vpop.permute.xlu0 %6520
  %6524 = vset.pattern.permute.xlu0 0
  %6525 = vperm.xlu0 %6524, %v5338
  %v6526 = vpop.permute.xlu0 %6525
  %6529 = vset.pattern.permute.xlu0 0
  %6530 = vperm.xlu0 %6529, %v5339
  %v6531 = vpop.permute.xlu0 %6530
  %6534 = vset.pattern.permute.xlu0 0
  %6535 = vperm.xlu0 %6534, %v5340
  %v6536 = vpop.permute.xlu0 %6535
  %6539 = vset.pattern.permute.xlu0 0
  %6540 = vperm.xlu0 %6539, %v5341
  %v6541 = vpop.permute.xlu0 %6540
  %6544 = vset.pattern.permute.xlu0 0
  %6545 = vperm.xlu0 %6544, %v5342
  %v6546 = vpop.permute.xlu0 %6545
  %vm6548 = vcmask 850944
  %v6550 = vsel %vm6548, %v5281, 0
  %v6553 = vsel %vm6548, %v5284, 0
  %v6556 = vsel %vm6548, %v5287, 0
  %v6559 = vsel %vm6548, %v5290, 0
  %v6562 = vsel %vm6548, %v5293, 0
  %v6565 = vsel %vm6548, %v5296, 0
  %v6568 = vsel %vm6548, %v5299, 0
  %v6571 = vsel %vm6548, %v5302, 0
  %v6574 = vsel %vm6548, %v5305, 0
  %v6577 = vsel %vm6548, %v5308, 0
  %v6580 = vsel %vm6548, %v5311, 0
  %v6583 = vsel %vm6548, %v5314, 0
  %v6586 = vsel %vm6548, %v5317, 0
  %v6589 = vsel %vm6548, %v5320, 0
  %v6592 = vsel %vm6548, %v5323, 0
  %v6595 = vsel %vm6548, %v5326, 0
  %6597 = vmatprep.subr.mxu0 %v5245
  %6598 = vmatpush1.msra.mxu0 %v5244
  %6599 = vmatprep.subr.mxu0 %v5252
  %6600 = vmatpush1.msra.mxu0 %v5251
  %6601 = vmatprep.subr.mxu0 %v5259
  %6602 = vmatpush1.msra.mxu0 %v5258
  %6603 = vmatprep.subr.mxu0 %v5266
  %6604 = vmatpush1.msra.mxu0 %v5265
  %6605 = vmatprep.subr.mxu0 %v5273
  %6606 = vmatpush1.msra.mxu0 %v5272
  %6607 = vmatprep.subr.mxu0 %v5449
  %6608 = vmatpush1.msra.mxu0 %v5448
  %6609 = vmatprep.subr.mxu0 %v5455
  %6610 = vmatpush1.msra.mxu0 %v5454
  %6611 = vmatprep.subr.mxu0 %v5461
  %6612 = vmatpush1.msra.mxu0 %v5460
  %6613 = vmatprep.subr.mxu0 %v5467
  %6614 = vmatpush1.msra.mxu0 %v5466
  %6615 = vmatprep.subr.mxu0 %v5473
  %6616 = vmatpush1.msra.mxu0 %v5472
  %6617 = vmatprep.subr.mxu0 %v5589
  %6618 = vmatpush1.msra.mxu0 %v5588
  %6619 = vmatprep.subr.mxu0 %v5595
  %6620 = vmatpush1.msra.mxu0 %v5594
  %6621 = vmatprep.subr.mxu0 %v5601
  %6622 = vmatpush1.msra.mxu0 %v5600
  %6623 = vmatprep.subr.mxu0 %v5607
  %6624 = vmatpush1.msra.mxu0 %v5606
  %6625 = vmatprep.subr.mxu0 %v5613
  %6626 = vmatpush1.msra.mxu0 %v5612
  %6627 = vmatprep.subr.mxu0 %v5729
  %6628 = vmatpush1.msra.mxu0 %v5728
  %6629 = vmatprep.subr.mxu0 %v5735
  %6630 = vmatpush1.msra.mxu0 %v5734
  %6631 = vmatprep.subr.mxu0 %v5741
  %6632 = vmatpush1.msra.mxu0 %v5740
  %6633 = vmatprep.subr.mxu0 %v5747
  %6634 = vmatpush1.msra.mxu0 %v5746
  %6635 = vmatprep.subr.mxu0 %v5753
  %6636 = vmatpush1.msra.mxu0 %v5752
  %6637 = vmatprep.subr.mxu0 %v5864
  %6638 = vmatpush1.msra.mxu0 %v5863
  %6639 = vmatprep.subr.mxu0 %v5870
  %6640 = vmatpush1.msra.mxu0 %v5869
  %6641 = vmatprep.subr.mxu0 %v5876
  %6642 = vmatpush1.msra.mxu0 %v5875
  %6643 = vmatprep.subr.mxu0 %v5882
  %6644 = vmatpush1.msra.mxu0 %v5881
  %6645 = vmatprep.subr.mxu0 %v5888
  %6646 = vmatpush1.msra.mxu0 %v5887
  %6647 = vmatprep.subr.mxu0 %v5999
  %6648 = vmatpush1.msra.mxu0 %v5998
  %6649 = vmatprep.subr.mxu0 %v6005
  %6650 = vmatpush1.msra.mxu0 %v6004
  %6651 = vmatprep.subr.mxu0 %v6011
  %6652 = vmatpush1.msra.mxu0 %v6010
  %6653 = vmatprep.subr.mxu0 %v6017
  %6654 = vmatpush1.msra.mxu0 %v6016
  %6655 = vmatprep.subr.mxu0 %v6023
  %6656 = vmatpush1.msra.mxu0 %v6022
  %6657 = vmatprep.subr.mxu0 %v6134
  %6658 = vmatpush1.msra.mxu0 %v6133
  %6659 = vmatprep.subr.mxu0 %v6140
  %6660 = vmatpush1.msra.mxu0 %v6139
  %6661 = vmatprep.mubr.f32.mxu0 %v5280
  %6662 = vmatmul.mubr.f32.gmra.mrb[0].mxu0 %v5279
  %v6663 = vpop.f32.mrb[0].mxu0
  %v6664 = vadd.f32 %v6471, %v6663
  %v6665 = vpop.f32.mrb[0].mxu0
  %v6666 = vadd.f32 %v6471, %v6665
  %6667 = vmatprep.mubr.f32.mxu0 %v5283
  %6668 = vmatmul.mubr.f32.gmra.mrb[0].mxu0 %v5282
  %v6669 = vpop.f32.mrb[0].mxu0
  %v6670 = vadd.f32 %v6476, %v6669
  %v6671 = vpop.f32.mrb[0].mxu0
  %v6672 = vadd.f32 %v6476, %v6671
  %6673 = vmatprep.mubr.f32.mxu0 %v5286
  %6674 = vmatmul.mubr.f32.gmra.mrb[0].mxu0 %v5285
  %v6675 = vpop.f32.mrb[0].mxu0
  %v6676 = vadd.f32 %v6481, %v6675
  %v6677 = vpop.f32.mrb[0].mxu0
  %v6678 = vadd.f32 %v6481, %v6677
  %6679 = vmatprep.mubr.f32.mxu0 %v5289
  %6680 = vmatmul.mubr.f32.gmra.mrb[0].mxu0 %v5288
  %v6681 = vpop.f32.mrb[0].mxu0
  %v6682 = vadd.f32 %v6486, %v6681
  %v6683 = vpop.f32.mrb[0].mxu0
  %v6684 = vadd.f32 %v6486, %v6683
  %6685 = vmatprep.mubr.f32.mxu0 %v5292
  %6686 = vmatmul.mubr.f32.gmra.mrb[0].mxu0 %v5291
  %v6687 = vpop.f32.mrb[0].mxu0
  %v6688 = vadd.f32 %v6491, %v6687
  %v6689 = vpop.f32.mrb[0].mxu0
  %v6690 = vadd.f32 %v6491, %v6689
  %6691 = vmatprep.mubr.f32.mxu0 %v5295
  %6692 = vmatmul.mubr.f32.gmra.mrb[0].mxu0 %v5294
  %v6693 = vpop.f32.mrb[0].mxu0
  %v6694 = vadd.f32 %v6496, %v6693
  %v6695 = vpop.f32.mrb[0].mxu0
  %v6696 = vadd.f32 %v6496, %v6695
  %6697 = vmatprep.mubr.f32.mxu0 %v5298
  %6698 = vmatmul.mubr.f32.gmra.mrb[0].mxu0 %v5297
  %v6699 = vpop.f32.mrb[0].mxu0
  %v6700 = vadd.f32 %v6501, %v6699
  %v6701 = vpop.f32.mrb[0].mxu0
  %v6702 = vadd.f32 %v6501, %v6701
  %6703 = vmatprep.mubr.f32.mxu0 %v5301
  %6704 = vmatmul.mubr.f32.gmra.mrb[0].mxu0 %v5300
  %v6705 = vpop.f32.mrb[0].mxu0
  %v6706 = vadd.f32 %v6506, %v6705
  %v6707 = vpop.f32.mrb[0].mxu0
  %v6708 = vadd.f32 %v6506, %v6707
  %6709 = vmatprep.mubr.f32.mxu0 %v5304
  %6710 = vmatmul.mubr.f32.gmra.mrb[0].mxu0 %v5303
  %v6711 = vpop.f32.mrb[0].mxu0
  %v6712 = vadd.f32 %v6511, %v6711
  %v6713 = vpop.f32.mrb[0].mxu0
  %v6714 = vadd.f32 %v6511, %v6713
  %6715 = vmatprep.mubr.f32.mxu0 %v5307
  %6716 = vmatmul.mubr.f32.gmra.mrb[0].mxu0 %v5306
  %v6717 = vpop.f32.mrb[0].mxu0
  %v6718 = vadd.f32 %v6516, %v6717
  %v6719 = vpop.f32.mrb[0].mxu0
  %v6720 = vadd.f32 %v6516, %v6719
  %6721 = vmatprep.mubr.f32.mxu0 %v5310
  %6722 = vmatmul.mubr.f32.gmra.mrb[0].mxu0 %v5309
  %v6723 = vpop.f32.mrb[0].mxu0
  %v6724 = vadd.f32 %v6521, %v6723
  %v6725 = vpop.f32.mrb[0].mxu0
  %v6726 = vadd.f32 %v6521, %v6725
  %6727 = vmatprep.mubr.f32.mxu0 %v5313
  %6728 = vmatmul.mubr.f32.gmra.mrb[0].mxu0 %v5312
  %v6729 = vpop.f32.mrb[0].mxu0
  %v6730 = vadd.f32 %v6526, %v6729
  %v6731 = vpop.f32.mrb[0].mxu0
  %v6732 = vadd.f32 %v6526, %v6731
  %6733 = vmatprep.mubr.f32.mxu0 %v5316
  %6734 = vmatmul.mubr.f32.gmra.mrb[0].mxu0 %v5315
  %v6735 = vpop.f32.mrb[0].mxu0
  %v6736 = vadd.f32 %v6531, %v6735
  %v6737 = vpop.f32.mrb[0].mxu0
  %v6738 = vadd.f32 %v6531, %v6737
  %6739 = vmatprep.mubr.f32.mxu0 %v5319
  %6740 = vmatmul.mubr.f32.gmra.mrb[0].mxu0 %v5318
  %v6741 = vpop.f32.mrb[0].mxu0
  %v6742 = vadd.f32 %v6536, %v6741
  %v6743 = vpop.f32.mrb[0].mxu0
  %v6744 = vadd.f32 %v6536, %v6743
  %6745 = vmatprep.mubr.f32.mxu0 %v5322
  %6746 = vmatmul.mubr.f32.gmra.mrb[0].mxu0 %v5321
  %v6747 = vpop.f32.mrb[0].mxu0
  %v6748 = vadd.f32 %v6541, %v6747
  %v6749 = vpop.f32.mrb[0].mxu0
  %v6750 = vadd.f32 %v6541, %v6749
  %6751 = vmatprep.mubr.f32.mxu0 %v5325
  %6752 = vmatmul.mubr.f32.gmra.mrb[0].mxu0 %v5324
  %v6753 = vpop.f32.mrb[0].mxu0
  %v6754 = vadd.f32 %v6546, %v6753
  %v6755 = vpop.f32.mrb[0].mxu0
  %v6756 = vadd.f32 %v6546, %v6755
  %6757 = vdwg.mxu0
  %6758 = vmatprep.subr.mxu0 %v6146
  %6759 = vmatpush1.msra.mxu0 %v6145
  %6760 = vmatprep.subr.mxu0 %v6152
  %6761 = vmatpush1.msra.mxu0 %v6151
  %6762 = vmatprep.subr.mxu0 %v6158
  %6763 = vmatpush1.msra.mxu0 %v6157
  %6764 = vmatprep.subr.mxu0 %v6269
  %6765 = vmatpush1.msra.mxu0 %v6268
  %6766 = vmatprep.subr.mxu0 %v6275
  %6767 = vmatpush1.msra.mxu0 %v6274
  %6768 = vmatprep.subr.mxu0 %v6281
  %6769 = vmatpush1.msra.mxu0 %v6280
  %6770 = vmatprep.subr.mxu0 %v6287
  %6771 = vmatpush1.msra.mxu0 %v6286
  %6772 = vmatprep.subr.mxu0 %v6293
  %6773 = vmatpush1.msra.mxu0 %v6292
  %6774 = vmatprep.subr.mxu0 %v6404
  %6775 = vmatpush1.msra.mxu0 %v6403
  %6776 = vmatprep.subr.mxu0 %v6410
  %6777 = vmatpush1.msra.mxu0 %v6409
  %6778 = vmatprep.subr.mxu0 %v6416
  %6779 = vmatpush1.msra.mxu0 %v6415
  %6780 = vmatprep.subr.mxu0 %v6422
  %6781 = vmatpush1.msra.mxu0 %v6421
  %6782 = vmatprep.subr.mxu0 %v6428
  %6783 = vmatpush1.msra.mxu0 %v6427
  %6784 = vmatprep.subr.mxu0 0.0
  %6785 = vmatpush1.msra.mxu0 0.0
  %6786 = vmatprep.subr.mxu0 0.0
  %6787 = vmatpush1.msra.mxu0 0.0
  %6788 = vmatprep.subr.mxu0 0.0
  %6789 = vmatpush1.msra.mxu0 0.0
  %6790 = vmatprep.subr.mxu0 0.0
  %6791 = vmatpush1.msra.mxu0 0.0
  %6792 = vmatprep.subr.mxu0 0.0
  %6793 = vmatpush1.msra.mxu0 0.0
  %6794 = vmatprep.subr.mxu0 0.0
  %6795 = vmatpush1.msra.mxu0 0.0
  %6796 = vmatprep.subr.mxu0 0.0
  %6797 = vmatpush1.msra.mxu0 0.0
  %6798 = vmatprep.subr.mxu0 0.0
  %6799 = vmatpush1.msra.mxu0 0.0
  %6800 = vmatprep.subr.mxu0 0.0
  %6801 = vmatpush1.msra.mxu0 0.0
  %6802 = vmatprep.subr.mxu0 0.0
  %6803 = vmatpush1.msra.mxu0 0.0
  %6804 = vmatprep.subr.mxu0 0.0
  %6805 = vmatpush1.msra.mxu0 0.0
  %6806 = vmatprep.subr.mxu0 0.0
  %6807 = vmatpush1.msra.mxu0 0.0
  %6808 = vmatprep.subr.mxu0 0.0
  %6809 = vmatpush1.msra.mxu0 0.0
  %6810 = vmatprep.subr.mxu0 0.0
  %6811 = vmatpush1.msra.mxu0 0.0
  %6812 = vmatprep.subr.mxu0 0.0
  %6813 = vmatpush1.msra.mxu0 0.0
  %6814 = vmatprep.subr.mxu0 0.0
  %6815 = vmatpush1.msra.mxu0 0.0
  %6816 = vmatprep.subr.mxu0 0.0
  %6817 = vmatpush1.msra.mxu0 0.0
  %6818 = vmatprep.subr.mxu0 0.0
  %6819 = vmatpush1.msra.mxu0 0.0
  %6820 = vmatprep.subr.mxu0 0.0
  %6821 = vmatpush1.msra.mxu0 0.0
  %6822 = vmatprep.mubr.f32.mxu0 0.0
  %6823 = vmatmul.mubr.f32.gmra.mrb[0].mxu0 %v6550
  %v6824 = vpop.f32.mrb[0].mxu0
  %v6825 = vadd.f32 %v6664, %v6824
  %v6826 = vpop.f32.mrb[0].mxu0
  %v6827 = vadd.f32 %v6666, %v6826
  %6828 = vmatprep.mubr.f32.mxu0 0.0
  %6829 = vmatmul.mubr.f32.gmra.mrb[0].mxu0 %v6553
  %v6830 = vpop.f32.mrb[0].mxu0
  %v6831 = vadd.f32 %v6670, %v6830
  %v6832 = vpop.f32.mrb[0].mxu0
  %v6833 = vadd.f32 %v6672, %v6832
  %6834 = vmatprep.mubr.f32.mxu0 0.0
  %6835 = vmatmul.mubr.f32.gmra.mrb[0].mxu0 %v6556
  %v6836 = vpop.f32.mrb[0].mxu0
  %v6837 = vadd.f32 %v6676, %v6836
  %v6838 = vpop.f32.mrb[0].mxu0
  %v6839 = vadd.f32 %v6678, %v6838
  %6840 = vmatprep.mubr.f32.mxu0 0.0
  %6841 = vmatmul.mubr.f32.gmra.mrb[0].mxu0 %v6559
  %v6842 = vpop.f32.mrb[0].mxu0
  %v6843 = vadd.f32 %v6682, %v6842
  %v6844 = vpop.f32.mrb[0].mxu0
  %v6845 = vadd.f32 %v6684, %v6844
  %6846 = vmatprep.mubr.f32.mxu0 0.0
  %6847 = vmatmul.mubr.f32.gmra.mrb[0].mxu0 %v6562
  %v6848 = vpop.f32.mrb[0].mxu0
  %v6849 = vadd.f32 %v6688, %v6848
  %v6850 = vpop.f32.mrb[0].mxu0
  %v6851 = vadd.f32 %v6690, %v6850
  %6852 = vmatprep.mubr.f32.mxu0 0.0
  %6853 = vmatmul.mubr.f32.gmra.mrb[0].mxu0 %v6565
  %v6854 = vpop.f32.mrb[0].mxu0
  %v6855 = vadd.f32 %v6694, %v6854
  %v6856 = vpop.f32.mrb[0].mxu0
  %v6857 = vadd.f32 %v6696, %v6856
  %6858 = vmatprep.mubr.f32.mxu0 0.0
  %6859 = vmatmul.mubr.f32.gmra.mrb[0].mxu0 %v6568
  %v6860 = vpop.f32.mrb[0].mxu0
  %v6861 = vadd.f32 %v6700, %v6860
  %v6862 = vpop.f32.mrb[0].mxu0
  %v6863 = vadd.f32 %v6702, %v6862
  %6864 = vmatprep.mubr.f32.mxu0 0.0
  %6865 = vmatmul.mubr.f32.gmra.mrb[0].mxu0 %v6571
  %v6866 = vpop.f32.mrb[0].mxu0
  %v6867 = vadd.f32 %v6706, %v6866
  %v6868 = vpop.f32.mrb[0].mxu0
  %v6869 = vadd.f32 %v6708, %v6868
  %6870 = vmatprep.mubr.f32.mxu0 0.0
  %6871 = vmatmul.mubr.f32.gmra.mrb[0].mxu0 %v6574
  %v6872 = vpop.f32.mrb[0].mxu0
  %v6873 = vadd.f32 %v6712, %v6872
  %v6874 = vpop.f32.mrb[0].mxu0
  %v6875 = vadd.f32 %v6714, %v6874
  %6876 = vmatprep.mubr.f32.mxu0 0.0
  %6877 = vmatmul.mubr.f32.gmra.mrb[0].mxu0 %v6577
  %v6878 = vpop.f32.mrb[0].mxu0
  %v6879 = vadd.f32 %v6718, %v6878
  %v6880 = vpop.f32.mrb[0].mxu0
  %v6881 = vadd.f32 %v6720, %v6880
  %6882 = vmatprep.mubr.f32.mxu0 0.0
  %6883 = vmatmul.mubr.f32.gmra.mrb[0].mxu0 %v6580
  %v6884 = vpop.f32.mrb[0].mxu0
  %v6885 = vadd.f32 %v6724, %v6884
  %v6886 = vpop.f32.mrb[0].mxu0
  %v6887 = vadd.f32 %v6726, %v6886
  %6888 = vmatprep.mubr.f32.mxu0 0.0
  %6889 = vmatmul.mubr.f32.gmra.mrb[0].mxu0 %v6583
  %v6890 = vpop.f32.mrb[0].mxu0
  %v6891 = vadd.f32 %v6730, %v6890
  %v6892 = vpop.f32.mrb[0].mxu0
  %v6893 = vadd.f32 %v6732, %v6892
  %6894 = vmatprep.mubr.f32.mxu0 0.0
  %6895 = vmatmul.mubr.f32.gmra.mrb[0].mxu0 %v6586
  %v6896 = vpop.f32.mrb[0].mxu0
  %v6897 = vadd.f32 %v6736, %v6896
  %v6898 = vpop.f32.mrb[0].mxu0
  %v6899 = vadd.f32 %v6738, %v6898
  %6900 = vmatprep.mubr.f32.mxu0 0.0
  %6901 = vmatmul.mubr.f32.gmra.mrb[0].mxu0 %v6589
  %v6902 = vpop.f32.mrb[0].mxu0
  %v6903 = vadd.f32 %v6742, %v6902
  %v6904 = vpop.f32.mrb[0].mxu0
  %v6905 = vadd.f32 %v6744, %v6904
  %6906 = vmatprep.mubr.f32.mxu0 0.0
  %6907 = vmatmul.mubr.f32.gmra.mrb[0].mxu0 %v6592
  %v6908 = vpop.f32.mrb[0].mxu0
  %v6909 = vadd.f32 %v6748, %v6908
  %v6910 = vpop.f32.mrb[0].mxu0
  %v6911 = vadd.f32 %v6750, %v6910
  %6912 = vmatprep.mubr.f32.mxu0 0.0
  %6913 = vmatmul.mubr.f32.gmra.mrb[0].mxu0 %v6595
  %v6914 = vpop.f32.mrb[0].mxu0
  %v6915 = vadd.f32 %v6754, %v6914
  %v6916 = vpop.f32.mrb[0].mxu0
  %v6917 = vadd.f32 %v6756, %v6916
  %6918 = vdwg.mxu0
  %6919 = vmatprep.subr.mxu0 %v5247
  %6920 = vmatpush1.msra.mxu0 %v5246
  %6921 = vmatprep.subr.mxu0 %v5254
  %6922 = vmatpush1.msra.mxu0 %v5253
  %6923 = vmatprep.subr.mxu0 %v5261
  %6924 = vmatpush1.msra.mxu0 %v5260
  %6925 = vmatprep.subr.mxu0 %v5268
  %6926 = vmatpush1.msra.mxu0 %v5267
  %6927 = vmatprep.subr.mxu0 %v5275
  %6928 = vmatpush1.msra.mxu0 %v5274
  %6929 = vmatprep.subr.mxu0 %v5451
  %6930 = vmatpush1.msra.mxu0 %v5450
  %6931 = vmatprep.subr.mxu0 %v5457
  %6932 = vmatpush1.msra.mxu0 %v5456
  %6933 = vmatprep.subr.mxu0 %v5463
  %6934 = vmatpush1.msra.mxu0 %v5462
  %6935 = vmatprep.subr.mxu0 %v5469
  %6936 = vmatpush1.msra.mxu0 %v5468
  %6937 = vmatprep.subr.mxu0 %v5475
  %6938 = vmatpush1.msra.mxu0 %v5474
  %6939 = vmatprep.subr.mxu0 %v5591
  %6940 = vmatpush1.msra.mxu0 %v5590
  %6941 = vmatprep.subr.mxu0 %v5597
  %6942 = vmatpush1.msra.mxu0 %v5596
  %6943 = vmatprep.subr.mxu0 %v5603
  %6944 = vmatpush1.msra.mxu0 %v5602
  %6945 = vmatprep.subr.mxu0 %v5609
  %6946 = vmatpush1.msra.mxu0 %v5608
  %6947 = vmatprep.subr.mxu0 %v5615
  %6948 = vmatpush1.msra.mxu0 %v5614
  %6949 = vmatprep.subr.mxu0 %v5731
  %6950 = vmatpush1.msra.mxu0 %v5730
  %6951 = vmatprep.subr.mxu0 %v5737
  %6952 = vmatpush1.msra.mxu0 %v5736
  %6953 = vmatprep.subr.mxu0 %v5743
  %6954 = vmatpush1.msra.mxu0 %v5742
  %6955 = vmatprep.subr.mxu0 %v5749
  %6956 = vmatpush1.msra.mxu0 %v5748
  %6957 = vmatprep.subr.mxu0 %v5755
  %6958 = vmatpush1.msra.mxu0 %v5754
  %6959 = vmatprep.subr.mxu0 %v5866
  %6960 = vmatpush1.msra.mxu0 %v5865
  %6961 = vmatprep.subr.mxu0 %v5872
  %6962 = vmatpush1.msra.mxu0 %v5871
  %6963 = vmatprep.subr.mxu0 %v5878
  %6964 = vmatpush1.msra.mxu0 %v5877
  %6965 = vmatprep.subr.mxu0 %v5884
  %6966 = vmatpush1.msra.mxu0 %v5883
  %6967 = vmatprep.subr.mxu0 %v5890
  %6968 = vmatpush1.msra.mxu0 %v5889
  %6969 = vmatprep.subr.mxu0 %v6001
  %6970 = vmatpush1.msra.mxu0 %v6000
  %6971 = vmatprep.subr.mxu0 %v6007
  %6972 = vmatpush1.msra.mxu0 %v6006
  %6973 = vmatprep.subr.mxu0 %v6013
  %6974 = vmatpush1.msra.mxu0 %v6012
  %6975 = vmatprep.subr.mxu0 %v6019
  %6976 = vmatpush1.msra.mxu0 %v6018
  %6977 = vmatprep.subr.mxu0 %v6025
  %6978 = vmatpush1.msra.mxu0 %v6024
  %6979 = vmatprep.subr.mxu0 %v6136
  %6980 = vmatpush1.msra.mxu0 %v6135
  %6981 = vmatprep.subr.mxu0 %v6142
  %6982 = vmatpush1.msra.mxu0 %v6141
  %6983 = vmatprep.mubr.f32.mxu0 %v5280
  %6984 = vmatmul.mubr.f32.gmra.mrb[0].mxu0 %v5279
  %v6985 = vpop.f32.mrb[0].mxu0
  %v6986 = vadd.f32 %v6471, %v6985
  %v6987 = vpop.f32.mrb[0].mxu0
  %v6988 = vadd.f32 %v6471, %v6987
  %6989 = vmatprep.mubr.f32.mxu0 %v5283
  %6990 = vmatmul.mubr.f32.gmra.mrb[0].mxu0 %v5282
  %v6991 = vpop.f32.mrb[0].mxu0
  %v6992 = vadd.f32 %v6476, %v6991
  %v6993 = vpop.f32.mrb[0].mxu0
  %v6994 = vadd.f32 %v6476, %v6993
  %6995 = vmatprep.mubr.f32.mxu0 %v5286
  %6996 = vmatmul.mubr.f32.gmra.mrb[0].mxu0 %v5285
  %v6997 = vpop.f32.mrb[0].mxu0
  %v6998 = vadd.f32 %v6481, %v6997
  %v6999 = vpop.f32.mrb[0].mxu0
  %v7000 = vadd.f32 %v6481, %v6999
  %7001 = vmatprep.mubr.f32.mxu0 %v5289
  %7002 = vmatmul.mubr.f32.gmra.mrb[0].mxu0 %v5288
  %v7003 = vpop.f32.mrb[0].mxu0
  %v7004 = vadd.f32 %v6486, %v7003
  %v7005 = vpop.f32.mrb[0].mxu0
  %v7006 = vadd.f32 %v6486, %v7005
  %7007 = vmatprep.mubr.f32.mxu0 %v5292
  %7008 = vmatmul.mubr.f32.gmra.mrb[0].mxu0 %v5291
  %v7009 = vpop.f32.mrb[0].mxu0
  %v7010 = vadd.f32 %v6491, %v7009
  %v7011 = vpop.f32.mrb[0].mxu0
  %v7012 = vadd.f32 %v6491, %v7011
  %7013 = vmatprep.mubr.f32.mxu0 %v5295
  %7014 = vmatmul.mubr.f32.gmra.mrb[0].mxu0 %v5294
  %v7015 = vpop.f32.mrb[0].mxu0
  %v7016 = vadd.f32 %v6496, %v7015
  %v7017 = vpop.f32.mrb[0].mxu0
  %v7018 = vadd.f32 %v6496, %v7017
  %7019 = vmatprep.mubr.f32.mxu0 %v5298
  %7020 = vmatmul.mubr.f32.gmra.mrb[0].mxu0 %v5297
  %v7021 = vpop.f32.mrb[0].mxu0
  %v7022 = vadd.f32 %v6501, %v7021
  %v7023 = vpop.f32.mrb[0].mxu0
  %v7024 = vadd.f32 %v6501, %v7023
  %7025 = vmatprep.mubr.f32.mxu0 %v5301
  %7026 = vmatmul.mubr.f32.gmra.mrb[0].mxu0 %v5300
  %v7027 = vpop.f32.mrb[0].mxu0
  %v7028 = vadd.f32 %v6506, %v7027
  %v7029 = vpop.f32.mrb[0].mxu0
  %v7030 = vadd.f32 %v6506, %v7029
  %7031 = vmatprep.mubr.f32.mxu0 %v5304
  %7032 = vmatmul.mubr.f32.gmra.mrb[0].mxu0 %v5303
  %v7033 = vpop.f32.mrb[0].mxu0
  %v7034 = vadd.f32 %v6511, %v7033
  %v7035 = vpop.f32.mrb[0].mxu0
  %v7036 = vadd.f32 %v6511, %v7035
  %7037 = vmatprep.mubr.f32.mxu0 %v5307
  %7038 = vmatmul.mubr.f32.gmra.mrb[0].mxu0 %v5306
  %v7039 = vpop.f32.mrb[0].mxu0
  %v7040 = vadd.f32 %v6516, %v7039
  %v7041 = vpop.f32.mrb[0].mxu0
  %v7042 = vadd.f32 %v6516, %v7041
  %7043 = vmatprep.mubr.f32.mxu0 %v5310
  %7044 = vmatmul.mubr.f32.gmra.mrb[0].mxu0 %v5309
  %v7045 = vpop.f32.mrb[0].mxu0
  %v7046 = vadd.f32 %v6521, %v7045
  %v7047 = vpop.f32.mrb[0].mxu0
  %v7048 = vadd.f32 %v6521, %v7047
  %7049 = vmatprep.mubr.f32.mxu0 %v5313
  %7050 = vmatmul.mubr.f32.gmra.mrb[0].mxu0 %v5312
  %v7051 = vpop.f32.mrb[0].mxu0
  %v7052 = vadd.f32 %v6526, %v7051
  %v7053 = vpop.f32.mrb[0].mxu0
  %v7054 = vadd.f32 %v6526, %v7053
  %7055 = vmatprep.mubr.f32.mxu0 %v5316
  %7056 = vmatmul.mubr.f32.gmra.mrb[0].mxu0 %v5315
  %v7057 = vpop.f32.mrb[0].mxu0
  %v7058 = vadd.f32 %v6531, %v7057
  %v7059 = vpop.f32.mrb[0].mxu0
  %v7060 = vadd.f32 %v6531, %v7059
  %7061 = vmatprep.mubr.f32.mxu0 %v5319
  %7062 = vmatmul.mubr.f32.gmra.mrb[0].mxu0 %v5318
  %v7063 = vpop.f32.mrb[0].mxu0
  %v7064 = vadd.f32 %v6536, %v7063
  %v7065 = vpop.f32.mrb[0].mxu0
  %v7066 = vadd.f32 %v6536, %v7065
  %7067 = vmatprep.mubr.f32.mxu0 %v5322
  %7068 = vmatmul.mubr.f32.gmra.mrb[0].mxu0 %v5321
  %v7069 = vpop.f32.mrb[0].mxu0
  %v7070 = vadd.f32 %v6541, %v7069
  %v7071 = vpop.f32.mrb[0].mxu0
  %v7072 = vadd.f32 %v6541, %v7071
  %7073 = vmatprep.mubr.f32.mxu0 %v5325
  %7074 = vmatmul.mubr.f32.gmra.mrb[0].mxu0 %v5324
  %v7075 = vpop.f32.mrb[0].mxu0
  %v7076 = vadd.f32 %v6546, %v7075
  %v7077 = vpop.f32.mrb[0].mxu0
  %v7078 = vadd.f32 %v6546, %v7077
  %7079 = vdwg.mxu0
  %7080 = vmatprep.subr.mxu0 %v6148
  %7081 = vmatpush1.msra.mxu0 %v6147
  %7082 = vmatprep.subr.mxu0 %v6154
  %7083 = vmatpush1.msra.mxu0 %v6153
  %7084 = vmatprep.subr.mxu0 %v6160
  %7085 = vmatpush1.msra.mxu0 %v6159
  %7086 = vmatprep.subr.mxu0 %v6271
  %7087 = vmatpush1.msra.mxu0 %v6270
  %7088 = vmatprep.subr.mxu0 %v6277
  %7089 = vmatpush1.msra.mxu0 %v6276
  %7090 = vmatprep.subr.mxu0 %v6283
  %7091 = vmatpush1.msra.mxu0 %v6282
  %7092 = vmatprep.subr.mxu0 %v6289
  %7093 = vmatpush1.msra.mxu0 %v6288
  %7094 = vmatprep.subr.mxu0 %v6295
  %7095 = vmatpush1.msra.mxu0 %v6294
  %7096 = vmatprep.subr.mxu0 %v6406
  %7097 = vmatpush1.msra.mxu0 %v6405
  %7098 = vmatprep.subr.mxu0 %v6412
  %7099 = vmatpush1.msra.mxu0 %v6411
  %7100 = vmatprep.subr.mxu0 %v6418
  %7101 = vmatpush1.msra.mxu0 %v6417
  %7102 = vmatprep.subr.mxu0 %v6424
  %7103 = vmatpush1.msra.mxu0 %v6423
  %7104 = vmatprep.subr.mxu0 %v6430
  %7105 = vmatpush1.msra.mxu0 %v6429
  %7106 = vmatprep.subr.mxu0 0.0
  %7107 = vmatpush1.msra.mxu0 0.0
  %7108 = vmatprep.subr.mxu0 0.0
  %7109 = vmatpush1.msra.mxu0 0.0
  %7110 = vmatprep.subr.mxu0 0.0
  %7111 = vmatpush1.msra.mxu0 0.0
  %7112 = vmatprep.subr.mxu0 0.0
  %7113 = vmatpush1.msra.mxu0 0.0
  %7114 = vmatprep.subr.mxu0 0.0
  %7115 = vmatpush1.msra.mxu0 0.0
  %7116 = vmatprep.subr.mxu0 0.0
  %7117 = vmatpush1.msra.mxu0 0.0
  %7118 = vmatprep.subr.mxu0 0.0
  %7119 = vmatpush1.msra.mxu0 0.0
  %7120 = vmatprep.subr.mxu0 0.0
  %7121 = vmatpush1.msra.mxu0 0.0
  %7122 = vmatprep.subr.mxu0 0.0
  %7123 = vmatpush1.msra.mxu0 0.0
  %7124 = vmatprep.subr.mxu0 0.0
  %7125 = vmatpush1.msra.mxu0 0.0
  %7126 = vmatprep.subr.mxu0 0.0
  %7127 = vmatpush1.msra.mxu0 0.0
  %7128 = vmatprep.subr.mxu0 0.0
  %7129 = vmatpush1.msra.mxu0 0.0
  %7130 = vmatprep.subr.mxu0 0.0
  %7131 = vmatpush1.msra.mxu0 0.0
  %7132 = vmatprep.subr.mxu0 0.0
  %7133 = vmatpush1.msra.mxu0 0.0
  %7134 = vmatprep.subr.mxu0 0.0
  %7135 = vmatpush1.msra.mxu0 0.0
  %7136 = vmatprep.subr.mxu0 0.0
  %7137 = vmatpush1.msra.mxu0 0.0
  %7138 = vmatprep.subr.mxu0 0.0
  %7139 = vmatpush1.msra.mxu0 0.0
  %7140 = vmatprep.subr.mxu0 0.0
  %7141 = vmatpush1.msra.mxu0 0.0
  %7142 = vmatprep.subr.mxu0 0.0
  %7143 = vmatpush1.msra.mxu0 0.0
  %7144 = vmatprep.mubr.f32.mxu0 0.0
  %7145 = vmatmul.mubr.f32.gmra.mrb[0].mxu0 %v6550
  %v7146 = vpop.f32.mrb[0].mxu0
  %v7147 = vadd.f32 %v6986, %v7146
  %v7148 = vpop.f32.mrb[0].mxu0
  %v7149 = vadd.f32 %v6988, %v7148
  %7150 = vmatprep.mubr.f32.mxu0 0.0
  %7151 = vmatmul.mubr.f32.gmra.mrb[0].mxu0 %v6553
  %v7152 = vpop.f32.mrb[0].mxu0
  %v7153 = vadd.f32 %v6992, %v7152
  %v7154 = vpop.f32.mrb[0].mxu0
  %v7155 = vadd.f32 %v6994, %v7154
  %7156 = vmatprep.mubr.f32.mxu0 0.0
  %7157 = vmatmul.mubr.f32.gmra.mrb[0].mxu0 %v6556
  %v7158 = vpop.f32.mrb[0].mxu0
  %v7159 = vadd.f32 %v6998, %v7158
  %v7160 = vpop.f32.mrb[0].mxu0
  %v7161 = vadd.f32 %v7000, %v7160
  %7162 = vmatprep.mubr.f32.mxu0 0.0
  %7163 = vmatmul.mubr.f32.gmra.mrb[0].mxu0 %v6559
  %v7164 = vpop.f32.mrb[0].mxu0
  %v7165 = vadd.f32 %v7004, %v7164
  %v7166 = vpop.f32.mrb[0].mxu0
  %v7167 = vadd.f32 %v7006, %v7166
  %7168 = vmatprep.mubr.f32.mxu0 0.0
  %7169 = vmatmul.mubr.f32.gmra.mrb[0].mxu0 %v6562
  %v7170 = vpop.f32.mrb[0].mxu0
  %v7171 = vadd.f32 %v7010, %v7170
  %v7172 = vpop.f32.mrb[0].mxu0
  %v7173 = vadd.f32 %v7012, %v7172
  %7174 = vmatprep.mubr.f32.mxu0 0.0
  %7175 = vmatmul.mubr.f32.gmra.mrb[0].mxu0 %v6565
  %v7176 = vpop.f32.mrb[0].mxu0
  %v7177 = vadd.f32 %v7016, %v7176
  %v7178 = vpop.f32.mrb[0].mxu0
  %v7179 = vadd.f32 %v7018, %v7178
  %7180 = vmatprep.mubr.f32.mxu0 0.0
  %7181 = vmatmul.mubr.f32.gmra.mrb[0].mxu0 %v6568
  %v7182 = vpop.f32.mrb[0].mxu0
  %v7183 = vadd.f32 %v7022, %v7182
  %v7184 = vpop.f32.mrb[0].mxu0
  %v7185 = vadd.f32 %v7024, %v7184
  %7186 = vmatprep.mubr.f32.mxu0 0.0
  %7187 = vmatmul.mubr.f32.gmra.mrb[0].mxu0 %v6571
  %v7188 = vpop.f32.mrb[0].mxu0
  %v7189 = vadd.f32 %v7028, %v7188
  %v7190 = vpop.f32.mrb[0].mxu0
  %v7191 = vadd.f32 %v7030, %v7190
  %7192 = vmatprep.mubr.f32.mxu0 0.0
  %7193 = vmatmul.mubr.f32.gmra.mrb[0].mxu0 %v6574
  %v7194 = vpop.f32.mrb[0].mxu0
  %v7195 = vadd.f32 %v7034, %v7194
  %v7196 = vpop.f32.mrb[0].mxu0
  %v7197 = vadd.f32 %v7036, %v7196
  %7198 = vmatprep.mubr.f32.mxu0 0.0
  %7199 = vmatmul.mubr.f32.gmra.mrb[0].mxu0 %v6577
  %v7200 = vpop.f32.mrb[0].mxu0
  %v7201 = vadd.f32 %v7040, %v7200
  %v7202 = vpop.f32.mrb[0].mxu0
  %v7203 = vadd.f32 %v7042, %v7202
  %7204 = vmatprep.mubr.f32.mxu0 0.0
  %7205 = vmatmul.mubr.f32.gmra.mrb[0].mxu0 %v6580
  %v7206 = vpop.f32.mrb[0].mxu0
  %v7207 = vadd.f32 %v7046, %v7206
  %v7208 = vpop.f32.mrb[0].mxu0
  %v7209 = vadd.f32 %v7048, %v7208
  %7210 = vmatprep.mubr.f32.mxu0 0.0
  %7211 = vmatmul.mubr.f32.gmra.mrb[0].mxu0 %v6583
  %v7212 = vpop.f32.mrb[0].mxu0
  %v7213 = vadd.f32 %v7052, %v7212
  %v7214 = vpop.f32.mrb[0].mxu0
  %v7215 = vadd.f32 %v7054, %v7214
  %7216 = vmatprep.mubr.f32.mxu0 0.0
  %7217 = vmatmul.mubr.f32.gmra.mrb[0].mxu0 %v6586
  %v7218 = vpop.f32.mrb[0].mxu0
  %v7219 = vadd.f32 %v7058, %v7218
  %v7220 = vpop.f32.mrb[0].mxu0
  %v7221 = vadd.f32 %v7060, %v7220
  %7222 = vmatprep.mubr.f32.mxu0 0.0
  %7223 = vmatmul.mubr.f32.gmra.mrb[0].mxu0 %v6589
  %v7224 = vpop.f32.mrb[0].mxu0
  %v7225 = vadd.f32 %v7064, %v7224
  %v7226 = vpop.f32.mrb[0].mxu0
  %v7227 = vadd.f32 %v7066, %v7226
  %7228 = vmatprep.mubr.f32.mxu0 0.0
  %7229 = vmatmul.mubr.f32.gmra.mrb[0].mxu0 %v6592
  %v7230 = vpop.f32.mrb[0].mxu0
  %v7231 = vadd.f32 %v7070, %v7230
  %v7232 = vpop.f32.mrb[0].mxu0
  %v7233 = vadd.f32 %v7072, %v7232
  %7234 = vmatprep.mubr.f32.mxu0 0.0
  %7235 = vmatmul.mubr.f32.gmra.mrb[0].mxu0 %v6595
  %v7236 = vpop.f32.mrb[0].mxu0
  %v7237 = vadd.f32 %v7076, %v7236
  %v7238 = vpop.f32.mrb[0].mxu0
  %v7239 = vadd.f32 %v7078, %v7238
  %7240 = vdwg.mxu0
  %7241 = vmatprep.subr.mxu0 %v5249
  %7242 = vmatpush1.msra.mxu0 %v5248
  %7243 = vmatprep.subr.mxu0 %v5256
  %7244 = vmatpush1.msra.mxu0 %v5255
  %7245 = vmatprep.subr.mxu0 %v5263
  %7246 = vmatpush1.msra.mxu0 %v5262
  %7247 = vmatprep.subr.mxu0 %v5270
  %7248 = vmatpush1.msra.mxu0 %v5269
  %7249 = vmatprep.subr.mxu0 %v5277
  %7250 = vmatpush1.msra.mxu0 %v5276
  %7251 = vmatprep.subr.mxu0 %v5453
  %7252 = vmatpush1.msra.mxu0 %v5452
  %7253 = vmatprep.subr.mxu0 %v5459
  %7254 = vmatpush1.msra.mxu0 %v5458
  %7255 = vmatprep.subr.mxu0 %v5465
  %7256 = vmatpush1.msra.mxu0 %v5464
  %7257 = vmatprep.subr.mxu0 %v5471
  %7258 = vmatpush1.msra.mxu0 %v5470
  %7259 = vmatprep.subr.mxu0 %v5477
  %7260 = vmatpush1.msra.mxu0 %v5476
  %7261 = vmatprep.subr.mxu0 %v5593
  %7262 = vmatpush1.msra.mxu0 %v5592
  %7263 = vmatprep.subr.mxu0 %v5599
  %7264 = vmatpush1.msra.mxu0 %v5598
  %7265 = vmatprep.subr.mxu0 %v5605
  %7266 = vmatpush1.msra.mxu0 %v5604
  %7267 = vmatprep.subr.mxu0 %v5611
  %7268 = vmatpush1.msra.mxu0 %v5610
  %7269 = vmatprep.subr.mxu0 %v5617
  %7270 = vmatpush1.msra.mxu0 %v5616
  %7271 = vmatprep.subr.mxu0 %v5788
  %7272 = vmatpush1.msra.mxu0 %v5732
  %7273 = vmatprep.subr.mxu0 %v5789
  %7274 = vmatpush1.msra.mxu0 %v5738
  %7275 = vmatprep.subr.mxu0 %v5790
  %7276 = vmatpush1.msra.mxu0 %v5744
  %7277 = vmatprep.subr.mxu0 %v5791
  %7278 = vmatpush1.msra.mxu0 %v5750
  %7279 = vmatprep.subr.mxu0 %v5792
  %7280 = vmatpush1.msra.mxu0 %v5756
  %7281 = vmatprep.subr.mxu0 %v5923
  %7282 = vmatpush1.msra.mxu0 %v5867
  %7283 = vmatprep.subr.mxu0 %v5924
  %7284 = vmatpush1.msra.mxu0 %v5873
  %7285 = vmatprep.subr.mxu0 %v5925
  %7286 = vmatpush1.msra.mxu0 %v5879
  %7287 = vmatprep.subr.mxu0 %v5926
  %7288 = vmatpush1.msra.mxu0 %v5885
  %7289 = vmatprep.subr.mxu0 %v5927
  %7290 = vmatpush1.msra.mxu0 %v5891
  %7291 = vmatprep.subr.mxu0 %v6058
  %7292 = vmatpush1.msra.mxu0 %v6002
  %7293 = vmatprep.subr.mxu0 %v6059
  %7294 = vmatpush1.msra.mxu0 %v6008
  %7295 = vmatprep.subr.mxu0 %v6060
  %7296 = vmatpush1.msra.mxu0 %v6014
  %7297 = vmatprep.subr.mxu0 %v6061
  %7298 = vmatpush1.msra.mxu0 %v6020
  %7299 = vmatprep.subr.mxu0 %v6062
  %7300 = vmatpush1.msra.mxu0 %v6026
  %7301 = vmatprep.subr.mxu0 %v6193
  %7302 = vmatpush1.msra.mxu0 %v6137
  %7303 = vmatprep.subr.mxu0 %v6194
  %7304 = vmatpush1.msra.mxu0 %v6143
  %7305 = vmatprep.mubr.f32.mxu0 %v5280
  %7306 = vmatmul.mubr.f32.gmra.mrb[0].mxu0 %v5279
  %v7307 = vpop.f32.mrb[0].mxu0
  %v7308 = vadd.f32 %v6471, %v7307
  %v7309 = vpop.f32.mrb[0].mxu0
  %v7310 = vadd.f32 %v6471, %v7309
  %7311 = vmatprep.mubr.f32.mxu0 %v5283
  %7312 = vmatmul.mubr.f32.gmra.mrb[0].mxu0 %v5282
  %v7313 = vpop.f32.mrb[0].mxu0
  %v7314 = vadd.f32 %v6476, %v7313
  %v7315 = vpop.f32.mrb[0].mxu0
  %v7316 = vadd.f32 %v6476, %v7315
  %7317 = vmatprep.mubr.f32.mxu0 %v5286
  %7318 = vmatmul.mubr.f32.gmra.mrb[0].mxu0 %v5285
  %v7319 = vpop.f32.mrb[0].mxu0
  %v7320 = vadd.f32 %v6481, %v7319
  %v7321 = vpop.f32.mrb[0].mxu0
  %v7322 = vadd.f32 %v6481, %v7321
  %7323 = vmatprep.mubr.f32.mxu0 %v5289
  %7324 = vmatmul.mubr.f32.gmra.mrb[0].mxu0 %v5288
  %v7325 = vpop.f32.mrb[0].mxu0
  %v7326 = vadd.f32 %v6486, %v7325
  %v7327 = vpop.f32.mrb[0].mxu0
  %v7328 = vadd.f32 %v6486, %v7327
  %7329 = vmatprep.mubr.f32.mxu0 %v5292
  %7330 = vmatmul.mubr.f32.gmra.mrb[0].mxu0 %v5291
  %v7331 = vpop.f32.mrb[0].mxu0
  %v7332 = vadd.f32 %v6491, %v7331
  %v7333 = vpop.f32.mrb[0].mxu0
  %v7334 = vadd.f32 %v6491, %v7333
  %7335 = vmatprep.mubr.f32.mxu0 %v5295
  %7336 = vmatmul.mubr.f32.gmra.mrb[0].mxu0 %v5294
  %v7337 = vpop.f32.mrb[0].mxu0
  %v7338 = vadd.f32 %v6496, %v7337
  %v7339 = vpop.f32.mrb[0].mxu0
  %v7340 = vadd.f32 %v6496, %v7339
  %7341 = vmatprep.mubr.f32.mxu0 %v5298
  %7342 = vmatmul.mubr.f32.gmra.mrb[0].mxu0 %v5297
  %v7343 = vpop.f32.mrb[0].mxu0
  %v7344 = vadd.f32 %v6501, %v7343
  %v7345 = vpop.f32.mrb[0].mxu0
  %v7346 = vadd.f32 %v6501, %v7345
  %7347 = vmatprep.mubr.f32.mxu0 %v5301
  %7348 = vmatmul.mubr.f32.gmra.mrb[0].mxu0 %v5300
  %v7349 = vpop.f32.mrb[0].mxu0
  %v7350 = vadd.f32 %v6506, %v7349
  %v7351 = vpop.f32.mrb[0].mxu0
  %v7352 = vadd.f32 %v6506, %v7351
  %7353 = vmatprep.mubr.f32.mxu0 %v5304
  %7354 = vmatmul.mubr.f32.gmra.mrb[0].mxu0 %v5303
  %v7355 = vpop.f32.mrb[0].mxu0
  %v7356 = vadd.f32 %v6511, %v7355
  %v7357 = vpop.f32.mrb[0].mxu0
  %v7358 = vadd.f32 %v6511, %v7357
  %7359 = vmatprep.mubr.f32.mxu0 %v5307
  %7360 = vmatmul.mubr.f32.gmra.mrb[0].mxu0 %v5306
  %v7361 = vpop.f32.mrb[0].mxu0
  %v7362 = vadd.f32 %v6516, %v7361
  %v7363 = vpop.f32.mrb[0].mxu0
  %v7364 = vadd.f32 %v6516, %v7363
  %7365 = vmatprep.mubr.f32.mxu0 %v5310
  %7366 = vmatmul.mubr.f32.gmra.mrb[0].mxu0 %v5309
  %v7367 = vpop.f32.mrb[0].mxu0
  %v7368 = vadd.f32 %v6521, %v7367
  %v7369 = vpop.f32.mrb[0].mxu0
  %v7370 = vadd.f32 %v6521, %v7369
  %7371 = vmatprep.mubr.f32.mxu0 %v5313
  %7372 = vmatmul.mubr.f32.gmra.mrb[0].mxu0 %v5312
  %v7373 = vpop.f32.mrb[0].mxu0
  %v7374 = vadd.f32 %v6526, %v7373
  %v7375 = vpop.f32.mrb[0].mxu0
  %v7376 = vadd.f32 %v6526, %v7375
  %7377 = vmatprep.mubr.f32.mxu0 %v5316
  %7378 = vmatmul.mubr.f32.gmra.mrb[0].mxu0 %v5315
  %v7379 = vpop.f32.mrb[0].mxu0
  %v7380 = vadd.f32 %v6531, %v7379
  %v7381 = vpop.f32.mrb[0].mxu0
  %v7382 = vadd.f32 %v6531, %v7381
  %7383 = vmatprep.mubr.f32.mxu0 %v5319
  %7384 = vmatmul.mubr.f32.gmra.mrb[0].mxu0 %v5318
  %v7385 = vpop.f32.mrb[0].mxu0
  %v7386 = vadd.f32 %v6536, %v7385
  %v7387 = vpop.f32.mrb[0].mxu0
  %v7388 = vadd.f32 %v6536, %v7387
  %7389 = vmatprep.mubr.f32.mxu0 %v5322
  %7390 = vmatmul.mubr.f32.gmra.mrb[0].mxu0 %v5321
  %v7391 = vpop.f32.mrb[0].mxu0
  %v7392 = vadd.f32 %v6541, %v7391
  %v7393 = vpop.f32.mrb[0].mxu0
  %v7394 = vadd.f32 %v6541, %v7393
  %7395 = vmatprep.mubr.f32.mxu0 %v5325
  %7396 = vmatmul.mubr.f32.gmra.mrb[0].mxu0 %v5324
  %v7397 = vpop.f32.mrb[0].mxu0
  %v7398 = vadd.f32 %v6546, %v7397
  %v7399 = vpop.f32.mrb[0].mxu0
  %v7400 = vadd.f32 %v6546, %v7399
  %7401 = vdwg.mxu0
  %7402 = vmatprep.subr.mxu0 %v6195
  %7403 = vmatpush1.msra.mxu0 %v6149
  %7404 = vmatprep.subr.mxu0 %v6196
  %7405 = vmatpush1.msra.mxu0 %v6155
  %7406 = vmatprep.subr.mxu0 %v6197
  %7407 = vmatpush1.msra.mxu0 %v6161
  %7408 = vmatprep.subr.mxu0 %v6328
  %7409 = vmatpush1.msra.mxu0 %v6272
  %7410 = vmatprep.subr.mxu0 %v6329
  %7411 = vmatpush1.msra.mxu0 %v6278
  %7412 = vmatprep.subr.mxu0 %v6330
  %7413 = vmatpush1.msra.mxu0 %v6284
  %7414 = vmatprep.subr.mxu0 %v6331
  %7415 = vmatpush1.msra.mxu0 %v6290
  %7416 = vmatprep.subr.mxu0 %v6332
  %7417 = vmatpush1.msra.mxu0 %v6296
  %7418 = vmatprep.subr.mxu0 %v6463
  %7419 = vmatpush1.msra.mxu0 %v6407
  %7420 = vmatprep.subr.mxu0 %v6464
  %7421 = vmatpush1.msra.mxu0 %v6413
  %7422 = vmatprep.subr.mxu0 %v6465
  %7423 = vmatpush1.msra.mxu0 %v6419
  %7424 = vmatprep.subr.mxu0 %v6466
  %7425 = vmatpush1.msra.mxu0 %v6425
  %7426 = vmatprep.subr.mxu0 %v6467
  %7427 = vmatpush1.msra.mxu0 %v6431
  %7428 = vmatprep.subr.mxu0 0.0
  %7429 = vmatpush1.msra.mxu0 0.0
  %7430 = vmatprep.subr.mxu0 0.0
  %7431 = vmatpush1.msra.mxu0 0.0
  %7432 = vmatprep.subr.mxu0 0.0
  %7433 = vmatpush1.msra.mxu0 0.0
  %7434 = vmatprep.subr.mxu0 0.0
  %7435 = vmatpush1.msra.mxu0 0.0
  %7436 = vmatprep.subr.mxu0 0.0
  %7437 = vmatpush1.msra.mxu0 0.0
  %7438 = vmatprep.subr.mxu0 0.0
  %7439 = vmatpush1.msra.mxu0 0.0
  %7440 = vmatprep.subr.mxu0 0.0
  %7441 = vmatpush1.msra.mxu0 0.0
  %7442 = vmatprep.subr.mxu0 0.0
  %7443 = vmatpush1.msra.mxu0 0.0
  %7444 = vmatprep.subr.mxu0 0.0
  %7445 = vmatpush1.msra.mxu0 0.0
  %7446 = vmatprep.subr.mxu0 0.0
  %7447 = vmatpush1.msra.mxu0 0.0
  %7448 = vmatprep.subr.mxu0 0.0
  %7449 = vmatpush1.msra.mxu0 0.0
  %7450 = vmatprep.subr.mxu0 0.0
  %7451 = vmatpush1.msra.mxu0 0.0
  %7452 = vmatprep.subr.mxu0 0.0
  %7453 = vmatpush1.msra.mxu0 0.0
  %7454 = vmatprep.subr.mxu0 0.0
  %7455 = vmatpush1.msra.mxu0 0.0
  %7456 = vmatprep.subr.mxu0 0.0
  %7457 = vmatpush1.msra.mxu0 0.0
  %7458 = vmatprep.subr.mxu0 0.0
  %7459 = vmatpush1.msra.mxu0 0.0
  %7460 = vmatprep.subr.mxu0 0.0
  %7461 = vmatpush1.msra.mxu0 0.0
  %7462 = vmatprep.subr.mxu0 0.0
  %7463 = vmatpush1.msra.mxu0 0.0
  %7464 = vmatprep.subr.mxu0 0.0
  %7465 = vmatpush1.msra.mxu0 0.0
  %7466 = vmatprep.mubr.f32.mxu0 0.0
  %7467 = vmatmul.mubr.f32.gmra.mrb[0].mxu0 %v6550
  %v7468 = vpop.f32.mrb[0].mxu0
  %v7469 = vadd.f32 %v7308, %v7468
  %v7470 = vpop.f32.mrb[0].mxu0
  %v7471 = vadd.f32 %v7310, %v7470
  %7472 = vmatprep.mubr.f32.mxu0 0.0
  %7473 = vmatmul.mubr.f32.gmra.mrb[0].mxu0 %v6553
  %v7474 = vpop.f32.mrb[0].mxu0
  %v7475 = vadd.f32 %v7314, %v7474
  %v7476 = vpop.f32.mrb[0].mxu0
  %v7477 = vadd.f32 %v7316, %v7476
  %7478 = vmatprep.mubr.f32.mxu0 0.0
  %7479 = vmatmul.mubr.f32.gmra.mrb[0].mxu0 %v6556
  %v7480 = vpop.f32.mrb[0].mxu0
  %v7481 = vadd.f32 %v7320, %v7480
  %v7482 = vpop.f32.mrb[0].mxu0
  %v7483 = vadd.f32 %v7322, %v7482
  %7484 = vmatprep.mubr.f32.mxu0 0.0
  %7485 = vmatmul.mubr.f32.gmra.mrb[0].mxu0 %v6559
  %v7486 = vpop.f32.mrb[0].mxu0
  %v7487 = vadd.f32 %v7326, %v7486
  %v7488 = vpop.f32.mrb[0].mxu0
  %v7489 = vadd.f32 %v7328, %v7488
  %7490 = vmatprep.mubr.f32.mxu0 0.0
  %7491 = vmatmul.mubr.f32.gmra.mrb[0].mxu0 %v6562
  %v7492 = vpop.f32.mrb[0].mxu0
  %v7493 = vadd.f32 %v7332, %v7492
  %v7494 = vpop.f32.mrb[0].mxu0
  %v7495 = vadd.f32 %v7334, %v7494
  %7496 = vmatprep.mubr.f32.mxu0 0.0
  %7497 = vmatmul.mubr.f32.gmra.mrb[0].mxu0 %v6565
  %v7498 = vpop.f32.mrb[0].mxu0
  %v7499 = vadd.f32 %v7338, %v7498
  %v7500 = vpop.f32.mrb[0].mxu0
  %v7501 = vadd.f32 %v7340, %v7500
  %7502 = vmatprep.mubr.f32.mxu0 0.0
  %7503 = vmatmul.mubr.f32.gmra.mrb[0].mxu0 %v6568
  %v7504 = vpop.f32.mrb[0].mxu0
  %v7505 = vadd.f32 %v7344, %v7504
  %v7506 = vpop.f32.mrb[0].mxu0
  %v7507 = vadd.f32 %v7346, %v7506
  %7508 = vmatprep.mubr.f32.mxu0 0.0
  %7509 = vmatmul.mubr.f32.gmra.mrb[0].mxu0 %v6571
  %v7510 = vpop.f32.mrb[0].mxu0
  %v7511 = vadd.f32 %v7350, %v7510
  %v7512 = vpop.f32.mrb[0].mxu0
  %v7513 = vadd.f32 %v7352, %v7512
  %7514 = vmatprep.mubr.f32.mxu0 0.0
  %7515 = vmatmul.mubr.f32.gmra.mrb[0].mxu0 %v6574
  %v7516 = vpop.f32.mrb[0].mxu0
  %v7517 = vadd.f32 %v7356, %v7516
  %v7518 = vpop.f32.mrb[0].mxu0
  %v7519 = vadd.f32 %v7358, %v7518
  %7520 = vmatprep.mubr.f32.mxu0 0.0
  %7521 = vmatmul.mubr.f32.gmra.mrb[0].mxu0 %v6577
  %v7522 = vpop.f32.mrb[0].mxu0
  %v7523 = vadd.f32 %v7362, %v7522
  %v7524 = vpop.f32.mrb[0].mxu0
  %v7525 = vadd.f32 %v7364, %v7524
  %7526 = vmatprep.mubr.f32.mxu0 0.0
  %7527 = vmatmul.mubr.f32.gmra.mrb[0].mxu0 %v6580
  %v7528 = vpop.f32.mrb[0].mxu0
  %v7529 = vadd.f32 %v7368, %v7528
  %v7530 = vpop.f32.mrb[0].mxu0
  %v7531 = vadd.f32 %v7370, %v7530
  %7532 = vmatprep.mubr.f32.mxu0 0.0
  %7533 = vmatmul.mubr.f32.gmra.mrb[0].mxu0 %v6583
  %v7534 = vpop.f32.mrb[0].mxu0
  %v7535 = vadd.f32 %v7374, %v7534
  %v7536 = vpop.f32.mrb[0].mxu0
  %v7537 = vadd.f32 %v7376, %v7536
  %7538 = vmatprep.mubr.f32.mxu0 0.0
  %7539 = vmatmul.mubr.f32.gmra.mrb[0].mxu0 %v6586
  %v7540 = vpop.f32.mrb[0].mxu0
  %v7541 = vadd.f32 %v7380, %v7540
  %v7542 = vpop.f32.mrb[0].mxu0
  %v7543 = vadd.f32 %v7382, %v7542
  %7544 = vmatprep.mubr.f32.mxu0 0.0
  %7545 = vmatmul.mubr.f32.gmra.mrb[0].mxu0 %v6589
  %v7546 = vpop.f32.mrb[0].mxu0
  %v7547 = vadd.f32 %v7386, %v7546
  %v7548 = vpop.f32.mrb[0].mxu0
  %v7549 = vadd.f32 %v7388, %v7548
  %7550 = vmatprep.mubr.f32.mxu0 0.0
  %7551 = vmatmul.mubr.f32.gmra.mrb[0].mxu0 %v6592
  %v7552 = vpop.f32.mrb[0].mxu0
  %v7553 = vadd.f32 %v7392, %v7552
  %v7554 = vpop.f32.mrb[0].mxu0
  %v7555 = vadd.f32 %v7394, %v7554
  %7556 = vmatprep.mubr.f32.mxu0 0.0
  %7557 = vmatmul.mubr.f32.gmra.mrb[0].mxu0 %v6595
  %v7558 = vpop.f32.mrb[0].mxu0
  %v7559 = vadd.f32 %v7398, %v7558
  %v7560 = vpop.f32.mrb[0].mxu0
  %v7561 = vadd.f32 %v7400, %v7560
  %7562 = vdwg.mxu0
  %7563 = vmatprep.subr.mxu0 0.0
  %7564 = vmatpush1.msra.mxu0 %v5250
  %7565 = vmatprep.subr.mxu0 0.0
  %7566 = vmatpush1.msra.mxu0 %v5257
  %7567 = vmatprep.subr.mxu0 0.0
  %7568 = vmatpush1.msra.mxu0 %v5264
  %7569 = vmatprep.subr.mxu0 0.0
  %7570 = vmatpush1.msra.mxu0 %v5271
  %7571 = vmatprep.subr.mxu0 0.0
  %7572 = vmatpush1.msra.mxu0 %v5278
  %7573 = vmatprep.subr.mxu0 0.0
  %7574 = vmatpush1.msra.mxu0 %v5513
  %7575 = vmatprep.subr.mxu0 0.0
  %7576 = vmatpush1.msra.mxu0 %v5514
  %7577 = vmatprep.subr.mxu0 0.0
  %7578 = vmatpush1.msra.mxu0 %v5515
  %7579 = vmatprep.subr.mxu0 0.0
  %7580 = vmatpush1.msra.mxu0 %v5516
  %7581 = vmatprep.subr.mxu0 0.0
  %7582 = vmatpush1.msra.mxu0 %v5517
  %7583 = vmatprep.subr.mxu0 0.0
  %7584 = vmatpush1.msra.mxu0 %v5653
  %7585 = vmatprep.subr.mxu0 0.0
  %7586 = vmatpush1.msra.mxu0 %v5654
  %7587 = vmatprep.subr.mxu0 0.0
  %7588 = vmatpush1.msra.mxu0 %v5655
  %7589 = vmatprep.subr.mxu0 0.0
  %7590 = vmatpush1.msra.mxu0 %v5656
  %7591 = vmatprep.subr.mxu0 0.0
  %7592 = vmatpush1.msra.mxu0 %v5657
  %7593 = vmatprep.subr.mxu0 0.0
  %7594 = vmatpush1.msra.mxu0 0.0
  %7595 = vmatprep.subr.mxu0 0.0
  %7596 = vmatpush1.msra.mxu0 0.0
  %7597 = vmatprep.subr.mxu0 0.0
  %7598 = vmatpush1.msra.mxu0 0.0
  %7599 = vmatprep.subr.mxu0 0.0
  %7600 = vmatpush1.msra.mxu0 0.0
  %7601 = vmatprep.subr.mxu0 0.0
  %7602 = vmatpush1.msra.mxu0 0.0
  %7603 = vmatprep.subr.mxu0 0.0
  %7604 = vmatpush1.msra.mxu0 0.0
  %7605 = vmatprep.subr.mxu0 0.0
  %7606 = vmatpush1.msra.mxu0 0.0
  %7607 = vmatprep.subr.mxu0 0.0
  %7608 = vmatpush1.msra.mxu0 0.0
  %7609 = vmatprep.subr.mxu0 0.0
  %7610 = vmatpush1.msra.mxu0 0.0
  %7611 = vmatprep.subr.mxu0 0.0
  %7612 = vmatpush1.msra.mxu0 0.0
  %7613 = vmatprep.subr.mxu0 0.0
  %7614 = vmatpush1.msra.mxu0 0.0
  %7615 = vmatprep.subr.mxu0 0.0
  %7616 = vmatpush1.msra.mxu0 0.0
  %7617 = vmatprep.subr.mxu0 0.0
  %7618 = vmatpush1.msra.mxu0 0.0
  %7619 = vmatprep.subr.mxu0 0.0
  %7620 = vmatpush1.msra.mxu0 0.0
  %7621 = vmatprep.subr.mxu0 0.0
  %7622 = vmatpush1.msra.mxu0 0.0
  %7623 = vmatprep.subr.mxu0 0.0
  %7624 = vmatpush1.msra.mxu0 0.0
  %7625 = vmatprep.subr.mxu0 0.0
  %7626 = vmatpush1.msra.mxu0 0.0
  %7627 = vmatprep.mubr.f32.mxu0 %v5280
  %7628 = vmatmul.mubr.f32.gmra.mrb[0].mxu0 %v5279
  %v7629 = vpop.f32.mrb[0].mxu0
  %v7630 = vadd.f32 %v6471, %v7629
  %v7631 = vpop.f32.mrb[0].mxu0
  %7632 = vmatprep.mubr.f32.mxu0 %v5283
  %7633 = vmatmul.mubr.f32.gmra.mrb[0].mxu0 %v5282
  %v7634 = vpop.f32.mrb[0].mxu0
  %v7635 = vadd.f32 %v6476, %v7634
  %v7636 = vpop.f32.mrb[0].mxu0
  %7637 = vmatprep.mubr.f32.mxu0 %v5286
  %7638 = vmatmul.mubr.f32.gmra.mrb[0].mxu0 %v5285
  %v7639 = vpop.f32.mrb[0].mxu0
  %v7640 = vadd.f32 %v6481, %v7639
  %v7641 = vpop.f32.mrb[0].mxu0
  %7642 = vmatprep.mubr.f32.mxu0 %v5289
  %7643 = vmatmul.mubr.f32.gmra.mrb[0].mxu0 %v5288
  %v7644 = vpop.f32.mrb[0].mxu0
  %v7645 = vadd.f32 %v6486, %v7644
  %v7646 = vpop.f32.mrb[0].mxu0
  %7647 = vmatprep.mubr.f32.mxu0 %v5292
  %7648 = vmatmul.mubr.f32.gmra.mrb[0].mxu0 %v5291
  %v7649 = vpop.f32.mrb[0].mxu0
  %v7650 = vadd.f32 %v6491, %v7649
  %v7651 = vpop.f32.mrb[0].mxu0
  %7652 = vmatprep.mubr.f32.mxu0 %v5295
  %7653 = vmatmul.mubr.f32.gmra.mrb[0].mxu0 %v5294
  %v7654 = vpop.f32.mrb[0].mxu0
  %v7655 = vadd.f32 %v6496, %v7654
  %v7656 = vpop.f32.mrb[0].mxu0
  %7657 = vmatprep.mubr.f32.mxu0 %v5298
  %7658 = vmatmul.mubr.f32.gmra.mrb[0].mxu0 %v5297
  %v7659 = vpop.f32.mrb[0].mxu0
  %v7660 = vadd.f32 %v6501, %v7659
  %v7661 = vpop.f32.mrb[0].mxu0
  %7662 = vmatprep.mubr.f32.mxu0 %v5301
  %7663 = vmatmul.mubr.f32.gmra.mrb[0].mxu0 %v5300
  %v7664 = vpop.f32.mrb[0].mxu0
  %v7665 = vadd.f32 %v6506, %v7664
  %v7666 = vpop.f32.mrb[0].mxu0
  %7667 = vmatprep.mubr.f32.mxu0 %v5304
  %7668 = vmatmul.mubr.f32.gmra.mrb[0].mxu0 %v5303
  %v7669 = vpop.f32.mrb[0].mxu0
  %v7670 = vadd.f32 %v6511, %v7669
  %v7671 = vpop.f32.mrb[0].mxu0
  %7672 = vmatprep.mubr.f32.mxu0 %v5307
  %7673 = vmatmul.mubr.f32.gmra.mrb[0].mxu0 %v5306
  %v7674 = vpop.f32.mrb[0].mxu0
  %v7675 = vadd.f32 %v6516, %v7674
  %v7676 = vpop.f32.mrb[0].mxu0
  %7677 = vmatprep.mubr.f32.mxu0 %v5310
  %7678 = vmatmul.mubr.f32.gmra.mrb[0].mxu0 %v5309
  %v7679 = vpop.f32.mrb[0].mxu0
  %v7680 = vadd.f32 %v6521, %v7679
  %v7681 = vpop.f32.mrb[0].mxu0
  %7682 = vmatprep.mubr.f32.mxu0 %v5313
  %7683 = vmatmul.mubr.f32.gmra.mrb[0].mxu0 %v5312
  %v7684 = vpop.f32.mrb[0].mxu0
  %v7685 = vadd.f32 %v6526, %v7684
  %v7686 = vpop.f32.mrb[0].mxu0
  %7687 = vmatprep.mubr.f32.mxu0 %v5316
  %7688 = vmatmul.mubr.f32.gmra.mrb[0].mxu0 %v5315
  %v7689 = vpop.f32.mrb[0].mxu0
  %v7690 = vadd.f32 %v6531, %v7689
  %v7691 = vpop.f32.mrb[0].mxu0
  %7692 = vmatprep.mubr.f32.mxu0 %v5319
  %7693 = vmatmul.mubr.f32.gmra.mrb[0].mxu0 %v5318
  %v7694 = vpop.f32.mrb[0].mxu0
  %v7695 = vadd.f32 %v6536, %v7694
  %v7696 = vpop.f32.mrb[0].mxu0
  %7697 = vmatprep.mubr.f32.mxu0 %v5322
  %7698 = vmatmul.mubr.f32.gmra.mrb[0].mxu0 %v5321
  %v7699 = vpop.f32.mrb[0].mxu0
  %v7700 = vadd.f32 %v6541, %v7699
  %v7701 = vpop.f32.mrb[0].mxu0
  %7702 = vmatprep.mubr.f32.mxu0 %v5325
  %7703 = vmatmul.mubr.f32.gmra.mrb[0].mxu0 %v5324
  %v7704 = vpop.f32.mrb[0].mxu0
  %v7705 = vadd.f32 %v6546, %v7704
  %v7706 = vpop.f32.mrb[0].mxu0
  %7707 = vdwg.mxu0
  %7708 = vmatprep.subr.mxu0 0.0
  %7709 = vmatpush1.msra.mxu0 0.0
  %7710 = vmatprep.subr.mxu0 0.0
  %7711 = vmatpush1.msra.mxu0 0.0
  %7712 = vmatprep.subr.mxu0 0.0
  %7713 = vmatpush1.msra.mxu0 0.0
  %7714 = vmatprep.subr.mxu0 0.0
  %7715 = vmatpush1.msra.mxu0 0.0
  %7716 = vmatprep.subr.mxu0 0.0
  %7717 = vmatpush1.msra.mxu0 0.0
  %7718 = vmatprep.subr.mxu0 0.0
  %7719 = vmatpush1.msra.mxu0 0.0
  %7720 = vmatprep.subr.mxu0 0.0
  %7721 = vmatpush1.msra.mxu0 0.0
  %7722 = vmatprep.subr.mxu0 0.0
  %7723 = vmatpush1.msra.mxu0 0.0
  %7724 = vmatprep.subr.mxu0 0.0
  %7725 = vmatpush1.msra.mxu0 0.0
  %7726 = vmatprep.subr.mxu0 0.0
  %7727 = vmatpush1.msra.mxu0 0.0
  %7728 = vmatprep.subr.mxu0 0.0
  %7729 = vmatpush1.msra.mxu0 0.0
  %7730 = vmatprep.subr.mxu0 0.0
  %7731 = vmatpush1.msra.mxu0 0.0
  %7732 = vmatprep.subr.mxu0 0.0
  %7733 = vmatpush1.msra.mxu0 0.0
  %7734 = vmatprep.subr.mxu0 0.0
  %7735 = vmatpush1.msra.mxu0 0.0
  %7736 = vmatprep.subr.mxu0 0.0
  %7737 = vmatpush1.msra.mxu0 0.0
  %7738 = vmatprep.subr.mxu0 0.0
  %7739 = vmatpush1.msra.mxu0 0.0
  %7740 = vmatprep.subr.mxu0 0.0
  %7741 = vmatpush1.msra.mxu0 0.0
  %7742 = vmatprep.subr.mxu0 0.0
  %7743 = vmatpush1.msra.mxu0 0.0
  %7744 = vmatprep.subr.mxu0 0.0
  %7745 = vmatpush1.msra.mxu0 0.0
  %7746 = vmatprep.subr.mxu0 0.0
  %7747 = vmatpush1.msra.mxu0 0.0
  %7748 = vmatprep.subr.mxu0 0.0
  %7749 = vmatpush1.msra.mxu0 0.0
  %7750 = vmatprep.subr.mxu0 0.0
  %7751 = vmatpush1.msra.mxu0 0.0
  %7752 = vmatprep.subr.mxu0 0.0
  %7753 = vmatpush1.msra.mxu0 0.0
  %7754 = vmatprep.subr.mxu0 0.0
  %7755 = vmatpush1.msra.mxu0 0.0
  %7756 = vmatprep.subr.mxu0 0.0
  %7757 = vmatpush1.msra.mxu0 0.0
  %7758 = vmatprep.subr.mxu0 0.0
  %7759 = vmatpush1.msra.mxu0 0.0
  %7760 = vmatprep.subr.mxu0 0.0
  %7761 = vmatpush1.msra.mxu0 0.0
  %7762 = vmatprep.subr.mxu0 0.0
  %7763 = vmatpush1.msra.mxu0 0.0
  %7764 = vmatprep.subr.mxu0 0.0
  %7765 = vmatpush1.msra.mxu0 0.0
  %7766 = vmatprep.subr.mxu0 0.0
  %7767 = vmatpush1.msra.mxu0 0.0
  %7768 = vmatprep.subr.mxu0 0.0
  %7769 = vmatpush1.msra.mxu0 0.0
  %7770 = vmatprep.subr.mxu0 0.0
  %7771 = vmatpush1.msra.mxu0 0.0
  %7772 = vmatprep.mubr.f32.mxu0 0.0
  %7773 = vmatmul.mubr.f32.gmra.mrb[0].mxu0 %v6550
  %v7774 = vpop.f32.mrb[0].mxu0
  %v7775 = vadd.f32 %v7630, %v7774
  %v7776 = vpop.f32.mrb[0].mxu0
  %7777 = vmatprep.mubr.f32.mxu0 0.0
  %7778 = vmatmul.mubr.f32.gmra.mrb[0].mxu0 %v6553
  %v7779 = vpop.f32.mrb[0].mxu0
  %v7780 = vadd.f32 %v7635, %v7779
  %v7781 = vpop.f32.mrb[0].mxu0
  %7782 = vmatprep.mubr.f32.mxu0 0.0
  %7783 = vmatmul.mubr.f32.gmra.mrb[0].mxu0 %v6556
  %v7784 = vpop.f32.mrb[0].mxu0
  %v7785 = vadd.f32 %v7640, %v7784
  %v7786 = vpop.f32.mrb[0].mxu0
  %7787 = vmatprep.mubr.f32.mxu0 0.0
  %7788 = vmatmul.mubr.f32.gmra.mrb[0].mxu0 %v6559
  %v7789 = vpop.f32.mrb[0].mxu0
  %v7790 = vadd.f32 %v7645, %v7789
  %v7791 = vpop.f32.mrb[0].mxu0
  %7792 = vmatprep.mubr.f32.mxu0 0.0
  %7793 = vmatmul.mubr.f32.gmra.mrb[0].mxu0 %v6562
  %v7794 = vpop.f32.mrb[0].mxu0
  %v7795 = vadd.f32 %v7650, %v7794
  %v7796 = vpop.f32.mrb[0].mxu0
  %7797 = vmatprep.mubr.f32.mxu0 0.0
  %7798 = vmatmul.mubr.f32.gmra.mrb[0].mxu0 %v6565
  %v7799 = vpop.f32.mrb[0].mxu0
  %v7800 = vadd.f32 %v7655, %v7799
  %v7801 = vpop.f32.mrb[0].mxu0
  %7802 = vmatprep.mubr.f32.mxu0 0.0
  %7803 = vmatmul.mubr.f32.gmra.mrb[0].mxu0 %v6568
  %v7804 = vpop.f32.mrb[0].mxu0
  %v7805 = vadd.f32 %v7660, %v7804
  %v7806 = vpop.f32.mrb[0].mxu0
  %7807 = vmatprep.mubr.f32.mxu0 0.0
  %7808 = vmatmul.mubr.f32.gmra.mrb[0].mxu0 %v6571
  %v7809 = vpop.f32.mrb[0].mxu0
  %v7810 = vadd.f32 %v7665, %v7809
  %v7811 = vpop.f32.mrb[0].mxu0
  %7812 = vmatprep.mubr.f32.mxu0 0.0
  %7813 = vmatmul.mubr.f32.gmra.mrb[0].mxu0 %v6574
  %v7814 = vpop.f32.mrb[0].mxu0
  %v7815 = vadd.f32 %v7670, %v7814
  %v7816 = vpop.f32.mrb[0].mxu0
  %7817 = vmatprep.mubr.f32.mxu0 0.0
  %7818 = vmatmul.mubr.f32.gmra.mrb[0].mxu0 %v6577
  %v7819 = vpop.f32.mrb[0].mxu0
  %v7820 = vadd.f32 %v7675, %v7819
  %v7821 = vpop.f32.mrb[0].mxu0
  %7822 = vmatprep.mubr.f32.mxu0 0.0
  %7823 = vmatmul.mubr.f32.gmra.mrb[0].mxu0 %v6580
  %v7824 = vpop.f32.mrb[0].mxu0
  %v7825 = vadd.f32 %v7680, %v7824
  %v7826 = vpop.f32.mrb[0].mxu0
  %7827 = vmatprep.mubr.f32.mxu0 0.0
  %7828 = vmatmul.mubr.f32.gmra.mrb[0].mxu0 %v6583
  %v7829 = vpop.f32.mrb[0].mxu0
  %v7830 = vadd.f32 %v7685, %v7829
  %v7831 = vpop.f32.mrb[0].mxu0
  %7832 = vmatprep.mubr.f32.mxu0 0.0
  %7833 = vmatmul.mubr.f32.gmra.mrb[0].mxu0 %v6586
  %v7834 = vpop.f32.mrb[0].mxu0
  %v7835 = vadd.f32 %v7690, %v7834
  %v7836 = vpop.f32.mrb[0].mxu0
  %7837 = vmatprep.mubr.f32.mxu0 0.0
  %7838 = vmatmul.mubr.f32.gmra.mrb[0].mxu0 %v6589
  %v7839 = vpop.f32.mrb[0].mxu0
  %v7840 = vadd.f32 %v7695, %v7839
  %v7841 = vpop.f32.mrb[0].mxu0
  %7842 = vmatprep.mubr.f32.mxu0 0.0
  %7843 = vmatmul.mubr.f32.gmra.mrb[0].mxu0 %v6592
  %v7844 = vpop.f32.mrb[0].mxu0
  %v7845 = vadd.f32 %v7700, %v7844
  %v7846 = vpop.f32.mrb[0].mxu0
  %7847 = vmatprep.mubr.f32.mxu0 0.0
  %7848 = vmatmul.mubr.f32.gmra.mrb[0].mxu0 %v6595
  %v7849 = vpop.f32.mrb[0].mxu0
  %v7850 = vadd.f32 %v7705, %v7849
  %v7851 = vpop.f32.mrb[0].mxu0
  %7852 = vdwg.mxu0
  %v7853 = vmax.f32 %v6825, 0.0
  %v7854 = vmax.f32 %v6827, 0.0
  %v7855 = vmax.f32 %v7147, 0.0
  %v7856 = vmax.f32 %v7149, 0.0
  %v7857 = vmax.f32 %v7469, 0.0
  %v7858 = vmax.f32 %v7471, 0.0
  %v7859 = vmax.f32 %v7775, 0.0
  %v7860 = vmax.f32 %v6831, 0.0
  %v7861 = vmax.f32 %v6833, 0.0
  %v7862 = vmax.f32 %v7153, 0.0
  %v7863 = vmax.f32 %v7155, 0.0
  %v7864 = vmax.f32 %v7475, 0.0
  %v7865 = vmax.f32 %v7477, 0.0
  %v7866 = vmax.f32 %v7780, 0.0
  %v7867 = vmax.f32 %v6837, 0.0
  %v7868 = vmax.f32 %v6839, 0.0
  %v7869 = vmax.f32 %v7159, 0.0
  %v7870 = vmax.f32 %v7161, 0.0
  %v7871 = vmax.f32 %v7481, 0.0
  %v7872 = vmax.f32 %v7483, 0.0
  %v7873 = vmax.f32 %v7785, 0.0
  %v7874 = vmax.f32 %v6843, 0.0
  %v7875 = vmax.f32 %v6845, 0.0
  %v7876 = vmax.f32 %v7165, 0.0
  %v7877 = vmax.f32 %v7167, 0.0
  %v7878 = vmax.f32 %v7487, 0.0
  %v7879 = vmax.f32 %v7489, 0.0
  %v7880 = vmax.f32 %v7790, 0.0
  %v7881 = vmax.f32 %v6849, 0.0
  %v7882 = vmax.f32 %v6851, 0.0
  %v7883 = vmax.f32 %v7171, 0.0
  %v7884 = vmax.f32 %v7173, 0.0
  %v7885 = vmax.f32 %v7493, 0.0
  %v7886 = vmax.f32 %v7495, 0.0
  %v7887 = vmax.f32 %v7795, 0.0
  %v7888 = vmax.f32 %v6855, 0.0
  %v7889 = vmax.f32 %v6857, 0.0
  %v7890 = vmax.f32 %v7177, 0.0
  %v7891 = vmax.f32 %v7179, 0.0
  %v7892 = vmax.f32 %v7499, 0.0
  %v7893 = vmax.f32 %v7501, 0.0
  %v7894 = vmax.f32 %v7800, 0.0
  %v7895 = vmax.f32 %v6861, 0.0
  %v7896 = vmax.f32 %v6863, 0.0
  %v7897 = vmax.f32 %v7183, 0.0
  %v7898 = vmax.f32 %v7185, 0.0
  %v7899 = vmax.f32 %v7505, 0.0
  %v7900 = vmax.f32 %v7507, 0.0
  %v7901 = vmax.f32 %v7805, 0.0
  %v7902 = vmax.f32 %v6867, 0.0
  %v7903 = vmax.f32 %v6869, 0.0
  %v7904 = vmax.f32 %v7189, 0.0
  %v7905 = vmax.f32 %v7191, 0.0
  %v7906 = vmax.f32 %v7511, 0.0
  %v7907 = vmax.f32 %v7513, 0.0
  %v7908 = vmax.f32 %v7810, 0.0
  %v7909 = vmax.f32 %v6873, 0.0
  %v7910 = vmax.f32 %v6875, 0.0
  %v7911 = vmax.f32 %v7195, 0.0
  %v7912 = vmax.f32 %v7197, 0.0
  %v7913 = vmax.f32 %v7517, 0.0
  %v7914 = vmax.f32 %v7519, 0.0
  %v7915 = vmax.f32 %v7815, 0.0
  %v7916 = vmax.f32 %v6879, 0.0
  %v7917 = vmax.f32 %v6881, 0.0
  %v7918 = vmax.f32 %v7201, 0.0
  %v7919 = vmax.f32 %v7203, 0.0
  %v7920 = vmax.f32 %v7523, 0.0
  %v7921 = vmax.f32 %v7525, 0.0
  %v7922 = vmax.f32 %v7820, 0.0
  %v7923 = vmax.f32 %v6885, 0.0
  %v7924 = vmax.f32 %v6887, 0.0
  %v7925 = vmax.f32 %v7207, 0.0
  %v7926 = vmax.f32 %v7209, 0.0
  %v7927 = vmax.f32 %v7529, 0.0
  %v7928 = vmax.f32 %v7531, 0.0
  %v7929 = vmax.f32 %v7825, 0.0
  %v7930 = vmax.f32 %v6891, 0.0
  %v7931 = vmax.f32 %v6893, 0.0
  %v7932 = vmax.f32 %v7213, 0.0
  %v7933 = vmax.f32 %v7215, 0.0
  %v7934 = vmax.f32 %v7535, 0.0
  %v7935 = vmax.f32 %v7537, 0.0
  %v7936 = vmax.f32 %v7830, 0.0
  %v7937 = vmax.f32 %v6897, 0.0
  %v7938 = vmax.f32 %v6899, 0.0
  %v7939 = vmax.f32 %v7219, 0.0
  %v7940 = vmax.f32 %v7221, 0.0
  %v7941 = vmax.f32 %v7541, 0.0
  %v7942 = vmax.f32 %v7543, 0.0
  %v7943 = vmax.f32 %v7835, 0.0
  %v7944 = vmax.f32 %v6903, 0.0
  %v7945 = vmax.f32 %v6905, 0.0
  %v7946 = vmax.f32 %v7225, 0.0
  %v7947 = vmax.f32 %v7227, 0.0
  %v7948 = vmax.f32 %v7547, 0.0
  %v7949 = vmax.f32 %v7549, 0.0
  %v7950 = vmax.f32 %v7840, 0.0
  %v7951 = vmax.f32 %v6909, 0.0
  %v7952 = vmax.f32 %v6911, 0.0
  %v7953 = vmax.f32 %v7231, 0.0
  %v7954 = vmax.f32 %v7233, 0.0
  %v7955 = vmax.f32 %v7553, 0.0
  %v7956 = vmax.f32 %v7555, 0.0
  %v7957 = vmax.f32 %v7845, 0.0
  %v7958 = vmax.f32 %v6915, 0.0
  %v7959 = vmax.f32 %v6917, 0.0
  %v7960 = vmax.f32 %v7237, 0.0
  %v7961 = vmax.f32 %v7239, 0.0
  %v7962 = vmax.f32 %v7559, 0.0
  %v7963 = vmax.f32 %v7561, 0.0
  %v7964 = vmax.f32 %v7850, 0.0
  %8077 = vrot.lane.b32.xlu0 %v7853, 126
  %v8078 = vpop.permute.xlu0 %8077
  %8079 = vrot.lane.b32.xlu0 %v7854, 126
  %v8080 = vpop.permute.xlu0 %8079
  %8081 = vrot.lane.b32.xlu0 %v7855, 126
  %v8082 = vpop.permute.xlu0 %8081
  %8083 = vrot.lane.b32.xlu0 %v7856, 126
  %v8084 = vpop.permute.xlu0 %8083
  %8085 = vrot.lane.b32.xlu0 %v7857, 126
  %v8086 = vpop.permute.xlu0 %8085
  %8087 = vrot.lane.b32.xlu0 %v7858, 126
  %v8088 = vpop.permute.xlu0 %8087
  %8089 = vrot.lane.b32.xlu0 %v7859, 126
  %v8090 = vpop.permute.xlu0 %8089
  %8091 = vrot.lane.b32.xlu0 %v7860, 126
  %v8092 = vpop.permute.xlu0 %8091
  %8093 = vrot.lane.b32.xlu0 %v7861, 126
  %v8094 = vpop.permute.xlu0 %8093
  %8095 = vrot.lane.b32.xlu0 %v7862, 126
  %v8096 = vpop.permute.xlu0 %8095
  %8097 = vrot.lane.b32.xlu0 %v7863, 126
  %v8098 = vpop.permute.xlu0 %8097
  %8099 = vrot.lane.b32.xlu0 %v7864, 126
  %v8100 = vpop.permute.xlu0 %8099
  %8101 = vrot.lane.b32.xlu0 %v7865, 126
  %v8102 = vpop.permute.xlu0 %8101
  %8103 = vrot.lane.b32.xlu0 %v7866, 126
  %v8104 = vpop.permute.xlu0 %8103
  %8105 = vrot.lane.b32.xlu0 %v7867, 126
  %v8106 = vpop.permute.xlu0 %8105
  %8107 = vrot.lane.b32.xlu0 %v7868, 126
  %v8108 = vpop.permute.xlu0 %8107
  %8109 = vrot.lane.b32.xlu0 %v7869, 126
  %v8110 = vpop.permute.xlu0 %8109
  %8111 = vrot.lane.b32.xlu0 %v7870, 126
  %v8112 = vpop.permute.xlu0 %8111
  %8113 = vrot.lane.b32.xlu0 %v7871, 126
  %v8114 = vpop.permute.xlu0 %8113
  %8115 = vrot.lane.b32.xlu0 %v7872, 126
  %v8116 = vpop.permute.xlu0 %8115
  %8117 = vrot.lane.b32.xlu0 %v7873, 126
  %v8118 = vpop.permute.xlu0 %8117
  %8119 = vrot.lane.b32.xlu0 %v7874, 126
  %v8120 = vpop.permute.xlu0 %8119
  %8121 = vrot.lane.b32.xlu0 %v7875, 126
  %v8122 = vpop.permute.xlu0 %8121
  %8123 = vrot.lane.b32.xlu0 %v7876, 126
  %v8124 = vpop.permute.xlu0 %8123
  %8125 = vrot.lane.b32.xlu0 %v7877, 126
  %v8126 = vpop.permute.xlu0 %8125
  %8127 = vrot.lane.b32.xlu0 %v7878, 126
  %v8128 = vpop.permute.xlu0 %8127
  %8129 = vrot.lane.b32.xlu0 %v7879, 126
  %v8130 = vpop.permute.xlu0 %8129
  %8131 = vrot.lane.b32.xlu0 %v7880, 126
  %v8132 = vpop.permute.xlu0 %8131
  %8133 = vrot.lane.b32.xlu0 %v7881, 126
  %v8134 = vpop.permute.xlu0 %8133
  %8135 = vrot.lane.b32.xlu0 %v7882, 126
  %v8136 = vpop.permute.xlu0 %8135
  %8137 = vrot.lane.b32.xlu0 %v7883, 126
  %v8138 = vpop.permute.xlu0 %8137
  %8139 = vrot.lane.b32.xlu0 %v7884, 126
  %v8140 = vpop.permute.xlu0 %8139
  %8141 = vrot.lane.b32.xlu0 %v7885, 126
  %v8142 = vpop.permute.xlu0 %8141
  %8143 = vrot.lane.b32.xlu0 %v7886, 126
  %v8144 = vpop.permute.xlu0 %8143
  %8145 = vrot.lane.b32.xlu0 %v7887, 126
  %v8146 = vpop.permute.xlu0 %8145
  %8147 = vrot.lane.b32.xlu0 %v7888, 126
  %v8148 = vpop.permute.xlu0 %8147
  %8149 = vrot.lane.b32.xlu0 %v7889, 126
  %v8150 = vpop.permute.xlu0 %8149
  %8151 = vrot.lane.b32.xlu0 %v7890, 126
  %v8152 = vpop.permute.xlu0 %8151
  %8153 = vrot.lane.b32.xlu0 %v7891, 126
  %v8154 = vpop.permute.xlu0 %8153
  %8155 = vrot.lane.b32.xlu0 %v7892, 126
  %v8156 = vpop.permute.xlu0 %8155
  %8157 = vrot.lane.b32.xlu0 %v7893, 126
  %v8158 = vpop.permute.xlu0 %8157
  %8159 = vrot.lane.b32.xlu0 %v7894, 126
  %v8160 = vpop.permute.xlu0 %8159
  %8161 = vrot.lane.b32.xlu0 %v7895, 126
  %v8162 = vpop.permute.xlu0 %8161
  %8163 = vrot.lane.b32.xlu0 %v7896, 126
  %v8164 = vpop.permute.xlu0 %8163
  %8165 = vrot.lane.b32.xlu0 %v7897, 126
  %v8166 = vpop.permute.xlu0 %8165
  %8167 = vrot.lane.b32.xlu0 %v7898, 126
  %v8168 = vpop.permute.xlu0 %8167
  %8169 = vrot.lane.b32.xlu0 %v7899, 126
  %v8170 = vpop.permute.xlu0 %8169
  %8171 = vrot.lane.b32.xlu0 %v7900, 126
  %v8172 = vpop.permute.xlu0 %8171
  %8173 = vrot.lane.b32.xlu0 %v7901, 126
  %v8174 = vpop.permute.xlu0 %8173
  %8175 = vrot.lane.b32.xlu0 %v7902, 126
  %v8176 = vpop.permute.xlu0 %8175
  %8177 = vrot.lane.b32.xlu0 %v7903, 126
  %v8178 = vpop.permute.xlu0 %8177
  %8179 = vrot.lane.b32.xlu0 %v7904, 126
  %v8180 = vpop.permute.xlu0 %8179
  %8181 = vrot.lane.b32.xlu0 %v7905, 126
  %v8182 = vpop.permute.xlu0 %8181
  %8183 = vrot.lane.b32.xlu0 %v7906, 126
  %v8184 = vpop.permute.xlu0 %8183
  %8185 = vrot.lane.b32.xlu0 %v7907, 126
  %v8186 = vpop.permute.xlu0 %8185
  %8187 = vrot.lane.b32.xlu0 %v7908, 126
  %v8188 = vpop.permute.xlu0 %8187
  %8189 = vrot.lane.b32.xlu0 %v7909, 126
  %v8190 = vpop.permute.xlu0 %8189
  %8191 = vrot.lane.b32.xlu0 %v7910, 126
  %v8192 = vpop.permute.xlu0 %8191
  %8193 = vrot.lane.b32.xlu0 %v7911, 126
  %v8194 = vpop.permute.xlu0 %8193
  %8195 = vrot.lane.b32.xlu0 %v7912, 126
  %v8196 = vpop.permute.xlu0 %8195
  %8197 = vrot.lane.b32.xlu0 %v7913, 126
  %v8198 = vpop.permute.xlu0 %8197
  %8199 = vrot.lane.b32.xlu0 %v7914, 126
  %v8200 = vpop.permute.xlu0 %8199
  %8201 = vrot.lane.b32.xlu0 %v7915, 126
  %v8202 = vpop.permute.xlu0 %8201
  %8203 = vrot.lane.b32.xlu0 %v7916, 126
  %v8204 = vpop.permute.xlu0 %8203
  %8205 = vrot.lane.b32.xlu0 %v7917, 126
  %v8206 = vpop.permute.xlu0 %8205
  %8207 = vrot.lane.b32.xlu0 %v7918, 126
  %v8208 = vpop.permute.xlu0 %8207
  %8209 = vrot.lane.b32.xlu0 %v7919, 126
  %v8210 = vpop.permute.xlu0 %8209
  %8211 = vrot.lane.b32.xlu0 %v7920, 126
  %v8212 = vpop.permute.xlu0 %8211
  %8213 = vrot.lane.b32.xlu0 %v7921, 126
  %v8214 = vpop.permute.xlu0 %8213
  %8215 = vrot.lane.b32.xlu0 %v7922, 126
  %v8216 = vpop.permute.xlu0 %8215
  %8217 = vrot.lane.b32.xlu0 %v7923, 126
  %v8218 = vpop.permute.xlu0 %8217
  %8219 = vrot.lane.b32.xlu0 %v7924, 126
  %v8220 = vpop.permute.xlu0 %8219
  %8221 = vrot.lane.b32.xlu0 %v7925, 126
  %v8222 = vpop.permute.xlu0 %8221
  %8223 = vrot.lane.b32.xlu0 %v7926, 126
  %v8224 = vpop.permute.xlu0 %8223
  %8225 = vrot.lane.b32.xlu0 %v7927, 126
  %v8226 = vpop.permute.xlu0 %8225
  %8227 = vrot.lane.b32.xlu0 %v7928, 126
  %v8228 = vpop.permute.xlu0 %8227
  %8229 = vrot.lane.b32.xlu0 %v7929, 126
  %v8230 = vpop.permute.xlu0 %8229
  %8231 = vrot.lane.b32.xlu0 %v7930, 126
  %v8232 = vpop.permute.xlu0 %8231
  %8233 = vrot.lane.b32.xlu0 %v7931, 126
  %v8234 = vpop.permute.xlu0 %8233
  %8235 = vrot.lane.b32.xlu0 %v7932, 126
  %v8236 = vpop.permute.xlu0 %8235
  %8237 = vrot.lane.b32.xlu0 %v7933, 126
  %v8238 = vpop.permute.xlu0 %8237
  %8239 = vrot.lane.b32.xlu0 %v7934, 126
  %v8240 = vpop.permute.xlu0 %8239
  %8241 = vrot.lane.b32.xlu0 %v7935, 126
  %v8242 = vpop.permute.xlu0 %8241
  %8243 = vrot.lane.b32.xlu0 %v7936, 126
  %v8244 = vpop.permute.xlu0 %8243
  %8245 = vrot.lane.b32.xlu0 %v7937, 126
  %v8246 = vpop.permute.xlu0 %8245
  %8247 = vrot.lane.b32.xlu0 %v7938, 126
  %v8248 = vpop.permute.xlu0 %8247
  %8249 = vrot.lane.b32.xlu0 %v7939, 126
  %v8250 = vpop.permute.xlu0 %8249
  %8251 = vrot.lane.b32.xlu0 %v7940, 126
  %v8252 = vpop.permute.xlu0 %8251
  %8253 = vrot.lane.b32.xlu0 %v7941, 126
  %v8254 = vpop.permute.xlu0 %8253
  %8255 = vrot.lane.b32.xlu0 %v7942, 126
  %v8256 = vpop.permute.xlu0 %8255
  %8257 = vrot.lane.b32.xlu0 %v7943, 126
  %v8258 = vpop.permute.xlu0 %8257
  %8259 = vrot.lane.b32.xlu0 %v7944, 126
  %v8260 = vpop.permute.xlu0 %8259
  %8261 = vrot.lane.b32.xlu0 %v7945, 126
  %v8262 = vpop.permute.xlu0 %8261
  %8263 = vrot.lane.b32.xlu0 %v7946, 126
  %v8264 = vpop.permute.xlu0 %8263
  %8265 = vrot.lane.b32.xlu0 %v7947, 126
  %v8266 = vpop.permute.xlu0 %8265
  %8267 = vrot.lane.b32.xlu0 %v7948, 126
  %v8268 = vpop.permute.xlu0 %8267
  %8269 = vrot.lane.b32.xlu0 %v7949, 126
  %v8270 = vpop.permute.xlu0 %8269
  %8271 = vrot.lane.b32.xlu0 %v7950, 126
  %v8272 = vpop.permute.xlu0 %8271
  %8273 = vrot.lane.b32.xlu0 %v7951, 126
  %v8274 = vpop.permute.xlu0 %8273
  %8275 = vrot.lane.b32.xlu0 %v7952, 126
  %v8276 = vpop.permute.xlu0 %8275
  %8277 = vrot.lane.b32.xlu0 %v7953, 126
  %v8278 = vpop.permute.xlu0 %8277
  %8279 = vrot.lane.b32.xlu0 %v7954, 126
  %v8280 = vpop.permute.xlu0 %8279
  %8281 = vrot.lane.b32.xlu0 %v7955, 126
  %v8282 = vpop.permute.xlu0 %8281
  %8283 = vrot.lane.b32.xlu0 %v7956, 126
  %v8284 = vpop.permute.xlu0 %8283
  %8285 = vrot.lane.b32.xlu0 %v7957, 126
  %v8286 = vpop.permute.xlu0 %8285
  %8287 = vrot.lane.b32.xlu0 %v7958, 126
  %v8288 = vpop.permute.xlu0 %8287
  %8289 = vrot.lane.b32.xlu0 %v7959, 126
  %v8290 = vpop.permute.xlu0 %8289
  %8291 = vrot.lane.b32.xlu0 %v7960, 126
  %v8292 = vpop.permute.xlu0 %8291
  %8293 = vrot.lane.b32.xlu0 %v7961, 126
  %v8294 = vpop.permute.xlu0 %8293
  %8295 = vrot.lane.b32.xlu0 %v7962, 126
  %v8296 = vpop.permute.xlu0 %8295
  %8297 = vrot.lane.b32.xlu0 %v7963, 126
  %v8298 = vpop.permute.xlu0 %8297
  %8299 = vrot.lane.b32.xlu0 %v7964, 126
  %v8300 = vpop.permute.xlu0 %8299
  %v8301 = vsel %vm125, %v8078, %v8080
  %v8302 = vsel %vm125, %v8080, %v8082
  %v8303 = vsel %vm125, %v8082, %v8084
  %v8304 = vsel %vm125, %v8084, %v8086
  %v8305 = vsel %vm125, %v8086, %v8088
  %v8306 = vsel %vm125, %v8088, %v8090
  %v8307 = vsel %vm125, %v8092, %v8094
  %v8308 = vsel %vm125, %v8094, %v8096
  %v8309 = vsel %vm125, %v8096, %v8098
  %v8310 = vsel %vm125, %v8098, %v8100
  %v8311 = vsel %vm125, %v8100, %v8102
  %v8312 = vsel %vm125, %v8102, %v8104
  %v8313 = vsel %vm125, %v8106, %v8108
  %v8314 = vsel %vm125, %v8108, %v8110
  %v8315 = vsel %vm125, %v8110, %v8112
  %v8316 = vsel %vm125, %v8112, %v8114
  %v8317 = vsel %vm125, %v8114, %v8116
  %v8318 = vsel %vm125, %v8116, %v8118
  %v8319 = vsel %vm125, %v8120, %v8122
  %v8320 = vsel %vm125, %v8122, %v8124
  %v8321 = vsel %vm125, %v8124, %v8126
  %v8322 = vsel %vm125, %v8126, %v8128
  %v8323 = vsel %vm125, %v8128, %v8130
  %v8324 = vsel %vm125, %v8130, %v8132
  %v8325 = vsel %vm125, %v8134, %v8136
  %v8326 = vsel %vm125, %v8136, %v8138
  %v8327 = vsel %vm125, %v8138, %v8140
  %v8328 = vsel %vm125, %v8140, %v8142
  %v8329 = vsel %vm125, %v8142, %v8144
  %v8330 = vsel %vm125, %v8144, %v8146
  %v8331 = vsel %vm125, %v8148, %v8150
  %v8332 = vsel %vm125, %v8150, %v8152
  %v8333 = vsel %vm125, %v8152, %v8154
  %v8334 = vsel %vm125, %v8154, %v8156
  %v8335 = vsel %vm125, %v8156, %v8158
  %v8336 = vsel %vm125, %v8158, %v8160
  %v8337 = vsel %vm125, %v8162, %v8164
  %v8338 = vsel %vm125, %v8164, %v8166
  %v8339 = vsel %vm125, %v8166, %v8168
  %v8340 = vsel %vm125, %v8168, %v8170
  %v8341 = vsel %vm125, %v8170, %v8172
  %v8342 = vsel %vm125, %v8172, %v8174
  %v8343 = vsel %vm125, %v8176, %v8178
  %v8344 = vsel %vm125, %v8178, %v8180
  %v8345 = vsel %vm125, %v8180, %v8182
  %v8346 = vsel %vm125, %v8182, %v8184
  %v8347 = vsel %vm125, %v8184, %v8186
  %v8348 = vsel %vm125, %v8186, %v8188
  %v8349 = vsel %vm125, %v8190, %v8192
  %v8350 = vsel %vm125, %v8192, %v8194
  %v8351 = vsel %vm125, %v8194, %v8196
  %v8352 = vsel %vm125, %v8196, %v8198
  %v8353 = vsel %vm125, %v8198, %v8200
  %v8354 = vsel %vm125, %v8200, %v8202
  %v8355 = vsel %vm125, %v8204, %v8206
  %v8356 = vsel %vm125, %v8206, %v8208
  %v8357 = vsel %vm125, %v8208, %v8210
  %v8358 = vsel %vm125, %v8210, %v8212
  %v8359 = vsel %vm125, %v8212, %v8214
  %v8360 = vsel %vm125, %v8214, %v8216
  %v8361 = vsel %vm125, %v8218, %v8220
  %v8362 = vsel %vm125, %v8220, %v8222
  %v8363 = vsel %vm125, %v8222, %v8224
  %v8364 = vsel %vm125, %v8224, %v8226
  %v8365 = vsel %vm125, %v8226, %v8228
  %v8366 = vsel %vm125, %v8228, %v8230
  %v8367 = vsel %vm125, %v8232, %v8234
  %v8368 = vsel %vm125, %v8234, %v8236
  %v8369 = vsel %vm125, %v8236, %v8238
  %v8370 = vsel %vm125, %v8238, %v8240
  %v8371 = vsel %vm125, %v8240, %v8242
  %v8372 = vsel %vm125, %v8242, %v8244
  %v8373 = vsel %vm125, %v8246, %v8248
  %v8374 = vsel %vm125, %v8248, %v8250
  %v8375 = vsel %vm125, %v8250, %v8252
  %v8376 = vsel %vm125, %v8252, %v8254
  %v8377 = vsel %vm125, %v8254, %v8256
  %v8378 = vsel %vm125, %v8256, %v8258
  %v8379 = vsel %vm125, %v8260, %v8262
  %v8380 = vsel %vm125, %v8262, %v8264
  %v8381 = vsel %vm125, %v8264, %v8266
  %v8382 = vsel %vm125, %v8266, %v8268
  %v8383 = vsel %vm125, %v8268, %v8270
  %v8384 = vsel %vm125, %v8270, %v8272
  %v8385 = vsel %vm125, %v8274, %v8276
  %v8386 = vsel %vm125, %v8276, %v8278
  %v8387 = vsel %vm125, %v8278, %v8280
  %v8388 = vsel %vm125, %v8280, %v8282
  %v8389 = vsel %vm125, %v8282, %v8284
  %v8390 = vsel %vm125, %v8284, %v8286
  %v8391 = vsel %vm125, %v8288, %v8290
  %v8392 = vsel %vm125, %v8290, %v8292
  %v8393 = vsel %vm125, %v8292, %v8294
  %v8394 = vsel %vm125, %v8294, %v8296
  %v8395 = vsel %vm125, %v8296, %v8298
  %v8396 = vsel %vm125, %v8298, %v8300
  %v8509 = vsel %vm139, %v8090, 0.0
  %v8510 = vsel %vm139, %v8104, 0.0
  %v8511 = vsel %vm139, %v8118, 0.0
  %v8512 = vsel %vm139, %v8132, 0.0
  %v8513 = vsel %vm139, %v8146, 0.0
  %v8514 = vsel %vm139, %v8160, 0.0
  %v8515 = vsel %vm139, %v8174, 0.0
  %v8516 = vsel %vm139, %v8188, 0.0
  %v8517 = vsel %vm139, %v8202, 0.0
  %v8518 = vsel %vm139, %v8216, 0.0
  %v8519 = vsel %vm139, %v8230, 0.0
  %v8520 = vsel %vm139, %v8244, 0.0
  %v8521 = vsel %vm139, %v8258, 0.0
  %v8522 = vsel %vm139, %v8272, 0.0
  %v8523 = vsel %vm139, %v8286, 0.0
  %v8524 = vsel %vm139, %v8300, 0.0
  %v8525 = vmax.f32 %v7853, %v8301
  %v8526 = vmax.f32 %v7854, %v8302
  %v8527 = vmax.f32 %v7855, %v8303
  %v8528 = vmax.f32 %v7856, %v8304
  %v8529 = vmax.f32 %v7857, %v8305
  %v8530 = vmax.f32 %v7858, %v8306
  %v8531 = vmax.f32 %v7859, %v8509
  %v8532 = vmax.f32 %v7860, %v8307
  %v8533 = vmax.f32 %v7861, %v8308
  %v8534 = vmax.f32 %v7862, %v8309
  %v8535 = vmax.f32 %v7863, %v8310
  %v8536 = vmax.f32 %v7864, %v8311
  %v8537 = vmax.f32 %v7865, %v8312
  %v8538 = vmax.f32 %v7866, %v8510
  %v8539 = vmax.f32 %v7867, %v8313
  %v8540 = vmax.f32 %v7868, %v8314
  %v8541 = vmax.f32 %v7869, %v8315
  %v8542 = vmax.f32 %v7870, %v8316
  %v8543 = vmax.f32 %v7871, %v8317
  %v8544 = vmax.f32 %v7872, %v8318
  %v8545 = vmax.f32 %v7873, %v8511
  %v8546 = vmax.f32 %v7874, %v8319
  %v8547 = vmax.f32 %v7875, %v8320
  %v8548 = vmax.f32 %v7876, %v8321
  %v8549 = vmax.f32 %v7877, %v8322
  %v8550 = vmax.f32 %v7878, %v8323
  %v8551 = vmax.f32 %v7879, %v8324
  %v8552 = vmax.f32 %v7880, %v8512
  %v8553 = vmax.f32 %v7881, %v8325
  %v8554 = vmax.f32 %v7882, %v8326
  %v8555 = vmax.f32 %v7883, %v8327
  %v8556 = vmax.f32 %v7884, %v8328
  %v8557 = vmax.f32 %v7885, %v8329
  %v8558 = vmax.f32 %v7886, %v8330
  %v8559 = vmax.f32 %v7887, %v8513
  %v8560 = vmax.f32 %v7888, %v8331
  %v8561 = vmax.f32 %v7889, %v8332
  %v8562 = vmax.f32 %v7890, %v8333
  %v8563 = vmax.f32 %v7891, %v8334
  %v8564 = vmax.f32 %v7892, %v8335
  %v8565 = vmax.f32 %v7893, %v8336
  %v8566 = vmax.f32 %v7894, %v8514
  %v8567 = vmax.f32 %v7895, %v8337
  %v8568 = vmax.f32 %v7896, %v8338
  %v8569 = vmax.f32 %v7897, %v8339
  %v8570 = vmax.f32 %v7898, %v8340
  %v8571 = vmax.f32 %v7899, %v8341
  %v8572 = vmax.f32 %v7900, %v8342
  %v8573 = vmax.f32 %v7901, %v8515
  %v8574 = vmax.f32 %v7902, %v8343
  %v8575 = vmax.f32 %v7903, %v8344
  %v8576 = vmax.f32 %v7904, %v8345
  %v8577 = vmax.f32 %v7905, %v8346
  %v8578 = vmax.f32 %v7906, %v8347
  %v8579 = vmax.f32 %v7907, %v8348
  %v8580 = vmax.f32 %v7908, %v8516
  %v8581 = vmax.f32 %v7909, %v8349
  %v8582 = vmax.f32 %v7910, %v8350
  %v8583 = vmax.f32 %v7911, %v8351
  %v8584 = vmax.f32 %v7912, %v8352
  %v8585 = vmax.f32 %v7913, %v8353
  %v8586 = vmax.f32 %v7914, %v8354
  %v8587 = vmax.f32 %v7915, %v8517
  %v8588 = vmax.f32 %v7916, %v8355
  %v8589 = vmax.f32 %v7917, %v8356
  %v8590 = vmax.f32 %v7918, %v8357
  %v8591 = vmax.f32 %v7919, %v8358
  %v8592 = vmax.f32 %v7920, %v8359
  %v8593 = vmax.f32 %v7921, %v8360
  %v8594 = vmax.f32 %v7922, %v8518
  %v8595 = vmax.f32 %v7923, %v8361
  %v8596 = vmax.f32 %v7924, %v8362
  %v8597 = vmax.f32 %v7925, %v8363
  %v8598 = vmax.f32 %v7926, %v8364
  %v8599 = vmax.f32 %v7927, %v8365
  %v8600 = vmax.f32 %v7928, %v8366
  %v8601 = vmax.f32 %v7929, %v8519
  %v8602 = vmax.f32 %v7930, %v8367
  %v8603 = vmax.f32 %v7931, %v8368
  %v8604 = vmax.f32 %v7932, %v8369
  %v8605 = vmax.f32 %v7933, %v8370
  %v8606 = vmax.f32 %v7934, %v8371
  %v8607 = vmax.f32 %v7935, %v8372
  %v8608 = vmax.f32 %v7936, %v8520
  %v8609 = vmax.f32 %v7937, %v8373
  %v8610 = vmax.f32 %v7938, %v8374
  %v8611 = vmax.f32 %v7939, %v8375
  %v8612 = vmax.f32 %v7940, %v8376
  %v8613 = vmax.f32 %v7941, %v8377
  %v8614 = vmax.f32 %v7942, %v8378
  %v8615 = vmax.f32 %v7943, %v8521
  %v8616 = vmax.f32 %v7944, %v8379
  %v8617 = vmax.f32 %v7945, %v8380
  %v8618 = vmax.f32 %v7946, %v8381
  %v8619 = vmax.f32 %v7947, %v8382
  %v8620 = vmax.f32 %v7948, %v8383
  %v8621 = vmax.f32 %v7949, %v8384
  %v8622 = vmax.f32 %v7950, %v8522
  %v8623 = vmax.f32 %v7951, %v8385
  %v8624 = vmax.f32 %v7952, %v8386
  %v8625 = vmax.f32 %v7953, %v8387
  %v8626 = vmax.f32 %v7954, %v8388
  %v8627 = vmax.f32 %v7955, %v8389
  %v8628 = vmax.f32 %v7956, %v8390
  %v8629 = vmax.f32 %v7957, %v8523
  %v8630 = vmax.f32 %v7958, %v8391
  %v8631 = vmax.f32 %v7959, %v8392
  %v8632 = vmax.f32 %v7960, %v8393
  %v8633 = vmax.f32 %v7961, %v8394
  %v8634 = vmax.f32 %v7962, %v8395
  %v8635 = vmax.f32 %v7963, %v8396
  %v8636 = vmax.f32 %v7964, %v8524
  %8749 = vrot.lane.b32.xlu0 %v8525, 72
  %v8750 = vpop.permute.xlu0 %8749
  %8751 = vrot.lane.b32.xlu0 %v8526, 72
  %v8752 = vpop.permute.xlu0 %8751
  %8753 = vrot.lane.b32.xlu0 %v8527, 72
  %v8754 = vpop.permute.xlu0 %8753
  %8755 = vrot.lane.b32.xlu0 %v8528, 72
  %v8756 = vpop.permute.xlu0 %8755
  %8757 = vrot.lane.b32.xlu0 %v8529, 72
  %v8758 = vpop.permute.xlu0 %8757
  %8759 = vrot.lane.b32.xlu0 %v8530, 72
  %v8760 = vpop.permute.xlu0 %8759
  %8761 = vrot.lane.b32.xlu0 %v8531, 72
  %v8762 = vpop.permute.xlu0 %8761
  %8763 = vrot.lane.b32.xlu0 %v8532, 72
  %v8764 = vpop.permute.xlu0 %8763
  %8765 = vrot.lane.b32.xlu0 %v8533, 72
  %v8766 = vpop.permute.xlu0 %8765
  %8767 = vrot.lane.b32.xlu0 %v8534, 72
  %v8768 = vpop.permute.xlu0 %8767
  %8769 = vrot.lane.b32.xlu0 %v8535, 72
  %v8770 = vpop.permute.xlu0 %8769
  %8771 = vrot.lane.b32.xlu0 %v8536, 72
  %v8772 = vpop.permute.xlu0 %8771
  %8773 = vrot.lane.b32.xlu0 %v8537, 72
  %v8774 = vpop.permute.xlu0 %8773
  %8775 = vrot.lane.b32.xlu0 %v8538, 72
  %v8776 = vpop.permute.xlu0 %8775
  %8777 = vrot.lane.b32.xlu0 %v8539, 72
  %v8778 = vpop.permute.xlu0 %8777
  %8779 = vrot.lane.b32.xlu0 %v8540, 72
  %v8780 = vpop.permute.xlu0 %8779
  %8781 = vrot.lane.b32.xlu0 %v8541, 72
  %v8782 = vpop.permute.xlu0 %8781
  %8783 = vrot.lane.b32.xlu0 %v8542, 72
  %v8784 = vpop.permute.xlu0 %8783
  %8785 = vrot.lane.b32.xlu0 %v8543, 72
  %v8786 = vpop.permute.xlu0 %8785
  %8787 = vrot.lane.b32.xlu0 %v8544, 72
  %v8788 = vpop.permute.xlu0 %8787
  %8789 = vrot.lane.b32.xlu0 %v8545, 72
  %v8790 = vpop.permute.xlu0 %8789
  %8791 = vrot.lane.b32.xlu0 %v8546, 72
  %v8792 = vpop.permute.xlu0 %8791
  %8793 = vrot.lane.b32.xlu0 %v8547, 72
  %v8794 = vpop.permute.xlu0 %8793
  %8795 = vrot.lane.b32.xlu0 %v8548, 72
  %v8796 = vpop.permute.xlu0 %8795
  %8797 = vrot.lane.b32.xlu0 %v8549, 72
  %v8798 = vpop.permute.xlu0 %8797
  %8799 = vrot.lane.b32.xlu0 %v8550, 72
  %v8800 = vpop.permute.xlu0 %8799
  %8801 = vrot.lane.b32.xlu0 %v8551, 72
  %v8802 = vpop.permute.xlu0 %8801
  %8803 = vrot.lane.b32.xlu0 %v8552, 72
  %v8804 = vpop.permute.xlu0 %8803
  %8805 = vrot.lane.b32.xlu0 %v8553, 72
  %v8806 = vpop.permute.xlu0 %8805
  %8807 = vrot.lane.b32.xlu0 %v8554, 72
  %v8808 = vpop.permute.xlu0 %8807
  %8809 = vrot.lane.b32.xlu0 %v8555, 72
  %v8810 = vpop.permute.xlu0 %8809
  %8811 = vrot.lane.b32.xlu0 %v8556, 72
  %v8812 = vpop.permute.xlu0 %8811
  %8813 = vrot.lane.b32.xlu0 %v8557, 72
  %v8814 = vpop.permute.xlu0 %8813
  %8815 = vrot.lane.b32.xlu0 %v8558, 72
  %v8816 = vpop.permute.xlu0 %8815
  %8817 = vrot.lane.b32.xlu0 %v8559, 72
  %v8818 = vpop.permute.xlu0 %8817
  %8819 = vrot.lane.b32.xlu0 %v8560, 72
  %v8820 = vpop.permute.xlu0 %8819
  %8821 = vrot.lane.b32.xlu0 %v8561, 72
  %v8822 = vpop.permute.xlu0 %8821
  %8823 = vrot.lane.b32.xlu0 %v8562, 72
  %v8824 = vpop.permute.xlu0 %8823
  %8825 = vrot.lane.b32.xlu0 %v8563, 72
  %v8826 = vpop.permute.xlu0 %8825
  %8827 = vrot.lane.b32.xlu0 %v8564, 72
  %v8828 = vpop.permute.xlu0 %8827
  %8829 = vrot.lane.b32.xlu0 %v8565, 72
  %v8830 = vpop.permute.xlu0 %8829
  %8831 = vrot.lane.b32.xlu0 %v8566, 72
  %v8832 = vpop.permute.xlu0 %8831
  %8833 = vrot.lane.b32.xlu0 %v8567, 72
  %v8834 = vpop.permute.xlu0 %8833
  %8835 = vrot.lane.b32.xlu0 %v8568, 72
  %v8836 = vpop.permute.xlu0 %8835
  %8837 = vrot.lane.b32.xlu0 %v8569, 72
  %v8838 = vpop.permute.xlu0 %8837
  %8839 = vrot.lane.b32.xlu0 %v8570, 72
  %v8840 = vpop.permute.xlu0 %8839
  %8841 = vrot.lane.b32.xlu0 %v8571, 72
  %v8842 = vpop.permute.xlu0 %8841
  %8843 = vrot.lane.b32.xlu0 %v8572, 72
  %v8844 = vpop.permute.xlu0 %8843
  %8845 = vrot.lane.b32.xlu0 %v8573, 72
  %v8846 = vpop.permute.xlu0 %8845
  %8847 = vrot.lane.b32.xlu0 %v8574, 72
  %v8848 = vpop.permute.xlu0 %8847
  %8849 = vrot.lane.b32.xlu0 %v8575, 72
  %v8850 = vpop.permute.xlu0 %8849
  %8851 = vrot.lane.b32.xlu0 %v8576, 72
  %v8852 = vpop.permute.xlu0 %8851
  %8853 = vrot.lane.b32.xlu0 %v8577, 72
  %v8854 = vpop.permute.xlu0 %8853
  %8855 = vrot.lane.b32.xlu0 %v8578, 72
  %v8856 = vpop.permute.xlu0 %8855
  %8857 = vrot.lane.b32.xlu0 %v8579, 72
  %v8858 = vpop.permute.xlu0 %8857
  %8859 = vrot.lane.b32.xlu0 %v8580, 72
  %v8860 = vpop.permute.xlu0 %8859
  %8861 = vrot.lane.b32.xlu0 %v8581, 72
  %v8862 = vpop.permute.xlu0 %8861
  %8863 = vrot.lane.b32.xlu0 %v8582, 72
  %v8864 = vpop.permute.xlu0 %8863
  %8865 = vrot.lane.b32.xlu0 %v8583, 72
  %v8866 = vpop.permute.xlu0 %8865
  %8867 = vrot.lane.b32.xlu0 %v8584, 72
  %v8868 = vpop.permute.xlu0 %8867
  %8869 = vrot.lane.b32.xlu0 %v8585, 72
  %v8870 = vpop.permute.xlu0 %8869
  %8871 = vrot.lane.b32.xlu0 %v8586, 72
  %v8872 = vpop.permute.xlu0 %8871
  %8873 = vrot.lane.b32.xlu0 %v8587, 72
  %v8874 = vpop.permute.xlu0 %8873
  %8875 = vrot.lane.b32.xlu0 %v8588, 72
  %v8876 = vpop.permute.xlu0 %8875
  %8877 = vrot.lane.b32.xlu0 %v8589, 72
  %v8878 = vpop.permute.xlu0 %8877
  %8879 = vrot.lane.b32.xlu0 %v8590, 72
  %v8880 = vpop.permute.xlu0 %8879
  %8881 = vrot.lane.b32.xlu0 %v8591, 72
  %v8882 = vpop.permute.xlu0 %8881
  %8883 = vrot.lane.b32.xlu0 %v8592, 72
  %v8884 = vpop.permute.xlu0 %8883
  %8885 = vrot.lane.b32.xlu0 %v8593, 72
  %v8886 = vpop.permute.xlu0 %8885
  %8887 = vrot.lane.b32.xlu0 %v8594, 72
  %v8888 = vpop.permute.xlu0 %8887
  %8889 = vrot.lane.b32.xlu0 %v8595, 72
  %v8890 = vpop.permute.xlu0 %8889
  %8891 = vrot.lane.b32.xlu0 %v8596, 72
  %v8892 = vpop.permute.xlu0 %8891
  %8893 = vrot.lane.b32.xlu0 %v8597, 72
  %v8894 = vpop.permute.xlu0 %8893
  %8895 = vrot.lane.b32.xlu0 %v8598, 72
  %v8896 = vpop.permute.xlu0 %8895
  %8897 = vrot.lane.b32.xlu0 %v8599, 72
  %v8898 = vpop.permute.xlu0 %8897
  %8899 = vrot.lane.b32.xlu0 %v8600, 72
  %v8900 = vpop.permute.xlu0 %8899
  %8901 = vrot.lane.b32.xlu0 %v8601, 72
  %v8902 = vpop.permute.xlu0 %8901
  %8903 = vrot.lane.b32.xlu0 %v8602, 72
  %v8904 = vpop.permute.xlu0 %8903
  %8905 = vrot.lane.b32.xlu0 %v8603, 72
  %v8906 = vpop.permute.xlu0 %8905
  %8907 = vrot.lane.b32.xlu0 %v8604, 72
  %v8908 = vpop.permute.xlu0 %8907
  %8909 = vrot.lane.b32.xlu0 %v8605, 72
  %v8910 = vpop.permute.xlu0 %8909
  %8911 = vrot.lane.b32.xlu0 %v8606, 72
  %v8912 = vpop.permute.xlu0 %8911
  %8913 = vrot.lane.b32.xlu0 %v8607, 72
  %v8914 = vpop.permute.xlu0 %8913
  %8915 = vrot.lane.b32.xlu0 %v8608, 72
  %v8916 = vpop.permute.xlu0 %8915
  %8917 = vrot.lane.b32.xlu0 %v8609, 72
  %v8918 = vpop.permute.xlu0 %8917
  %8919 = vrot.lane.b32.xlu0 %v8610, 72
  %v8920 = vpop.permute.xlu0 %8919
  %8921 = vrot.lane.b32.xlu0 %v8611, 72
  %v8922 = vpop.permute.xlu0 %8921
  %8923 = vrot.lane.b32.xlu0 %v8612, 72
  %v8924 = vpop.permute.xlu0 %8923
  %8925 = vrot.lane.b32.xlu0 %v8613, 72
  %v8926 = vpop.permute.xlu0 %8925
  %8927 = vrot.lane.b32.xlu0 %v8614, 72
  %v8928 = vpop.permute.xlu0 %8927
  %8929 = vrot.lane.b32.xlu0 %v8615, 72
  %v8930 = vpop.permute.xlu0 %8929
  %8931 = vrot.lane.b32.xlu0 %v8616, 72
  %v8932 = vpop.permute.xlu0 %8931
  %8933 = vrot.lane.b32.xlu0 %v8617, 72
  %v8934 = vpop.permute.xlu0 %8933
  %8935 = vrot.lane.b32.xlu0 %v8618, 72
  %v8936 = vpop.permute.xlu0 %8935
  %8937 = vrot.lane.b32.xlu0 %v8619, 72
  %v8938 = vpop.permute.xlu0 %8937
  %8939 = vrot.lane.b32.xlu0 %v8620, 72
  %v8940 = vpop.permute.xlu0 %8939
  %8941 = vrot.lane.b32.xlu0 %v8621, 72
  %v8942 = vpop.permute.xlu0 %8941
  %8943 = vrot.lane.b32.xlu0 %v8622, 72
  %v8944 = vpop.permute.xlu0 %8943
  %8945 = vrot.lane.b32.xlu0 %v8623, 72
  %v8946 = vpop.permute.xlu0 %8945
  %8947 = vrot.lane.b32.xlu0 %v8624, 72
  %v8948 = vpop.permute.xlu0 %8947
  %8949 = vrot.lane.b32.xlu0 %v8625, 72
  %v8950 = vpop.permute.xlu0 %8949
  %8951 = vrot.lane.b32.xlu0 %v8626, 72
  %v8952 = vpop.permute.xlu0 %8951
  %8953 = vrot.lane.b32.xlu0 %v8627, 72
  %v8954 = vpop.permute.xlu0 %8953
  %8955 = vrot.lane.b32.xlu0 %v8628, 72
  %v8956 = vpop.permute.xlu0 %8955
  %8957 = vrot.lane.b32.xlu0 %v8629, 72
  %v8958 = vpop.permute.xlu0 %8957
  %8959 = vrot.lane.b32.xlu0 %v8630, 72
  %v8960 = vpop.permute.xlu0 %8959
  %8961 = vrot.lane.b32.xlu0 %v8631, 72
  %v8962 = vpop.permute.xlu0 %8961
  %8963 = vrot.lane.b32.xlu0 %v8632, 72
  %v8964 = vpop.permute.xlu0 %8963
  %8965 = vrot.lane.b32.xlu0 %v8633, 72
  %v8966 = vpop.permute.xlu0 %8965
  %8967 = vrot.lane.b32.xlu0 %v8634, 72
  %v8968 = vpop.permute.xlu0 %8967
  %8969 = vrot.lane.b32.xlu0 %v8635, 72
  %v8970 = vpop.permute.xlu0 %8969
  %8971 = vrot.lane.b32.xlu0 %v8636, 72
  %v8972 = vpop.permute.xlu0 %8971
  %v8973 = vsel %vm242, %v8750, %v8752
  %v8974 = vsel %vm242, %v8752, %v8754
  %v8975 = vsel %vm242, %v8754, %v8756
  %v8976 = vsel %vm242, %v8756, %v8758
  %v8977 = vsel %vm242, %v8758, %v8760
  %v8978 = vsel %vm242, %v8760, %v8762
  %v8979 = vsel %vm242, %v8764, %v8766
  %v8980 = vsel %vm242, %v8766, %v8768
  %v8981 = vsel %vm242, %v8768, %v8770
  %v8982 = vsel %vm242, %v8770, %v8772
  %v8983 = vsel %vm242, %v8772, %v8774
  %v8984 = vsel %vm242, %v8774, %v8776
  %v8985 = vsel %vm242, %v8778, %v8780
  %v8986 = vsel %vm242, %v8780, %v8782
  %v8987 = vsel %vm242, %v8782, %v8784
  %v8988 = vsel %vm242, %v8784, %v8786
  %v8989 = vsel %vm242, %v8786, %v8788
  %v8990 = vsel %vm242, %v8788, %v8790
  %v8991 = vsel %vm242, %v8792, %v8794
  %v8992 = vsel %vm242, %v8794, %v8796
  %v8993 = vsel %vm242, %v8796, %v8798
  %v8994 = vsel %vm242, %v8798, %v8800
  %v8995 = vsel %vm242, %v8800, %v8802
  %v8996 = vsel %vm242, %v8802, %v8804
  %v8997 = vsel %vm242, %v8806, %v8808
  %v8998 = vsel %vm242, %v8808, %v8810
  %v8999 = vsel %vm242, %v8810, %v8812
  %v9000 = vsel %vm242, %v8812, %v8814
  %v9001 = vsel %vm242, %v8814, %v8816
  %v9002 = vsel %vm242, %v8816, %v8818
  %v9003 = vsel %vm242, %v8820, %v8822
  %v9004 = vsel %vm242, %v8822, %v8824
  %v9005 = vsel %vm242, %v8824, %v8826
  %v9006 = vsel %vm242, %v8826, %v8828
  %v9007 = vsel %vm242, %v8828, %v8830
  %v9008 = vsel %vm242, %v8830, %v8832
  %v9009 = vsel %vm242, %v8834, %v8836
  %v9010 = vsel %vm242, %v8836, %v8838
  %v9011 = vsel %vm242, %v8838, %v8840
  %v9012 = vsel %vm242, %v8840, %v8842
  %v9013 = vsel %vm242, %v8842, %v8844
  %v9014 = vsel %vm242, %v8844, %v8846
  %v9015 = vsel %vm242, %v8848, %v8850
  %v9016 = vsel %vm242, %v8850, %v8852
  %v9017 = vsel %vm242, %v8852, %v8854
  %v9018 = vsel %vm242, %v8854, %v8856
  %v9019 = vsel %vm242, %v8856, %v8858
  %v9020 = vsel %vm242, %v8858, %v8860
  %v9021 = vsel %vm242, %v8862, %v8864
  %v9022 = vsel %vm242, %v8864, %v8866
  %v9023 = vsel %vm242, %v8866, %v8868
  %v9024 = vsel %vm242, %v8868, %v8870
  %v9025 = vsel %vm242, %v8870, %v8872
  %v9026 = vsel %vm242, %v8872, %v8874
  %v9027 = vsel %vm242, %v8876, %v8878
  %v9028 = vsel %vm242, %v8878, %v8880
  %v9029 = vsel %vm242, %v8880, %v8882
  %v9030 = vsel %vm242, %v8882, %v8884
  %v9031 = vsel %vm242, %v8884, %v8886
  %v9032 = vsel %vm242, %v8886, %v8888
  %v9033 = vsel %vm242, %v8890, %v8892
  %v9034 = vsel %vm242, %v8892, %v8894
  %v9035 = vsel %vm242, %v8894, %v8896
  %v9036 = vsel %vm242, %v8896, %v8898
  %v9037 = vsel %vm242, %v8898, %v8900
  %v9038 = vsel %vm242, %v8900, %v8902
  %v9039 = vsel %vm242, %v8904, %v8906
  %v9040 = vsel %vm242, %v8906, %v8908
  %v9041 = vsel %vm242, %v8908, %v8910
  %v9042 = vsel %vm242, %v8910, %v8912
  %v9043 = vsel %vm242, %v8912, %v8914
  %v9044 = vsel %vm242, %v8914, %v8916
  %v9045 = vsel %vm242, %v8918, %v8920
  %v9046 = vsel %vm242, %v8920, %v8922
  %v9047 = vsel %vm242, %v8922, %v8924
  %v9048 = vsel %vm242, %v8924, %v8926
  %v9049 = vsel %vm242, %v8926, %v8928
  %v9050 = vsel %vm242, %v8928, %v8930
  %v9051 = vsel %vm242, %v8932, %v8934
  %v9052 = vsel %vm242, %v8934, %v8936
  %v9053 = vsel %vm242, %v8936, %v8938
  %v9054 = vsel %vm242, %v8938, %v8940
  %v9055 = vsel %vm242, %v8940, %v8942
  %v9056 = vsel %vm242, %v8942, %v8944
  %v9057 = vsel %vm242, %v8946, %v8948
  %v9058 = vsel %vm242, %v8948, %v8950
  %v9059 = vsel %vm242, %v8950, %v8952
  %v9060 = vsel %vm242, %v8952, %v8954
  %v9061 = vsel %vm242, %v8954, %v8956
  %v9062 = vsel %vm242, %v8956, %v8958
  %v9063 = vsel %vm242, %v8960, %v8962
  %v9064 = vsel %vm242, %v8962, %v8964
  %v9065 = vsel %vm242, %v8964, %v8966
  %v9066 = vsel %vm242, %v8966, %v8968
  %v9067 = vsel %vm242, %v8968, %v8970
  %v9068 = vsel %vm242, %v8970, %v8972
  %v9165 = vsel %vm255, %v8978, 0.0
  %v9166 = vsel %vm255, %v8984, 0.0
  %v9167 = vsel %vm255, %v8990, 0.0
  %v9168 = vsel %vm255, %v8996, 0.0
  %v9169 = vsel %vm255, %v9002, 0.0
  %v9170 = vsel %vm255, %v9008, 0.0
  %v9171 = vsel %vm255, %v9014, 0.0
  %v9172 = vsel %vm255, %v9020, 0.0
  %v9173 = vsel %vm255, %v9026, 0.0
  %v9174 = vsel %vm255, %v9032, 0.0
  %v9175 = vsel %vm255, %v9038, 0.0
  %v9176 = vsel %vm255, %v9044, 0.0
  %v9177 = vsel %vm255, %v9050, 0.0
  %v9178 = vsel %vm255, %v9056, 0.0
  %v9179 = vsel %vm255, %v9062, 0.0
  %v9180 = vsel %vm255, %v9068, 0.0
  %v9181 = vmax.f32 %v8525, %v8973
  %v9182 = vmax.f32 %v8526, %v8974
  %v9183 = vmax.f32 %v8527, %v8975
  %v9184 = vmax.f32 %v8528, %v8976
  %v9185 = vmax.f32 %v8529, %v8977
  %v9186 = vmax.f32 %v8530, %v9165
  %v9187 = vmax.f32 %v8531, 0.0
  %v9188 = vmax.f32 %v8532, %v8979
  %v9189 = vmax.f32 %v8533, %v8980
  %v9190 = vmax.f32 %v8534, %v8981
  %v9191 = vmax.f32 %v8535, %v8982
  %v9192 = vmax.f32 %v8536, %v8983
  %v9193 = vmax.f32 %v8537, %v9166
  %v9194 = vmax.f32 %v8538, 0.0
  %v9195 = vmax.f32 %v8539, %v8985
  %v9196 = vmax.f32 %v8540, %v8986
  %v9197 = vmax.f32 %v8541, %v8987
  %v9198 = vmax.f32 %v8542, %v8988
  %v9199 = vmax.f32 %v8543, %v8989
  %v9200 = vmax.f32 %v8544, %v9167
  %v9201 = vmax.f32 %v8545, 0.0
  %v9202 = vmax.f32 %v8546, %v8991
  %v9203 = vmax.f32 %v8547, %v8992
  %v9204 = vmax.f32 %v8548, %v8993
  %v9205 = vmax.f32 %v8549, %v8994
  %v9206 = vmax.f32 %v8550, %v8995
  %v9207 = vmax.f32 %v8551, %v9168
  %v9208 = vmax.f32 %v8552, 0.0
  %v9209 = vmax.f32 %v8553, %v8997
  %v9210 = vmax.f32 %v8554, %v8998
  %v9211 = vmax.f32 %v8555, %v8999
  %v9212 = vmax.f32 %v8556, %v9000
  %v9213 = vmax.f32 %v8557, %v9001
  %v9214 = vmax.f32 %v8558, %v9169
  %v9215 = vmax.f32 %v8559, 0.0
  %v9216 = vmax.f32 %v8560, %v9003
  %v9217 = vmax.f32 %v8561, %v9004
  %v9218 = vmax.f32 %v8562, %v9005
  %v9219 = vmax.f32 %v8563, %v9006
  %v9220 = vmax.f32 %v8564, %v9007
  %v9221 = vmax.f32 %v8565, %v9170
  %v9222 = vmax.f32 %v8566, 0.0
  %v9223 = vmax.f32 %v8567, %v9009
  %v9224 = vmax.f32 %v8568, %v9010
  %v9225 = vmax.f32 %v8569, %v9011
  %v9226 = vmax.f32 %v8570, %v9012
  %v9227 = vmax.f32 %v8571, %v9013
  %v9228 = vmax.f32 %v8572, %v9171
  %v9229 = vmax.f32 %v8573, 0.0
  %v9230 = vmax.f32 %v8574, %v9015
  %v9231 = vmax.f32 %v8575, %v9016
  %v9232 = vmax.f32 %v8576, %v9017
  %v9233 = vmax.f32 %v8577, %v9018
  %v9234 = vmax.f32 %v8578, %v9019
  %v9235 = vmax.f32 %v8579, %v9172
  %v9236 = vmax.f32 %v8580, 0.0
  %v9237 = vmax.f32 %v8581, %v9021
  %v9238 = vmax.f32 %v8582, %v9022
  %v9239 = vmax.f32 %v8583, %v9023
  %v9240 = vmax.f32 %v8584, %v9024
  %v9241 = vmax.f32 %v8585, %v9025
  %v9242 = vmax.f32 %v8586, %v9173
  %v9243 = vmax.f32 %v8587, 0.0
  %v9244 = vmax.f32 %v8588, %v9027
  %v9245 = vmax.f32 %v8589, %v9028
  %v9246 = vmax.f32 %v8590, %v9029
  %v9247 = vmax.f32 %v8591, %v9030
  %v9248 = vmax.f32 %v8592, %v9031
  %v9249 = vmax.f32 %v8593, %v9174
  %v9250 = vmax.f32 %v8594, 0.0
  %v9251 = vmax.f32 %v8595, %v9033
  %v9252 = vmax.f32 %v8596, %v9034
  %v9253 = vmax.f32 %v8597, %v9035
  %v9254 = vmax.f32 %v8598, %v9036
  %v9255 = vmax.f32 %v8599, %v9037
  %v9256 = vmax.f32 %v8600, %v9175
  %v9257 = vmax.f32 %v8601, 0.0
  %v9258 = vmax.f32 %v8602, %v9039
  %v9259 = vmax.f32 %v8603, %v9040
  %v9260 = vmax.f32 %v8604, %v9041
  %v9261 = vmax.f32 %v8605, %v9042
  %v9262 = vmax.f32 %v8606, %v9043
  %v9263 = vmax.f32 %v8607, %v9176
  %v9264 = vmax.f32 %v8608, 0.0
  %v9265 = vmax.f32 %v8609, %v9045
  %v9266 = vmax.f32 %v8610, %v9046
  %v9267 = vmax.f32 %v8611, %v9047
  %v9268 = vmax.f32 %v8612, %v9048
  %v9269 = vmax.f32 %v8613, %v9049
  %v9270 = vmax.f32 %v8614, %v9177
  %v9271 = vmax.f32 %v8615, 0.0
  %v9272 = vmax.f32 %v8616, %v9051
  %v9273 = vmax.f32 %v8617, %v9052
  %v9274 = vmax.f32 %v8618, %v9053
  %v9275 = vmax.f32 %v8619, %v9054
  %v9276 = vmax.f32 %v8620, %v9055
  %v9277 = vmax.f32 %v8621, %v9178
  %v9278 = vmax.f32 %v8622, 0.0
  %v9279 = vmax.f32 %v8623, %v9057
  %v9280 = vmax.f32 %v8624, %v9058
  %v9281 = vmax.f32 %v8625, %v9059
  %v9282 = vmax.f32 %v8626, %v9060
  %v9283 = vmax.f32 %v8627, %v9061
  %v9284 = vmax.f32 %v8628, %v9179
  %v9285 = vmax.f32 %v8629, 0.0
  %v9286 = vmax.f32 %v8630, %v9063
  %v9287 = vmax.f32 %v8631, %v9064
  %v9288 = vmax.f32 %v8632, %v9065
  %v9289 = vmax.f32 %v8633, %v9066
  %v9290 = vmax.f32 %v8634, %v9067
  %v9291 = vmax.f32 %v8635, %v9180
  %v9292 = vmax.f32 %v8636, 0.0
  %v9293 = vld [vmem:[%s7] sm:$0xff]
  %v9294 = vld [vmem:[%s7 + $0x8] sm:$0xff]
  %v9295 = vld [vmem:[%s7 + $0x10] sm:$0xff]
  %v9296 = vld [vmem:[%s7 + $0x18] sm:$0xff]
  %v9297 = vld [vmem:[%s7 + $0x20] sm:$0xff]
  %v9298 = vld [vmem:[%s7 + $0x28] sm:$0xff]
  %v9299 = vld [vmem:[%s7 + $0x30] sm:$0xff]
  %v9300 = vld [vmem:[%s7 + $0x38] sm:$0xff]
  %v9301 = vld [vmem:[%s7 + $0x40] sm:$0xff]
  %v9302 = vld [vmem:[%s7 + $0x48] sm:$0xff]
  %v9303 = vld [vmem:[%s7 + $0x50] sm:$0xff]
  %v9304 = vld [vmem:[%s7 + $0x58] sm:$0xff]
  %v9305 = vld [vmem:[%s7 + $0x60] sm:$0xff]
  %v9306 = vld [vmem:[%s7 + $0x68] sm:$0xff]
  %v9307 = vld [vmem:[%s7 + $0x70] sm:$0xff]
  %v9308 = vld [vmem:[%s7 + $0x78] sm:$0xff]
  %v9309 = vld [vmem:[%s7 + $0x80] sm:$0xff]
  %v9310 = vld [vmem:[%s7 + $0x88] sm:$0xff]
  %v9311 = vld [vmem:[%s7 + $0x90] sm:$0xff]
  %v9312 = vld [vmem:[%s7 + $0x98] sm:$0xff]
  %v9313 = vld [vmem:[%s7 + $0xa0] sm:$0xff]
  %v9314 = vld [vmem:[%s7 + $0xa8] sm:$0xff]
  %v9315 = vld [vmem:[%s7 + $0xb0] sm:$0xff]
  %v9316 = vld [vmem:[%s7 + $0xb8] sm:$0xff]
  %v9317 = vld [vmem:[%s7 + $0xc0] sm:$0xff]
  %v9318 = vld [vmem:[%s7 + $0xc8] sm:$0xff]
  %v9319 = vld [vmem:[%s7 + $0xd0] sm:$0xff]
  %v9320 = vld [vmem:[%s7 + $0xd8] sm:$0xff]
  %v9321 = vld [vmem:[%s7 + $0xe0] sm:$0xff]
  %v9322 = vld [vmem:[%s7 + $0xe8] sm:$0xff]
  %v9323 = vld [vmem:[%s7 + $0xf0] sm:$0xff]
  %v9324 = vld [vmem:[%s7 + $0xf8] sm:$0xff]
  %v9325 = vld [vmem:[%s7 + $0x100] sm:$0xff]
  %v9326 = vld [vmem:[%s7 + $0x108] sm:$0xff]
  %v9327 = vld [vmem:[%s7 + $0x110] sm:$0xff]
  %v9328 = vld [vmem:[%s7 + $0x118] sm:$0xff]
  %v9329 = vld [vmem:[%s7 + $0x120] sm:$0xff]
  %v9330 = vld [vmem:[%s7 + $0x128] sm:$0xff]
  %v9331 = vld [vmem:[%s7 + $0x130] sm:$0xff]
  %v9332 = vld [vmem:[%s7 + $0x138] sm:$0xff]
  %v9333 = vld [vmem:[%s7 + $0x140] sm:$0xff]
  %v9334 = vld [vmem:[%s7 + $0x148] sm:$0xff]
  %v9335 = vld [vmem:[%s7 + $0x150] sm:$0xff]
  %v9336 = vld [vmem:[%s7 + $0x158] sm:$0xff]
  %v9337 = vld [vmem:[%s7 + $0x160] sm:$0xff]
  %v9338 = vld [vmem:[%s7 + $0x168] sm:$0xff]
  %v9339 = vld [vmem:[%s7 + $0x170] sm:$0xff]
  %v9340 = vld [vmem:[%s7 + $0x178] sm:$0xff]
  %v9341 = vld [vmem:[%s7 + $0x180] sm:$0xff]
  %v9342 = vld [vmem:[%s7 + $0x188] sm:$0xff]
  %v9343 = vld [vmem:[%s7 + $0x190] sm:$0xff]
  %v9344 = vld [vmem:[%s7 + $0x198] sm:$0xff]
  %v9345 = vld [vmem:[%s7 + $0x1a0] sm:$0xff]
  %v9346 = vld [vmem:[%s7 + $0x1a8] sm:$0xff]
  %v9347 = vld [vmem:[%s7 + $0x1b0] sm:$0xff]
  %v9348 = vld [vmem:[%s7 + $0x1b8] sm:$0xff]
  %v9349 = vld [vmem:[%s7 + $0x1c0] sm:$0xff]
  %v9350 = vld [vmem:[%s7 + $0x1c8] sm:$0xff]
  %v9351 = vld [vmem:[%s7 + $0x1d0] sm:$0xff]
  %v9352 = vld [vmem:[%s7 + $0x1d8] sm:$0xff]
  %v9353 = vld [vmem:[%s7 + $0x1e0] sm:$0xff]
  %v9354 = vld [vmem:[%s7 + $0x1e8] sm:$0xff]
  %v9355 = vld [vmem:[%s7 + $0x1f0] sm:$0xff]
  %v9356 = vld [vmem:[%s7 + $0x1f8] sm:$0xff]
  %v9357 = vld [vmem:[%s7 + $0x200] sm:$0xff]
  %v9358 = vld [vmem:[%s7 + $0x208] sm:$0xff]
  %v9359 = vld [vmem:[%s7 + $0x210] sm:$0xff]
  %v9360 = vld [vmem:[%s7 + $0x218] sm:$0xff]
  %v9361 = vld [vmem:[%s7 + $0x220] sm:$0xff]
  %v9362 = vld [vmem:[%s7 + $0x228] sm:$0xff]
  %v9363 = vld [vmem:[%s7 + $0x230] sm:$0xff]
  %v9364 = vld [vmem:[%s7 + $0x238] sm:$0xff]
  %v9365 = vld [vmem:[%s7 + $0x240] sm:$0xff]
  %v9366 = vld [vmem:[%s7 + $0x248] sm:$0xff]
  %v9367 = vld [vmem:[%s7 + $0x250] sm:$0xff]
  %v9368 = vld [vmem:[%s7 + $0x258] sm:$0xff]
  %v9369 = vld [vmem:[%s7 + $0x260] sm:$0xff]
  %v9370 = vld [vmem:[%s7 + $0x268] sm:$0xff]
  %v9371 = vld [vmem:[%s7 + $0x270] sm:$0xff]
  %v9372 = vld [vmem:[%s7 + $0x278] sm:$0xff]
  %v9373 = vld [vmem:[%s7 + $0x280] sm:$0xff]
  %v9374 = vld [vmem:[%s7 + $0x288] sm:$0xff]
  %v9375 = vld [vmem:[%s7 + $0x290] sm:$0xff]
  %v9376 = vld [vmem:[%s7 + $0x298] sm:$0xff]
  %v9377 = vld [vmem:[%s7 + $0x2a0] sm:$0xff]
  %v9378 = vld [vmem:[%s7 + $0x2a8] sm:$0xff]
  %v9379 = vld [vmem:[%s7 + $0x2b0] sm:$0xff]
  %v9380 = vld [vmem:[%s7 + $0x2b8] sm:$0xff]
  %v9381 = vld [vmem:[%s7 + $0x2c0] sm:$0xff]
  %v9382 = vld [vmem:[%s7 + $0x2c8] sm:$0xff]
  %v9383 = vld [vmem:[%s7 + $0x2d0] sm:$0xff]
  %v9384 = vld [vmem:[%s7 + $0x2d8] sm:$0xff]
  %v9385 = vld [vmem:[%s7 + $0x2e0] sm:$0xff]
  %v9386 = vld [vmem:[%s7 + $0x2e8] sm:$0xff]
  %v9387 = vld [vmem:[%s7 + $0x2f0] sm:$0xff]
  %v9388 = vld [vmem:[%s7 + $0x2f8] sm:$0xff]
  %v9389 = vld [vmem:[%s7 + $0x300] sm:$0xff]
  %v9390 = vld [vmem:[%s7 + $0x308] sm:$0xff]
  %v9392 = vsel %vm3404, %v9187, 0
  %v9395 = vsel %vm3404, %v9194, 0
  %v9398 = vsel %vm3404, %v9201, 0
  %v9401 = vsel %vm3404, %v9208, 0
  %v9404 = vsel %vm3404, %v9215, 0
  %v9407 = vsel %vm3404, %v9222, 0
  %v9410 = vsel %vm3404, %v9229, 0
  %v9413 = vsel %vm3404, %v9236, 0
  %v9416 = vsel %vm3404, %v9243, 0
  %v9419 = vsel %vm3404, %v9250, 0
  %v9422 = vsel %vm3404, %v9257, 0
  %v9425 = vsel %vm3404, %v9264, 0
  %v9428 = vsel %vm3404, %v9271, 0
  %v9431 = vsel %vm3404, %v9278, 0
  %v9434 = vsel %vm3404, %v9285, 0
  %v9437 = vsel %vm3404, %v9292, 0
  %9439 = vmatprep.subr.mxu0 0.0
  %9440 = vmatpush1.msra.mxu0 %v9293
  %9441 = vmatprep.subr.mxu0 0.0
  %9442 = vmatpush1.msra.mxu0 %v9294
  %9443 = vmatprep.subr.mxu0 0.0
  %9444 = vmatpush1.msra.mxu0 %v9295
  %9445 = vmatprep.subr.mxu0 0.0
  %9446 = vmatpush1.msra.mxu0 %v9296
  %9447 = vmatprep.subr.mxu0 0.0
  %9448 = vmatpush1.msra.mxu0 %v9297
  %9449 = vmatprep.subr.mxu0 0.0
  %9450 = vmatpush1.msra.mxu0 %v9298
  %9451 = vmatprep.subr.mxu0 0.0
  %9452 = vmatpush1.msra.mxu0 %v9299
  %9453 = vmatprep.subr.mxu0 0.0
  %9454 = vmatpush1.msra.mxu0 %v9300
  %9455 = vmatprep.subr.mxu0 0.0
  %9456 = vmatpush1.msra.mxu0 %v9301
  %9457 = vmatprep.subr.mxu0 0.0
  %9458 = vmatpush1.msra.mxu0 %v9302
  %9459 = vmatprep.subr.mxu0 0.0
  %9460 = vmatpush1.msra.mxu0 %v9303
  %9461 = vmatprep.subr.mxu0 0.0
  %9462 = vmatpush1.msra.mxu0 %v9304
  %9463 = vmatprep.subr.mxu0 0.0
  %9464 = vmatpush1.msra.mxu0 %v9305
  %9465 = vmatprep.subr.mxu0 0.0
  %9466 = vmatpush1.msra.mxu0 %v9306
  %9467 = vmatprep.subr.mxu0 0.0
  %9468 = vmatpush1.msra.mxu0 %v9307
  %9469 = vmatprep.subr.mxu0 0.0
  %9470 = vmatpush1.msra.mxu0 %v9308
  %9471 = vmatprep.subr.mxu0 0.0
  %9472 = vmatpush1.msra.mxu0 %v9309
  %9473 = vmatprep.subr.mxu0 0.0
  %9474 = vmatpush1.msra.mxu0 %v9310
  %9475 = vmatprep.subr.mxu0 0.0
  %9476 = vmatpush1.msra.mxu0 %v9311
  %9477 = vmatprep.subr.mxu0 0.0
  %9478 = vmatpush1.msra.mxu0 %v9312
  %9479 = vmatprep.subr.mxu0 0.0
  %9480 = vmatpush1.msra.mxu0 %v9313
  %9481 = vmatprep.subr.mxu0 0.0
  %9482 = vmatpush1.msra.mxu0 %v9314
  %9483 = vmatprep.subr.mxu0 0.0
  %9484 = vmatpush1.msra.mxu0 %v9315
  %9485 = vmatprep.subr.mxu0 0.0
  %9486 = vmatpush1.msra.mxu0 %v9316
  %9487 = vmatprep.subr.mxu0 0.0
  %9488 = vmatpush1.msra.mxu0 %v9317
  %9489 = vmatprep.subr.mxu0 0.0
  %9490 = vmatpush1.msra.mxu0 %v9318
  %9491 = vmatprep.subr.mxu0 0.0
  %9492 = vmatpush1.msra.mxu0 %v9319
  %9493 = vmatprep.subr.mxu0 0.0
  %9494 = vmatpush1.msra.mxu0 %v9320
  %9495 = vmatprep.subr.mxu0 0.0
  %9496 = vmatpush1.msra.mxu0 %v9321
  %9497 = vmatprep.subr.mxu0 0.0
  %9498 = vmatpush1.msra.mxu0 %v9322
  %9499 = vmatprep.subr.mxu0 0.0
  %9500 = vmatpush1.msra.mxu0 %v9323
  %9501 = vmatprep.subr.mxu0 0.0
  %9502 = vmatpush1.msra.mxu0 %v9324
  %9503 = vmatprep.mubr.f32.mxu0 %v9182
  %9504 = vmatmul.mubr.f32.gmra.mrb[0].mxu0 %v9181
  %v9505 = vpop.f32.mrb[0].mxu0
  %v9506 = vadd.f32 0.0, %v9505
  %v9507 = vpop.f32.mrb[0].mxu0
  %9508 = vmatprep.mubr.f32.mxu0 %v9189
  %9509 = vmatmul.mubr.f32.gmra.mrb[0].mxu0 %v9188
  %v9510 = vpop.f32.mrb[0].mxu0
  %v9511 = vadd.f32 0.0, %v9510
  %v9512 = vpop.f32.mrb[0].mxu0
  %9513 = vmatprep.mubr.f32.mxu0 %v9196
  %9514 = vmatmul.mubr.f32.gmra.mrb[0].mxu0 %v9195
  %v9515 = vpop.f32.mrb[0].mxu0
  %v9516 = vadd.f32 0.0, %v9515
  %v9517 = vpop.f32.mrb[0].mxu0
  %9518 = vmatprep.mubr.f32.mxu0 %v9203
  %9519 = vmatmul.mubr.f32.gmra.mrb[0].mxu0 %v9202
  %v9520 = vpop.f32.mrb[0].mxu0
  %v9521 = vadd.f32 0.0, %v9520
  %v9522 = vpop.f32.mrb[0].mxu0
  %9523 = vmatprep.mubr.f32.mxu0 %v9210
  %9524 = vmatmul.mubr.f32.gmra.mrb[0].mxu0 %v9209
  %v9525 = vpop.f32.mrb[0].mxu0
  %v9526 = vadd.f32 0.0, %v9525
  %v9527 = vpop.f32.mrb[0].mxu0
  %9528 = vmatprep.mubr.f32.mxu0 %v9217
  %9529 = vmatmul.mubr.f32.gmra.mrb[0].mxu0 %v9216
  %v9530 = vpop.f32.mrb[0].mxu0
  %v9531 = vadd.f32 0.0, %v9530
  %v9532 = vpop.f32.mrb[0].mxu0
  %9533 = vmatprep.mubr.f32.mxu0 %v9224
  %9534 = vmatmul.mubr.f32.gmra.mrb[0].mxu0 %v9223
  %v9535 = vpop.f32.mrb[0].mxu0
  %v9536 = vadd.f32 0.0, %v9535
  %v9537 = vpop.f32.mrb[0].mxu0
  %9538 = vmatprep.mubr.f32.mxu0 %v9231
  %9539 = vmatmul.mubr.f32.gmra.mrb[0].mxu0 %v9230
  %v9540 = vpop.f32.mrb[0].mxu0
  %v9541 = vadd.f32 0.0, %v9540
  %v9542 = vpop.f32.mrb[0].mxu0
  %9543 = vmatprep.mubr.f32.mxu0 %v9238
  %9544 = vmatmul.mubr.f32.gmra.mrb[0].mxu0 %v9237
  %v9545 = vpop.f32.mrb[0].mxu0
  %v9546 = vadd.f32 0.0, %v9545
  %v9547 = vpop.f32.mrb[0].mxu0
  %9548 = vmatprep.mubr.f32.mxu0 %v9245
  %9549 = vmatmul.mubr.f32.gmra.mrb[0].mxu0 %v9244
  %v9550 = vpop.f32.mrb[0].mxu0
  %v9551 = vadd.f32 0.0, %v9550
  %v9552 = vpop.f32.mrb[0].mxu0
  %9553 = vmatprep.mubr.f32.mxu0 %v9252
  %9554 = vmatmul.mubr.f32.gmra.mrb[0].mxu0 %v9251
  %v9555 = vpop.f32.mrb[0].mxu0
  %v9556 = vadd.f32 0.0, %v9555
  %v9557 = vpop.f32.mrb[0].mxu0
  %9558 = vmatprep.mubr.f32.mxu0 %v9259
  %9559 = vmatmul.mubr.f32.gmra.mrb[0].mxu0 %v9258
  %v9560 = vpop.f32.mrb[0].mxu0
  %v9561 = vadd.f32 0.0, %v9560
  %v9562 = vpop.f32.mrb[0].mxu0
  %9563 = vmatprep.mubr.f32.mxu0 %v9266
  %9564 = vmatmul.mubr.f32.gmra.mrb[0].mxu0 %v9265
  %v9565 = vpop.f32.mrb[0].mxu0
  %v9566 = vadd.f32 0.0, %v9565
  %v9567 = vpop.f32.mrb[0].mxu0
  %9568 = vmatprep.mubr.f32.mxu0 %v9273
  %9569 = vmatmul.mubr.f32.gmra.mrb[0].mxu0 %v9272
  %v9570 = vpop.f32.mrb[0].mxu0
  %v9571 = vadd.f32 0.0, %v9570
  %v9572 = vpop.f32.mrb[0].mxu0
  %9573 = vmatprep.mubr.f32.mxu0 %v9280
  %9574 = vmatmul.mubr.f32.gmra.mrb[0].mxu0 %v9279
  %v9575 = vpop.f32.mrb[0].mxu0
  %v9576 = vadd.f32 0.0, %v9575
  %v9577 = vpop.f32.mrb[0].mxu0
  %9578 = vmatprep.mubr.f32.mxu0 %v9287
  %9579 = vmatmul.mubr.f32.gmra.mrb[0].mxu0 %v9286
  %v9580 = vpop.f32.mrb[0].mxu0
  %v9581 = vadd.f32 0.0, %v9580
  %v9582 = vpop.f32.mrb[0].mxu0
  %9583 = vdwg.mxu0
  %9584 = vmatprep.subr.mxu0 0.0
  %9585 = vmatpush1.msra.mxu0 %v9325
  %9586 = vmatprep.subr.mxu0 0.0
  %9587 = vmatpush1.msra.mxu0 %v9326
  %9588 = vmatprep.subr.mxu0 0.0
  %9589 = vmatpush1.msra.mxu0 %v9327
  %9590 = vmatprep.subr.mxu0 0.0
  %9591 = vmatpush1.msra.mxu0 %v9328
  %9592 = vmatprep.subr.mxu0 0.0
  %9593 = vmatpush1.msra.mxu0 %v9329
  %9594 = vmatprep.subr.mxu0 0.0
  %9595 = vmatpush1.msra.mxu0 %v9330
  %9596 = vmatprep.subr.mxu0 0.0
  %9597 = vmatpush1.msra.mxu0 %v9331
  %9598 = vmatprep.subr.mxu0 0.0
  %9599 = vmatpush1.msra.mxu0 %v9332
  %9600 = vmatprep.subr.mxu0 0.0
  %9601 = vmatpush1.msra.mxu0 %v9333
  %9602 = vmatprep.subr.mxu0 0.0
  %9603 = vmatpush1.msra.mxu0 %v9334
  %9604 = vmatprep.subr.mxu0 0.0
  %9605 = vmatpush1.msra.mxu0 %v9335
  %9606 = vmatprep.subr.mxu0 0.0
  %9607 = vmatpush1.msra.mxu0 %v9336
  %9608 = vmatprep.subr.mxu0 0.0
  %9609 = vmatpush1.msra.mxu0 %v9337
  %9610 = vmatprep.subr.mxu0 0.0
  %9611 = vmatpush1.msra.mxu0 %v9338
  %9612 = vmatprep.subr.mxu0 0.0
  %9613 = vmatpush1.msra.mxu0 %v9339
  %9614 = vmatprep.subr.mxu0 0.0
  %9615 = vmatpush1.msra.mxu0 %v9340
  %9616 = vmatprep.subr.mxu0 0.0
  %9617 = vmatpush1.msra.mxu0 %v9341
  %9618 = vmatprep.subr.mxu0 0.0
  %9619 = vmatpush1.msra.mxu0 %v9342
  %9620 = vmatprep.subr.mxu0 0.0
  %9621 = vmatpush1.msra.mxu0 %v9343
  %9622 = vmatprep.subr.mxu0 0.0
  %9623 = vmatpush1.msra.mxu0 %v9344
  %9624 = vmatprep.subr.mxu0 0.0
  %9625 = vmatpush1.msra.mxu0 %v9345
  %9626 = vmatprep.subr.mxu0 0.0
  %9627 = vmatpush1.msra.mxu0 %v9346
  %9628 = vmatprep.subr.mxu0 0.0
  %9629 = vmatpush1.msra.mxu0 %v9347
  %9630 = vmatprep.subr.mxu0 0.0
  %9631 = vmatpush1.msra.mxu0 %v9348
  %9632 = vmatprep.subr.mxu0 0.0
  %9633 = vmatpush1.msra.mxu0 %v9349
  %9634 = vmatprep.subr.mxu0 0.0
  %9635 = vmatpush1.msra.mxu0 %v9350
  %9636 = vmatprep.subr.mxu0 0.0
  %9637 = vmatpush1.msra.mxu0 %v9351
  %9638 = vmatprep.subr.mxu0 0.0
  %9639 = vmatpush1.msra.mxu0 %v9352
  %9640 = vmatprep.subr.mxu0 0.0
  %9641 = vmatpush1.msra.mxu0 %v9353
  %9642 = vmatprep.subr.mxu0 0.0
  %9643 = vmatpush1.msra.mxu0 %v9354
  %9644 = vmatprep.subr.mxu0 0.0
  %9645 = vmatpush1.msra.mxu0 %v9355
  %9646 = vmatprep.subr.mxu0 0.0
  %9647 = vmatpush1.msra.mxu0 %v9356
  %9648 = vmatprep.mubr.f32.mxu0 %v9184
  %9649 = vmatmul.mubr.f32.gmra.mrb[0].mxu0 %v9183
  %v9650 = vpop.f32.mrb[0].mxu0
  %v9651 = vadd.f32 %v9506, %v9650
  %v9652 = vpop.f32.mrb[0].mxu0
  %9653 = vmatprep.mubr.f32.mxu0 %v9191
  %9654 = vmatmul.mubr.f32.gmra.mrb[0].mxu0 %v9190
  %v9655 = vpop.f32.mrb[0].mxu0
  %v9656 = vadd.f32 %v9511, %v9655
  %v9657 = vpop.f32.mrb[0].mxu0
  %9658 = vmatprep.mubr.f32.mxu0 %v9198
  %9659 = vmatmul.mubr.f32.gmra.mrb[0].mxu0 %v9197
  %v9660 = vpop.f32.mrb[0].mxu0
  %v9661 = vadd.f32 %v9516, %v9660
  %v9662 = vpop.f32.mrb[0].mxu0
  %9663 = vmatprep.mubr.f32.mxu0 %v9205
  %9664 = vmatmul.mubr.f32.gmra.mrb[0].mxu0 %v9204
  %v9665 = vpop.f32.mrb[0].mxu0
  %v9666 = vadd.f32 %v9521, %v9665
  %v9667 = vpop.f32.mrb[0].mxu0
  %9668 = vmatprep.mubr.f32.mxu0 %v9212
  %9669 = vmatmul.mubr.f32.gmra.mrb[0].mxu0 %v9211
  %v9670 = vpop.f32.mrb[0].mxu0
  %v9671 = vadd.f32 %v9526, %v9670
  %v9672 = vpop.f32.mrb[0].mxu0
  %9673 = vmatprep.mubr.f32.mxu0 %v9219
  %9674 = vmatmul.mubr.f32.gmra.mrb[0].mxu0 %v9218
  %v9675 = vpop.f32.mrb[0].mxu0
  %v9676 = vadd.f32 %v9531, %v9675
  %v9677 = vpop.f32.mrb[0].mxu0
  %9678 = vmatprep.mubr.f32.mxu0 %v9226
  %9679 = vmatmul.mubr.f32.gmra.mrb[0].mxu0 %v9225
  %v9680 = vpop.f32.mrb[0].mxu0
  %v9681 = vadd.f32 %v9536, %v9680
  %v9682 = vpop.f32.mrb[0].mxu0
  %9683 = vmatprep.mubr.f32.mxu0 %v9233
  %9684 = vmatmul.mubr.f32.gmra.mrb[0].mxu0 %v9232
  %v9685 = vpop.f32.mrb[0].mxu0
  %v9686 = vadd.f32 %v9541, %v9685
  %v9687 = vpop.f32.mrb[0].mxu0
  %9688 = vmatprep.mubr.f32.mxu0 %v9240
  %9689 = vmatmul.mubr.f32.gmra.mrb[0].mxu0 %v9239
  %v9690 = vpop.f32.mrb[0].mxu0
  %v9691 = vadd.f32 %v9546, %v9690
  %v9692 = vpop.f32.mrb[0].mxu0
  %9693 = vmatprep.mubr.f32.mxu0 %v9247
  %9694 = vmatmul.mubr.f32.gmra.mrb[0].mxu0 %v9246
  %v9695 = vpop.f32.mrb[0].mxu0
  %v9696 = vadd.f32 %v9551, %v9695
  %v9697 = vpop.f32.mrb[0].mxu0
  %9698 = vmatprep.mubr.f32.mxu0 %v9254
  %9699 = vmatmul.mubr.f32.gmra.mrb[0].mxu0 %v9253
  %v9700 = vpop.f32.mrb[0].mxu0
  %v9701 = vadd.f32 %v9556, %v9700
  %v9702 = vpop.f32.mrb[0].mxu0
  %9703 = vmatprep.mubr.f32.mxu0 %v9261
  %9704 = vmatmul.mubr.f32.gmra.mrb[0].mxu0 %v9260
  %v9705 = vpop.f32.mrb[0].mxu0
  %v9706 = vadd.f32 %v9561, %v9705
  %v9707 = vpop.f32.mrb[0].mxu0
  %9708 = vmatprep.mubr.f32.mxu0 %v9268
  %9709 = vmatmul.mubr.f32.gmra.mrb[0].mxu0 %v9267
  %v9710 = vpop.f32.mrb[0].mxu0
  %v9711 = vadd.f32 %v9566, %v9710
  %v9712 = vpop.f32.mrb[0].mxu0
  %9713 = vmatprep.mubr.f32.mxu0 %v9275
  %9714 = vmatmul.mubr.f32.gmra.mrb[0].mxu0 %v9274
  %v9715 = vpop.f32.mrb[0].mxu0
  %v9716 = vadd.f32 %v9571, %v9715
  %v9717 = vpop.f32.mrb[0].mxu0
  %9718 = vmatprep.mubr.f32.mxu0 %v9282
  %9719 = vmatmul.mubr.f32.gmra.mrb[0].mxu0 %v9281
  %v9720 = vpop.f32.mrb[0].mxu0
  %v9721 = vadd.f32 %v9576, %v9720
  %v9722 = vpop.f32.mrb[0].mxu0
  %9723 = vmatprep.mubr.f32.mxu0 %v9289
  %9724 = vmatmul.mubr.f32.gmra.mrb[0].mxu0 %v9288
  %v9725 = vpop.f32.mrb[0].mxu0
  %v9726 = vadd.f32 %v9581, %v9725
  %v9727 = vpop.f32.mrb[0].mxu0
  %9728 = vdwg.mxu0
  %9729 = vmatprep.subr.mxu0 0.0
  %9730 = vmatpush1.msra.mxu0 %v9357
  %9731 = vmatprep.subr.mxu0 0.0
  %9732 = vmatpush1.msra.mxu0 %v9358
  %9733 = vmatprep.subr.mxu0 0.0
  %9734 = vmatpush1.msra.mxu0 %v9359
  %9735 = vmatprep.subr.mxu0 0.0
  %9736 = vmatpush1.msra.mxu0 %v9360
  %9737 = vmatprep.subr.mxu0 0.0
  %9738 = vmatpush1.msra.mxu0 %v9361
  %9739 = vmatprep.subr.mxu0 0.0
  %9740 = vmatpush1.msra.mxu0 %v9362
  %9741 = vmatprep.subr.mxu0 0.0
  %9742 = vmatpush1.msra.mxu0 %v9363
  %9743 = vmatprep.subr.mxu0 0.0
  %9744 = vmatpush1.msra.mxu0 %v9364
  %9745 = vmatprep.subr.mxu0 0.0
  %9746 = vmatpush1.msra.mxu0 %v9365
  %9747 = vmatprep.subr.mxu0 0.0
  %9748 = vmatpush1.msra.mxu0 %v9366
  %9749 = vmatprep.subr.mxu0 0.0
  %9750 = vmatpush1.msra.mxu0 %v9367
  %9751 = vmatprep.subr.mxu0 0.0
  %9752 = vmatpush1.msra.mxu0 %v9368
  %9753 = vmatprep.subr.mxu0 0.0
  %9754 = vmatpush1.msra.mxu0 %v9369
  %9755 = vmatprep.subr.mxu0 0.0
  %9756 = vmatpush1.msra.mxu0 %v9370
  %9757 = vmatprep.subr.mxu0 0.0
  %9758 = vmatpush1.msra.mxu0 %v9371
  %9759 = vmatprep.subr.mxu0 0.0
  %9760 = vmatpush1.msra.mxu0 %v9372
  %9761 = vmatprep.subr.mxu0 0.0
  %9762 = vmatpush1.msra.mxu0 %v9373
  %9763 = vmatprep.subr.mxu0 0.0
  %9764 = vmatpush1.msra.mxu0 %v9374
  %9765 = vmatprep.subr.mxu0 0.0
  %9766 = vmatpush1.msra.mxu0 %v9375
  %9767 = vmatprep.subr.mxu0 0.0
  %9768 = vmatpush1.msra.mxu0 %v9376
  %9769 = vmatprep.subr.mxu0 0.0
  %9770 = vmatpush1.msra.mxu0 %v9377
  %9771 = vmatprep.subr.mxu0 0.0
  %9772 = vmatpush1.msra.mxu0 %v9378
  %9773 = vmatprep.subr.mxu0 0.0
  %9774 = vmatpush1.msra.mxu0 %v9379
  %9775 = vmatprep.subr.mxu0 0.0
  %9776 = vmatpush1.msra.mxu0 %v9380
  %9777 = vmatprep.subr.mxu0 0.0
  %9778 = vmatpush1.msra.mxu0 %v9381
  %9779 = vmatprep.subr.mxu0 0.0
  %9780 = vmatpush1.msra.mxu0 %v9382
  %9781 = vmatprep.subr.mxu0 0.0
  %9782 = vmatpush1.msra.mxu0 %v9383
  %9783 = vmatprep.subr.mxu0 0.0
  %9784 = vmatpush1.msra.mxu0 %v9384
  %9785 = vmatprep.subr.mxu0 0.0
  %9786 = vmatpush1.msra.mxu0 %v9385
  %9787 = vmatprep.subr.mxu0 0.0
  %9788 = vmatpush1.msra.mxu0 %v9386
  %9789 = vmatprep.subr.mxu0 0.0
  %9790 = vmatpush1.msra.mxu0 %v9387
  %9791 = vmatprep.subr.mxu0 0.0
  %9792 = vmatpush1.msra.mxu0 %v9388
  %9793 = vmatprep.mubr.f32.mxu0 %v9186
  %9794 = vmatmul.mubr.f32.gmra.mrb[0].mxu0 %v9185
  %v9795 = vpop.f32.mrb[0].mxu0
  %v9796 = vadd.f32 %v9651, %v9795
  %v9797 = vpop.f32.mrb[0].mxu0
  %9798 = vmatprep.mubr.f32.mxu0 %v9193
  %9799 = vmatmul.mubr.f32.gmra.mrb[0].mxu0 %v9192
  %v9800 = vpop.f32.mrb[0].mxu0
  %v9801 = vadd.f32 %v9656, %v9800
  %v9802 = vpop.f32.mrb[0].mxu0
  %9803 = vmatprep.mubr.f32.mxu0 %v9200
  %9804 = vmatmul.mubr.f32.gmra.mrb[0].mxu0 %v9199
  %v9805 = vpop.f32.mrb[0].mxu0
  %v9806 = vadd.f32 %v9661, %v9805
  %v9807 = vpop.f32.mrb[0].mxu0
  %9808 = vmatprep.mubr.f32.mxu0 %v9207
  %9809 = vmatmul.mubr.f32.gmra.mrb[0].mxu0 %v9206
  %v9810 = vpop.f32.mrb[0].mxu0
  %v9811 = vadd.f32 %v9666, %v9810
  %v9812 = vpop.f32.mrb[0].mxu0
  %9813 = vmatprep.mubr.f32.mxu0 %v9214
  %9814 = vmatmul.mubr.f32.gmra.mrb[0].mxu0 %v9213
  %v9815 = vpop.f32.mrb[0].mxu0
  %v9816 = vadd.f32 %v9671, %v9815
  %v9817 = vpop.f32.mrb[0].mxu0
  %9818 = vmatprep.mubr.f32.mxu0 %v9221
  %9819 = vmatmul.mubr.f32.gmra.mrb[0].mxu0 %v9220
  %v9820 = vpop.f32.mrb[0].mxu0
  %v9821 = vadd.f32 %v9676, %v9820
  %v9822 = vpop.f32.mrb[0].mxu0
  %9823 = vmatprep.mubr.f32.mxu0 %v9228
  %9824 = vmatmul.mubr.f32.gmra.mrb[0].mxu0 %v9227
  %v9825 = vpop.f32.mrb[0].mxu0
  %v9826 = vadd.f32 %v9681, %v9825
  %v9827 = vpop.f32.mrb[0].mxu0
  %9828 = vmatprep.mubr.f32.mxu0 %v9235
  %9829 = vmatmul.mubr.f32.gmra.mrb[0].mxu0 %v9234
  %v9830 = vpop.f32.mrb[0].mxu0
  %v9831 = vadd.f32 %v9686, %v9830
  %v9832 = vpop.f32.mrb[0].mxu0
  %9833 = vmatprep.mubr.f32.mxu0 %v9242
  %9834 = vmatmul.mubr.f32.gmra.mrb[0].mxu0 %v9241
  %v9835 = vpop.f32.mrb[0].mxu0
  %v9836 = vadd.f32 %v9691, %v9835
  %v9837 = vpop.f32.mrb[0].mxu0
  %9838 = vmatprep.mubr.f32.mxu0 %v9249
  %9839 = vmatmul.mubr.f32.gmra.mrb[0].mxu0 %v9248
  %v9840 = vpop.f32.mrb[0].mxu0
  %v9841 = vadd.f32 %v9696, %v9840
  %v9842 = vpop.f32.mrb[0].mxu0
  %9843 = vmatprep.mubr.f32.mxu0 %v9256
  %9844 = vmatmul.mubr.f32.gmra.mrb[0].mxu0 %v9255
  %v9845 = vpop.f32.mrb[0].mxu0
  %v9846 = vadd.f32 %v9701, %v9845
  %v9847 = vpop.f32.mrb[0].mxu0
  %9848 = vmatprep.mubr.f32.mxu0 %v9263
  %9849 = vmatmul.mubr.f32.gmra.mrb[0].mxu0 %v9262
  %v9850 = vpop.f32.mrb[0].mxu0
  %v9851 = vadd.f32 %v9706, %v9850
  %v9852 = vpop.f32.mrb[0].mxu0
  %9853 = vmatprep.mubr.f32.mxu0 %v9270
  %9854 = vmatmul.mubr.f32.gmra.mrb[0].mxu0 %v9269
  %v9855 = vpop.f32.mrb[0].mxu0
  %v9856 = vadd.f32 %v9711, %v9855
  %v9857 = vpop.f32.mrb[0].mxu0
  %9858 = vmatprep.mubr.f32.mxu0 %v9277
  %9859 = vmatmul.mubr.f32.gmra.mrb[0].mxu0 %v9276
  %v9860 = vpop.f32.mrb[0].mxu0
  %v9861 = vadd.f32 %v9716, %v9860
  %v9862 = vpop.f32.mrb[0].mxu0
  %9863 = vmatprep.mubr.f32.mxu0 %v9284
  %9864 = vmatmul.mubr.f32.gmra.mrb[0].mxu0 %v9283
  %v9865 = vpop.f32.mrb[0].mxu0
  %v9866 = vadd.f32 %v9721, %v9865
  %v9867 = vpop.f32.mrb[0].mxu0
  %9868 = vmatprep.mubr.f32.mxu0 %v9291
  %9869 = vmatmul.mubr.f32.gmra.mrb[0].mxu0 %v9290
  %v9870 = vpop.f32.mrb[0].mxu0
  %v9871 = vadd.f32 %v9726, %v9870
  %v9872 = vpop.f32.mrb[0].mxu0
  %9873 = vdwg.mxu0
  %9874 = vmatprep.subr.mxu0 0.0
  %9875 = vmatpush1.msra.mxu0 %v9389
  %9876 = vmatprep.subr.mxu0 0.0
  %9877 = vmatpush1.msra.mxu0 %v9390
  %9878 = vmatprep.subr.mxu0 0.0
  %9879 = vmatpush1.msra.mxu0 0.0
  %9880 = vmatprep.subr.mxu0 0.0
  %9881 = vmatpush1.msra.mxu0 0.0
  %9882 = vmatprep.subr.mxu0 0.0
  %9883 = vmatpush1.msra.mxu0 0.0
  %9884 = vmatprep.subr.mxu0 0.0
  %9885 = vmatpush1.msra.mxu0 0.0
  %9886 = vmatprep.subr.mxu0 0.0
  %9887 = vmatpush1.msra.mxu0 0.0
  %9888 = vmatprep.subr.mxu0 0.0
  %9889 = vmatpush1.msra.mxu0 0.0
  %9890 = vmatprep.subr.mxu0 0.0
  %9891 = vmatpush1.msra.mxu0 0.0
  %9892 = vmatprep.subr.mxu0 0.0
  %9893 = vmatpush1.msra.mxu0 0.0
  %9894 = vmatprep.subr.mxu0 0.0
  %9895 = vmatpush1.msra.mxu0 0.0
  %9896 = vmatprep.subr.mxu0 0.0
  %9897 = vmatpush1.msra.mxu0 0.0
  %9898 = vmatprep.subr.mxu0 0.0
  %9899 = vmatpush1.msra.mxu0 0.0
  %9900 = vmatprep.subr.mxu0 0.0
  %9901 = vmatpush1.msra.mxu0 0.0
  %9902 = vmatprep.subr.mxu0 0.0
  %9903 = vmatpush1.msra.mxu0 0.0
  %9904 = vmatprep.subr.mxu0 0.0
  %9905 = vmatpush1.msra.mxu0 0.0
  %9906 = vmatprep.subr.mxu0 0.0
  %9907 = vmatpush1.msra.mxu0 0.0
  %9908 = vmatprep.subr.mxu0 0.0
  %9909 = vmatpush1.msra.mxu0 0.0
  %9910 = vmatprep.subr.mxu0 0.0
  %9911 = vmatpush1.msra.mxu0 0.0
  %9912 = vmatprep.subr.mxu0 0.0
  %9913 = vmatpush1.msra.mxu0 0.0
  %9914 = vmatprep.subr.mxu0 0.0
  %9915 = vmatpush1.msra.mxu0 0.0
  %9916 = vmatprep.subr.mxu0 0.0
  %9917 = vmatpush1.msra.mxu0 0.0
  %9918 = vmatprep.subr.mxu0 0.0
  %9919 = vmatpush1.msra.mxu0 0.0
  %9920 = vmatprep.subr.mxu0 0.0
  %9921 = vmatpush1.msra.mxu0 0.0
  %9922 = vmatprep.subr.mxu0 0.0
  %9923 = vmatpush1.msra.mxu0 0.0
  %9924 = vmatprep.subr.mxu0 0.0
  %9925 = vmatpush1.msra.mxu0 0.0
  %9926 = vmatprep.subr.mxu0 0.0
  %9927 = vmatpush1.msra.mxu0 0.0
  %9928 = vmatprep.subr.mxu0 0.0
  %9929 = vmatpush1.msra.mxu0 0.0
  %9930 = vmatprep.subr.mxu0 0.0
  %9931 = vmatpush1.msra.mxu0 0.0
  %9932 = vmatprep.subr.mxu0 0.0
  %9933 = vmatpush1.msra.mxu0 0.0
  %9934 = vmatprep.subr.mxu0 0.0
  %9935 = vmatpush1.msra.mxu0 0.0
  %9936 = vmatprep.subr.mxu0 0.0
  %9937 = vmatpush1.msra.mxu0 0.0
  %9938 = vmatprep.mubr.f32.mxu0 0.0
  %9939 = vmatmul.mubr.f32.gmra.mrb[0].mxu0 %v9392
  %v9940 = vpop.f32.mrb[0].mxu0
  %v9941 = vadd.f32 %v9796, %v9940
  %v9942 = vpop.f32.mrb[0].mxu0
  %9943 = vmatprep.mubr.f32.mxu0 0.0
  %9944 = vmatmul.mubr.f32.gmra.mrb[0].mxu0 %v9395
  %v9945 = vpop.f32.mrb[0].mxu0
  %v9946 = vadd.f32 %v9801, %v9945
  %v9947 = vpop.f32.mrb[0].mxu0
  %9948 = vmatprep.mubr.f32.mxu0 0.0
  %9949 = vmatmul.mubr.f32.gmra.mrb[0].mxu0 %v9398
  %v9950 = vpop.f32.mrb[0].mxu0
  %v9951 = vadd.f32 %v9806, %v9950
  %v9952 = vpop.f32.mrb[0].mxu0
  %9953 = vmatprep.mubr.f32.mxu0 0.0
  %9954 = vmatmul.mubr.f32.gmra.mrb[0].mxu0 %v9401
  %v9955 = vpop.f32.mrb[0].mxu0
  %v9956 = vadd.f32 %v9811, %v9955
  %v9957 = vpop.f32.mrb[0].mxu0
  %9958 = vmatprep.mubr.f32.mxu0 0.0
  %9959 = vmatmul.mubr.f32.gmra.mrb[0].mxu0 %v9404
  %v9960 = vpop.f32.mrb[0].mxu0
  %v9961 = vadd.f32 %v9816, %v9960
  %v9962 = vpop.f32.mrb[0].mxu0
  %9963 = vmatprep.mubr.f32.mxu0 0.0
  %9964 = vmatmul.mubr.f32.gmra.mrb[0].mxu0 %v9407
  %v9965 = vpop.f32.mrb[0].mxu0
  %v9966 = vadd.f32 %v9821, %v9965
  %v9967 = vpop.f32.mrb[0].mxu0
  %9968 = vmatprep.mubr.f32.mxu0 0.0
  %9969 = vmatmul.mubr.f32.gmra.mrb[0].mxu0 %v9410
  %v9970 = vpop.f32.mrb[0].mxu0
  %v9971 = vadd.f32 %v9826, %v9970
  %v9972 = vpop.f32.mrb[0].mxu0
  %9973 = vmatprep.mubr.f32.mxu0 0.0
  %9974 = vmatmul.mubr.f32.gmra.mrb[0].mxu0 %v9413
  %v9975 = vpop.f32.mrb[0].mxu0
  %v9976 = vadd.f32 %v9831, %v9975
  %v9977 = vpop.f32.mrb[0].mxu0
  %9978 = vmatprep.mubr.f32.mxu0 0.0
  %9979 = vmatmul.mubr.f32.gmra.mrb[0].mxu0 %v9416
  %v9980 = vpop.f32.mrb[0].mxu0
  %v9981 = vadd.f32 %v9836, %v9980
  %v9982 = vpop.f32.mrb[0].mxu0
  %9983 = vmatprep.mubr.f32.mxu0 0.0
  %9984 = vmatmul.mubr.f32.gmra.mrb[0].mxu0 %v9419
  %v9985 = vpop.f32.mrb[0].mxu0
  %v9986 = vadd.f32 %v9841, %v9985
  %v9987 = vpop.f32.mrb[0].mxu0
  %9988 = vmatprep.mubr.f32.mxu0 0.0
  %9989 = vmatmul.mubr.f32.gmra.mrb[0].mxu0 %v9422
  %v9990 = vpop.f32.mrb[0].mxu0
  %v9991 = vadd.f32 %v9846, %v9990
  %v9992 = vpop.f32.mrb[0].mxu0
  %9993 = vmatprep.mubr.f32.mxu0 0.0
  %9994 = vmatmul.mubr.f32.gmra.mrb[0].mxu0 %v9425
  %v9995 = vpop.f32.mrb[0].mxu0
  %v9996 = vadd.f32 %v9851, %v9995
  %v9997 = vpop.f32.mrb[0].mxu0
  %9998 = vmatprep.mubr.f32.mxu0 0.0
  %9999 = vmatmul.mubr.f32.gmra.mrb[0].mxu0 %v9428
  %v10000 = vpop.f32.mrb[0].mxu0
  %v10001 = vadd.f32 %v9856, %v10000
  %v10002 = vpop.f32.mrb[0].mxu0
  %10003 = vmatprep.mubr.f32.mxu0 0.0
  %10004 = vmatmul.mubr.f32.gmra.mrb[0].mxu0 %v9431
  %v10005 = vpop.f32.mrb[0].mxu0
  %v10006 = vadd.f32 %v9861, %v10005
  %v10007 = vpop.f32.mrb[0].mxu0
  %10008 = vmatprep.mubr.f32.mxu0 0.0
  %10009 = vmatmul.mubr.f32.gmra.mrb[0].mxu0 %v9434
  %v10010 = vpop.f32.mrb[0].mxu0
  %v10011 = vadd.f32 %v9866, %v10010
  %v10012 = vpop.f32.mrb[0].mxu0
  %10013 = vmatprep.mubr.f32.mxu0 0.0
  %10014 = vmatmul.mubr.f32.gmra.mrb[0].mxu0 %v9437
  %v10015 = vpop.f32.mrb[0].mxu0
  %v10016 = vadd.f32 %v9871, %v10015
  %v10017 = vpop.f32.mrb[0].mxu0
  %10018 = vdwg.mxu0
  %10020 = vrot.lane.b32.xlu0 %v9946, 16
  %v10021 = vpop.permute.xlu0 %10020
  %10024 = vrot.lane.b32.xlu0 %v9951, 32
  %v10025 = vpop.permute.xlu0 %10024
  %10028 = vrot.lane.b32.xlu0 %v9956, 48
  %v10029 = vpop.permute.xlu0 %10028
  %10032 = vrot.lane.b32.xlu0 %v9961, 64
  %v10033 = vpop.permute.xlu0 %10032
  %10036 = vrot.lane.b32.xlu0 %v9966, 80
  %v10037 = vpop.permute.xlu0 %10036
  %10040 = vrot.lane.b32.xlu0 %v9971, 96
  %v10041 = vpop.permute.xlu0 %10040
  %10044 = vrot.lane.b32.xlu0 %v9976, 112
  %v10045 = vpop.permute.xlu0 %10044
  %10048 = vrot.lane.b32.xlu0 %v9986, 16
  %v10049 = vpop.permute.xlu0 %10048
  %10052 = vrot.lane.b32.xlu0 %v9991, 32
  %v10053 = vpop.permute.xlu0 %10052
  %10056 = vrot.lane.b32.xlu0 %v9996, 48
  %v10057 = vpop.permute.xlu0 %10056
  %10060 = vrot.lane.b32.xlu0 %v10001, 64
  %v10061 = vpop.permute.xlu0 %10060
  %10064 = vrot.lane.b32.xlu0 %v10006, 80
  %v10065 = vpop.permute.xlu0 %10064
  %10068 = vrot.lane.b32.xlu0 %v10011, 96
  %v10069 = vpop.permute.xlu0 %10068
  %10072 = vrot.lane.b32.xlu0 %v10016, 112
  %v10073 = vpop.permute.xlu0 %10072
  %v10075 = vsel %vm3404, %v9941, %v10021
  %v10076 = vsel %vm3525, %v10075, %v10025
  %vm10077 = vcmask 392192
  %v10078 = vsel %vm10077, %v10076, %v10029
  %vm10079 = vcmask 523264
  %v10080 = vsel %vm10079, %v10078, %v10033
  %v10081 = vsel %vm4103, %v10080, %v10037
  %vm10082 = vcmask 785408
  %v10083 = vsel %vm10082, %v10081, %v10041
  %vm10084 = vcmask 916480
  %v10085 = vsel %vm10084, %v10083, %v10045
  %v10086 = vsel %vm3404, %v9981, %v10049
  %v10087 = vsel %vm3525, %v10086, %v10053
  %v10088 = vsel %vm10077, %v10087, %v10057
  %v10089 = vsel %vm10079, %v10088, %v10061
  %v10090 = vsel %vm4103, %v10089, %v10065
  %v10091 = vsel %vm10082, %v10090, %v10069
  %v10092 = vsel %vm10084, %v10091, %v10073
  %v10093 = vld [vmem:[%s8] sm:$0xff]
  %v10094 = vld [vmem:[%s8 + $0x8] sm:$0xff]
  %v10095 = vld [vmem:[%s8 + $0x10] sm:$0xff]
  %v10096 = vld [vmem:[%s8 + $0x18] sm:$0xff]
  %v10097 = vld [vmem:[%s8 + $0x20] sm:$0xff]
  %v10098 = vld [vmem:[%s8 + $0x28] sm:$0xff]
  %v10099 = vld [vmem:[%s8 + $0x30] sm:$0xff]
  %v10100 = vld [vmem:[%s8 + $0x38] sm:$0xff]
  %v10101 = vld [vmem:[%s8 + $0x40] sm:$0xff]
  %v10102 = vld [vmem:[%s8 + $0x48] sm:$0xff]
  %v10103 = vld [vmem:[%s8 + $0x50] sm:$0xff]
  %v10104 = vld [vmem:[%s8 + $0x58] sm:$0xff]
  %v10105 = vld [vmem:[%s8 + $0x60] sm:$0xff]
  %v10106 = vld [vmem:[%s8 + $0x68] sm:$0xff]
  %v10107 = vld [vmem:[%s8 + $0x70] sm:$0xff]
  %v10108 = vld [vmem:[%s8 + $0x78] sm:$0xff]
  %v10109 = vld [vmem:[%s8 + $0x80] sm:$0xff]
  %v10110 = vld [vmem:[%s8 + $0x88] sm:$0xff]
  %v10111 = vld [vmem:[%s8 + $0x90] sm:$0xff]
  %v10112 = vld [vmem:[%s8 + $0x98] sm:$0xff]
  %v10113 = vld [vmem:[%s8 + $0xa0] sm:$0xff]
  %v10114 = vld [vmem:[%s8 + $0xa8] sm:$0xff]
  %v10115 = vld [vmem:[%s8 + $0xb0] sm:$0xff]
  %v10116 = vld [vmem:[%s8 + $0xb8] sm:$0xff]
  %v10117 = vld [vmem:[%s8 + $0xc0] sm:$0xff]
  %v10118 = vld [vmem:[%s8 + $0xc8] sm:$0xff]
  %v10119 = vld [vmem:[%s8 + $0xd0] sm:$0xff]
  %v10120 = vld [vmem:[%s8 + $0xd8] sm:$0xff]
  %v10121 = vld [vmem:[%s8 + $0xe0] sm:$0xff]
  %v10122 = vld [vmem:[%s8 + $0xe8] sm:$0xff]
  %v10123 = vld [vmem:[%s8 + $0xf0] sm:$0xff]
  %v10124 = vld [vmem:[%s8 + $0xf8] sm:$0xff]
  %v10125 = vld [vmem:[%s9] sm:$0x1]
  %v10127 = vlaneseq
  %v10128 = vshrl.u32 %v10127, 7
  %v10129 = vsub.s32 0, %v10128
  %v10130 = vrot.slane %v10125, %v10129
  %10132 = vmatprep.subr.mxu0 0.0
  %10133 = vmatpush1.msra.mxu0 %v10093
  %10134 = vmatprep.subr.mxu0 0.0
  %10135 = vmatpush1.msra.mxu0 %v10094
  %10136 = vmatprep.subr.mxu0 0.0
  %10137 = vmatpush1.msra.mxu0 %v10095
  %10138 = vmatprep.subr.mxu0 0.0
  %10139 = vmatpush1.msra.mxu0 %v10096
  %10140 = vmatprep.subr.mxu0 0.0
  %10141 = vmatpush1.msra.mxu0 %v10097
  %10142 = vmatprep.subr.mxu0 0.0
  %10143 = vmatpush1.msra.mxu0 %v10098
  %10144 = vmatprep.subr.mxu0 0.0
  %10145 = vmatpush1.msra.mxu0 %v10099
  %10146 = vmatprep.subr.mxu0 0.0
  %10147 = vmatpush1.msra.mxu0 %v10100
  %10148 = vmatprep.subr.mxu0 0.0
  %10149 = vmatpush1.msra.mxu0 %v10101
  %10150 = vmatprep.subr.mxu0 0.0
  %10151 = vmatpush1.msra.mxu0 %v10102
  %10152 = vmatprep.subr.mxu0 0.0
  %10153 = vmatpush1.msra.mxu0 %v10103
  %10154 = vmatprep.subr.mxu0 0.0
  %10155 = vmatpush1.msra.mxu0 %v10104
  %10156 = vmatprep.subr.mxu0 0.0
  %10157 = vmatpush1.msra.mxu0 %v10105
  %10158 = vmatprep.subr.mxu0 0.0
  %10159 = vmatpush1.msra.mxu0 %v10106
  %10160 = vmatprep.subr.mxu0 0.0
  %10161 = vmatpush1.msra.mxu0 %v10107
  %10162 = vmatprep.subr.mxu0 0.0
  %10163 = vmatpush1.msra.mxu0 %v10108
  %10164 = vmatprep.subr.mxu0 0.0
  %10165 = vmatpush1.msra.mxu0 %v10109
  %10166 = vmatprep.subr.mxu0 0.0
  %10167 = vmatpush1.msra.mxu0 %v10110
  %10168 = vmatprep.subr.mxu0 0.0
  %10169 = vmatpush1.msra.mxu0 %v10111
  %10170 = vmatprep.subr.mxu0 0.0
  %10171 = vmatpush1.msra.mxu0 %v10112
  %10172 = vmatprep.subr.mxu0 0.0
  %10173 = vmatpush1.msra.mxu0 %v10113
  %10174 = vmatprep.subr.mxu0 0.0
  %10175 = vmatpush1.msra.mxu0 %v10114
  %10176 = vmatprep.subr.mxu0 0.0
  %10177 = vmatpush1.msra.mxu0 %v10115
  %10178 = vmatprep.subr.mxu0 0.0
  %10179 = vmatpush1.msra.mxu0 %v10116
  %10180 = vmatprep.subr.mxu0 0.0
  %10181 = vmatpush1.msra.mxu0 %v10117
  %10182 = vmatprep.subr.mxu0 0.0
  %10183 = vmatpush1.msra.mxu0 %v10118
  %10184 = vmatprep.subr.mxu0 0.0
  %10185 = vmatpush1.msra.mxu0 %v10119
  %10186 = vmatprep.subr.mxu0 0.0
  %10187 = vmatpush1.msra.mxu0 %v10120
  %10188 = vmatprep.subr.mxu0 0.0
  %10189 = vmatpush1.msra.mxu0 %v10121
  %10190 = vmatprep.subr.mxu0 0.0
  %10191 = vmatpush1.msra.mxu0 %v10122
  %10192 = vmatprep.subr.mxu0 0.0
  %10193 = vmatpush1.msra.mxu0 %v10123
  %10194 = vmatprep.subr.mxu0 0.0
  %10195 = vmatpush1.msra.mxu0 %v10124
  %10196 = vmatprep.mubr.f32.mxu0 %v10092
  %10197 = vmatmul.mubr.f32.gmra.mrb[0].mxu0 %v10085
  %v10198 = vpop.f32.mrb[0].mxu0
  %v10199 = vadd.f32 %v10130, %v10198
  %v10200 = vpop.f32.mrb[0].mxu0
  %10201 = vdwg.mxu0
  %v10202 = vmax.f32 %v10199, 0.0
  %v10203 = vld [vmem:[%s10] sm:$0xff]
  %v10204 = vld [vmem:[%s10 + $0x8] sm:$0xff]
  %v10205 = vld [vmem:[%s10 + $0x10] sm:$0xff]
  %v10206 = vld [vmem:[%s10 + $0x18] sm:$0xff]
  %v10207 = vld [vmem:[%s10 + $0x20] sm:$0xff]
  %v10208 = vld [vmem:[%s10 + $0x28] sm:$0xff]
  %v10209 = vld [vmem:[%s10 + $0x30] sm:$0xff]
  %v10210 = vld [vmem:[%s10 + $0x38] sm:$0xff]
  %v10211 = vld [vmem:[%s10 + $0x40] sm:$0xff]
  %v10212 = vld [vmem:[%s10 + $0x48] sm:$0xff]
  %v10213 = vld [vmem:[%s10 + $0x50] sm:$0xff]
  %v10214 = vld [vmem:[%s10 + $0x58] sm:$0xff]
  %v10215 = vld [vmem:[%s10 + $0x60] sm:$0xff]
  %v10216 = vld [vmem:[%s10 + $0x68] sm:$0xff]
  %v10217 = vld [vmem:[%s10 + $0x70] sm:$0xff]
  %v10218 = vld [vmem:[%s10 + $0x78] sm:$0xff]
  %v10219 = vld [vmem:[%s11] sm:$0x1]
  %v10221 = vlaneseq
  %v10222 = vshrl.u32 %v10221, 7
  %v10223 = vsub.s32 0, %v10222
  %v10224 = vrot.slane %v10219, %v10223
  %10226 = vmatprep.subr.mxu0 0.0
  %10227 = vmatpush1.msra.mxu0 %v10203
  %10228 = vmatprep.subr.mxu0 0.0
  %10229 = vmatpush1.msra.mxu0 %v10204
  %10230 = vmatprep.subr.mxu0 0.0
  %10231 = vmatpush1.msra.mxu0 %v10205
  %10232 = vmatprep.subr.mxu0 0.0
  %10233 = vmatpush1.msra.mxu0 %v10206
  %10234 = vmatprep.subr.mxu0 0.0
  %10235 = vmatpush1.msra.mxu0 %v10207
  %10236 = vmatprep.subr.mxu0 0.0
  %10237 = vmatpush1.msra.mxu0 %v10208
  %10238 = vmatprep.subr.mxu0 0.0
  %10239 = vmatpush1.msra.mxu0 %v10209
  %10240 = vmatprep.subr.mxu0 0.0
  %10241 = vmatpush1.msra.mxu0 %v10210
  %10242 = vmatprep.subr.mxu0 0.0
  %10243 = vmatpush1.msra.mxu0 %v10211
  %10244 = vmatprep.subr.mxu0 0.0
  %10245 = vmatpush1.msra.mxu0 %v10212
  %10246 = vmatprep.subr.mxu0 0.0
  %10247 = vmatpush1.msra.mxu0 %v10213
  %10248 = vmatprep.subr.mxu0 0.0
  %10249 = vmatpush1.msra.mxu0 %v10214
  %10250 = vmatprep.subr.mxu0 0.0
  %10251 = vmatpush1.msra.mxu0 %v10215
  %10252 = vmatprep.subr.mxu0 0.0
  %10253 = vmatpush1.msra.mxu0 %v10216
  %10254 = vmatprep.subr.mxu0 0.0
  %10255 = vmatpush1.msra.mxu0 %v10217
  %10256 = vmatprep.subr.mxu0 0.0
  %10257 = vmatpush1.msra.mxu0 %v10218
  %10258 = vmatprep.subr.mxu0 0.0
  %10259 = vmatpush1.msra.mxu0 0.0
  %10260 = vmatprep.subr.mxu0 0.0
  %10261 = vmatpush1.msra.mxu0 0.0
  %10262 = vmatprep.subr.mxu0 0.0
  %10263 = vmatpush1.msra.mxu0 0.0
  %10264 = vmatprep.subr.mxu0 0.0
  %10265 = vmatpush1.msra.mxu0 0.0
  %10266 = vmatprep.subr.mxu0 0.0
  %10267 = vmatpush1.msra.mxu0 0.0
  %10268 = vmatprep.subr.mxu0 0.0
  %10269 = vmatpush1.msra.mxu0 0.0
  %10270 = vmatprep.subr.mxu0 0.0
  %10271 = vmatpush1.msra.mxu0 0.0
  %10272 = vmatprep.subr.mxu0 0.0
  %10273 = vmatpush1.msra.mxu0 0.0
  %10274 = vmatprep.subr.mxu0 0.0
  %10275 = vmatpush1.msra.mxu0 0.0
  %10276 = vmatprep.subr.mxu0 0.0
  %10277 = vmatpush1.msra.mxu0 0.0
  %10278 = vmatprep.subr.mxu0 0.0
  %10279 = vmatpush1.msra.mxu0 0.0
  %10280 = vmatprep.subr.mxu0 0.0
  %10281 = vmatpush1.msra.mxu0 0.0
  %10282 = vmatprep.subr.mxu0 0.0
  %10283 = vmatpush1.msra.mxu0 0.0
  %10284 = vmatprep.subr.mxu0 0.0
  %10285 = vmatpush1.msra.mxu0 0.0
  %10286 = vmatprep.subr.mxu0 0.0
  %10287 = vmatpush1.msra.mxu0 0.0
  %10288 = vmatprep.subr.mxu0 0.0
  %10289 = vmatpush1.msra.mxu0 0.0
  %10290 = vmatprep.mubr.f32.mxu0 0.0
  %10291 = vmatmul.mubr.f32.gmra.mrb[0].mxu0 %v10202
  %v10292 = vpop.f32.mrb[0].mxu0
  %v10293 = vadd.f32 %v10224, %v10292
  %v10294 = vpop.f32.mrb[0].mxu0
  %10295 = vdwg.mxu0
  %v10296 = vmax.f32 %v10293, 0.0
  %v10297 = vld [vmem:[%s12] sm:$0xff]
  %v10298 = vld [vmem:[%s12 + $0x8] sm:$0xff]
  %v10299 = vld [vmem:[%s12 + $0x10] sm:$0xff]
  %v10300 = vld [vmem:[%s12 + $0x18] sm:$0xff]
  %v10301 = vld [vmem:[%s12 + $0x20] sm:$0xff]
  %v10302 = vld [vmem:[%s12 + $0x28] sm:$0xff]
  %v10303 = vld [vmem:[%s12 + $0x30] sm:$0xff]
  %v10304 = vld [vmem:[%s12 + $0x38] sm:$0xff]
  %v10305 = vld [vmem:[%s12 + $0x40] sm:$0xff]
  %v10306 = vld [vmem:[%s12 + $0x48] sm:$0xff]
  %v10307 = vld [vmem:[%s12 + $0x50] sm:$0xff]
  %v10308 = vld [vmem:[%s12 + $0x58] sm:$0xff]
  %v10309 = vld [vmem:[%s12 + $0x60] sm:$0xff]
  %v10310 = vld [vmem:[%s12 + $0x68] sm:$0xff]
  %v10311 = vld [vmem:[%s12 + $0x70] sm:$0xff]
  %v10312 = vld [vmem:[%s12 + $0x78] sm:$0xff]
  %v10313 = vld [vmem:[%s13] sm:$0x1]
  %v10315 = vlaneseq
  %v10316 = vshrl.u32 %v10315, 7
  %v10317 = vsub.s32 0, %v10316
  %v10318 = vrot.slane %v10313, %v10317
  %10320 = vmatprep.subr.mxu0 0.0
  %10321 = vmatpush1.msra.mxu0 %v10297
  %10322 = vmatprep.subr.mxu0 0.0
  %10323 = vmatpush1.msra.mxu0 %v10298
  %10324 = vmatprep.subr.mxu0 0.0
  %10325 = vmatpush1.msra.mxu0 %v10299
  %10326 = vmatprep.subr.mxu0 0.0
  %10327 = vmatpush1.msra.mxu0 %v10300
  %10328 = vmatprep.subr.mxu0 0.0
  %10329 = vmatpush1.msra.mxu0 %v10301
  %10330 = vmatprep.subr.mxu0 0.0
  %10331 = vmatpush1.msra.mxu0 %v10302
  %10332 = vmatprep.subr.mxu0 0.0
  %10333 = vmatpush1.msra.mxu0 %v10303
  %10334 = vmatprep.subr.mxu0 0.0
  %10335 = vmatpush1.msra.mxu0 %v10304
  %10336 = vmatprep.subr.mxu0 0.0
  %10337 = vmatpush1.msra.mxu0 %v10305
  %10338 = vmatprep.subr.mxu0 0.0
  %10339 = vmatpush1.msra.mxu0 %v10306
  %10340 = vmatprep.subr.mxu0 0.0
  %10341 = vmatpush1.msra.mxu0 %v10307
  %10342 = vmatprep.subr.mxu0 0.0
  %10343 = vmatpush1.msra.mxu0 %v10308
  %10344 = vmatprep.subr.mxu0 0.0
  %10345 = vmatpush1.msra.mxu0 %v10309
  %10346 = vmatprep.subr.mxu0 0.0
  %10347 = vmatpush1.msra.mxu0 %v10310
  %10348 = vmatprep.subr.mxu0 0.0
  %10349 = vmatpush1.msra.mxu0 %v10311
  %10350 = vmatprep.subr.mxu0 0.0
  %10351 = vmatpush1.msra.mxu0 %v10312
  %10352 = vmatprep.subr.mxu0 0.0
  %10353 = vmatpush1.msra.mxu0 0.0
  %10354 = vmatprep.subr.mxu0 0.0
  %10355 = vmatpush1.msra.mxu0 0.0
  %10356 = vmatprep.subr.mxu0 0.0
  %10357 = vmatpush1.msra.mxu0 0.0
  %10358 = vmatprep.subr.mxu0 0.0
  %10359 = vmatpush1.msra.mxu0 0.0
  %10360 = vmatprep.subr.mxu0 0.0
  %10361 = vmatpush1.msra.mxu0 0.0
  %10362 = vmatprep.subr.mxu0 0.0
  %10363 = vmatpush1.msra.mxu0 0.0
  %10364 = vmatprep.subr.mxu0 0.0
  %10365 = vmatpush1.msra.mxu0 0.0
  %10366 = vmatprep.subr.mxu0 0.0
  %10367 = vmatpush1.msra.mxu0 0.0
  %10368 = vmatprep.subr.mxu0 0.0
  %10369 = vmatpush1.msra.mxu0 0.0
  %10370 = vmatprep.subr.mxu0 0.0
  %10371 = vmatpush1.msra.mxu0 0.0
  %10372 = vmatprep.subr.mxu0 0.0
  %10373 = vmatpush1.msra.mxu0 0.0
  %10374 = vmatprep.subr.mxu0 0.0
  %10375 = vmatpush1.msra.mxu0 0.0
  %10376 = vmatprep.subr.mxu0 0.0
  %10377 = vmatpush1.msra.mxu0 0.0
  %10378 = vmatprep.subr.mxu0 0.0
  %10379 = vmatpush1.msra.mxu0 0.0
  %10380 = vmatprep.subr.mxu0 0.0
  %10381 = vmatpush1.msra.mxu0 0.0
  %10382 = vmatprep.subr.mxu0 0.0
  %10383 = vmatpush1.msra.mxu0 0.0
  %10384 = vmatprep.mubr.f32.mxu0 0.0
  %10385 = vmatmul.mubr.f32.gmra.mrb[0].mxu0 %v10296
  %v10386 = vpop.f32.mrb[0].mxu0
  %v10387 = vadd.f32 %v10318, %v10386
  %v10388 = vpop.f32.mrb[0].mxu0
  %10389 = vdwg.mxu0
  %10390 = vst [vmem:[%s14] sm:$0xff] %v10387
  // Predicated region
  $region58: #{cnn_forward.1} parent=0 // pred_check
    _
  $region59: #{cnn_forward.1} parent=0 // pred_check_branch
    %10392 = sbr.rel (0) target = $region61
  $region60: #{cnn_forward.1} parent=0 // pred_region
    _
  $region61: #{cnn_forward.1} parent=0 // pred_fallthru
    _
  // Predicated region
  $region62: #{cnn_forward.1} parent=0 // pred_check
    _
  $region63: #{cnn_forward.1} parent=0 // pred_check_branch
    %10394 = sbr.rel (0) target = $region65
  $region64: #{cnn_forward.1} parent=0 // pred_region
    _
  $region65: #{cnn_forward.1} parent=0 // pred_fallthru
    _

</llo_original>
